<compile_context>
chip_gen: v7x
topology: tpu7x:2x2x1
jax: 0.10.0
libtpu: 0.0.40
codegen_flags: <defaults>
</compile_context>

<pallas_src>
import jax
import jax.numpy as jnp
import numpy as np
from jax.experimental import pallas as pl
from jax.experimental.pallas import tpu as pltpu


# ----------------------------------------------------------------------------
# Pallas kernels
# ----------------------------------------------------------------------------
def _make_unit_kernel(n_pieces, h, w, k2, c0, c1):
    """Fused BN1+ReLU -> 1x1 conv -> BN2+ReLU -> k2 x k2 'same' conv."""
    p2 = k2 // 2

    def kernel(*refs):
        xs = refs[0:n_pieces]                       # (1, h*w, c_i) f32 each
        s1 = refs[n_pieces:2 * n_pieces]            # (1, c_i) each
        b1 = refs[2 * n_pieces:3 * n_pieces]        # (1, c_i) each
        w1 = refs[3 * n_pieces:4 * n_pieces]        # (c_i, c0) bf16 each
        s2_ref, b2_ref, w2_ref, o_ref, pad_ref = refs[4 * n_pieces:]

        # --- BN1 + ReLU + 1x1 conv, summed over the dense-input pieces.
        #     (equivalent to BN+ReLU+conv of the channel concat; avoids the
        #      HBM concat entirely.)  bf16 MXU operands, f32 accumulation.
        acc1 = jnp.zeros((h * w, c0), jnp.float32)
        for i in range(n_pieces):
            x = xs[i][0]                                           # (h*w, c_i)
            a = jnp.maximum(x * s1[i][...] + b1[i][...], 0.0)      # f32 on VPU
            acc1 = acc1 + jnp.dot(a.astype(jnp.bfloat16), w1[i][...],
                                  preferred_element_type=jnp.float32)

        # --- BN2 + ReLU (f32, VPU).
        c = jnp.maximum(acc1 * s2_ref[...] + b2_ref[...], 0.0)     # (h*w, c0)

        # --- k2 x k2 'same' conv from a zero-padded VMEM tile (in-VMEM
        #     shifted views; no extra HBM traffic).
        @pl.when(pl.program_id(0) == 0)
        def _():
            pad_ref[...] = jnp.zeros_like(pad_ref)   # border stays zero forever
        pad_ref[pl.ds(p2, h), pl.ds(p2, w), :] = c.reshape(h, w, c0)

        w2 = w2_ref[...]                             # (k2*k2, c0, c1) bf16
        acc2 = jnp.zeros((h * w, c1), jnp.float32)
        for ky in range(k2):                         # unrolled static tap loop
            for kx in range(k2):
                tap = pad_ref[pl.ds(ky, h), pl.ds(kx, w), :].reshape(h * w, c0)
                acc2 = acc2 + jnp.dot(tap.astype(jnp.bfloat16),
                                      w2[ky * k2 + kx],
                                      preferred_element_type=jnp.float32)
        o_ref[0] = acc2.astype(o_ref.dtype)

    return kernel


def _bnrelu_kernel(x_ref, s_ref, b_ref, o_ref):
    o_ref[...] = jnp.maximum(x_ref[...] * s_ref[...] + b_ref[...], 0.0)


# ----------------------------------------------------------------------------
# Wrappers around pallas_call
# ----------------------------------------------------------------------------
def _full_spec(a):
    # Whole (tiny) parameter tensor resident in VMEM, same block every step.
    return pl.BlockSpec(a.shape, lambda b, nd=a.ndim: (0,) * nd)


def dense_unit(pieces, u, n, h, w):
    """One dense unit. `pieces`: channel slices of the dense input, each
    (n, h*w, c_i) f32.  Returns the new feature map, (n, h*w, c1) f32."""
    piece_ch = [int(p.shape[-1]) for p in pieces]
    k1 = u["w1"].shape[0]
    k2 = u["w2"].shape[0]
    assert k1 == 1, "TODO(synk): unit_ksize[0] != 1 not implemented"
    assert k2 % 2 == 1, "even conv kernel sizes not supported"
    cin = sum(piece_ch)
    c0 = u["w1"].shape[-1]
    c1 = u["w2"].shape[-1]
    p2 = k2 // 2

    # Split BN1 params and the 1x1 weight per channel piece (parameter prep).
    offs = np.concatenate([[0], np.cumsum(piece_ch)]).astype(np.int64)
    w1_2d = u["w1"].reshape(cin, c0).astype(jnp.bfloat16)
    s1_p, b1_p, w1_p = [], [], []
    for i in range(len(pieces)):
        lo, hi = int(offs[i]), int(offs[i + 1])
        s1_p.append(u["s1"][lo:hi].reshape(1, -1))
        b1_p.append(u["b1"][lo:hi].reshape(1, -1))
        w1_p.append(w1_2d[lo:hi])
    s2 = u["s2"].reshape(1, c0)
    b2 = u["b2"].reshape(1, c0)
    w2 = u["w2"].reshape(k2 * k2, c0, c1).astype(jnp.bfloat16)

    args = list(pieces) + s1_p + b1_p + w1_p + [s2, b2, w2]
    in_specs = [pl.BlockSpec((1, h * w, ci), lambda b: (b, 0, 0))
                for ci in piece_ch]
    in_specs += [_full_spec(a) for a in (s1_p + b1_p + w1_p + [s2, b2, w2])]

    kernel = _make_unit_kernel(len(pieces), h, w, k2, c0, c1)
    return pl.pallas_call(
        kernel,
        out_shape=jax.ShapeDtypeStruct((n, h * w, c1), jnp.float32),
        grid=(n,),
        in_specs=in_specs,
        out_specs=pl.BlockSpec((1, h * w, c1), lambda b: (b, 0, 0)),
        scratch_shapes=[
            pltpu.VMEM((h + 2 * p2, w + 2 * p2, c0), jnp.float32)],
        compiler_params=pltpu.CompilerParams(
            dimension_semantics=("parallel",)),
    )(*args)


def block_bnrelu(feat, scale, shift, n, h, w):
    """Trailing BN+ReLU on the concatenated features, lane-dense layout.
    feat: (n, h*w, C).  Returns (n, h, w, C)."""
    c = feat.shape[-1]
    feat2d = feat.reshape(n * h, w * c)          # contiguous reinterpretation
    s_row = jnp.tile(scale, w).reshape(1, w * c)
    b_row = jnp.tile(shift, w).reshape(1, w * c)
    out2d = pl.pallas_call(
        _bnrelu_kernel,
        out_shape=jax.ShapeDtypeStruct((n * h, w * c), feat.dtype),
        grid=(n,),
        in_specs=[pl.BlockSpec((h, w * c), lambda b: (b, 0)),
                  pl.BlockSpec((1, w * c), lambda b: (0, 0)),
                  pl.BlockSpec((1, w * c), lambda b: (0, 0))],
        out_specs=pl.BlockSpec((h, w * c), lambda b: (b, 0)),
        compiler_params=pltpu.CompilerParams(
            dimension_semantics=("parallel",)),
    )(feat2d, s_row, b_row)
    return out2d.reshape(n, h, w, c)


# ----------------------------------------------------------------------------
# Parameter init (deterministic, synthetic) — mirrors DenseBlock.__init__
# ----------------------------------------------------------------------------
def _init_bn(key, c, eps=1e-5):
    k1, k2, k3, k4 = jax.random.split(key, 4)
    gamma = jax.random.uniform(k1, (c,), jnp.float32, 0.8, 1.2)
    beta = 0.1 * jax.random.normal(k2, (c,), jnp.float32)
    mean = 0.1 * jax.random.normal(k3, (c,), jnp.float32)
    var = jax.random.uniform(k4, (c,), jnp.float32, 0.5, 1.5)
    scale = gamma / jnp.sqrt(var + eps)
    shift = beta - mean * scale
    return scale, shift


def init_dense_block_params(key, in_ch, unit_ksize, unit_ch, unit_count):
    assert len(unit_ksize) == len(unit_ch), "Unbalance Unit Info"
    params = {"units": []}
    unit_in_ch = in_ch
    for _ in range(unit_count):
        key, kb1, kw1, kb2, kw2 = jax.random.split(key, 5)
        s1, b1 = _init_bn(kb1, unit_in_ch)
        w1 = 0.2 * jax.random.normal(
            kw1, (unit_ksize[0], unit_ksize[0], unit_in_ch, unit_ch[0]),
            jnp.float32)
        s2, b2 = _init_bn(kb2, unit_ch[0])
        w2 = 0.2 * jax.random.normal(
            kw2, (unit_ksize[1], unit_ksize[1], unit_ch[0], unit_ch[1]),
            jnp.float32)
        params["units"].append(
            {"s1": s1, "b1": b1, "w1": w1, "s2": s2, "b2": b2, "w2": w2})
        unit_in_ch += unit_ch[1]
    key, kblk = jax.random.split(key)
    s_blk, b_blk = _init_bn(kblk, unit_in_ch)
    params["s_blk"] = s_blk
    params["b_blk"] = b_blk
    return params


# ----------------------------------------------------------------------------
# DenseBlock forward (Pallas kernels for the hot path)
# ----------------------------------------------------------------------------
def dense_block_forward(x_nchw, params):
    x = jnp.transpose(x_nchw, (0, 2, 3, 1))             # NCHW -> NHWC
    n, h, w, in_ch = x.shape
    pieces = [x.reshape(n, h * w, in_ch)]
    for u in params["units"]:
        pieces.append(dense_unit(pieces, u, n, h, w))   # fused unit kernel
    feat = jnp.concatenate(pieces, axis=-1)             # single concat at end
    out = block_bnrelu(feat, params["s_blk"], params["b_blk"], n, h, w)
    return jnp.transpose(out, (0, 3, 1, 2))             # NHWC -> NCHW


# ----------------------------------------------------------------------------
# Reference (matches kernel numerics: bf16 conv operands, f32 accumulation)
# ----------------------------------------------------------------------------
def _ref_conv(a_nhwc, w_hwio):
    return jax.lax.conv_general_dilated(
        a_nhwc.astype(jnp.bfloat16), w_hwio.astype(jnp.bfloat16),
        window_strides=(1, 1), padding="SAME",
        dimension_numbers=("NHWC", "HWIO", "NHWC"),
        preferred_element_type=jnp.float32)


def ref_forward(x_nchw, params):
    prev = jnp.transpose(x_nchw, (0, 2, 3, 1))
    for u in params["units"]:
        a = jnp.maximum(prev * u["s1"] + u["b1"], 0.0)
        b = _ref_conv(a, u["w1"])
        c = jnp.maximum(b * u["s2"] + u["b2"], 0.0)
        d = _ref_conv(c, u["w2"])
        prev = jnp.concatenate([prev, d], axis=-1)
    out = jnp.maximum(prev * params["s_blk"] + params["b_blk"], 0.0)
    return jnp.transpose(out, (0, 3, 1, 2))


# ----------------------------------------------------------------------------
if __name__ == "__main__":
    # Config: DenseBlock(in_ch=4, unit_ksize=[1, 3], unit_ch=[8, 4],
    #                    unit_count=2, split=1)
    in_ch, unit_ksize, unit_ch, unit_count, split = 4, (1, 3), (8, 4), 2, 1
    assert split == 1  # TODO(synk): grouped conv not implemented.

    key = jax.random.PRNGKey(0)
    key, kx, kp = jax.random.split(key, 3)
    x = jax.random.normal(kx, (2, in_ch, 16, 16), jnp.float32)  # NCHW input
    params = init_dense_block_params(kp, in_ch, unit_ksize, unit_ch, unit_count)

    fwd = jax.jit(dense_block_forward)
    out = jax.block_until_ready(fwd(x, params))

    expected_out_ch = in_ch + unit_count * unit_ch[-1]
    assert out.shape == (2, expected_out_ch, 16, 16), out.shape

    ref = jax.block_until_ready(ref_forward(x, params))
    max_diff = float(jnp.max(jnp.abs(out - ref)))
    assert max_diff < 2e-2, f"mismatch vs reference: {max_diff}"

    print("KERNEL_OK")
</pallas_src>

<mosaic_0001>
module attributes {stable_mosaic.version = 11 : i64} {
  func.func @kernel(%arg0: i32, %arg1: memref<1x256x4xf32, #tpu.memory_space<vmem>>, %arg2: memref<1x4xf32, #tpu.memory_space<vmem>>, %arg3: memref<1x4xf32, #tpu.memory_space<vmem>>, %arg4: memref<4x8xbf16, #tpu.memory_space<vmem>>, %arg5: memref<1x8xf32, #tpu.memory_space<vmem>>, %arg6: memref<1x8xf32, #tpu.memory_space<vmem>>, %arg7: memref<9x8x4xbf16, #tpu.memory_space<vmem>>, %arg8: memref<1x256x4xf32, #tpu.memory_space<vmem>>, %arg9: memref<18x18x8xf32, #tpu.memory_space<vmem>>) attributes {dimension_semantics = [#tpu.dimension_semantics<parallel>], iteration_bounds = array<i64: 2>, scalar_prefetch = 0 : i64, scratch_operands = 1 : i64, tpu.core_type = #tpu.core_type<tc>, window_params = [{transform_indices = @transform_0, window_bounds = array<i64: 1, 256, 4>}, {pipeline_mode = #tpu.pipeline_mode<synchronous>, transform_indices = @transform_1, window_bounds = array<i64: 1, 4>}, {pipeline_mode = #tpu.pipeline_mode<synchronous>, transform_indices = @transform_2, window_bounds = array<i64: 1, 4>}, {pipeline_mode = #tpu.pipeline_mode<synchronous>, transform_indices = @transform_3, window_bounds = array<i64: 4, 8>}, {pipeline_mode = #tpu.pipeline_mode<synchronous>, transform_indices = @transform_4, window_bounds = array<i64: 1, 8>}, {pipeline_mode = #tpu.pipeline_mode<synchronous>, transform_indices = @transform_5, window_bounds = array<i64: 1, 8>}, {pipeline_mode = #tpu.pipeline_mode<synchronous>, transform_indices = @transform_6, window_bounds = array<i64: 9, 8, 4>}, {transform_indices = @transform_7, window_bounds = array<i64: 1, 256, 4>}]} {
    %cst = arith.constant 0.000000e+00 : f32
    %0 = vector.broadcast %cst : f32 to vector<256x8xf32>
    %c0 = arith.constant 0 : index
    %c0_0 = arith.constant 0 : index
    %c0_1 = arith.constant 0 : index
    %1 = vector.load %arg1[%c0, %c0_0, %c0_1] : memref<1x256x4xf32, #tpu.memory_space<vmem>>, vector<1x256x4xf32>
    %2 = vector.shape_cast %1 : vector<1x256x4xf32> to vector<256x4xf32>
    %c0_2 = arith.constant 0 : index
    %c0_3 = arith.constant 0 : index
    %3 = vector.load %arg2[%c0_2, %c0_3] : memref<1x4xf32, #tpu.memory_space<vmem>>, vector<1x4xf32>
    %4 = vector.broadcast %3 : vector<1x4xf32> to vector<256x4xf32>
    %5 = arith.mulf %2, %4 : vector<256x4xf32>
    %c0_4 = arith.constant 0 : index
    %c0_5 = arith.constant 0 : index
    %6 = vector.load %arg3[%c0_4, %c0_5] : memref<1x4xf32, #tpu.memory_space<vmem>>, vector<1x4xf32>
    %7 = vector.broadcast %6 : vector<1x4xf32> to vector<256x4xf32>
    %8 = arith.addf %5, %7 : vector<256x4xf32>
    %cst_6 = arith.constant 0.000000e+00 : f32
    %9 = vector.broadcast %cst_6 : f32 to vector<256x4xf32>
    %10 = arith.maximumf %8, %9 : vector<256x4xf32>
    %11 = arith.truncf %10 : vector<256x4xf32> to vector<256x4xbf16>
    %c0_7 = arith.constant 0 : index
    %c0_8 = arith.constant 0 : index
    %12 = vector.load %arg4[%c0_7, %c0_8] : memref<4x8xbf16, #tpu.memory_space<vmem>>, vector<4x8xbf16>
    %cst_9 = arith.constant dense<0.000000e+00> : vector<256x8xf32>
    %13 = tpu.matmul %11, %12, %cst_9 {dimension_numbers = #tpu.dot_dimension_numbers<[1], [0], [0], [1], [0, 0, 1, 1], [], []>} : vector<256x4xbf16>, vector<4x8xbf16>, vector<256x8xf32> -> vector<256x8xf32>
    %14 = arith.addf %0, %13 : vector<256x8xf32>
    %c0_10 = arith.constant 0 : index
    %c0_11 = arith.constant 0 : index
    %15 = vector.load %arg5[%c0_10, %c0_11] : memref<1x8xf32, #tpu.memory_space<vmem>>, vector<1x8xf32>
    %16 = vector.broadcast %15 : vector<1x8xf32> to vector<256x8xf32>
    %17 = arith.mulf %14, %16 : vector<256x8xf32>
    %c0_12 = arith.constant 0 : index
    %c0_13 = arith.constant 0 : index
    %18 = vector.load %arg6[%c0_12, %c0_13] : memref<1x8xf32, #tpu.memory_space<vmem>>, vector<1x8xf32>
    %19 = vector.broadcast %18 : vector<1x8xf32> to vector<256x8xf32>
    %20 = arith.addf %17, %19 : vector<256x8xf32>
    %cst_14 = arith.constant 0.000000e+00 : f32
    %21 = vector.broadcast %cst_14 : f32 to vector<256x8xf32>
    %22 = arith.maximumf %20, %21 : vector<256x8xf32>
    %c0_i32 = arith.constant 0 : i32
    %23 = arith.cmpi eq, %arg0, %c0_i32 : i32
    %24 = arith.extui %23 : i1 to i32
    %c0_i32_15 = arith.constant 0 : i32
    %25 = arith.cmpi ne, %24, %c0_i32_15 : i32
    scf.if %25 {
      %cst_60 = arith.constant 0.000000e+00 : f32
      %96 = vector.broadcast %cst_60 : f32 to vector<18x18x8xf32>
      %c0_61 = arith.constant 0 : index
      %c0_62 = arith.constant 0 : index
      %c0_63 = arith.constant 0 : index
      %97 = vector.load %arg9[%c0_61, %c0_62, %c0_63] : memref<18x18x8xf32, #tpu.memory_space<vmem>>, vector<18x18x8xf32>
      tpu.vector_store %arg9[%c0_61, %c0_62, %c0_63], %96 {strides = array<i32>} : memref<18x18x8xf32, #tpu.memory_space<vmem>>, vector<18x18x8xf32>,
    } else {
    }
    %26 = vector.shape_cast %22 : vector<256x8xf32> to vector<16x16x8xf32>
    %c1 = arith.constant 1 : index
    %c1_16 = arith.constant 1 : index
    %c0_17 = arith.constant 0 : index
    %27 = vector.load %arg9[%c1, %c1_16, %c0_17] : memref<18x18x8xf32, #tpu.memory_space<vmem>>, vector<16x16x8xf32>
    tpu.vector_store %arg9[%c1, %c1_16, %c0_17], %26 {strides = array<i32>} : memref<18x18x8xf32, #tpu.memory_space<vmem>>, vector<16x16x8xf32>,
    %c0_18 = arith.constant 0 : index
    %c0_19 = arith.constant 0 : index
    %c0_20 = arith.constant 0 : index
    %28 = vector.load %arg7[%c0_18, %c0_19, %c0_20] : memref<9x8x4xbf16, #tpu.memory_space<vmem>>, vector<9x8x4xbf16>
    %cst_21 = arith.constant 0.000000e+00 : f32
    %29 = vector.broadcast %cst_21 : f32 to vector<256x4xf32>
    %c0_22 = arith.constant 0 : index
    %c0_23 = arith.constant 0 : index
    %c0_24 = arith.constant 0 : index
    %30 = vector.load %arg9[%c0_22, %c0_23, %c0_24] : memref<18x18x8xf32, #tpu.memory_space<vmem>>, vector<16x16x8xf32>
    %31 = vector.shape_cast %30 : vector<16x16x8xf32> to vector<256x8xf32>
    %32 = arith.truncf %31 : vector<256x8xf32> to vector<256x8xbf16>
    %33 = vector.extract_strided_slice %28 {offsets = [0, 0, 0], sizes = [1, 8, 4], strides = [1, 1, 1]} : vector<9x8x4xbf16> to vector<1x8x4xbf16>
    %34 = vector.shape_cast %33 : vector<1x8x4xbf16> to vector<8x4xbf16>
    %cst_25 = arith.constant dense<0.000000e+00> : vector<256x4xf32>
    %35 = tpu.matmul %32, %34, %cst_25 {dimension_numbers = #tpu.dot_dimension_numbers<[1], [0], [0], [1], [0, 0, 1, 1], [], []>} : vector<256x8xbf16>, vector<8x4xbf16>, vector<256x4xf32> -> vector<256x4xf32>
    %36 = arith.addf %29, %35 : vector<256x4xf32>
    %c0_26 = arith.constant 0 : index
    %c1_27 = arith.constant 1 : index
    %c0_28 = arith.constant 0 : index
    %37 = vector.load %arg9[%c0_26, %c1_27, %c0_28] : memref<18x18x8xf32, #tpu.memory_space<vmem>>, vector<16x16x8xf32>
    %38 = vector.shape_cast %37 : vector<16x16x8xf32> to vector<256x8xf32>
    %39 = arith.truncf %38 : vector<256x8xf32> to vector<256x8xbf16>
    %40 = vector.extract_strided_slice %28 {offsets = [1, 0, 0], sizes = [1, 8, 4], strides = [1, 1, 1]} : vector<9x8x4xbf16> to vector<1x8x4xbf16>
    %41 = vector.shape_cast %40 : vector<1x8x4xbf16> to vector<8x4xbf16>
    %cst_29 = arith.constant dense<0.000000e+00> : vector<256x4xf32>
    %42 = tpu.matmul %39, %41, %cst_29 {dimension_numbers = #tpu.dot_dimension_numbers<[1], [0], [0], [1], [0, 0, 1, 1], [], []>} : vector<256x8xbf16>, vector<8x4xbf16>, vector<256x4xf32> -> vector<256x4xf32>
    %43 = arith.addf %36, %42 : vector<256x4xf32>
    %c0_30 = arith.constant 0 : index
    %c2 = arith.constant 2 : index
    %c0_31 = arith.constant 0 : index
    %44 = vector.load %arg9[%c0_30, %c2, %c0_31] : memref<18x18x8xf32, #tpu.memory_space<vmem>>, vector<16x16x8xf32>
    %45 = vector.shape_cast %44 : vector<16x16x8xf32> to vector<256x8xf32>
    %46 = arith.truncf %45 : vector<256x8xf32> to vector<256x8xbf16>
    %47 = vector.extract_strided_slice %28 {offsets = [2, 0, 0], sizes = [1, 8, 4], strides = [1, 1, 1]} : vector<9x8x4xbf16> to vector<1x8x4xbf16>
    %48 = vector.shape_cast %47 : vector<1x8x4xbf16> to vector<8x4xbf16>
    %cst_32 = arith.constant dense<0.000000e+00> : vector<256x4xf32>
    %49 = tpu.matmul %46, %48, %cst_32 {dimension_numbers = #tpu.dot_dimension_numbers<[1], [0], [0], [1], [0, 0, 1, 1], [], []>} : vector<256x8xbf16>, vector<8x4xbf16>, vector<256x4xf32> -> vector<256x4xf32>
    %50 = arith.addf %43, %49 : vector<256x4xf32>
    %c1_33 = arith.constant 1 : index
    %c0_34 = arith.constant 0 : index
    %c0_35 = arith.constant 0 : index
    %51 = vector.load %arg9[%c1_33, %c0_34, %c0_35] : memref<18x18x8xf32, #tpu.memory_space<vmem>>, vector<16x16x8xf32>
    %52 = vector.shape_cast %51 : vector<16x16x8xf32> to vector<256x8xf32>
    %53 = arith.truncf %52 : vector<256x8xf32> to vector<256x8xbf16>
    %54 = vector.extract_strided_slice %28 {offsets = [3, 0, 0], sizes = [1, 8, 4], strides = [1, 1, 1]} : vector<9x8x4xbf16> to vector<1x8x4xbf16>
    %55 = vector.shape_cast %54 : vector<1x8x4xbf16> to vector<8x4xbf16>
    %cst_36 = arith.constant dense<0.000000e+00> : vector<256x4xf32>
    %56 = tpu.matmul %53, %55, %cst_36 {dimension_numbers = #tpu.dot_dimension_numbers<[1], [0], [0], [1], [0, 0, 1, 1], [], []>} : vector<256x8xbf16>, vector<8x4xbf16>, vector<256x4xf32> -> vector<256x4xf32>
    %57 = arith.addf %50, %56 : vector<256x4xf32>
    %c1_37 = arith.constant 1 : index
    %c1_38 = arith.constant 1 : index
    %c0_39 = arith.constant 0 : index
    %58 = vector.load %arg9[%c1_37, %c1_38, %c0_39] : memref<18x18x8xf32, #tpu.memory_space<vmem>>, vector<16x16x8xf32>
    %59 = vector.shape_cast %58 : vector<16x16x8xf32> to vector<256x8xf32>
    %60 = arith.truncf %59 : vector<256x8xf32> to vector<256x8xbf16>
    %61 = vector.extract_strided_slice %28 {offsets = [4, 0, 0], sizes = [1, 8, 4], strides = [1, 1, 1]} : vector<9x8x4xbf16> to vector<1x8x4xbf16>
    %62 = vector.shape_cast %61 : vector<1x8x4xbf16> to vector<8x4xbf16>
    %cst_40 = arith.constant dense<0.000000e+00> : vector<256x4xf32>
    %63 = tpu.matmul %60, %62, %cst_40 {dimension_numbers = #tpu.dot_dimension_numbers<[1], [0], [0], [1], [0, 0, 1, 1], [], []>} : vector<256x8xbf16>, vector<8x4xbf16>, vector<256x4xf32> -> vector<256x4xf32>
    %64 = arith.addf %57, %63 : vector<256x4xf32>
    %c1_41 = arith.constant 1 : index
    %c2_42 = arith.constant 2 : index
    %c0_43 = arith.constant 0 : index
    %65 = vector.load %arg9[%c1_41, %c2_42, %c0_43] : memref<18x18x8xf32, #tpu.memory_space<vmem>>, vector<16x16x8xf32>
    %66 = vector.shape_cast %65 : vector<16x16x8xf32> to vector<256x8xf32>
    %67 = arith.truncf %66 : vector<256x8xf32> to vector<256x8xbf16>
    %68 = vector.extract_strided_slice %28 {offsets = [5, 0, 0], sizes = [1, 8, 4], strides = [1, 1, 1]} : vector<9x8x4xbf16> to vector<1x8x4xbf16>
    %69 = vector.shape_cast %68 : vector<1x8x4xbf16> to vector<8x4xbf16>
    %cst_44 = arith.constant dense<0.000000e+00> : vector<256x4xf32>
    %70 = tpu.matmul %67, %69, %cst_44 {dimension_numbers = #tpu.dot_dimension_numbers<[1], [0], [0], [1], [0, 0, 1, 1], [], []>} : vector<256x8xbf16>, vector<8x4xbf16>, vector<256x4xf32> -> vector<256x4xf32>
    %71 = arith.addf %64, %70 : vector<256x4xf32>
    %c2_45 = arith.constant 2 : index
    %c0_46 = arith.constant 0 : index
    %c0_47 = arith.constant 0 : index
    %72 = vector.load %arg9[%c2_45, %c0_46, %c0_47] : memref<18x18x8xf32, #tpu.memory_space<vmem>>, vector<16x16x8xf32>
    %73 = vector.shape_cast %72 : vector<16x16x8xf32> to vector<256x8xf32>
    %74 = arith.truncf %73 : vector<256x8xf32> to vector<256x8xbf16>
    %75 = vector.extract_strided_slice %28 {offsets = [6, 0, 0], sizes = [1, 8, 4], strides = [1, 1, 1]} : vector<9x8x4xbf16> to vector<1x8x4xbf16>
    %76 = vector.shape_cast %75 : vector<1x8x4xbf16> to vector<8x4xbf16>
    %cst_48 = arith.constant dense<0.000000e+00> : vector<256x4xf32>
    %77 = tpu.matmul %74, %76, %cst_48 {dimension_numbers = #tpu.dot_dimension_numbers<[1], [0], [0], [1], [0, 0, 1, 1], [], []>} : vector<256x8xbf16>, vector<8x4xbf16>, vector<256x4xf32> -> vector<256x4xf32>
    %78 = arith.addf %71, %77 : vector<256x4xf32>
    %c2_49 = arith.constant 2 : index
    %c1_50 = arith.constant 1 : index
    %c0_51 = arith.constant 0 : index
    %79 = vector.load %arg9[%c2_49, %c1_50, %c0_51] : memref<18x18x8xf32, #tpu.memory_space<vmem>>, vector<16x16x8xf32>
    %80 = vector.shape_cast %79 : vector<16x16x8xf32> to vector<256x8xf32>
    %81 = arith.truncf %80 : vector<256x8xf32> to vector<256x8xbf16>
    %82 = vector.extract_strided_slice %28 {offsets = [7, 0, 0], sizes = [1, 8, 4], strides = [1, 1, 1]} : vector<9x8x4xbf16> to vector<1x8x4xbf16>
    %83 = vector.shape_cast %82 : vector<1x8x4xbf16> to vector<8x4xbf16>
    %cst_52 = arith.constant dense<0.000000e+00> : vector<256x4xf32>
    %84 = tpu.matmul %81, %83, %cst_52 {dimension_numbers = #tpu.dot_dimension_numbers<[1], [0], [0], [1], [0, 0, 1, 1], [], []>} : vector<256x8xbf16>, vector<8x4xbf16>, vector<256x4xf32> -> vector<256x4xf32>
    %85 = arith.addf %78, %84 : vector<256x4xf32>
    %c2_53 = arith.constant 2 : index
    %c2_54 = arith.constant 2 : index
    %c0_55 = arith.constant 0 : index
    %86 = vector.load %arg9[%c2_53, %c2_54, %c0_55] : memref<18x18x8xf32, #tpu.memory_space<vmem>>, vector<16x16x8xf32>
    %87 = vector.shape_cast %86 : vector<16x16x8xf32> to vector<256x8xf32>
    %88 = arith.truncf %87 : vector<256x8xf32> to vector<256x8xbf16>
    %89 = vector.extract_strided_slice %28 {offsets = [8, 0, 0], sizes = [1, 8, 4], strides = [1, 1, 1]} : vector<9x8x4xbf16> to vector<1x8x4xbf16>
    %90 = vector.shape_cast %89 : vector<1x8x4xbf16> to vector<8x4xbf16>
    %cst_56 = arith.constant dense<0.000000e+00> : vector<256x4xf32>
    %91 = tpu.matmul %88, %90, %cst_56 {dimension_numbers = #tpu.dot_dimension_numbers<[1], [0], [0], [1], [0, 0, 1, 1], [], []>} : vector<256x8xbf16>, vector<8x4xbf16>, vector<256x4xf32> -> vector<256x4xf32>
    %92 = arith.addf %85, %91 : vector<256x4xf32>
    %c0_57 = arith.constant 0 : index
    %c0_58 = arith.constant 0 : index
    %c0_59 = arith.constant 0 : index
    %93 = vector.load %arg8[%c0_57, %c0_58, %c0_59] : memref<1x256x4xf32, #tpu.memory_space<vmem>>, vector<1x256x4xf32>
    %94 = vector.shape_cast %93 : vector<1x256x4xf32> to vector<256x4xf32>
    %95 = vector.shape_cast %92 : vector<256x4xf32> to vector<1x256x4xf32>
    tpu.vector_store %arg8[%c0_57, %c0_58, %c0_59], %95 {strides = array<i32>} : memref<1x256x4xf32, #tpu.memory_space<vmem>>, vector<1x256x4xf32>,
    return
  }
  func.func @transform_0(%arg0: i32) -> (i32, i32, i32) {
    %c0_i32 = arith.constant 0 : i32
    %c0_i32_0 = arith.constant 0 : i32
    %c0_i32_1 = arith.constant 0 : i32
    return %arg0, %c0_i32, %c0_i32_0 : i32, i32, i32
  }
  func.func @transform_1(%arg0: i32) -> (i32, i32) {
    %c0_i32 = arith.constant 0 : i32
    %c0_i32_0 = arith.constant 0 : i32
    %c0_i32_1 = arith.constant 0 : i32
    return %c0_i32, %c0_i32_0 : i32, i32
  }
  func.func @transform_2(%arg0: i32) -> (i32, i32) {
    %c0_i32 = arith.constant 0 : i32
    %c0_i32_0 = arith.constant 0 : i32
    %c0_i32_1 = arith.constant 0 : i32
    return %c0_i32, %c0_i32_0 : i32, i32
  }
  func.func @transform_3(%arg0: i32) -> (i32, i32) {
    %c0_i32 = arith.constant 0 : i32
    %c0_i32_0 = arith.constant 0 : i32
    %c0_i32_1 = arith.constant 0 : i32
    return %c0_i32, %c0_i32_0 : i32, i32
  }
  func.func @transform_4(%arg0: i32) -> (i32, i32) {
    %c0_i32 = arith.constant 0 : i32
    %c0_i32_0 = arith.constant 0 : i32
    %c0_i32_1 = arith.constant 0 : i32
    return %c0_i32, %c0_i32_0 : i32, i32
  }
  func.func @transform_5(%arg0: i32) -> (i32, i32) {
    %c0_i32 = arith.constant 0 : i32
    %c0_i32_0 = arith.constant 0 : i32
    %c0_i32_1 = arith.constant 0 : i32
    return %c0_i32, %c0_i32_0 : i32, i32
  }
  func.func @transform_6(%arg0: i32) -> (i32, i32, i32) {
    %c0_i32 = arith.constant 0 : i32
    %c0_i32_0 = arith.constant 0 : i32
    %c0_i32_1 = arith.constant 0 : i32
    %c0_i32_2 = arith.constant 0 : i32
    return %c0_i32, %c0_i32_0, %c0_i32_1 : i32, i32, i32
  }
  func.func @transform_7(%arg0: i32) -> (i32, i32, i32) {
    %c0_i32 = arith.constant 0 : i32
    %c0_i32_0 = arith.constant 0 : i32
    %c0_i32_1 = arith.constant 0 : i32
    return %arg0, %c0_i32, %c0_i32_0 : i32, i32, i32
  }
}

module attributes {stable_mosaic.version = 11 : i64} {
  func.func @kernel(%arg0: i32, %arg1: memref<1x256x4xf32, #tpu.memory_space<vmem>>, %arg2: memref<1x256x4xf32, #tpu.memory_space<vmem>>, %arg3: memref<1x4xf32, #tpu.memory_space<vmem>>, %arg4: memref<1x4xf32, #tpu.memory_space<vmem>>, %arg5: memref<1x4xf32, #tpu.memory_space<vmem>>, %arg6: memref<1x4xf32, #tpu.memory_space<vmem>>, %arg7: memref<4x8xbf16, #tpu.memory_space<vmem>>, %arg8: memref<4x8xbf16, #tpu.memory_space<vmem>>, %arg9: memref<1x8xf32, #tpu.memory_space<vmem>>, %arg10: memref<1x8xf32, #tpu.memory_space<vmem>>, %arg11: memref<9x8x4xbf16, #tpu.memory_space<vmem>>, %arg12: memref<1x256x4xf32, #tpu.memory_space<vmem>>, %arg13: memref<18x18x8xf32, #tpu.memory_space<vmem>>) attributes {dimension_semantics = [#tpu.dimension_semantics<parallel>], iteration_bounds = array<i64: 2>, scalar_prefetch = 0 : i64, scratch_operands = 1 : i64, tpu.core_type = #tpu.core_type<tc>, window_params = [{transform_indices = @transform_0, window_bounds = array<i64: 1, 256, 4>}, {transform_indices = @transform_1, window_bounds = array<i64: 1, 256, 4>}, {pipeline_mode = #tpu.pipeline_mode<synchronous>, transform_indices = @transform_2, window_bounds = array<i64: 1, 4>}, {pipeline_mode = #tpu.pipeline_mode<synchronous>, transform_indices = @transform_3, window_bounds = array<i64: 1, 4>}, {pipeline_mode = #tpu.pipeline_mode<synchronous>, transform_indices = @transform_4, window_bounds = array<i64: 1, 4>}, {pipeline_mode = #tpu.pipeline_mode<synchronous>, transform_indices = @transform_5, window_bounds = array<i64: 1, 4>}, {pipeline_mode = #tpu.pipeline_mode<synchronous>, transform_indices = @transform_6, window_bounds = array<i64: 4, 8>}, {pipeline_mode = #tpu.pipeline_mode<synchronous>, transform_indices = @transform_7, window_bounds = array<i64: 4, 8>}, {pipeline_mode = #tpu.pipeline_mode<synchronous>, transform_indices = @transform_8, window_bounds = array<i64: 1, 8>}, {pipeline_mode = #tpu.pipeline_mode<synchronous>, transform_indices = @transform_9, window_bounds = array<i64: 1, 8>}, {pipeline_mode = #tpu.pipeline_mode<synchronous>, transform_indices = @transform_10, window_bounds = array<i64: 9, 8, 4>}, {transform_indices = @transform_11, window_bounds = array<i64: 1, 256, 4>}]} {
    %cst = arith.constant 0.000000e+00 : f32
    %0 = vector.broadcast %cst : f32 to vector<256x8xf32>
    %c0 = arith.constant 0 : index
    %c0_0 = arith.constant 0 : index
    %c0_1 = arith.constant 0 : index
    %1 = vector.load %arg1[%c0, %c0_0, %c0_1] : memref<1x256x4xf32, #tpu.memory_space<vmem>>, vector<1x256x4xf32>
    %2 = vector.shape_cast %1 : vector<1x256x4xf32> to vector<256x4xf32>
    %c0_2 = arith.constant 0 : index
    %c0_3 = arith.constant 0 : index
    %3 = vector.load %arg3[%c0_2, %c0_3] : memref<1x4xf32, #tpu.memory_space<vmem>>, vector<1x4xf32>
    %4 = vector.broadcast %3 : vector<1x4xf32> to vector<256x4xf32>
    %5 = arith.mulf %2, %4 : vector<256x4xf32>
    %c0_4 = arith.constant 0 : index
    %c0_5 = arith.constant 0 : index
    %6 = vector.load %arg5[%c0_4, %c0_5] : memref<1x4xf32, #tpu.memory_space<vmem>>, vector<1x4xf32>
    %7 = vector.broadcast %6 : vector<1x4xf32> to vector<256x4xf32>
    %8 = arith.addf %5, %7 : vector<256x4xf32>
    %cst_6 = arith.constant 0.000000e+00 : f32
    %9 = vector.broadcast %cst_6 : f32 to vector<256x4xf32>
    %10 = arith.maximumf %8, %9 : vector<256x4xf32>
    %11 = arith.truncf %10 : vector<256x4xf32> to vector<256x4xbf16>
    %c0_7 = arith.constant 0 : index
    %c0_8 = arith.constant 0 : index
    %12 = vector.load %arg7[%c0_7, %c0_8] : memref<4x8xbf16, #tpu.memory_space<vmem>>, vector<4x8xbf16>
    %cst_9 = arith.constant dense<0.000000e+00> : vector<256x8xf32>
    %13 = tpu.matmul %11, %12, %cst_9 {dimension_numbers = #tpu.dot_dimension_numbers<[1], [0], [0], [1], [0, 0, 1, 1], [], []>} : vector<256x4xbf16>, vector<4x8xbf16>, vector<256x8xf32> -> vector<256x8xf32>
    %14 = arith.addf %0, %13 : vector<256x8xf32>
    %c0_10 = arith.constant 0 : index
    %c0_11 = arith.constant 0 : index
    %c0_12 = arith.constant 0 : index
    %15 = vector.load %arg2[%c0_10, %c0_11, %c0_12] : memref<1x256x4xf32, #tpu.memory_space<vmem>>, vector<1x256x4xf32>
    %16 = vector.shape_cast %15 : vector<1x256x4xf32> to vector<256x4xf32>
    %c0_13 = arith.constant 0 : index
    %c0_14 = arith.constant 0 : index
    %17 = vector.load %arg4[%c0_13, %c0_14] : memref<1x4xf32, #tpu.memory_space<vmem>>, vector<1x4xf32>
    %18 = vector.broadcast %17 : vector<1x4xf32> to vector<256x4xf32>
    %19 = arith.mulf %16, %18 : vector<256x4xf32>
    %c0_15 = arith.constant 0 : index
    %c0_16 = arith.constant 0 : index
    %20 = vector.load %arg6[%c0_15, %c0_16] : memref<1x4xf32, #tpu.memory_space<vmem>>, vector<1x4xf32>
    %21 = vector.broadcast %20 : vector<1x4xf32> to vector<256x4xf32>
    %22 = arith.addf %19, %21 : vector<256x4xf32>
    %cst_17 = arith.constant 0.000000e+00 : f32
    %23 = vector.broadcast %cst_17 : f32 to vector<256x4xf32>
    %24 = arith.maximumf %22, %23 : vector<256x4xf32>
    %25 = arith.truncf %24 : vector<256x4xf32> to vector<256x4xbf16>
    %c0_18 = arith.constant 0 : index
    %c0_19 = arith.constant 0 : index
    %26 = vector.load %arg8[%c0_18, %c0_19] : memref<4x8xbf16, #tpu.memory_space<vmem>>, vector<4x8xbf16>
    %cst_20 = arith.constant dense<0.000000e+00> : vector<256x8xf32>
    %27 = tpu.matmul %25, %26, %cst_20 {dimension_numbers = #tpu.dot_dimension_numbers<[1], [0], [0], [1], [0, 0, 1, 1], [], []>} : vector<256x4xbf16>, vector<4x8xbf16>, vector<256x8xf32> -> vector<256x8xf32>
    %28 = arith.addf %14, %27 : vector<256x8xf32>
    %c0_21 = arith.constant 0 : index
    %c0_22 = arith.constant 0 : index
    %29 = vector.load %arg9[%c0_21, %c0_22] : memref<1x8xf32, #tpu.memory_space<vmem>>, vector<1x8xf32>
    %30 = vector.broadcast %29 : vector<1x8xf32> to vector<256x8xf32>
    %31 = arith.mulf %28, %30 : vector<256x8xf32>
    %c0_23 = arith.constant 0 : index
    %c0_24 = arith.constant 0 : index
    %32 = vector.load %arg10[%c0_23, %c0_24] : memref<1x8xf32, #tpu.memory_space<vmem>>, vector<1x8xf32>
    %33 = vector.broadcast %32 : vector<1x8xf32> to vector<256x8xf32>
    %34 = arith.addf %31, %33 : vector<256x8xf32>
    %cst_25 = arith.constant 0.000000e+00 : f32
    %35 = vector.broadcast %cst_25 : f32 to vector<256x8xf32>
    %36 = arith.maximumf %34, %35 : vector<256x8xf32>
    %c0_i32 = arith.constant 0 : i32
    %37 = arith.cmpi eq, %arg0, %c0_i32 : i32
    %38 = arith.extui %37 : i1 to i32
    %c0_i32_26 = arith.constant 0 : i32
    %39 = arith.cmpi ne, %38, %c0_i32_26 : i32
    scf.if %39 {
      %cst_71 = arith.constant 0.000000e+00 : f32
      %110 = vector.broadcast %cst_71 : f32 to vector<18x18x8xf32>
      %c0_72 = arith.constant 0 : index
      %c0_73 = arith.constant 0 : index
      %c0_74 = arith.constant 0 : index
      %111 = vector.load %arg13[%c0_72, %c0_73, %c0_74] : memref<18x18x8xf32, #tpu.memory_space<vmem>>, vector<18x18x8xf32>
      tpu.vector_store %arg13[%c0_72, %c0_73, %c0_74], %110 {strides = array<i32>} : memref<18x18x8xf32, #tpu.memory_space<vmem>>, vector<18x18x8xf32>,
    } else {
    }
    %40 = vector.shape_cast %36 : vector<256x8xf32> to vector<16x16x8xf32>
    %c1 = arith.constant 1 : index
    %c1_27 = arith.constant 1 : index
    %c0_28 = arith.constant 0 : index
    %41 = vector.load %arg13[%c1, %c1_27, %c0_28] : memref<18x18x8xf32, #tpu.memory_space<vmem>>, vector<16x16x8xf32>
    tpu.vector_store %arg13[%c1, %c1_27, %c0_28], %40 {strides = array<i32>} : memref<18x18x8xf32, #tpu.memory_space<vmem>>, vector<16x16x8xf32>,
    %c0_29 = arith.constant 0 : index
    %c0_30 = arith.constant 0 : index
    %c0_31 = arith.constant 0 : index
    %42 = vector.load %arg11[%c0_29, %c0_30, %c0_31] : memref<9x8x4xbf16, #tpu.memory_space<vmem>>, vector<9x8x4xbf16>
    %cst_32 = arith.constant 0.000000e+00 : f32
    %43 = vector.broadcast %cst_32 : f32 to vector<256x4xf32>
    %c0_33 = arith.constant 0 : index
    %c0_34 = arith.constant 0 : index
    %c0_35 = arith.constant 0 : index
    %44 = vector.load %arg13[%c0_33, %c0_34, %c0_35] : memref<18x18x8xf32, #tpu.memory_space<vmem>>, vector<16x16x8xf32>
    %45 = vector.shape_cast %44 : vector<16x16x8xf32> to vector<256x8xf32>
    %46 = arith.truncf %45 : vector<256x8xf32> to vector<256x8xbf16>
    %47 = vector.extract_strided_slice %42 {offsets = [0, 0, 0], sizes = [1, 8, 4], strides = [1, 1, 1]} : vector<9x8x4xbf16> to vector<1x8x4xbf16>
    %48 = vector.shape_cast %47 : vector<1x8x4xbf16> to vector<8x4xbf16>
    %cst_36 = arith.constant dense<0.000000e+00> : vector<256x4xf32>
    %49 = tpu.matmul %46, %48, %cst_36 {dimension_numbers = #tpu.dot_dimension_numbers<[1], [0], [0], [1], [0, 0, 1, 1], [], []>} : vector<256x8xbf16>, vector<8x4xbf16>, vector<256x4xf32> -> vector<256x4xf32>
    %50 = arith.addf %43, %49 : vector<256x4xf32>
    %c0_37 = arith.constant 0 : index
    %c1_38 = arith.constant 1 : index
    %c0_39 = arith.constant 0 : index
    %51 = vector.load %arg13[%c0_37, %c1_38, %c0_39] : memref<18x18x8xf32, #tpu.memory_space<vmem>>, vector<16x16x8xf32>
    %52 = vector.shape_cast %51 : vector<16x16x8xf32> to vector<256x8xf32>
    %53 = arith.truncf %52 : vector<256x8xf32> to vector<256x8xbf16>
    %54 = vector.extract_strided_slice %42 {offsets = [1, 0, 0], sizes = [1, 8, 4], strides = [1, 1, 1]} : vector<9x8x4xbf16> to vector<1x8x4xbf16>
    %55 = vector.shape_cast %54 : vector<1x8x4xbf16> to vector<8x4xbf16>
    %cst_40 = arith.constant dense<0.000000e+00> : vector<256x4xf32>
    %56 = tpu.matmul %53, %55, %cst_40 {dimension_numbers = #tpu.dot_dimension_numbers<[1], [0], [0], [1], [0, 0, 1, 1], [], []>} : vector<256x8xbf16>, vector<8x4xbf16>, vector<256x4xf32> -> vector<256x4xf32>
    %57 = arith.addf %50, %56 : vector<256x4xf32>
    %c0_41 = arith.constant 0 : index
    %c2 = arith.constant 2 : index
    %c0_42 = arith.constant 0 : index
    %58 = vector.load %arg13[%c0_41, %c2, %c0_42] : memref<18x18x8xf32, #tpu.memory_space<vmem>>, vector<16x16x8xf32>
    %59 = vector.shape_cast %58 : vector<16x16x8xf32> to vector<256x8xf32>
    %60 = arith.truncf %59 : vector<256x8xf32> to vector<256x8xbf16>
    %61 = vector.extract_strided_slice %42 {offsets = [2, 0, 0], sizes = [1, 8, 4], strides = [1, 1, 1]} : vector<9x8x4xbf16> to vector<1x8x4xbf16>
    %62 = vector.shape_cast %61 : vector<1x8x4xbf16> to vector<8x4xbf16>
    %cst_43 = arith.constant dense<0.000000e+00> : vector<256x4xf32>
    %63 = tpu.matmul %60, %62, %cst_43 {dimension_numbers = #tpu.dot_dimension_numbers<[1], [0], [0], [1], [0, 0, 1, 1], [], []>} : vector<256x8xbf16>, vector<8x4xbf16>, vector<256x4xf32> -> vector<256x4xf32>
    %64 = arith.addf %57, %63 : vector<256x4xf32>
    %c1_44 = arith.constant 1 : index
    %c0_45 = arith.constant 0 : index
    %c0_46 = arith.constant 0 : index
    %65 = vector.load %arg13[%c1_44, %c0_45, %c0_46] : memref<18x18x8xf32, #tpu.memory_space<vmem>>, vector<16x16x8xf32>
    %66 = vector.shape_cast %65 : vector<16x16x8xf32> to vector<256x8xf32>
    %67 = arith.truncf %66 : vector<256x8xf32> to vector<256x8xbf16>
    %68 = vector.extract_strided_slice %42 {offsets = [3, 0, 0], sizes = [1, 8, 4], strides = [1, 1, 1]} : vector<9x8x4xbf16> to vector<1x8x4xbf16>
    %69 = vector.shape_cast %68 : vector<1x8x4xbf16> to vector<8x4xbf16>
    %cst_47 = arith.constant dense<0.000000e+00> : vector<256x4xf32>
    %70 = tpu.matmul %67, %69, %cst_47 {dimension_numbers = #tpu.dot_dimension_numbers<[1], [0], [0], [1], [0, 0, 1, 1], [], []>} : vector<256x8xbf16>, vector<8x4xbf16>, vector<256x4xf32> -> vector<256x4xf32>
    %71 = arith.addf %64, %70 : vector<256x4xf32>
    %c1_48 = arith.constant 1 : index
    %c1_49 = arith.constant 1 : index
    %c0_50 = arith.constant 0 : index
    %72 = vector.load %arg13[%c1_48, %c1_49, %c0_50] : memref<18x18x8xf32, #tpu.memory_space<vmem>>, vector<16x16x8xf32>
    %73 = vector.shape_cast %72 : vector<16x16x8xf32> to vector<256x8xf32>
    %74 = arith.truncf %73 : vector<256x8xf32> to vector<256x8xbf16>
    %75 = vector.extract_strided_slice %42 {offsets = [4, 0, 0], sizes = [1, 8, 4], strides = [1, 1, 1]} : vector<9x8x4xbf16> to vector<1x8x4xbf16>
    %76 = vector.shape_cast %75 : vector<1x8x4xbf16> to vector<8x4xbf16>
    %cst_51 = arith.constant dense<0.000000e+00> : vector<256x4xf32>
    %77 = tpu.matmul %74, %76, %cst_51 {dimension_numbers = #tpu.dot_dimension_numbers<[1], [0], [0], [1], [0, 0, 1, 1], [], []>} : vector<256x8xbf16>, vector<8x4xbf16>, vector<256x4xf32> -> vector<256x4xf32>
    %78 = arith.addf %71, %77 : vector<256x4xf32>
    %c1_52 = arith.constant 1 : index
    %c2_53 = arith.constant 2 : index
    %c0_54 = arith.constant 0 : index
    %79 = vector.load %arg13[%c1_52, %c2_53, %c0_54] : memref<18x18x8xf32, #tpu.memory_space<vmem>>, vector<16x16x8xf32>
    %80 = vector.shape_cast %79 : vector<16x16x8xf32> to vector<256x8xf32>
    %81 = arith.truncf %80 : vector<256x8xf32> to vector<256x8xbf16>
    %82 = vector.extract_strided_slice %42 {offsets = [5, 0, 0], sizes = [1, 8, 4], strides = [1, 1, 1]} : vector<9x8x4xbf16> to vector<1x8x4xbf16>
    %83 = vector.shape_cast %82 : vector<1x8x4xbf16> to vector<8x4xbf16>
    %cst_55 = arith.constant dense<0.000000e+00> : vector<256x4xf32>
    %84 = tpu.matmul %81, %83, %cst_55 {dimension_numbers = #tpu.dot_dimension_numbers<[1], [0], [0], [1], [0, 0, 1, 1], [], []>} : vector<256x8xbf16>, vector<8x4xbf16>, vector<256x4xf32> -> vector<256x4xf32>
    %85 = arith.addf %78, %84 : vector<256x4xf32>
    %c2_56 = arith.constant 2 : index
    %c0_57 = arith.constant 0 : index
    %c0_58 = arith.constant 0 : index
    %86 = vector.load %arg13[%c2_56, %c0_57, %c0_58] : memref<18x18x8xf32, #tpu.memory_space<vmem>>, vector<16x16x8xf32>
    %87 = vector.shape_cast %86 : vector<16x16x8xf32> to vector<256x8xf32>
    %88 = arith.truncf %87 : vector<256x8xf32> to vector<256x8xbf16>
    %89 = vector.extract_strided_slice %42 {offsets = [6, 0, 0], sizes = [1, 8, 4], strides = [1, 1, 1]} : vector<9x8x4xbf16> to vector<1x8x4xbf16>
    %90 = vector.shape_cast %89 : vector<1x8x4xbf16> to vector<8x4xbf16>
    %cst_59 = arith.constant dense<0.000000e+00> : vector<256x4xf32>
    %91 = tpu.matmul %88, %90, %cst_59 {dimension_numbers = #tpu.dot_dimension_numbers<[1], [0], [0], [1], [0, 0, 1, 1], [], []>} : vector<256x8xbf16>, vector<8x4xbf16>, vector<256x4xf32> -> vector<256x4xf32>
    %92 = arith.addf %85, %91 : vector<256x4xf32>
    %c2_60 = arith.constant 2 : index
    %c1_61 = arith.constant 1 : index
    %c0_62 = arith.constant 0 : index
    %93 = vector.load %arg13[%c2_60, %c1_61, %c0_62] : memref<18x18x8xf32, #tpu.memory_space<vmem>>, vector<16x16x8xf32>
    %94 = vector.shape_cast %93 : vector<16x16x8xf32> to vector<256x8xf32>
    %95 = arith.truncf %94 : vector<256x8xf32> to vector<256x8xbf16>
    %96 = vector.extract_strided_slice %42 {offsets = [7, 0, 0], sizes = [1, 8, 4], strides = [1, 1, 1]} : vector<9x8x4xbf16> to vector<1x8x4xbf16>
    %97 = vector.shape_cast %96 : vector<1x8x4xbf16> to vector<8x4xbf16>
    %cst_63 = arith.constant dense<0.000000e+00> : vector<256x4xf32>
    %98 = tpu.matmul %95, %97, %cst_63 {dimension_numbers = #tpu.dot_dimension_numbers<[1], [0], [0], [1], [0, 0, 1, 1], [], []>} : vector<256x8xbf16>, vector<8x4xbf16>, vector<256x4xf32> -> vector<256x4xf32>
    %99 = arith.addf %92, %98 : vector<256x4xf32>
    %c2_64 = arith.constant 2 : index
    %c2_65 = arith.constant 2 : index
    %c0_66 = arith.constant 0 : index
    %100 = vector.load %arg13[%c2_64, %c2_65, %c0_66] : memref<18x18x8xf32, #tpu.memory_space<vmem>>, vector<16x16x8xf32>
    %101 = vector.shape_cast %100 : vector<16x16x8xf32> to vector<256x8xf32>
    %102 = arith.truncf %101 : vector<256x8xf32> to vector<256x8xbf16>
    %103 = vector.extract_strided_slice %42 {offsets = [8, 0, 0], sizes = [1, 8, 4], strides = [1, 1, 1]} : vector<9x8x4xbf16> to vector<1x8x4xbf16>
    %104 = vector.shape_cast %103 : vector<1x8x4xbf16> to vector<8x4xbf16>
    %cst_67 = arith.constant dense<0.000000e+00> : vector<256x4xf32>
    %105 = tpu.matmul %102, %104, %cst_67 {dimension_numbers = #tpu.dot_dimension_numbers<[1], [0], [0], [1], [0, 0, 1, 1], [], []>} : vector<256x8xbf16>, vector<8x4xbf16>, vector<256x4xf32> -> vector<256x4xf32>
    %106 = arith.addf %99, %105 : vector<256x4xf32>
    %c0_68 = arith.constant 0 : index
    %c0_69 = arith.constant 0 : index
    %c0_70 = arith.constant 0 : index
    %107 = vector.load %arg12[%c0_68, %c0_69, %c0_70] : memref<1x256x4xf32, #tpu.memory_space<vmem>>, vector<1x256x4xf32>
    %108 = vector.shape_cast %107 : vector<1x256x4xf32> to vector<256x4xf32>
    %109 = vector.shape_cast %106 : vector<256x4xf32> to vector<1x256x4xf32>
    tpu.vector_store %arg12[%c0_68, %c0_69, %c0_70], %109 {strides = array<i32>} : memref<1x256x4xf32, #tpu.memory_space<vmem>>, vector<1x256x4xf32>,
    return
  }
  func.func @transform_0(%arg0: i32) -> (i32, i32, i32) {
    %c0_i32 = arith.constant 0 : i32
    %c0_i32_0 = arith.constant 0 : i32
    %c0_i32_1 = arith.constant 0 : i32
    return %arg0, %c0_i32, %c0_i32_0 : i32, i32, i32
  }
  func.func @transform_1(%arg0: i32) -> (i32, i32, i32) {
    %c0_i32 = arith.constant 0 : i32
    %c0_i32_0 = arith.constant 0 : i32
    %c0_i32_1 = arith.constant 0 : i32
    return %arg0, %c0_i32, %c0_i32_0 : i32, i32, i32
  }
  func.func @transform_2(%arg0: i32) -> (i32, i32) {
    %c0_i32 = arith.constant 0 : i32
    %c0_i32_0 = arith.constant 0 : i32
    %c0_i32_1 = arith.constant 0 : i32
    return %c0_i32, %c0_i32_0 : i32, i32
  }
  func.func @transform_3(%arg0: i32) -> (i32, i32) {
    %c0_i32 = arith.constant 0 : i32
    %c0_i32_0 = arith.constant 0 : i32
    %c0_i32_1 = arith.constant 0 : i32
    return %c0_i32, %c0_i32_0 : i32, i32
  }
  func.func @transform_4(%arg0: i32) -> (i32, i32) {
    %c0_i32 = arith.constant 0 : i32
    %c0_i32_0 = arith.constant 0 : i32
    %c0_i32_1 = arith.constant 0 : i32
    return %c0_i32, %c0_i32_0 : i32, i32
  }
  func.func @transform_5(%arg0: i32) -> (i32, i32) {
    %c0_i32 = arith.constant 0 : i32
    %c0_i32_0 = arith.constant 0 : i32
    %c0_i32_1 = arith.constant 0 : i32
    return %c0_i32, %c0_i32_0 : i32, i32
  }
  func.func @transform_6(%arg0: i32) -> (i32, i32) {
    %c0_i32 = arith.constant 0 : i32
    %c0_i32_0 = arith.constant 0 : i32
    %c0_i32_1 = arith.constant 0 : i32
    return %c0_i32, %c0_i32_0 : i32, i32
  }
  func.func @transform_7(%arg0: i32) -> (i32, i32) {
    %c0_i32 = arith.constant 0 : i32
    %c0_i32_0 = arith.constant 0 : i32
    %c0_i32_1 = arith.constant 0 : i32
    return %c0_i32, %c0_i32_0 : i32, i32
  }
  func.func @transform_8(%arg0: i32) -> (i32, i32) {
    %c0_i32 = arith.constant 0 : i32
    %c0_i32_0 = arith.constant 0 : i32
    %c0_i32_1 = arith.constant 0 : i32
    return %c0_i32, %c0_i32_0 : i32, i32
  }
  func.func @transform_9(%arg0: i32) -> (i32, i32) {
    %c0_i32 = arith.constant 0 : i32
    %c0_i32_0 = arith.constant 0 : i32
    %c0_i32_1 = arith.constant 0 : i32
    return %c0_i32, %c0_i32_0 : i32, i32
  }
  func.func @transform_10(%arg0: i32) -> (i32, i32, i32) {
    %c0_i32 = arith.constant 0 : i32
    %c0_i32_0 = arith.constant 0 : i32
    %c0_i32_1 = arith.constant 0 : i32
    %c0_i32_2 = arith.constant 0 : i32
    return %c0_i32, %c0_i32_0, %c0_i32_1 : i32, i32, i32
  }
  func.func @transform_11(%arg0: i32) -> (i32, i32, i32) {
    %c0_i32 = arith.constant 0 : i32
    %c0_i32_0 = arith.constant 0 : i32
    %c0_i32_1 = arith.constant 0 : i32
    return %arg0, %c0_i32, %c0_i32_0 : i32, i32, i32
  }
}

module attributes {stable_mosaic.version = 11 : i64} {
  func.func @_bnrelu_kernel(%arg0: i32, %arg1: memref<16x192xf32, #tpu.memory_space<vmem>>, %arg2: memref<1x192xf32, #tpu.memory_space<vmem>>, %arg3: memref<1x192xf32, #tpu.memory_space<vmem>>, %arg4: memref<16x192xf32, #tpu.memory_space<vmem>>) attributes {dimension_semantics = [#tpu.dimension_semantics<parallel>], iteration_bounds = array<i64: 2>, scalar_prefetch = 0 : i64, scratch_operands = 0 : i64, tpu.core_type = #tpu.core_type<tc>, window_params = [{transform_indices = @transform_0, window_bounds = array<i64: 16, 192>}, {pipeline_mode = #tpu.pipeline_mode<synchronous>, transform_indices = @transform_1, window_bounds = array<i64: 1, 192>}, {pipeline_mode = #tpu.pipeline_mode<synchronous>, transform_indices = @transform_2, window_bounds = array<i64: 1, 192>}, {transform_indices = @transform_3, window_bounds = array<i64: 16, 192>}]} {
    %c0 = arith.constant 0 : index
    %c0_0 = arith.constant 0 : index
    %0 = vector.load %arg1[%c0, %c0_0] : memref<16x192xf32, #tpu.memory_space<vmem>>, vector<16x192xf32>
    %c0_1 = arith.constant 0 : index
    %c0_2 = arith.constant 0 : index
    %1 = vector.load %arg2[%c0_1, %c0_2] : memref<1x192xf32, #tpu.memory_space<vmem>>, vector<1x192xf32>
    %2 = vector.broadcast %1 : vector<1x192xf32> to vector<16x192xf32>
    %3 = arith.mulf %0, %2 : vector<16x192xf32>
    %c0_3 = arith.constant 0 : index
    %c0_4 = arith.constant 0 : index
    %4 = vector.load %arg3[%c0_3, %c0_4] : memref<1x192xf32, #tpu.memory_space<vmem>>, vector<1x192xf32>
    %5 = vector.broadcast %4 : vector<1x192xf32> to vector<16x192xf32>
    %6 = arith.addf %3, %5 : vector<16x192xf32>
    %cst = arith.constant 0.000000e+00 : f32
    %7 = vector.broadcast %cst : f32 to vector<16x192xf32>
    %8 = arith.maximumf %6, %7 : vector<16x192xf32>
    %c0_5 = arith.constant 0 : index
    %c0_6 = arith.constant 0 : index
    %9 = vector.load %arg4[%c0_5, %c0_6] : memref<16x192xf32, #tpu.memory_space<vmem>>, vector<16x192xf32>
    tpu.vector_store %arg4[%c0_5, %c0_6], %8 {strides = array<i32>} : memref<16x192xf32, #tpu.memory_space<vmem>>, vector<16x192xf32>,
    return
  }
  func.func @transform_0(%arg0: i32) -> (i32, i32) {
    %c0_i32 = arith.constant 0 : i32
    %c0_i32_0 = arith.constant 0 : i32
    return %arg0, %c0_i32 : i32, i32
  }
  func.func @transform_1(%arg0: i32) -> (i32, i32) {
    %c0_i32 = arith.constant 0 : i32
    %c0_i32_0 = arith.constant 0 : i32
    %c0_i32_1 = arith.constant 0 : i32
    return %c0_i32, %c0_i32_0 : i32, i32
  }
  func.func @transform_2(%arg0: i32) -> (i32, i32) {
    %c0_i32 = arith.constant 0 : i32
    %c0_i32_0 = arith.constant 0 : i32
    %c0_i32_1 = arith.constant 0 : i32
    return %c0_i32, %c0_i32_0 : i32, i32
  }
  func.func @transform_3(%arg0: i32) -> (i32, i32) {
    %c0_i32 = arith.constant 0 : i32
    %c0_i32_0 = arith.constant 0 : i32
    return %arg0, %c0_i32 : i32, i32
  }
}

</mosaic_0001>

<llo_original>
// kernel: tile.13
$region0: #{tile.13}
  #allocation0 [shape = 's32[1]{0}', space=sflag, size = 0x4, scoped, tag = 'scoped memory for tile.13']
  %s0 = inlined_call_operand.vmem [shape: f32[12], index: 0, kind: input, shape index: {}]
  %s1 = inlined_call_operand.vmem [shape: f32[16,12], index: 1, kind: output, shape index: {}]
  // Predicated region
  $region2: #{tile.13} parent=0 // pred_check
    _
  $region3: #{tile.13} parent=0 // pred_check_branch
    %3 = sbr.rel (0) target = $region5
  $region4: #{tile.13} parent=0 // pred_region
    _
  $region5: #{tile.13} parent=0 // pred_fallthru
    _
  %v4 = vld [vmem:[%s0] ss:$0 sm:$0xff]
  %5 = vst [vmem:[%s1] sm:$0xff] %v4
  %s6 = scalar_lea.vmem %s1, 8
  %7 = vst [vmem:[%s6] sm:$0xff] %v4

// kernel: tile.14
$region0: #{tile.14}
  %s0 = inlined_call_operand.vmem [shape: f32[16,12], index: 0, kind: input, shape index: {}]
  %s1 = inlined_call_operand.vmem [shape: f32[1,192], index: 1, kind: output, shape index: {}]
  $region1: #{tile.14} parent=0
    #allocation0 [shape = 'u8[8192]{0}', space=vmem, size = 0x2000, scoped, tag = 'scoped mem for output reshape']
    %v2 = vld [vmem:[%s0] sm:$0x1]
    %vm3 = vcmask 97280
    %4 = vst.msk [vmem:[#allocation0] sm:$0x1] %vm3, %v2
    %s5 = scalar_lea.vmem %s0, 10
    %v6 = vld [vmem:[%s5] sm:$0x1]
    %s7 = scalar_lea.vmem %s0, 10
    %v8 = vld [vmem:[%s7] sm:$0x1]
    %vm9 = vcmask 64512
    %v10 = vsel %vm9, %v8, %v6
    %11 = vrot.lane.b32.xlu0 %v10, 120
    %v12 = vpop.permute.xlu0 %11
    %vm13 = vcmask 31744
    %s14 = scalar_lea.vmem [#allocation0], 8
    %15 = vst.msk [vmem:[%s14] sm:$0x1] %vm13, %v12
    %vm16 = vcmask 1048512
    %17 = vst.msk [vmem:[#allocation0] sm:$0x1] %vm16, %v12
    %s18 = scalar_lea.vmem %s0, 9
    %v19 = vld [vmem:[%s18] sm:$0x1]
    %20 = vrot.lane.b32.xlu0 %v19, 108
    %v21 = vpop.permute.xlu0 %20
    %vm22 = vcmask 982880
    %23 = vst.msk [vmem:[#allocation0] sm:$0x1] %vm22, %v21
    %s24 = scalar_lea.vmem %s0, 8
    %v25 = vld [vmem:[%s24] sm:$0x1]
    %26 = vrot.lane.b32.xlu0 %v25, 96
    %v27 = vpop.permute.xlu0 %26
    %vm28 = vcmask 884480
    %29 = vst.msk [vmem:[#allocation0] sm:$0x1] %vm28, %v27
    %s30 = scalar_lea.vmem %s0, 7
    %v31 = vld [vmem:[%s30] sm:$0x1]
    %32 = vrot.lane.b32.xlu0 %v31, 84
    %v33 = vpop.permute.xlu0 %32
    %vm34 = vcmask 786080
    %35 = vst.msk [vmem:[#allocation0] sm:$0x1] %vm34, %v33
    %s36 = scalar_lea.vmem %s0, 6
    %v37 = vld [vmem:[%s36] sm:$0x1]
    %38 = vrot.lane.b32.xlu0 %v37, 72
    %v39 = vpop.permute.xlu0 %38
    %vm40 = vcmask 687680
    %41 = vst.msk [vmem:[#allocation0] sm:$0x1] %vm40, %v39
    %s42 = scalar_lea.vmem %s0, 5
    %v43 = vld [vmem:[%s42] sm:$0x1]
    %44 = vrot.lane.b32.xlu0 %v43, 60
    %v45 = vpop.permute.xlu0 %44
    %vm46 = vcmask 589280
    %47 = vst.msk [vmem:[#allocation0] sm:$0x1] %vm46, %v45
    %s48 = scalar_lea.vmem %s0, 15
    %v49 = vld [vmem:[%s48] sm:$0x1]
    %50 = vrot.lane.b32.xlu0 %v49, 52
    %v51 = vpop.permute.xlu0 %50
    %vm52 = vcmask 523680
    %s53 = scalar_lea.vmem [#allocation0], 8
    %54 = vst.msk [vmem:[%s53] sm:$0x1] %vm52, %v51
    %s55 = scalar_lea.vmem %s0, 4
    %v56 = vld [vmem:[%s55] sm:$0x1]
    %57 = vrot.lane.b32.xlu0 %v56, 48
    %v58 = vpop.permute.xlu0 %57
    %vm59 = vcmask 490880
    %60 = vst.msk [vmem:[#allocation0] sm:$0x1] %vm59, %v58
    %s61 = scalar_lea.vmem %s0, 14
    %v62 = vld [vmem:[%s61] sm:$0x1]
    %63 = vrot.lane.b32.xlu0 %v62, 40
    %v64 = vpop.permute.xlu0 %63
    %vm65 = vcmask 425280
    %s66 = scalar_lea.vmem [#allocation0], 8
    %67 = vst.msk [vmem:[%s66] sm:$0x1] %vm65, %v64
    %s68 = scalar_lea.vmem %s0, 3
    %v69 = vld [vmem:[%s68] sm:$0x1]
    %70 = vrot.lane.b32.xlu0 %v69, 36
    %v71 = vpop.permute.xlu0 %70
    %vm72 = vcmask 392480
    %73 = vst.msk [vmem:[#allocation0] sm:$0x1] %vm72, %v71
    %s74 = scalar_lea.vmem %s0, 13
    %v75 = vld [vmem:[%s74] sm:$0x1]
    %76 = vrot.lane.b32.xlu0 %v75, 28
    %v77 = vpop.permute.xlu0 %76
    %vm78 = vcmask 326880
    %s79 = scalar_lea.vmem [#allocation0], 8
    %80 = vst.msk [vmem:[%s79] sm:$0x1] %vm78, %v77
    %s81 = scalar_lea.vmem %s0, 2
    %v82 = vld [vmem:[%s81] sm:$0x1]
    %83 = vrot.lane.b32.xlu0 %v82, 24
    %v84 = vpop.permute.xlu0 %83
    %vm85 = vcmask 294080
    %86 = vst.msk [vmem:[#allocation0] sm:$0x1] %vm85, %v84
    %s87 = scalar_lea.vmem %s0, 12
    %v88 = vld [vmem:[%s87] sm:$0x1]
    %89 = vrot.lane.b32.xlu0 %v88, 16
    %v90 = vpop.permute.xlu0 %89
    %vm91 = vcmask 228480
    %s92 = scalar_lea.vmem [#allocation0], 8
    %93 = vst.msk [vmem:[%s92] sm:$0x1] %vm91, %v90
    %s94 = scalar_lea.vmem %s0, 1
    %v95 = vld [vmem:[%s94] sm:$0x1]
    %96 = vrot.lane.b32.xlu0 %v95, 12
    %v97 = vpop.permute.xlu0 %96
    %vm98 = vcmask 195680
    %99 = vst.msk [vmem:[#allocation0] sm:$0x1] %vm98, %v97
    %s100 = scalar_lea.vmem %s0, 11
    %v101 = vld [vmem:[%s100] sm:$0x1]
    %102 = vrot.lane.b32.xlu0 %v101, 4
    %v103 = vpop.permute.xlu0 %102
    %vm104 = vcmask 130080
    %s105 = scalar_lea.vmem [#allocation0], 8
    %106 = vst.msk [vmem:[%s105] sm:$0x1] %vm104, %v103
    %s108 = sshllo.u32 0, 1
    %v110 = vld [vmem:[#allocation0] sm:%s108]
    %s111 = sshllo.u32 0, 1
    %112 = vst [vmem:[%s1] sm:%s111] %v110
    %s113 = scalar_lea.vmem [#allocation0], 8
    %v114 = vld [vmem:[%s113] sm:%s108]
    %s115 = sshllo.u32 0, 1
    %s116 = scalar_lea.vmem %s1, 1
    %117 = vst [vmem:[%s116] sm:%s115] %v114

// kernel: dense_block_forward.5
$region0: #{dense_block_forward.5}
  #allocation0 [shape = 'u32[]', space=smem, size = 0x4, offset = 0x4, fixed_abs, tag = 'smem constant byte address 0x4 - core index']
  #allocation1 [shape = 'u32[144,128]{1,0:T(1,128)}', space=vmem, size = 0x12000, scoped, tag = 'internal scratch']
  %s0 = inlined_call_operand.vmem [shape: f32[32,192], index: 0, kind: input, shape index: {}]
  %s1 = inlined_call_operand.vmem [shape: f32[1,192], index: 1, kind: input, shape index: {}]
  %s2 = inlined_call_operand.vmem [shape: f32[1,192], index: 2, kind: input, shape index: {}]
  %s3 = inlined_call_operand.vmem [shape: f32[32,192], index: 3, kind: output, shape index: {}]
  %s4 = sld [smem:[#allocation0]]
  $region45: #{dense_block_forward.5} parent=0
    _
  %s6 = ssub.s32 1, %s4
  %s7 = scalar_select 0, %s6, %s4
  loop: start=0, step=1, limit=4
  $region2: #{dense_block_forward.5} parent=0 // loop_pre_header
    _
  $region3: #{dense_block_forward.5} parent=0 // loop_header
    %s9 = sphi 0, %s13
    %p10 = scmp.ge.s32.totalorder %s9, 4
    %s19 = sphi 0, %s21
    %s22 = sphi 0, %s19
    %s23 = sphi 0, %s22
    %s39 = sphi 0, %s23
    %s43 = sphi 0, %s43
    %s45 = sphi 0, %s43
    %s46 = sphi 0, %s45
    %s60 = sphi 0, %s46
    %s64 = sphi 0, %s64
    %s66 = sphi 0, %s64
    %s67 = sphi 0, %s66
    %s81 = sphi 0, %s67
    %s87 = sphi 0, %s89
    %s90 = sphi 0, %s87
    %s91 = sphi 0, %s90
    %s107 = sphi 0, %s91
  $region4: #{dense_block_forward.5} parent=0 // loop_header_branch
    %12 = sbr.rel (%p10) target = $region8
  $region5: #{dense_block_forward.5} parent=0 // loop_body
    %s14 = ssub.s32 %s9, 1
    %s15 = ssub.s32 %s9, 2
    %s16 = sadd.s32 %s9, 1
    %s17 = ssub.s32 %s9, %s16
    %p18 = scmp.eq.s32.totalorder %s17, 0
    %s20 = sadd.s32 %s19, 1
    %s21 = scalar_select %p18, %s19, %s20
    %p24 = pneg %p18
    %p25 = scmp.eq.s32.totalorder %s9, 1
    %p26 = por %p24, %p25
    %p27 = scmp.ne.s32.totalorder %s19, %s22
    %p28 = scmp.eq.s32.totalorder %s9, 0
    %p29 = por %p27, %p28
    %p30 = scmp.ne.s32.totalorder %s19, %s22
    %p31 = scmp.eq.s32.totalorder %s14, 1
    %p32 = por %p30, %p31
    %p33 = scmp.ne.s32.totalorder %s22, %s23
    %p34 = scmp.eq.s32.totalorder %s14, 0
    %p35 = por %p33, %p34
    %p36 = scmp.ne.s32.totalorder %s22, %s23
    %p37 = scmp.eq.s32.totalorder %s15, 1
    %p38 = por %p36, %p37
    %p40 = scmp.ne.s32.totalorder %s23, %s39
    %p41 = scmp.eq.s32.totalorder %s15, 0
    %p42 = por %p40, %p41
    %s44 = sadd.s32 %s43, 1
    %p47 = scmp.eq.s32.totalorder %s9, 1
    %p48 = scmp.ne.s32.totalorder %s43, %s45
    %p49 = scmp.eq.s32.totalorder %s9, 0
    %p50 = por %p48, %p49
    %p51 = scmp.ne.s32.totalorder %s43, %s45
    %p52 = scmp.eq.s32.totalorder %s14, 1
    %p53 = por %p51, %p52
    %p54 = scmp.ne.s32.totalorder %s45, %s46
    %p55 = scmp.eq.s32.totalorder %s14, 0
    %p56 = por %p54, %p55
    %p57 = scmp.ne.s32.totalorder %s45, %s46
    %p58 = scmp.eq.s32.totalorder %s15, 1
    %p59 = por %p57, %p58
    %p61 = scmp.ne.s32.totalorder %s46, %s60
    %p62 = scmp.eq.s32.totalorder %s15, 0
    %p63 = por %p61, %p62
    %s65 = sadd.s32 %s64, 1
    %p68 = scmp.eq.s32.totalorder %s9, 1
    %p69 = scmp.ne.s32.totalorder %s64, %s66
    %p70 = scmp.eq.s32.totalorder %s9, 0
    %p71 = por %p69, %p70
    %p72 = scmp.ne.s32.totalorder %s64, %s66
    %p73 = scmp.eq.s32.totalorder %s14, 1
    %p74 = por %p72, %p73
    %p75 = scmp.ne.s32.totalorder %s66, %s67
    %p76 = scmp.eq.s32.totalorder %s14, 0
    %p77 = por %p75, %p76
    %p78 = scmp.ne.s32.totalorder %s66, %s67
    %p79 = scmp.eq.s32.totalorder %s15, 1
    %p80 = por %p78, %p79
    %p82 = scmp.ne.s32.totalorder %s67, %s81
    %p83 = scmp.eq.s32.totalorder %s15, 0
    %p84 = por %p82, %p83
    %s85 = ssub.s32 %s9, %s16
    %p86 = scmp.eq.s32.totalorder %s85, 0
    %s88 = sadd.s32 %s87, 1
    %s89 = scalar_select %p86, %s87, %s88
    %p92 = pneg %p86
    %p93 = scmp.eq.s32.totalorder %s9, 1
    %p94 = por %p92, %p93
    %p95 = scmp.ne.s32.totalorder %s87, %s90
    %p96 = scmp.eq.s32.totalorder %s9, 0
    %p97 = por %p95, %p96
    %p98 = scmp.ne.s32.totalorder %s87, %s90
    %p99 = scmp.eq.s32.totalorder %s14, 1
    %p100 = por %p98, %p99
    %p101 = scmp.ne.s32.totalorder %s90, %s91
    %p102 = scmp.eq.s32.totalorder %s14, 0
    %p103 = por %p101, %p102
    %p104 = scmp.ne.s32.totalorder %s90, %s91
    %p105 = scmp.eq.s32.totalorder %s15, 1
    %p106 = por %p104, %p105
    %p108 = scmp.ne.s32.totalorder %s91, %s107
    %p109 = scmp.eq.s32.totalorder %s15, 0
    %p110 = por %p108, %p109
    %p111 = scmp.le.s32.totalorder 1, %s9
    %p112 = scmp.lt.s32.totalorder %s9, 3
    %p113 = pnand %p111, %p112
    %p114 = pneg %p113
    // Predicated region
    $region9: #{dense_block_forward.5} parent=5 // pred_check
      _
    $region10: #{dense_block_forward.5} parent=5 // pred_check_branch
      %116 = sbr.rel (%p113) target = $region12
    $region11: #{dense_block_forward.5} parent=5 // pred_region
      %s117 = ssub.s32 %s9, 1
      // Predicated region
      $region13: #{dense_block_forward.5} parent=11 // pred_check
        %p118 = pneg %p56
      $region14: #{dense_block_forward.5} parent=11 // pred_check_branch
        %120 = sbr.rel (%p118) target = $region16
      $region15: #{dense_block_forward.5} parent=11 // pred_region
        _
      $region16: #{dense_block_forward.5} parent=11 // pred_fallthru
        _
      // Predicated region
      $region17: #{dense_block_forward.5} parent=11 // pred_check
        %p121 = pneg %p77
      $region18: #{dense_block_forward.5} parent=11 // pred_check_branch
        %123 = sbr.rel (%p121) target = $region20
      $region19: #{dense_block_forward.5} parent=11 // pred_region
        _
      $region20: #{dense_block_forward.5} parent=11 // pred_fallthru
        _
    $region12: #{dense_block_forward.5} parent=5 // pred_fallthru
      _
    %p124 = scmp.lt.s32.totalorder %s9, 2
    // Predicated region
    $region21: #{dense_block_forward.5} parent=5 // pred_check
      %p125 = pneg %p124
    $region22: #{dense_block_forward.5} parent=5 // pred_check_branch
      %127 = sbr.rel (%p125) target = $region24
    $region23: #{dense_block_forward.5} parent=5 // pred_region
      // Predicated region
      $region25: #{dense_block_forward.5} parent=23 // pred_check
        %p128 = pneg %p29
      $region26: #{dense_block_forward.5} parent=23 // pred_check_branch
        %130 = sbr.rel (%p128) target = $region28
      $region27: #{dense_block_forward.5} parent=23 // pred_region
        %s131 = smul.u32 2, %s9
        %p132 = scmp.lt.s32.totalorder %s131, 3
        %s133 = scalar_select %p132, %s131, 3
        %s134 = smul.addr %s133, 2
        %s135 = smul.addr %s134, 8
        %s136 = scalar_lea.vmem %s0, %s135
        %s137 = smul.u32 2, %s9
      $region28: #{dense_block_forward.5} parent=23 // pred_fallthru
        _
    $region24: #{dense_block_forward.5} parent=5 // pred_fallthru
      _
    %p138 = scmp.le.s32.totalorder 1, %s9
    %p139 = scmp.lt.s32.totalorder %s9, 3
    %p140 = pnand %p138, %p139
    %p141 = pneg %p140
    // Predicated region
    $region29: #{dense_block_forward.5} parent=5 // pred_check
      _
    $region30: #{dense_block_forward.5} parent=5 // pred_check_branch
      %143 = sbr.rel (%p140) target = $region32
    $region31: #{dense_block_forward.5} parent=5 // pred_region
      %s144 = ssub.s32 %s9, 1
      %s145 = smul.u32 2, %s14
      %p146 = scmp.lt.s32.totalorder %s145, 3
      %s147 = scalar_select %p146, %s145, 3
      %s148 = smul.addr %s147, 2
      %s149 = smul.addr %s148, 8
      %s150 = scalar_lea.vmem %s0, %s149
      %p151 = pneg %p35
      %p152 = pneg %p32
      %p153 = pneg %p56
      %p154 = pneg %p53
      %p155 = pneg %p77
      %p156 = pneg %p74
      %p157 = pneg %p103
      %p158 = pneg %p100
      %s159 = smul.u32 2, %s14
      %p160 = scmp.lt.s32.totalorder %s159, 3
      %s161 = scalar_select %p160, %s159, 3
      %s162 = smul.addr %s161, 2
      %s163 = smul.addr %s162, 8
      %s164 = scalar_lea.vmem %s3, %s163
      %s165 = smul.u32 2, %s14
      %p166 = scmp.lt.s32.totalorder %s165, 3
      %s167 = scalar_select %p166, %s165, 3
      %s168 = smul.addr %s167, 2
      %s169 = smul.addr %s168, 8
      %s170 = scalar_lea.vmem %s0, %s169
      %s171 = smul.u32 2, %s14
      %s172 = smul.u32 2, %s14
      %p173 = scmp.lt.s32.totalorder %s172, 3
      %s174 = scalar_select %p173, %s172, 3
      %s175 = smul.addr %s174, 2
      %s176 = smul.addr %s175, 8
      %s177 = scalar_lea.vmem %s3, %s176
      %s178 = smul.u32 2, %s14
      %v179 = vld [vmem:[%s170] sm:$0xff]
      %v180 = vld [vmem:[%s170 + $0x8] sm:$0xff]
      %v181 = vld [vmem:[%s170 + $0x10] sm:$0xff]
      %v182 = vld [vmem:[%s170 + $0x18] sm:$0xff]
      %v183 = vld [vmem:[%s1] sm:$0x3]
      %v185 = vlaneseq
      %v186 = vshrl.u32 %v185, 7
      %v187 = vsub.s32 0, %v186
      %v188 = vrot.slane %v183, %v187
      %v189 = vlaneseq
      %v190 = vshrl.u32 %v189, 7
      %v191 = vsub.s32 1, %v190
      %v192 = vrot.slane %v183, %v191
      %v195 = vmul.f32 %v179, %v188
      %v196 = vmul.f32 %v180, %v192
      %v197 = vmul.f32 %v181, %v188
      %v198 = vmul.f32 %v182, %v192
      %v199 = vld [vmem:[%s2] sm:$0x3]
      %v201 = vlaneseq
      %v202 = vshrl.u32 %v201, 7
      %v203 = vsub.s32 0, %v202
      %v204 = vrot.slane %v199, %v203
      %v205 = vlaneseq
      %v206 = vshrl.u32 %v205, 7
      %v207 = vsub.s32 1, %v206
      %v208 = vrot.slane %v199, %v207
      %v211 = vadd.f32 %v195, %v204
      %v212 = vadd.f32 %v196, %v208
      %v213 = vadd.f32 %v197, %v204
      %v214 = vadd.f32 %v198, %v208
      %v215 = vmax.f32 %v211, 0.0
      %v216 = vmax.f32 %v212, 0.0
      %v217 = vmax.f32 %v213, 0.0
      %v218 = vmax.f32 %v214, 0.0
      %219 = vst [vmem:[%s177] sm:$0xff] %v215
      %vm220 = vcmask 523264
      %221 = vst.msk [vmem:[%s177 + $0x8] sm:$0xff] %vm220, %v216
      %222 = vst [vmem:[%s177 + $0x10] sm:$0xff] %v217
      %223 = vst.msk [vmem:[%s177 + $0x18] sm:$0xff] %vm220, %v218
      %s224 = smul.u32 2, %s14
      %p225 = scmp.lt.s32.totalorder %s224, 3
      %s226 = scalar_select %p225, %s224, 3
      %s227 = smul.addr %s226, 2
      %s228 = smul.addr %s227, 8
      %s229 = scalar_lea.vmem %s3, %s228
      // Predicated region
      $region33: #{dense_block_forward.5} parent=31 // pred_check
        %p230 = pneg %p100
      $region34: #{dense_block_forward.5} parent=31 // pred_check_branch
        %232 = sbr.rel (%p230) target = $region36
      $region35: #{dense_block_forward.5} parent=31 // pred_region
        %s233 = smul.u32 2, %s14
      $region36: #{dense_block_forward.5} parent=31 // pred_fallthru
        _
    $region32: #{dense_block_forward.5} parent=5 // pred_fallthru
      _
    %p234 = scmp.le.s32.totalorder 2, %s9
    // Predicated region
    $region37: #{dense_block_forward.5} parent=5 // pred_check
      %p235 = pneg %p234
    $region38: #{dense_block_forward.5} parent=5 // pred_check_branch
      %237 = sbr.rel (%p235) target = $region40
    $region39: #{dense_block_forward.5} parent=5 // pred_region
      %s238 = ssub.s32 %s9, 2
      // Predicated region
      $region41: #{dense_block_forward.5} parent=39 // pred_check
        %p239 = pneg %p106
      $region42: #{dense_block_forward.5} parent=39 // pred_check_branch
        %241 = sbr.rel (%p239) target = $region44
      $region43: #{dense_block_forward.5} parent=39 // pred_region
        %s242 = smul.u32 2, %s15
        %p243 = scmp.lt.s32.totalorder %s242, 3
        %s244 = scalar_select %p243, %s242, 3
        %s245 = smul.addr %s244, 2
        %s246 = smul.addr %s245, 8
        %s247 = scalar_lea.vmem %s3, %s246
      $region44: #{dense_block_forward.5} parent=39 // pred_fallthru
        _
    $region40: #{dense_block_forward.5} parent=5 // pred_fallthru
      _
  $region6: #{dense_block_forward.5} parent=0 // loop_footer
    %s13 = sadd.s32 1, %s9
  $region7: #{dense_block_forward.5} parent=0 // loop_footer_branch
    %8 = sbr.rel target = $region3
  $region8: #{dense_block_forward.5} parent=0 // loop_exit
    _

// kernel: dense_block_forward.3
$region0: #{dense_block_forward.3}
  #allocation0 [shape = 'u32[]', space=smem, size = 0x4, offset = 0x4, fixed_abs, tag = 'smem constant byte address 0x4 - core index']
  #allocation1 [shape = 'u32[144,128]{1,0:T(1,128)}', space=vmem, size = 0x12000, scoped, tag = 'internal scratch']
  #allocation2 [shape = 'f32[18,18,8]{2,1,0:T(8,128)}', space=vmem, size = 0x36000, scoped, tag = 'scratch operand']
  %s0 = inlined_call_operand.vmem [shape: f32[2,256,4], index: 0, kind: input, shape index: {}]
  %s1 = inlined_call_operand.vmem [shape: f32[1,4], index: 1, kind: input, shape index: {}]
  %s2 = inlined_call_operand.vmem [shape: f32[1,4], index: 2, kind: input, shape index: {}]
  %s3 = inlined_call_operand.vmem [shape: bf16[4,8], index: 3, kind: input, shape index: {}]
  %s4 = inlined_call_operand.vmem [shape: f32[1,8], index: 4, kind: input, shape index: {}]
  %s5 = inlined_call_operand.vmem [shape: f32[1,8], index: 5, kind: input, shape index: {}]
  %s6 = inlined_call_operand.vmem [shape: bf16[9,8,4], index: 6, kind: input, shape index: {}]
  %s7 = inlined_call_operand.vmem [shape: f32[2,256,4], index: 7, kind: output, shape index: {}]
  %s8 = sld [smem:[#allocation0]]
  $region65: #{dense_block_forward.3} parent=0
    _
  %s10 = ssub.s32 1, %s8
  %s11 = scalar_select 0, %s10, %s8
  loop: start=0, step=1, limit=4
  $region2: #{dense_block_forward.3} parent=0 // loop_pre_header
    _
  $region3: #{dense_block_forward.3} parent=0 // loop_header
    %s13 = sphi 0, %s17
    %p14 = scmp.ge.s32.totalorder %s13, 4
    %s23 = sphi 0, %s25
    %s26 = sphi 0, %s23
    %s27 = sphi 0, %s26
    %s43 = sphi 0, %s27
    %s47 = sphi 0, %s47
    %s49 = sphi 0, %s47
    %s50 = sphi 0, %s49
    %s64 = sphi 0, %s50
    %s68 = sphi 0, %s68
    %s70 = sphi 0, %s68
    %s71 = sphi 0, %s70
    %s85 = sphi 0, %s71
    %s89 = sphi 0, %s89
    %s91 = sphi 0, %s89
    %s92 = sphi 0, %s91
    %s106 = sphi 0, %s92
    %s110 = sphi 0, %s110
    %s112 = sphi 0, %s110
    %s113 = sphi 0, %s112
    %s127 = sphi 0, %s113
    %s131 = sphi 0, %s131
    %s133 = sphi 0, %s131
    %s134 = sphi 0, %s133
    %s148 = sphi 0, %s134
    %s152 = sphi 0, %s152
    %s154 = sphi 0, %s152
    %s155 = sphi 0, %s154
    %s169 = sphi 0, %s155
    %s175 = sphi 0, %s177
    %s178 = sphi 0, %s175
    %s179 = sphi 0, %s178
    %s195 = sphi 0, %s179
  $region4: #{dense_block_forward.3} parent=0 // loop_header_branch
    %16 = sbr.rel (%p14) target = $region8
  $region5: #{dense_block_forward.3} parent=0 // loop_body
    %s18 = ssub.s32 %s13, 1
    %s19 = ssub.s32 %s13, 2
    %s20 = sadd.s32 %s13, 1
    %s21 = ssub.s32 %s13, %s20
    %p22 = scmp.eq.s32.totalorder %s21, 0
    %s24 = sadd.s32 %s23, 1
    %s25 = scalar_select %p22, %s23, %s24
    %p28 = pneg %p22
    %p29 = scmp.eq.s32.totalorder %s13, 1
    %p30 = por %p28, %p29
    %p31 = scmp.ne.s32.totalorder %s23, %s26
    %p32 = scmp.eq.s32.totalorder %s13, 0
    %p33 = por %p31, %p32
    %p34 = scmp.ne.s32.totalorder %s23, %s26
    %p35 = scmp.eq.s32.totalorder %s18, 1
    %p36 = por %p34, %p35
    %p37 = scmp.ne.s32.totalorder %s26, %s27
    %p38 = scmp.eq.s32.totalorder %s18, 0
    %p39 = por %p37, %p38
    %p40 = scmp.ne.s32.totalorder %s26, %s27
    %p41 = scmp.eq.s32.totalorder %s19, 1
    %p42 = por %p40, %p41
    %p44 = scmp.ne.s32.totalorder %s27, %s43
    %p45 = scmp.eq.s32.totalorder %s19, 0
    %p46 = por %p44, %p45
    %s48 = sadd.s32 %s47, 1
    %p51 = scmp.eq.s32.totalorder %s13, 1
    %p52 = scmp.ne.s32.totalorder %s47, %s49
    %p53 = scmp.eq.s32.totalorder %s13, 0
    %p54 = por %p52, %p53
    %p55 = scmp.ne.s32.totalorder %s47, %s49
    %p56 = scmp.eq.s32.totalorder %s18, 1
    %p57 = por %p55, %p56
    %p58 = scmp.ne.s32.totalorder %s49, %s50
    %p59 = scmp.eq.s32.totalorder %s18, 0
    %p60 = por %p58, %p59
    %p61 = scmp.ne.s32.totalorder %s49, %s50
    %p62 = scmp.eq.s32.totalorder %s19, 1
    %p63 = por %p61, %p62
    %p65 = scmp.ne.s32.totalorder %s50, %s64
    %p66 = scmp.eq.s32.totalorder %s19, 0
    %p67 = por %p65, %p66
    %s69 = sadd.s32 %s68, 1
    %p72 = scmp.eq.s32.totalorder %s13, 1
    %p73 = scmp.ne.s32.totalorder %s68, %s70
    %p74 = scmp.eq.s32.totalorder %s13, 0
    %p75 = por %p73, %p74
    %p76 = scmp.ne.s32.totalorder %s68, %s70
    %p77 = scmp.eq.s32.totalorder %s18, 1
    %p78 = por %p76, %p77
    %p79 = scmp.ne.s32.totalorder %s70, %s71
    %p80 = scmp.eq.s32.totalorder %s18, 0
    %p81 = por %p79, %p80
    %p82 = scmp.ne.s32.totalorder %s70, %s71
    %p83 = scmp.eq.s32.totalorder %s19, 1
    %p84 = por %p82, %p83
    %p86 = scmp.ne.s32.totalorder %s71, %s85
    %p87 = scmp.eq.s32.totalorder %s19, 0
    %p88 = por %p86, %p87
    %s90 = sadd.s32 %s89, 1
    %p93 = scmp.eq.s32.totalorder %s13, 1
    %p94 = scmp.ne.s32.totalorder %s89, %s91
    %p95 = scmp.eq.s32.totalorder %s13, 0
    %p96 = por %p94, %p95
    %p97 = scmp.ne.s32.totalorder %s89, %s91
    %p98 = scmp.eq.s32.totalorder %s18, 1
    %p99 = por %p97, %p98
    %p100 = scmp.ne.s32.totalorder %s91, %s92
    %p101 = scmp.eq.s32.totalorder %s18, 0
    %p102 = por %p100, %p101
    %p103 = scmp.ne.s32.totalorder %s91, %s92
    %p104 = scmp.eq.s32.totalorder %s19, 1
    %p105 = por %p103, %p104
    %p107 = scmp.ne.s32.totalorder %s92, %s106
    %p108 = scmp.eq.s32.totalorder %s19, 0
    %p109 = por %p107, %p108
    %s111 = sadd.s32 %s110, 1
    %p114 = scmp.eq.s32.totalorder %s13, 1
    %p115 = scmp.ne.s32.totalorder %s110, %s112
    %p116 = scmp.eq.s32.totalorder %s13, 0
    %p117 = por %p115, %p116
    %p118 = scmp.ne.s32.totalorder %s110, %s112
    %p119 = scmp.eq.s32.totalorder %s18, 1
    %p120 = por %p118, %p119
    %p121 = scmp.ne.s32.totalorder %s112, %s113
    %p122 = scmp.eq.s32.totalorder %s18, 0
    %p123 = por %p121, %p122
    %p124 = scmp.ne.s32.totalorder %s112, %s113
    %p125 = scmp.eq.s32.totalorder %s19, 1
    %p126 = por %p124, %p125
    %p128 = scmp.ne.s32.totalorder %s113, %s127
    %p129 = scmp.eq.s32.totalorder %s19, 0
    %p130 = por %p128, %p129
    %s132 = sadd.s32 %s131, 1
    %p135 = scmp.eq.s32.totalorder %s13, 1
    %p136 = scmp.ne.s32.totalorder %s131, %s133
    %p137 = scmp.eq.s32.totalorder %s13, 0
    %p138 = por %p136, %p137
    %p139 = scmp.ne.s32.totalorder %s131, %s133
    %p140 = scmp.eq.s32.totalorder %s18, 1
    %p141 = por %p139, %p140
    %p142 = scmp.ne.s32.totalorder %s133, %s134
    %p143 = scmp.eq.s32.totalorder %s18, 0
    %p144 = por %p142, %p143
    %p145 = scmp.ne.s32.totalorder %s133, %s134
    %p146 = scmp.eq.s32.totalorder %s19, 1
    %p147 = por %p145, %p146
    %p149 = scmp.ne.s32.totalorder %s134, %s148
    %p150 = scmp.eq.s32.totalorder %s19, 0
    %p151 = por %p149, %p150
    %s153 = sadd.s32 %s152, 1
    %p156 = scmp.eq.s32.totalorder %s13, 1
    %p157 = scmp.ne.s32.totalorder %s152, %s154
    %p158 = scmp.eq.s32.totalorder %s13, 0
    %p159 = por %p157, %p158
    %p160 = scmp.ne.s32.totalorder %s152, %s154
    %p161 = scmp.eq.s32.totalorder %s18, 1
    %p162 = por %p160, %p161
    %p163 = scmp.ne.s32.totalorder %s154, %s155
    %p164 = scmp.eq.s32.totalorder %s18, 0
    %p165 = por %p163, %p164
    %p166 = scmp.ne.s32.totalorder %s154, %s155
    %p167 = scmp.eq.s32.totalorder %s19, 1
    %p168 = por %p166, %p167
    %p170 = scmp.ne.s32.totalorder %s155, %s169
    %p171 = scmp.eq.s32.totalorder %s19, 0
    %p172 = por %p170, %p171
    %s173 = ssub.s32 %s13, %s20
    %p174 = scmp.eq.s32.totalorder %s173, 0
    %s176 = sadd.s32 %s175, 1
    %s177 = scalar_select %p174, %s175, %s176
    %p180 = pneg %p174
    %p181 = scmp.eq.s32.totalorder %s13, 1
    %p182 = por %p180, %p181
    %p183 = scmp.ne.s32.totalorder %s175, %s178
    %p184 = scmp.eq.s32.totalorder %s13, 0
    %p185 = por %p183, %p184
    %p186 = scmp.ne.s32.totalorder %s175, %s178
    %p187 = scmp.eq.s32.totalorder %s18, 1
    %p188 = por %p186, %p187
    %p189 = scmp.ne.s32.totalorder %s178, %s179
    %p190 = scmp.eq.s32.totalorder %s18, 0
    %p191 = por %p189, %p190
    %p192 = scmp.ne.s32.totalorder %s178, %s179
    %p193 = scmp.eq.s32.totalorder %s19, 1
    %p194 = por %p192, %p193
    %p196 = scmp.ne.s32.totalorder %s179, %s195
    %p197 = scmp.eq.s32.totalorder %s19, 0
    %p198 = por %p196, %p197
    %p199 = scmp.le.s32.totalorder 1, %s13
    %p200 = scmp.lt.s32.totalorder %s13, 3
    %p201 = pnand %p199, %p200
    %p202 = pneg %p201
    // Predicated region
    $region9: #{dense_block_forward.3} parent=5 // pred_check
      _
    $region10: #{dense_block_forward.3} parent=5 // pred_check_branch
      %204 = sbr.rel (%p201) target = $region12
    $region11: #{dense_block_forward.3} parent=5 // pred_region
      %s205 = ssub.s32 %s13, 1
      // Predicated region
      $region13: #{dense_block_forward.3} parent=11 // pred_check
        %p206 = pneg %p60
      $region14: #{dense_block_forward.3} parent=11 // pred_check_branch
        %208 = sbr.rel (%p206) target = $region16
      $region15: #{dense_block_forward.3} parent=11 // pred_region
        _
      $region16: #{dense_block_forward.3} parent=11 // pred_fallthru
        _
      // Predicated region
      $region17: #{dense_block_forward.3} parent=11 // pred_check
        %p209 = pneg %p81
      $region18: #{dense_block_forward.3} parent=11 // pred_check_branch
        %211 = sbr.rel (%p209) target = $region20
      $region19: #{dense_block_forward.3} parent=11 // pred_region
        _
      $region20: #{dense_block_forward.3} parent=11 // pred_fallthru
        _
      // Predicated region
      $region21: #{dense_block_forward.3} parent=11 // pred_check
        %p212 = pneg %p102
      $region22: #{dense_block_forward.3} parent=11 // pred_check_branch
        %214 = sbr.rel (%p212) target = $region24
      $region23: #{dense_block_forward.3} parent=11 // pred_region
        _
      $region24: #{dense_block_forward.3} parent=11 // pred_fallthru
        _
      // Predicated region
      $region25: #{dense_block_forward.3} parent=11 // pred_check
        %p215 = pneg %p123
      $region26: #{dense_block_forward.3} parent=11 // pred_check_branch
        %217 = sbr.rel (%p215) target = $region28
      $region27: #{dense_block_forward.3} parent=11 // pred_region
        _
      $region28: #{dense_block_forward.3} parent=11 // pred_fallthru
        _
      // Predicated region
      $region29: #{dense_block_forward.3} parent=11 // pred_check
        %p218 = pneg %p144
      $region30: #{dense_block_forward.3} parent=11 // pred_check_branch
        %220 = sbr.rel (%p218) target = $region32
      $region31: #{dense_block_forward.3} parent=11 // pred_region
        _
      $region32: #{dense_block_forward.3} parent=11 // pred_fallthru
        _
      // Predicated region
      $region33: #{dense_block_forward.3} parent=11 // pred_check
        %p221 = pneg %p165
      $region34: #{dense_block_forward.3} parent=11 // pred_check_branch
        %223 = sbr.rel (%p221) target = $region36
      $region35: #{dense_block_forward.3} parent=11 // pred_region
        _
      $region36: #{dense_block_forward.3} parent=11 // pred_fallthru
        _
    $region12: #{dense_block_forward.3} parent=5 // pred_fallthru
      _
    %p224 = scmp.lt.s32.totalorder %s13, 2
    // Predicated region
    $region37: #{dense_block_forward.3} parent=5 // pred_check
      %p225 = pneg %p224
    $region38: #{dense_block_forward.3} parent=5 // pred_check_branch
      %227 = sbr.rel (%p225) target = $region40
    $region39: #{dense_block_forward.3} parent=5 // pred_region
      // Predicated region
      $region41: #{dense_block_forward.3} parent=39 // pred_check
        %p228 = pneg %p33
      $region42: #{dense_block_forward.3} parent=39 // pred_check_branch
        %230 = sbr.rel (%p228) target = $region44
      $region43: #{dense_block_forward.3} parent=39 // pred_region
        %p231 = scmp.lt.s32.totalorder %s13, 1
        %s232 = scalar_select %p231, %s13, 1
        %s233 = smul.addr %s232, 32
        %s234 = smul.addr %s233, 8
        %s235 = scalar_lea.vmem %s0, %s234
      $region44: #{dense_block_forward.3} parent=39 // pred_fallthru
        _
    $region40: #{dense_block_forward.3} parent=5 // pred_fallthru
      _
    %p236 = scmp.le.s32.totalorder 1, %s13
    %p237 = scmp.lt.s32.totalorder %s13, 3
    %p238 = pnand %p236, %p237
    %p239 = pneg %p238
    // Predicated region
    $region45: #{dense_block_forward.3} parent=5 // pred_check
      _
    $region46: #{dense_block_forward.3} parent=5 // pred_check_branch
      %241 = sbr.rel (%p238) target = $region48
    $region47: #{dense_block_forward.3} parent=5 // pred_region
      %s242 = ssub.s32 %s13, 1
      %p243 = scmp.lt.s32.totalorder %s18, 1
      %s244 = scalar_select %p243, %s18, 1
      %s245 = smul.addr %s244, 32
      %s246 = smul.addr %s245, 8
      %s247 = scalar_lea.vmem %s0, %s246
      %p248 = pneg %p39
      %p249 = pneg %p36
      %p250 = pneg %p60
      %p251 = pneg %p57
      %p252 = pneg %p81
      %p253 = pneg %p78
      %p254 = pneg %p102
      %p255 = pneg %p99
      %p256 = pneg %p123
      %p257 = pneg %p120
      %p258 = pneg %p144
      %p259 = pneg %p141
      %p260 = pneg %p165
      %p261 = pneg %p162
      %p262 = pneg %p191
      %p263 = pneg %p188
      %p264 = scmp.lt.s32.totalorder %s18, 1
      %s265 = scalar_select %p264, %s18, 1
      %s266 = smul.addr %s265, 32
      %s267 = smul.addr %s266, 8
      %s268 = scalar_lea.vmem %s7, %s267
      %p269 = scmp.lt.s32.totalorder %s18, 1
      %s270 = scalar_select %p269, %s18, 1
      %s271 = smul.addr %s270, 32
      %s272 = smul.addr %s271, 8
      %s273 = scalar_lea.vmem %s0, %s272
      %p274 = scmp.lt.s32.totalorder %s18, 1
      %s275 = scalar_select %p274, %s18, 1
      %s276 = smul.addr %s275, 32
      %s277 = smul.addr %s276, 8
      %s278 = scalar_lea.vmem %s7, %s277
      %v280 = vld [vmem:[%s273] sm:$0xff]
      %v281 = vld [vmem:[%s273 + $0x8] sm:$0xff]
      %v282 = vld [vmem:[%s273 + $0x10] sm:$0xff]
      %v283 = vld [vmem:[%s273 + $0x18] sm:$0xff]
      %v284 = vld [vmem:[%s273 + $0x20] sm:$0xff]
      %v285 = vld [vmem:[%s273 + $0x28] sm:$0xff]
      %v286 = vld [vmem:[%s273 + $0x30] sm:$0xff]
      %v287 = vld [vmem:[%s273 + $0x38] sm:$0xff]
      %v288 = vld [vmem:[%s273 + $0x40] sm:$0xff]
      %v289 = vld [vmem:[%s273 + $0x48] sm:$0xff]
      %v290 = vld [vmem:[%s273 + $0x50] sm:$0xff]
      %v291 = vld [vmem:[%s273 + $0x58] sm:$0xff]
      %v292 = vld [vmem:[%s273 + $0x60] sm:$0xff]
      %v293 = vld [vmem:[%s273 + $0x68] sm:$0xff]
      %v294 = vld [vmem:[%s273 + $0x70] sm:$0xff]
      %v295 = vld [vmem:[%s273 + $0x78] sm:$0xff]
      %v296 = vld [vmem:[%s273 + $0x80] sm:$0xff]
      %v297 = vld [vmem:[%s273 + $0x88] sm:$0xff]
      %v298 = vld [vmem:[%s273 + $0x90] sm:$0xff]
      %v299 = vld [vmem:[%s273 + $0x98] sm:$0xff]
      %v300 = vld [vmem:[%s273 + $0xa0] sm:$0xff]
      %v301 = vld [vmem:[%s273 + $0xa8] sm:$0xff]
      %v302 = vld [vmem:[%s273 + $0xb0] sm:$0xff]
      %v303 = vld [vmem:[%s273 + $0xb8] sm:$0xff]
      %v304 = vld [vmem:[%s273 + $0xc0] sm:$0xff]
      %v305 = vld [vmem:[%s273 + $0xc8] sm:$0xff]
      %v306 = vld [vmem:[%s273 + $0xd0] sm:$0xff]
      %v307 = vld [vmem:[%s273 + $0xd8] sm:$0xff]
      %v308 = vld [vmem:[%s273 + $0xe0] sm:$0xff]
      %v309 = vld [vmem:[%s273 + $0xe8] sm:$0xff]
      %v310 = vld [vmem:[%s273 + $0xf0] sm:$0xff]
      %v311 = vld [vmem:[%s273 + $0xf8] sm:$0xff]
      %v312 = vld [vmem:[%s1] sm:$0x1]
      %v314 = vlaneseq
      %v315 = vshrl.u32 %v314, 7
      %v316 = vsub.s32 0, %v315
      %v317 = vrot.slane %v312, %v316
      %v319 = vmul.f32 %v280, %v317
      %v320 = vmul.f32 %v281, %v317
      %v321 = vmul.f32 %v282, %v317
      %v322 = vmul.f32 %v283, %v317
      %v323 = vmul.f32 %v284, %v317
      %v324 = vmul.f32 %v285, %v317
      %v325 = vmul.f32 %v286, %v317
      %v326 = vmul.f32 %v287, %v317
      %v327 = vmul.f32 %v288, %v317
      %v328 = vmul.f32 %v289, %v317
      %v329 = vmul.f32 %v290, %v317
      %v330 = vmul.f32 %v291, %v317
      %v331 = vmul.f32 %v292, %v317
      %v332 = vmul.f32 %v293, %v317
      %v333 = vmul.f32 %v294, %v317
      %v334 = vmul.f32 %v295, %v317
      %v335 = vmul.f32 %v296, %v317
      %v336 = vmul.f32 %v297, %v317
      %v337 = vmul.f32 %v298, %v317
      %v338 = vmul.f32 %v299, %v317
      %v339 = vmul.f32 %v300, %v317
      %v340 = vmul.f32 %v301, %v317
      %v341 = vmul.f32 %v302, %v317
      %v342 = vmul.f32 %v303, %v317
      %v343 = vmul.f32 %v304, %v317
      %v344 = vmul.f32 %v305, %v317
      %v345 = vmul.f32 %v306, %v317
      %v346 = vmul.f32 %v307, %v317
      %v347 = vmul.f32 %v308, %v317
      %v348 = vmul.f32 %v309, %v317
      %v349 = vmul.f32 %v310, %v317
      %v350 = vmul.f32 %v311, %v317
      %v351 = vld [vmem:[%s2] sm:$0x1]
      %v353 = vlaneseq
      %v354 = vshrl.u32 %v353, 7
      %v355 = vsub.s32 0, %v354
      %v356 = vrot.slane %v351, %v355
      %v358 = vadd.f32 %v319, %v356
      %v359 = vadd.f32 %v320, %v356
      %v360 = vadd.f32 %v321, %v356
      %v361 = vadd.f32 %v322, %v356
      %v362 = vadd.f32 %v323, %v356
      %v363 = vadd.f32 %v324, %v356
      %v364 = vadd.f32 %v325, %v356
      %v365 = vadd.f32 %v326, %v356
      %v366 = vadd.f32 %v327, %v356
      %v367 = vadd.f32 %v328, %v356
      %v368 = vadd.f32 %v329, %v356
      %v369 = vadd.f32 %v330, %v356
      %v370 = vadd.f32 %v331, %v356
      %v371 = vadd.f32 %v332, %v356
      %v372 = vadd.f32 %v333, %v356
      %v373 = vadd.f32 %v334, %v356
      %v374 = vadd.f32 %v335, %v356
      %v375 = vadd.f32 %v336, %v356
      %v376 = vadd.f32 %v337, %v356
      %v377 = vadd.f32 %v338, %v356
      %v378 = vadd.f32 %v339, %v356
      %v379 = vadd.f32 %v340, %v356
      %v380 = vadd.f32 %v341, %v356
      %v381 = vadd.f32 %v342, %v356
      %v382 = vadd.f32 %v343, %v356
      %v383 = vadd.f32 %v344, %v356
      %v384 = vadd.f32 %v345, %v356
      %v385 = vadd.f32 %v346, %v356
      %v386 = vadd.f32 %v347, %v356
      %v387 = vadd.f32 %v348, %v356
      %v388 = vadd.f32 %v349, %v356
      %v389 = vadd.f32 %v350, %v356
      %v390 = vmax.f32 %v358, 0.0
      %v391 = vmax.f32 %v359, 0.0
      %v392 = vmax.f32 %v360, 0.0
      %v393 = vmax.f32 %v361, 0.0
      %v394 = vmax.f32 %v362, 0.0
      %v395 = vmax.f32 %v363, 0.0
      %v396 = vmax.f32 %v364, 0.0
      %v397 = vmax.f32 %v365, 0.0
      %v398 = vmax.f32 %v366, 0.0
      %v399 = vmax.f32 %v367, 0.0
      %v400 = vmax.f32 %v368, 0.0
      %v401 = vmax.f32 %v369, 0.0
      %v402 = vmax.f32 %v370, 0.0
      %v403 = vmax.f32 %v371, 0.0
      %v404 = vmax.f32 %v372, 0.0
      %v405 = vmax.f32 %v373, 0.0
      %v406 = vmax.f32 %v374, 0.0
      %v407 = vmax.f32 %v375, 0.0
      %v408 = vmax.f32 %v376, 0.0
      %v409 = vmax.f32 %v377, 0.0
      %v410 = vmax.f32 %v378, 0.0
      %v411 = vmax.f32 %v379, 0.0
      %v412 = vmax.f32 %v380, 0.0
      %v413 = vmax.f32 %v381, 0.0
      %v414 = vmax.f32 %v382, 0.0
      %v415 = vmax.f32 %v383, 0.0
      %v416 = vmax.f32 %v384, 0.0
      %v417 = vmax.f32 %v385, 0.0
      %v418 = vmax.f32 %v386, 0.0
      %v419 = vmax.f32 %v387, 0.0
      %v420 = vmax.f32 %v388, 0.0
      %v421 = vmax.f32 %v389, 0.0
      %v422 = vpack.c.bf16 %v391, %v390
      %v423 = vpack.c.bf16 %v393, %v392
      %v424 = vpack.c.bf16 %v395, %v394
      %v425 = vpack.c.bf16 %v397, %v396
      %v426 = vpack.c.bf16 %v399, %v398
      %v427 = vpack.c.bf16 %v401, %v400
      %v428 = vpack.c.bf16 %v403, %v402
      %v429 = vpack.c.bf16 %v405, %v404
      %v430 = vpack.c.bf16 %v407, %v406
      %v431 = vpack.c.bf16 %v409, %v408
      %v432 = vpack.c.bf16 %v411, %v410
      %v433 = vpack.c.bf16 %v413, %v412
      %v434 = vpack.c.bf16 %v415, %v414
      %v435 = vpack.c.bf16 %v417, %v416
      %v436 = vpack.c.bf16 %v419, %v418
      %v437 = vpack.c.bf16 %v421, %v420
      %v438 = vld [vmem:[%s3] sm:$0x3]
      %vm439 = vcmask 31744
      %v441 = vsel %vm439, %v422, 0
      %v444 = vsel %vm439, %v423, 0
      %v447 = vsel %vm439, %v424, 0
      %v450 = vsel %vm439, %v425, 0
      %v453 = vsel %vm439, %v426, 0
      %v456 = vsel %vm439, %v427, 0
      %v459 = vsel %vm439, %v428, 0
      %v462 = vsel %vm439, %v429, 0
      %v465 = vsel %vm439, %v430, 0
      %v468 = vsel %vm439, %v431, 0
      %v471 = vsel %vm439, %v432, 0
      %v474 = vsel %vm439, %v433, 0
      %v477 = vsel %vm439, %v434, 0
      %v480 = vsel %vm439, %v435, 0
      %v483 = vsel %vm439, %v436, 0
      %v486 = vsel %vm439, %v437, 0
      %vm488 = vcmask 1041408
      %v490 = vsel %vm488, %v438, 0
      %492 = vmatprep.subr.bf16.mxu0 0
      %493 = vmatpush1.bf16.msra.mxu0 %v490
      %494 = vmatprep.subr.bf16.mxu0 0
      %495 = vmatpush1.bf16.msra.mxu0 0
      %496 = vmatprep.subr.bf16.mxu0 0
      %497 = vmatpush1.bf16.msra.mxu0 0
      %498 = vmatprep.subr.bf16.mxu0 0
      %499 = vmatpush1.bf16.msra.mxu0 0
      %500 = vmatprep.subr.bf16.mxu0 0
      %501 = vmatpush1.bf16.msra.mxu0 0
      %502 = vmatprep.subr.bf16.mxu0 0
      %503 = vmatpush1.bf16.msra.mxu0 0
      %504 = vmatprep.subr.bf16.mxu0 0
      %505 = vmatpush1.bf16.msra.mxu0 0
      %506 = vmatprep.subr.bf16.mxu0 0
      %507 = vmatpush1.bf16.msra.mxu0 0
      %508 = vmatprep.subr.bf16.mxu0 0
      %509 = vmatpush1.bf16.msra.mxu0 0
      %510 = vmatprep.subr.bf16.mxu0 0
      %511 = vmatpush1.bf16.msra.mxu0 0
      %512 = vmatprep.subr.bf16.mxu0 0
      %513 = vmatpush1.bf16.msra.mxu0 0
      %514 = vmatprep.subr.bf16.mxu0 0
      %515 = vmatpush1.bf16.msra.mxu0 0
      %516 = vmatprep.subr.bf16.mxu0 0
      %517 = vmatpush1.bf16.msra.mxu0 0
      %518 = vmatprep.subr.bf16.mxu0 0
      %519 = vmatpush1.bf16.msra.mxu0 0
      %520 = vmatprep.subr.bf16.mxu0 0
      %521 = vmatpush1.bf16.msra.mxu0 0
      %522 = vmatprep.subr.bf16.mxu0 0
      %523 = vmatpush1.bf16.msra.mxu0 0
      %524 = vmatprep.mubr.bf16.mxu0 0
      %525 = vmatmul.mubr.bf16.gmra.mrb[0].mxu0 %v441
      %v526 = vpop.f32.mrb[0].mxu0
      %v527 = vadd.f32 0.0, %v526
      %v528 = vpop.f32.mrb[0].mxu0
      %v529 = vpop.f32.mrb[0].mxu0
      %v530 = vadd.f32 0.0, %v529
      %v531 = vpop.f32.mrb[0].mxu0
      %532 = vmatprep.mubr.bf16.mxu0 0
      %533 = vmatmul.mubr.bf16.gmra.mrb[0].mxu0 %v444
      %v534 = vpop.f32.mrb[0].mxu0
      %v535 = vadd.f32 0.0, %v534
      %v536 = vpop.f32.mrb[0].mxu0
      %v537 = vpop.f32.mrb[0].mxu0
      %v538 = vadd.f32 0.0, %v537
      %v539 = vpop.f32.mrb[0].mxu0
      %540 = vmatprep.mubr.bf16.mxu0 0
      %541 = vmatmul.mubr.bf16.gmra.mrb[0].mxu0 %v447
      %v542 = vpop.f32.mrb[0].mxu0
      %v543 = vadd.f32 0.0, %v542
      %v544 = vpop.f32.mrb[0].mxu0
      %v545 = vpop.f32.mrb[0].mxu0
      %v546 = vadd.f32 0.0, %v545
      %v547 = vpop.f32.mrb[0].mxu0
      %548 = vmatprep.mubr.bf16.mxu0 0
      %549 = vmatmul.mubr.bf16.gmra.mrb[0].mxu0 %v450
      %v550 = vpop.f32.mrb[0].mxu0
      %v551 = vadd.f32 0.0, %v550
      %v552 = vpop.f32.mrb[0].mxu0
      %v553 = vpop.f32.mrb[0].mxu0
      %v554 = vadd.f32 0.0, %v553
      %v555 = vpop.f32.mrb[0].mxu0
      %556 = vmatprep.mubr.bf16.mxu0 0
      %557 = vmatmul.mubr.bf16.gmra.mrb[0].mxu0 %v453
      %v558 = vpop.f32.mrb[0].mxu0
      %v559 = vadd.f32 0.0, %v558
      %v560 = vpop.f32.mrb[0].mxu0
      %v561 = vpop.f32.mrb[0].mxu0
      %v562 = vadd.f32 0.0, %v561
      %v563 = vpop.f32.mrb[0].mxu0
      %564 = vmatprep.mubr.bf16.mxu0 0
      %565 = vmatmul.mubr.bf16.gmra.mrb[0].mxu0 %v456
      %v566 = vpop.f32.mrb[0].mxu0
      %v567 = vadd.f32 0.0, %v566
      %v568 = vpop.f32.mrb[0].mxu0
      %v569 = vpop.f32.mrb[0].mxu0
      %v570 = vadd.f32 0.0, %v569
      %v571 = vpop.f32.mrb[0].mxu0
      %572 = vmatprep.mubr.bf16.mxu0 0
      %573 = vmatmul.mubr.bf16.gmra.mrb[0].mxu0 %v459
      %v574 = vpop.f32.mrb[0].mxu0
      %v575 = vadd.f32 0.0, %v574
      %v576 = vpop.f32.mrb[0].mxu0
      %v577 = vpop.f32.mrb[0].mxu0
      %v578 = vadd.f32 0.0, %v577
      %v579 = vpop.f32.mrb[0].mxu0
      %580 = vmatprep.mubr.bf16.mxu0 0
      %581 = vmatmul.mubr.bf16.gmra.mrb[0].mxu0 %v462
      %v582 = vpop.f32.mrb[0].mxu0
      %v583 = vadd.f32 0.0, %v582
      %v584 = vpop.f32.mrb[0].mxu0
      %v585 = vpop.f32.mrb[0].mxu0
      %v586 = vadd.f32 0.0, %v585
      %v587 = vpop.f32.mrb[0].mxu0
      %588 = vmatprep.mubr.bf16.mxu0 0
      %589 = vmatmul.mubr.bf16.gmra.mrb[0].mxu0 %v465
      %v590 = vpop.f32.mrb[0].mxu0
      %v591 = vadd.f32 0.0, %v590
      %v592 = vpop.f32.mrb[0].mxu0
      %v593 = vpop.f32.mrb[0].mxu0
      %v594 = vadd.f32 0.0, %v593
      %v595 = vpop.f32.mrb[0].mxu0
      %596 = vmatprep.mubr.bf16.mxu0 0
      %597 = vmatmul.mubr.bf16.gmra.mrb[0].mxu0 %v468
      %v598 = vpop.f32.mrb[0].mxu0
      %v599 = vadd.f32 0.0, %v598
      %v600 = vpop.f32.mrb[0].mxu0
      %v601 = vpop.f32.mrb[0].mxu0
      %v602 = vadd.f32 0.0, %v601
      %v603 = vpop.f32.mrb[0].mxu0
      %604 = vmatprep.mubr.bf16.mxu0 0
      %605 = vmatmul.mubr.bf16.gmra.mrb[0].mxu0 %v471
      %v606 = vpop.f32.mrb[0].mxu0
      %v607 = vadd.f32 0.0, %v606
      %v608 = vpop.f32.mrb[0].mxu0
      %v609 = vpop.f32.mrb[0].mxu0
      %v610 = vadd.f32 0.0, %v609
      %v611 = vpop.f32.mrb[0].mxu0
      %612 = vmatprep.mubr.bf16.mxu0 0
      %613 = vmatmul.mubr.bf16.gmra.mrb[0].mxu0 %v474
      %v614 = vpop.f32.mrb[0].mxu0
      %v615 = vadd.f32 0.0, %v614
      %v616 = vpop.f32.mrb[0].mxu0
      %v617 = vpop.f32.mrb[0].mxu0
      %v618 = vadd.f32 0.0, %v617
      %v619 = vpop.f32.mrb[0].mxu0
      %620 = vmatprep.mubr.bf16.mxu0 0
      %621 = vmatmul.mubr.bf16.gmra.mrb[0].mxu0 %v477
      %v622 = vpop.f32.mrb[0].mxu0
      %v623 = vadd.f32 0.0, %v622
      %v624 = vpop.f32.mrb[0].mxu0
      %v625 = vpop.f32.mrb[0].mxu0
      %v626 = vadd.f32 0.0, %v625
      %v627 = vpop.f32.mrb[0].mxu0
      %628 = vmatprep.mubr.bf16.mxu0 0
      %629 = vmatmul.mubr.bf16.gmra.mrb[0].mxu0 %v480
      %v630 = vpop.f32.mrb[0].mxu0
      %v631 = vadd.f32 0.0, %v630
      %v632 = vpop.f32.mrb[0].mxu0
      %v633 = vpop.f32.mrb[0].mxu0
      %v634 = vadd.f32 0.0, %v633
      %v635 = vpop.f32.mrb[0].mxu0
      %636 = vmatprep.mubr.bf16.mxu0 0
      %637 = vmatmul.mubr.bf16.gmra.mrb[0].mxu0 %v483
      %v638 = vpop.f32.mrb[0].mxu0
      %v639 = vadd.f32 0.0, %v638
      %v640 = vpop.f32.mrb[0].mxu0
      %v641 = vpop.f32.mrb[0].mxu0
      %v642 = vadd.f32 0.0, %v641
      %v643 = vpop.f32.mrb[0].mxu0
      %644 = vmatprep.mubr.bf16.mxu0 0
      %645 = vmatmul.mubr.bf16.gmra.mrb[0].mxu0 %v486
      %v646 = vpop.f32.mrb[0].mxu0
      %v647 = vadd.f32 0.0, %v646
      %v648 = vpop.f32.mrb[0].mxu0
      %v649 = vpop.f32.mrb[0].mxu0
      %v650 = vadd.f32 0.0, %v649
      %v651 = vpop.f32.mrb[0].mxu0
      %652 = vdwg.mxu0
      %v653 = vld [vmem:[%s4] sm:$0x1]
      %v655 = vlaneseq
      %v656 = vshrl.u32 %v655, 7
      %v657 = vsub.s32 0, %v656
      %v658 = vrot.slane %v653, %v657
      %v660 = vmul.f32 %v527, %v658
      %v661 = vmul.f32 %v530, %v658
      %v662 = vmul.f32 %v535, %v658
      %v663 = vmul.f32 %v538, %v658
      %v664 = vmul.f32 %v543, %v658
      %v665 = vmul.f32 %v546, %v658
      %v666 = vmul.f32 %v551, %v658
      %v667 = vmul.f32 %v554, %v658
      %v668 = vmul.f32 %v559, %v658
      %v669 = vmul.f32 %v562, %v658
      %v670 = vmul.f32 %v567, %v658
      %v671 = vmul.f32 %v570, %v658
      %v672 = vmul.f32 %v575, %v658
      %v673 = vmul.f32 %v578, %v658
      %v674 = vmul.f32 %v583, %v658
      %v675 = vmul.f32 %v586, %v658
      %v676 = vmul.f32 %v591, %v658
      %v677 = vmul.f32 %v594, %v658
      %v678 = vmul.f32 %v599, %v658
      %v679 = vmul.f32 %v602, %v658
      %v680 = vmul.f32 %v607, %v658
      %v681 = vmul.f32 %v610, %v658
      %v682 = vmul.f32 %v615, %v658
      %v683 = vmul.f32 %v618, %v658
      %v684 = vmul.f32 %v623, %v658
      %v685 = vmul.f32 %v626, %v658
      %v686 = vmul.f32 %v631, %v658
      %v687 = vmul.f32 %v634, %v658
      %v688 = vmul.f32 %v639, %v658
      %v689 = vmul.f32 %v642, %v658
      %v690 = vmul.f32 %v647, %v658
      %v691 = vmul.f32 %v650, %v658
      %v692 = vld [vmem:[%s5] sm:$0x1]
      %v694 = vlaneseq
      %v695 = vshrl.u32 %v694, 7
      %v696 = vsub.s32 0, %v695
      %v697 = vrot.slane %v692, %v696
      %v699 = vadd.f32 %v660, %v697
      %v700 = vadd.f32 %v661, %v697
      %v701 = vadd.f32 %v662, %v697
      %v702 = vadd.f32 %v663, %v697
      %v703 = vadd.f32 %v664, %v697
      %v704 = vadd.f32 %v665, %v697
      %v705 = vadd.f32 %v666, %v697
      %v706 = vadd.f32 %v667, %v697
      %v707 = vadd.f32 %v668, %v697
      %v708 = vadd.f32 %v669, %v697
      %v709 = vadd.f32 %v670, %v697
      %v710 = vadd.f32 %v671, %v697
      %v711 = vadd.f32 %v672, %v697
      %v712 = vadd.f32 %v673, %v697
      %v713 = vadd.f32 %v674, %v697
      %v714 = vadd.f32 %v675, %v697
      %v715 = vadd.f32 %v676, %v697
      %v716 = vadd.f32 %v677, %v697
      %v717 = vadd.f32 %v678, %v697
      %v718 = vadd.f32 %v679, %v697
      %v719 = vadd.f32 %v680, %v697
      %v720 = vadd.f32 %v681, %v697
      %v721 = vadd.f32 %v682, %v697
      %v722 = vadd.f32 %v683, %v697
      %v723 = vadd.f32 %v684, %v697
      %v724 = vadd.f32 %v685, %v697
      %v725 = vadd.f32 %v686, %v697
      %v726 = vadd.f32 %v687, %v697
      %v727 = vadd.f32 %v688, %v697
      %v728 = vadd.f32 %v689, %v697
      %v729 = vadd.f32 %v690, %v697
      %v730 = vadd.f32 %v691, %v697
      %v731 = vmax.f32 %v699, 0.0
      %v732 = vmax.f32 %v700, 0.0
      %v733 = vmax.f32 %v701, 0.0
      %v734 = vmax.f32 %v702, 0.0
      %v735 = vmax.f32 %v703, 0.0
      %v736 = vmax.f32 %v704, 0.0
      %v737 = vmax.f32 %v705, 0.0
      %v738 = vmax.f32 %v706, 0.0
      %v739 = vmax.f32 %v707, 0.0
      %v740 = vmax.f32 %v708, 0.0
      %v741 = vmax.f32 %v709, 0.0
      %v742 = vmax.f32 %v710, 0.0
      %v743 = vmax.f32 %v711, 0.0
      %v744 = vmax.f32 %v712, 0.0
      %v745 = vmax.f32 %v713, 0.0
      %v746 = vmax.f32 %v714, 0.0
      %v747 = vmax.f32 %v715, 0.0
      %v748 = vmax.f32 %v716, 0.0
      %v749 = vmax.f32 %v717, 0.0
      %v750 = vmax.f32 %v718, 0.0
      %v751 = vmax.f32 %v719, 0.0
      %v752 = vmax.f32 %v720, 0.0
      %v753 = vmax.f32 %v721, 0.0
      %v754 = vmax.f32 %v722, 0.0
      %v755 = vmax.f32 %v723, 0.0
      %v756 = vmax.f32 %v724, 0.0
      %v757 = vmax.f32 %v725, 0.0
      %v758 = vmax.f32 %v726, 0.0
      %v759 = vmax.f32 %v727, 0.0
      %v760 = vmax.f32 %v728, 0.0
      %v761 = vmax.f32 %v729, 0.0
      %v762 = vmax.f32 %v730, 0.0
      %p763 = scmp.eq.s32.totalorder %s18, 0
      // Predicated region
      $region49: #{dense_block_forward.3} parent=47 // pred_check
        %p764 = pneg %p763
      $region50: #{dense_block_forward.3} parent=47 // pred_check_branch
        %766 = sbr.rel (%p764) target = $region52
      $region51: #{dense_block_forward.3} parent=47 // pred_region
        %vm767 = vcmask 64512
        %768 = vst.msk [vmem:[#allocation2] sm:$0xff] %vm767, 0.0
        %769 = vst.msk [vmem:[#allocation2 + $0x8] sm:$0xff] %vm767, 0.0
        %vm770 = vcmask 58368
        %771 = vst.msk [vmem:[#allocation2 + $0x10] sm:$0x3] %vm770, 0.0
        %772 = vst.msk [vmem:[#allocation2 + $0x18] sm:$0xff] %vm767, 0.0
        %773 = vst.msk [vmem:[#allocation2 + $0x20] sm:$0xff] %vm767, 0.0
        %774 = vst.msk [vmem:[#allocation2 + $0x28] sm:$0x3] %vm770, 0.0
        %775 = vst.msk [vmem:[#allocation2 + $0x30] sm:$0xff] %vm767, 0.0
        %776 = vst.msk [vmem:[#allocation2 + $0x38] sm:$0xff] %vm767, 0.0
        %777 = vst.msk [vmem:[#allocation2 + $0x40] sm:$0x3] %vm770, 0.0
        %778 = vst.msk [vmem:[#allocation2 + $0x48] sm:$0xff] %vm767, 0.0
        %779 = vst.msk [vmem:[#allocation2 + $0x50] sm:$0xff] %vm767, 0.0
        %780 = vst.msk [vmem:[#allocation2 + $0x58] sm:$0x3] %vm770, 0.0
        %781 = vst.msk [vmem:[#allocation2 + $0x60] sm:$0xff] %vm767, 0.0
        %782 = vst.msk [vmem:[#allocation2 + $0x68] sm:$0xff] %vm767, 0.0
        %783 = vst.msk [vmem:[#allocation2 + $0x70] sm:$0x3] %vm770, 0.0
        %784 = vst.msk [vmem:[#allocation2 + $0x78] sm:$0xff] %vm767, 0.0
        %785 = vst.msk [vmem:[#allocation2 + $0x80] sm:$0xff] %vm767, 0.0
        %786 = vst.msk [vmem:[#allocation2 + $0x88] sm:$0x3] %vm770, 0.0
        %787 = vst.msk [vmem:[#allocation2 + $0x90] sm:$0xff] %vm767, 0.0
        %788 = vst.msk [vmem:[#allocation2 + $0x98] sm:$0xff] %vm767, 0.0
        %789 = vst.msk [vmem:[#allocation2 + $0xa0] sm:$0x3] %vm770, 0.0
        %790 = vst.msk [vmem:[#allocation2 + $0xa8] sm:$0xff] %vm767, 0.0
        %791 = vst.msk [vmem:[#allocation2 + $0xb0] sm:$0xff] %vm767, 0.0
        %792 = vst.msk [vmem:[#allocation2 + $0xb8] sm:$0x3] %vm770, 0.0
        %793 = vst.msk [vmem:[#allocation2 + $0xc0] sm:$0xff] %vm767, 0.0
        %794 = vst.msk [vmem:[#allocation2 + $0xc8] sm:$0xff] %vm767, 0.0
        %795 = vst.msk [vmem:[#allocation2 + $0xd0] sm:$0x3] %vm770, 0.0
        %796 = vst.msk [vmem:[#allocation2 + $0xd8] sm:$0xff] %vm767, 0.0
        %797 = vst.msk [vmem:[#allocation2 + $0xe0] sm:$0xff] %vm767, 0.0
        %798 = vst.msk [vmem:[#allocation2 + $0xe8] sm:$0x3] %vm770, 0.0
        %799 = vst.msk [vmem:[#allocation2 + $0xf0] sm:$0xff] %vm767, 0.0
        %800 = vst.msk [vmem:[#allocation2 + $0xf8] sm:$0xff] %vm767, 0.0
        %801 = vst.msk [vmem:[#allocation2 + $0x100] sm:$0x3] %vm770, 0.0
        %802 = vst.msk [vmem:[#allocation2 + $0x108] sm:$0xff] %vm767, 0.0
        %803 = vst.msk [vmem:[#allocation2 + $0x110] sm:$0xff] %vm767, 0.0
        %804 = vst.msk [vmem:[#allocation2 + $0x118] sm:$0x3] %vm770, 0.0
        %805 = vst.msk [vmem:[#allocation2 + $0x120] sm:$0xff] %vm767, 0.0
        %806 = vst.msk [vmem:[#allocation2 + $0x128] sm:$0xff] %vm767, 0.0
        %807 = vst.msk [vmem:[#allocation2 + $0x130] sm:$0x3] %vm770, 0.0
        %808 = vst.msk [vmem:[#allocation2 + $0x138] sm:$0xff] %vm767, 0.0
        %809 = vst.msk [vmem:[#allocation2 + $0x140] sm:$0xff] %vm767, 0.0
        %810 = vst.msk [vmem:[#allocation2 + $0x148] sm:$0x3] %vm770, 0.0
        %811 = vst.msk [vmem:[#allocation2 + $0x150] sm:$0xff] %vm767, 0.0
        %812 = vst.msk [vmem:[#allocation2 + $0x158] sm:$0xff] %vm767, 0.0
        %813 = vst.msk [vmem:[#allocation2 + $0x160] sm:$0x3] %vm770, 0.0
        %814 = vst.msk [vmem:[#allocation2 + $0x168] sm:$0xff] %vm767, 0.0
        %815 = vst.msk [vmem:[#allocation2 + $0x170] sm:$0xff] %vm767, 0.0
        %816 = vst.msk [vmem:[#allocation2 + $0x178] sm:$0x3] %vm770, 0.0
        %817 = vst.msk [vmem:[#allocation2 + $0x180] sm:$0xff] %vm767, 0.0
        %818 = vst.msk [vmem:[#allocation2 + $0x188] sm:$0xff] %vm767, 0.0
        %819 = vst.msk [vmem:[#allocation2 + $0x190] sm:$0x3] %vm770, 0.0
        %820 = vst.msk [vmem:[#allocation2 + $0x198] sm:$0xff] %vm767, 0.0
        %821 = vst.msk [vmem:[#allocation2 + $0x1a0] sm:$0xff] %vm767, 0.0
        %822 = vst.msk [vmem:[#allocation2 + $0x1a8] sm:$0x3] %vm770, 0.0
      $region52: #{dense_block_forward.3} parent=47 // pred_fallthru
        _
      %s823 = scalar_lea.vmem [#allocation2], 24
      %vm824 = vcmask 64512
      %825 = vst.msk [vmem:[%s823 + $0x1] sm:$0xff] %vm824, %v731
      %826 = vst.msk [vmem:[%s823 + $0x9] sm:$0xff] %vm824, %v732
      %827 = vst.msk [vmem:[%s823 + $0x19] sm:$0xff] %vm824, %v733
      %828 = vst.msk [vmem:[%s823 + $0x21] sm:$0xff] %vm824, %v734
      %829 = vst.msk [vmem:[%s823 + $0x31] sm:$0xff] %vm824, %v735
      %830 = vst.msk [vmem:[%s823 + $0x39] sm:$0xff] %vm824, %v736
      %831 = vst.msk [vmem:[%s823 + $0x49] sm:$0xff] %vm824, %v737
      %832 = vst.msk [vmem:[%s823 + $0x51] sm:$0xff] %vm824, %v738
      %833 = vst.msk [vmem:[%s823 + $0x61] sm:$0xff] %vm824, %v739
      %834 = vst.msk [vmem:[%s823 + $0x69] sm:$0xff] %vm824, %v740
      %835 = vst.msk [vmem:[%s823 + $0x79] sm:$0xff] %vm824, %v741
      %836 = vst.msk [vmem:[%s823 + $0x81] sm:$0xff] %vm824, %v742
      %837 = vst.msk [vmem:[%s823 + $0x91] sm:$0xff] %vm824, %v743
      %838 = vst.msk [vmem:[%s823 + $0x99] sm:$0xff] %vm824, %v744
      %839 = vst.msk [vmem:[%s823 + $0xa9] sm:$0xff] %vm824, %v745
      %840 = vst.msk [vmem:[%s823 + $0xb1] sm:$0xff] %vm824, %v746
      %841 = vst.msk [vmem:[%s823 + $0xc1] sm:$0xff] %vm824, %v747
      %842 = vst.msk [vmem:[%s823 + $0xc9] sm:$0xff] %vm824, %v748
      %843 = vst.msk [vmem:[%s823 + $0xd9] sm:$0xff] %vm824, %v749
      %844 = vst.msk [vmem:[%s823 + $0xe1] sm:$0xff] %vm824, %v750
      %845 = vst.msk [vmem:[%s823 + $0xf1] sm:$0xff] %vm824, %v751
      %846 = vst.msk [vmem:[%s823 + $0xf9] sm:$0xff] %vm824, %v752
      %847 = vst.msk [vmem:[%s823 + $0x109] sm:$0xff] %vm824, %v753
      %848 = vst.msk [vmem:[%s823 + $0x111] sm:$0xff] %vm824, %v754
      %849 = vst.msk [vmem:[%s823 + $0x121] sm:$0xff] %vm824, %v755
      %850 = vst.msk [vmem:[%s823 + $0x129] sm:$0xff] %vm824, %v756
      %851 = vst.msk [vmem:[%s823 + $0x139] sm:$0xff] %vm824, %v757
      %852 = vst.msk [vmem:[%s823 + $0x141] sm:$0xff] %vm824, %v758
      %853 = vst.msk [vmem:[%s823 + $0x151] sm:$0xff] %vm824, %v759
      %854 = vst.msk [vmem:[%s823 + $0x159] sm:$0xff] %vm824, %v760
      %855 = vst.msk [vmem:[%s823 + $0x169] sm:$0xff] %vm824, %v761
      %856 = vst.msk [vmem:[%s823 + $0x171] sm:$0xff] %vm824, %v762
      %v857 = vld [vmem:[%s6] sm:$0xf]
      %v858 = vld [vmem:[%s6 + $0x4] sm:$0xf]
      %v859 = vld [vmem:[%s6 + $0x8] sm:$0xf]
      %v860 = vld [vmem:[%s6 + $0xc] sm:$0xf]
      %v861 = vld [vmem:[%s6 + $0x10] sm:$0xf]
      %v862 = vld [vmem:[%s6 + $0x14] sm:$0xf]
      %v863 = vld [vmem:[%s6 + $0x18] sm:$0xf]
      %v864 = vld [vmem:[%s6 + $0x1c] sm:$0xf]
      %v865 = vld [vmem:[%s6 + $0x20] sm:$0xf]
      %v866 = vld [vmem:[#allocation2] sm:$0xff]
      %v867 = vld [vmem:[#allocation2 + $0x8] sm:$0xff]
      %v868 = vld [vmem:[#allocation2 + $0x18] sm:$0xff]
      %v869 = vld [vmem:[#allocation2 + $0x20] sm:$0xff]
      %v870 = vld [vmem:[#allocation2 + $0x30] sm:$0xff]
      %v871 = vld [vmem:[#allocation2 + $0x38] sm:$0xff]
      %v872 = vld [vmem:[#allocation2 + $0x48] sm:$0xff]
      %v873 = vld [vmem:[#allocation2 + $0x50] sm:$0xff]
      %v874 = vld [vmem:[#allocation2 + $0x60] sm:$0xff]
      %v875 = vld [vmem:[#allocation2 + $0x68] sm:$0xff]
      %v876 = vld [vmem:[#allocation2 + $0x78] sm:$0xff]
      %v877 = vld [vmem:[#allocation2 + $0x80] sm:$0xff]
      %v878 = vld [vmem:[#allocation2 + $0x90] sm:$0xff]
      %v879 = vld [vmem:[#allocation2 + $0x98] sm:$0xff]
      %v880 = vld [vmem:[#allocation2 + $0xa8] sm:$0xff]
      %v881 = vld [vmem:[#allocation2 + $0xb0] sm:$0xff]
      %v882 = vld [vmem:[#allocation2 + $0xc0] sm:$0xff]
      %v883 = vld [vmem:[#allocation2 + $0xc8] sm:$0xff]
      %v884 = vld [vmem:[#allocation2 + $0xd8] sm:$0xff]
      %v885 = vld [vmem:[#allocation2 + $0xe0] sm:$0xff]
      %v886 = vld [vmem:[#allocation2 + $0xf0] sm:$0xff]
      %v887 = vld [vmem:[#allocation2 + $0xf8] sm:$0xff]
      %v888 = vld [vmem:[#allocation2 + $0x108] sm:$0xff]
      %v889 = vld [vmem:[#allocation2 + $0x110] sm:$0xff]
      %v890 = vld [vmem:[#allocation2 + $0x120] sm:$0xff]
      %v891 = vld [vmem:[#allocation2 + $0x128] sm:$0xff]
      %v892 = vld [vmem:[#allocation2 + $0x138] sm:$0xff]
      %v893 = vld [vmem:[#allocation2 + $0x140] sm:$0xff]
      %v894 = vld [vmem:[#allocation2 + $0x150] sm:$0xff]
      %v895 = vld [vmem:[#allocation2 + $0x158] sm:$0xff]
      %v896 = vld [vmem:[#allocation2 + $0x168] sm:$0xff]
      %v897 = vld [vmem:[#allocation2 + $0x170] sm:$0xff]
      %v898 = vpack.c.bf16 %v867, %v866
      %v899 = vpack.c.bf16 %v869, %v868
      %v900 = vpack.c.bf16 %v871, %v870
      %v901 = vpack.c.bf16 %v873, %v872
      %v902 = vpack.c.bf16 %v875, %v874
      %v903 = vpack.c.bf16 %v877, %v876
      %v904 = vpack.c.bf16 %v879, %v878
      %v905 = vpack.c.bf16 %v881, %v880
      %v906 = vpack.c.bf16 %v883, %v882
      %v907 = vpack.c.bf16 %v885, %v884
      %v908 = vpack.c.bf16 %v887, %v886
      %v909 = vpack.c.bf16 %v889, %v888
      %v910 = vpack.c.bf16 %v891, %v890
      %v911 = vpack.c.bf16 %v893, %v892
      %v912 = vpack.c.bf16 %v895, %v894
      %v913 = vpack.c.bf16 %v897, %v896
      %v914 = vld [vmem:[#allocation2 + $0x1] sm:$0xff]
      %v915 = vld [vmem:[#allocation2 + $0x9] sm:$0xff]
      %v916 = vld [vmem:[#allocation2 + $0x19] sm:$0xff]
      %v917 = vld [vmem:[#allocation2 + $0x21] sm:$0xff]
      %v918 = vld [vmem:[#allocation2 + $0x31] sm:$0xff]
      %v919 = vld [vmem:[#allocation2 + $0x39] sm:$0xff]
      %v920 = vld [vmem:[#allocation2 + $0x49] sm:$0xff]
      %v921 = vld [vmem:[#allocation2 + $0x51] sm:$0xff]
      %v922 = vld [vmem:[#allocation2 + $0x61] sm:$0xff]
      %v923 = vld [vmem:[#allocation2 + $0x69] sm:$0xff]
      %v924 = vld [vmem:[#allocation2 + $0x79] sm:$0xff]
      %v925 = vld [vmem:[#allocation2 + $0x81] sm:$0xff]
      %v926 = vld [vmem:[#allocation2 + $0x91] sm:$0xff]
      %v927 = vld [vmem:[#allocation2 + $0x99] sm:$0xff]
      %v928 = vld [vmem:[#allocation2 + $0xa9] sm:$0xff]
      %v929 = vld [vmem:[#allocation2 + $0xb1] sm:$0xff]
      %v930 = vld [vmem:[#allocation2 + $0xc1] sm:$0xff]
      %v931 = vld [vmem:[#allocation2 + $0xc9] sm:$0xff]
      %v932 = vld [vmem:[#allocation2 + $0xd9] sm:$0xff]
      %v933 = vld [vmem:[#allocation2 + $0xe1] sm:$0xff]
      %v934 = vld [vmem:[#allocation2 + $0xf1] sm:$0xff]
      %v935 = vld [vmem:[#allocation2 + $0xf9] sm:$0xff]
      %v936 = vld [vmem:[#allocation2 + $0x109] sm:$0xff]
      %v937 = vld [vmem:[#allocation2 + $0x111] sm:$0xff]
      %v938 = vld [vmem:[#allocation2 + $0x121] sm:$0xff]
      %v939 = vld [vmem:[#allocation2 + $0x129] sm:$0xff]
      %v940 = vld [vmem:[#allocation2 + $0x139] sm:$0xff]
      %v941 = vld [vmem:[#allocation2 + $0x141] sm:$0xff]
      %v942 = vld [vmem:[#allocation2 + $0x151] sm:$0xff]
      %v943 = vld [vmem:[#allocation2 + $0x159] sm:$0xff]
      %v944 = vld [vmem:[#allocation2 + $0x169] sm:$0xff]
      %v945 = vld [vmem:[#allocation2 + $0x171] sm:$0xff]
      %v946 = vpack.c.bf16 %v915, %v914
      %v947 = vpack.c.bf16 %v917, %v916
      %v948 = vpack.c.bf16 %v919, %v918
      %v949 = vpack.c.bf16 %v921, %v920
      %v950 = vpack.c.bf16 %v923, %v922
      %v951 = vpack.c.bf16 %v925, %v924
      %v952 = vpack.c.bf16 %v927, %v926
      %v953 = vpack.c.bf16 %v929, %v928
      %v954 = vpack.c.bf16 %v931, %v930
      %v955 = vpack.c.bf16 %v933, %v932
      %v956 = vpack.c.bf16 %v935, %v934
      %v957 = vpack.c.bf16 %v937, %v936
      %v958 = vpack.c.bf16 %v939, %v938
      %v959 = vpack.c.bf16 %v941, %v940
      %v960 = vpack.c.bf16 %v943, %v942
      %v961 = vpack.c.bf16 %v945, %v944
      %v963 = vsel %vm824, %v946, 0
      %v966 = vsel %vm824, %v947, 0
      %v969 = vsel %vm824, %v948, 0
      %v972 = vsel %vm824, %v949, 0
      %v975 = vsel %vm824, %v950, 0
      %v978 = vsel %vm824, %v951, 0
      %v981 = vsel %vm824, %v952, 0
      %v984 = vsel %vm824, %v953, 0
      %v987 = vsel %vm824, %v954, 0
      %v990 = vsel %vm824, %v955, 0
      %v993 = vsel %vm824, %v956, 0
      %v996 = vsel %vm824, %v957, 0
      %v999 = vsel %vm824, %v958, 0
      %v1002 = vsel %vm824, %v959, 0
      %v1005 = vsel %vm824, %v960, 0
      %v1008 = vsel %vm824, %v961, 0
      %vm1010 = vcmask 1043456
      %v1012 = vsel %vm1010, %v858, 0
      %1014 = vmatprep.subr.bf16.mxu0 0
      %1015 = vmatpush1.bf16.msra.mxu0 %v1012
      %1016 = vmatprep.subr.bf16.mxu0 0
      %1017 = vmatpush1.bf16.msra.mxu0 0
      %1018 = vmatprep.subr.bf16.mxu0 0
      %1019 = vmatpush1.bf16.msra.mxu0 0
      %1020 = vmatprep.subr.bf16.mxu0 0
      %1021 = vmatpush1.bf16.msra.mxu0 0
      %1022 = vmatprep.subr.bf16.mxu0 0
      %1023 = vmatpush1.bf16.msra.mxu0 0
      %1024 = vmatprep.subr.bf16.mxu0 0
      %1025 = vmatpush1.bf16.msra.mxu0 0
      %1026 = vmatprep.subr.bf16.mxu0 0
      %1027 = vmatpush1.bf16.msra.mxu0 0
      %1028 = vmatprep.subr.bf16.mxu0 0
      %1029 = vmatpush1.bf16.msra.mxu0 0
      %1030 = vmatprep.subr.bf16.mxu0 0
      %1031 = vmatpush1.bf16.msra.mxu0 0
      %1032 = vmatprep.subr.bf16.mxu0 0
      %1033 = vmatpush1.bf16.msra.mxu0 0
      %1034 = vmatprep.subr.bf16.mxu0 0
      %1035 = vmatpush1.bf16.msra.mxu0 0
      %1036 = vmatprep.subr.bf16.mxu0 0
      %1037 = vmatpush1.bf16.msra.mxu0 0
      %1038 = vmatprep.subr.bf16.mxu0 0
      %1039 = vmatpush1.bf16.msra.mxu0 0
      %1040 = vmatprep.subr.bf16.mxu0 0
      %1041 = vmatpush1.bf16.msra.mxu0 0
      %1042 = vmatprep.subr.bf16.mxu0 0
      %1043 = vmatpush1.bf16.msra.mxu0 0
      %1044 = vmatprep.subr.bf16.mxu0 0
      %1045 = vmatpush1.bf16.msra.mxu0 0
      %1046 = vmatprep.mubr.bf16.mxu0 0
      %1047 = vmatmul.mubr.bf16.gmra.mrb[0].mxu0 %v963
      %v1048 = vpop.f32.mrb[0].mxu0
      %v1049 = vadd.f32 0.0, %v1048
      %v1050 = vpop.f32.mrb[0].mxu0
      %v1051 = vpop.f32.mrb[0].mxu0
      %v1052 = vadd.f32 0.0, %v1051
      %v1053 = vpop.f32.mrb[0].mxu0
      %1054 = vmatprep.mubr.bf16.mxu0 0
      %1055 = vmatmul.mubr.bf16.gmra.mrb[0].mxu0 %v966
      %v1056 = vpop.f32.mrb[0].mxu0
      %v1057 = vadd.f32 0.0, %v1056
      %v1058 = vpop.f32.mrb[0].mxu0
      %v1059 = vpop.f32.mrb[0].mxu0
      %v1060 = vadd.f32 0.0, %v1059
      %v1061 = vpop.f32.mrb[0].mxu0
      %1062 = vmatprep.mubr.bf16.mxu0 0
      %1063 = vmatmul.mubr.bf16.gmra.mrb[0].mxu0 %v969
      %v1064 = vpop.f32.mrb[0].mxu0
      %v1065 = vadd.f32 0.0, %v1064
      %v1066 = vpop.f32.mrb[0].mxu0
      %v1067 = vpop.f32.mrb[0].mxu0
      %v1068 = vadd.f32 0.0, %v1067
      %v1069 = vpop.f32.mrb[0].mxu0
      %1070 = vmatprep.mubr.bf16.mxu0 0
      %1071 = vmatmul.mubr.bf16.gmra.mrb[0].mxu0 %v972
      %v1072 = vpop.f32.mrb[0].mxu0
      %v1073 = vadd.f32 0.0, %v1072
      %v1074 = vpop.f32.mrb[0].mxu0
      %v1075 = vpop.f32.mrb[0].mxu0
      %v1076 = vadd.f32 0.0, %v1075
      %v1077 = vpop.f32.mrb[0].mxu0
      %1078 = vmatprep.mubr.bf16.mxu0 0
      %1079 = vmatmul.mubr.bf16.gmra.mrb[0].mxu0 %v975
      %v1080 = vpop.f32.mrb[0].mxu0
      %v1081 = vadd.f32 0.0, %v1080
      %v1082 = vpop.f32.mrb[0].mxu0
      %v1083 = vpop.f32.mrb[0].mxu0
      %v1084 = vadd.f32 0.0, %v1083
      %v1085 = vpop.f32.mrb[0].mxu0
      %1086 = vmatprep.mubr.bf16.mxu0 0
      %1087 = vmatmul.mubr.bf16.gmra.mrb[0].mxu0 %v978
      %v1088 = vpop.f32.mrb[0].mxu0
      %v1089 = vadd.f32 0.0, %v1088
      %v1090 = vpop.f32.mrb[0].mxu0
      %v1091 = vpop.f32.mrb[0].mxu0
      %v1092 = vadd.f32 0.0, %v1091
      %v1093 = vpop.f32.mrb[0].mxu0
      %1094 = vmatprep.mubr.bf16.mxu0 0
      %1095 = vmatmul.mubr.bf16.gmra.mrb[0].mxu0 %v981
      %v1096 = vpop.f32.mrb[0].mxu0
      %v1097 = vadd.f32 0.0, %v1096
      %v1098 = vpop.f32.mrb[0].mxu0
      %v1099 = vpop.f32.mrb[0].mxu0
      %v1100 = vadd.f32 0.0, %v1099
      %v1101 = vpop.f32.mrb[0].mxu0
      %1102 = vmatprep.mubr.bf16.mxu0 0
      %1103 = vmatmul.mubr.bf16.gmra.mrb[0].mxu0 %v984
      %v1104 = vpop.f32.mrb[0].mxu0
      %v1105 = vadd.f32 0.0, %v1104
      %v1106 = vpop.f32.mrb[0].mxu0
      %v1107 = vpop.f32.mrb[0].mxu0
      %v1108 = vadd.f32 0.0, %v1107
      %v1109 = vpop.f32.mrb[0].mxu0
      %1110 = vmatprep.mubr.bf16.mxu0 0
      %1111 = vmatmul.mubr.bf16.gmra.mrb[0].mxu0 %v987
      %v1112 = vpop.f32.mrb[0].mxu0
      %v1113 = vadd.f32 0.0, %v1112
      %v1114 = vpop.f32.mrb[0].mxu0
      %v1115 = vpop.f32.mrb[0].mxu0
      %v1116 = vadd.f32 0.0, %v1115
      %v1117 = vpop.f32.mrb[0].mxu0
      %1118 = vmatprep.mubr.bf16.mxu0 0
      %1119 = vmatmul.mubr.bf16.gmra.mrb[0].mxu0 %v990
      %v1120 = vpop.f32.mrb[0].mxu0
      %v1121 = vadd.f32 0.0, %v1120
      %v1122 = vpop.f32.mrb[0].mxu0
      %v1123 = vpop.f32.mrb[0].mxu0
      %v1124 = vadd.f32 0.0, %v1123
      %v1125 = vpop.f32.mrb[0].mxu0
      %1126 = vmatprep.mubr.bf16.mxu0 0
      %1127 = vmatmul.mubr.bf16.gmra.mrb[0].mxu0 %v993
      %v1128 = vpop.f32.mrb[0].mxu0
      %v1129 = vadd.f32 0.0, %v1128
      %v1130 = vpop.f32.mrb[0].mxu0
      %v1131 = vpop.f32.mrb[0].mxu0
      %v1132 = vadd.f32 0.0, %v1131
      %v1133 = vpop.f32.mrb[0].mxu0
      %1134 = vmatprep.mubr.bf16.mxu0 0
      %1135 = vmatmul.mubr.bf16.gmra.mrb[0].mxu0 %v996
      %v1136 = vpop.f32.mrb[0].mxu0
      %v1137 = vadd.f32 0.0, %v1136
      %v1138 = vpop.f32.mrb[0].mxu0
      %v1139 = vpop.f32.mrb[0].mxu0
      %v1140 = vadd.f32 0.0, %v1139
      %v1141 = vpop.f32.mrb[0].mxu0
      %1142 = vmatprep.mubr.bf16.mxu0 0
      %1143 = vmatmul.mubr.bf16.gmra.mrb[0].mxu0 %v999
      %v1144 = vpop.f32.mrb[0].mxu0
      %v1145 = vadd.f32 0.0, %v1144
      %v1146 = vpop.f32.mrb[0].mxu0
      %v1147 = vpop.f32.mrb[0].mxu0
      %v1148 = vadd.f32 0.0, %v1147
      %v1149 = vpop.f32.mrb[0].mxu0
      %1150 = vmatprep.mubr.bf16.mxu0 0
      %1151 = vmatmul.mubr.bf16.gmra.mrb[0].mxu0 %v1002
      %v1152 = vpop.f32.mrb[0].mxu0
      %v1153 = vadd.f32 0.0, %v1152
      %v1154 = vpop.f32.mrb[0].mxu0
      %v1155 = vpop.f32.mrb[0].mxu0
      %v1156 = vadd.f32 0.0, %v1155
      %v1157 = vpop.f32.mrb[0].mxu0
      %1158 = vmatprep.mubr.bf16.mxu0 0
      %1159 = vmatmul.mubr.bf16.gmra.mrb[0].mxu0 %v1005
      %v1160 = vpop.f32.mrb[0].mxu0
      %v1161 = vadd.f32 0.0, %v1160
      %v1162 = vpop.f32.mrb[0].mxu0
      %v1163 = vpop.f32.mrb[0].mxu0
      %v1164 = vadd.f32 0.0, %v1163
      %v1165 = vpop.f32.mrb[0].mxu0
      %1166 = vmatprep.mubr.bf16.mxu0 0
      %1167 = vmatmul.mubr.bf16.gmra.mrb[0].mxu0 %v1008
      %v1168 = vpop.f32.mrb[0].mxu0
      %v1169 = vadd.f32 0.0, %v1168
      %v1170 = vpop.f32.mrb[0].mxu0
      %v1171 = vpop.f32.mrb[0].mxu0
      %v1172 = vadd.f32 0.0, %v1171
      %v1173 = vpop.f32.mrb[0].mxu0
      %1174 = vdwg.mxu0
      %v1176 = vsel %vm824, %v898, 0
      %v1179 = vsel %vm824, %v899, 0
      %v1182 = vsel %vm824, %v900, 0
      %v1185 = vsel %vm824, %v901, 0
      %v1188 = vsel %vm824, %v902, 0
      %v1191 = vsel %vm824, %v903, 0
      %v1194 = vsel %vm824, %v904, 0
      %v1197 = vsel %vm824, %v905, 0
      %v1200 = vsel %vm824, %v906, 0
      %v1203 = vsel %vm824, %v907, 0
      %v1206 = vsel %vm824, %v908, 0
      %v1209 = vsel %vm824, %v909, 0
      %v1212 = vsel %vm824, %v910, 0
      %v1215 = vsel %vm824, %v911, 0
      %v1218 = vsel %vm824, %v912, 0
      %v1221 = vsel %vm824, %v913, 0
      %v1224 = vsel %vm1010, %v857, 0
      %1226 = vmatprep.subr.bf16.mxu0 0
      %1227 = vmatpush1.bf16.msra.mxu0 %v1224
      %1228 = vmatprep.subr.bf16.mxu0 0
      %1229 = vmatpush1.bf16.msra.mxu0 0
      %1230 = vmatprep.subr.bf16.mxu0 0
      %1231 = vmatpush1.bf16.msra.mxu0 0
      %1232 = vmatprep.subr.bf16.mxu0 0
      %1233 = vmatpush1.bf16.msra.mxu0 0
      %1234 = vmatprep.subr.bf16.mxu0 0
      %1235 = vmatpush1.bf16.msra.mxu0 0
      %1236 = vmatprep.subr.bf16.mxu0 0
      %1237 = vmatpush1.bf16.msra.mxu0 0
      %1238 = vmatprep.subr.bf16.mxu0 0
      %1239 = vmatpush1.bf16.msra.mxu0 0
      %1240 = vmatprep.subr.bf16.mxu0 0
      %1241 = vmatpush1.bf16.msra.mxu0 0
      %1242 = vmatprep.subr.bf16.mxu0 0
      %1243 = vmatpush1.bf16.msra.mxu0 0
      %1244 = vmatprep.subr.bf16.mxu0 0
      %1245 = vmatpush1.bf16.msra.mxu0 0
      %1246 = vmatprep.subr.bf16.mxu0 0
      %1247 = vmatpush1.bf16.msra.mxu0 0
      %1248 = vmatprep.subr.bf16.mxu0 0
      %1249 = vmatpush1.bf16.msra.mxu0 0
      %1250 = vmatprep.subr.bf16.mxu0 0
      %1251 = vmatpush1.bf16.msra.mxu0 0
      %1252 = vmatprep.subr.bf16.mxu0 0
      %1253 = vmatpush1.bf16.msra.mxu0 0
      %1254 = vmatprep.subr.bf16.mxu0 0
      %1255 = vmatpush1.bf16.msra.mxu0 0
      %1256 = vmatprep.subr.bf16.mxu0 0
      %1257 = vmatpush1.bf16.msra.mxu0 0
      %1258 = vmatprep.mubr.bf16.mxu0 0
      %1259 = vmatmul.mubr.bf16.gmra.mrb[0].mxu0 %v1176
      %v1260 = vpop.f32.mrb[0].mxu0
      %v1261 = vadd.f32 %v1049, %v1260
      %v1262 = vpop.f32.mrb[0].mxu0
      %v1263 = vpop.f32.mrb[0].mxu0
      %v1264 = vadd.f32 %v1052, %v1263
      %v1265 = vpop.f32.mrb[0].mxu0
      %1266 = vmatprep.mubr.bf16.mxu0 0
      %1267 = vmatmul.mubr.bf16.gmra.mrb[0].mxu0 %v1179
      %v1268 = vpop.f32.mrb[0].mxu0
      %v1269 = vadd.f32 %v1057, %v1268
      %v1270 = vpop.f32.mrb[0].mxu0
      %v1271 = vpop.f32.mrb[0].mxu0
      %v1272 = vadd.f32 %v1060, %v1271
      %v1273 = vpop.f32.mrb[0].mxu0
      %1274 = vmatprep.mubr.bf16.mxu0 0
      %1275 = vmatmul.mubr.bf16.gmra.mrb[0].mxu0 %v1182
      %v1276 = vpop.f32.mrb[0].mxu0
      %v1277 = vadd.f32 %v1065, %v1276
      %v1278 = vpop.f32.mrb[0].mxu0
      %v1279 = vpop.f32.mrb[0].mxu0
      %v1280 = vadd.f32 %v1068, %v1279
      %v1281 = vpop.f32.mrb[0].mxu0
      %1282 = vmatprep.mubr.bf16.mxu0 0
      %1283 = vmatmul.mubr.bf16.gmra.mrb[0].mxu0 %v1185
      %v1284 = vpop.f32.mrb[0].mxu0
      %v1285 = vadd.f32 %v1073, %v1284
      %v1286 = vpop.f32.mrb[0].mxu0
      %v1287 = vpop.f32.mrb[0].mxu0
      %v1288 = vadd.f32 %v1076, %v1287
      %v1289 = vpop.f32.mrb[0].mxu0
      %1290 = vmatprep.mubr.bf16.mxu0 0
      %1291 = vmatmul.mubr.bf16.gmra.mrb[0].mxu0 %v1188
      %v1292 = vpop.f32.mrb[0].mxu0
      %v1293 = vadd.f32 %v1081, %v1292
      %v1294 = vpop.f32.mrb[0].mxu0
      %v1295 = vpop.f32.mrb[0].mxu0
      %v1296 = vadd.f32 %v1084, %v1295
      %v1297 = vpop.f32.mrb[0].mxu0
      %1298 = vmatprep.mubr.bf16.mxu0 0
      %1299 = vmatmul.mubr.bf16.gmra.mrb[0].mxu0 %v1191
      %v1300 = vpop.f32.mrb[0].mxu0
      %v1301 = vadd.f32 %v1089, %v1300
      %v1302 = vpop.f32.mrb[0].mxu0
      %v1303 = vpop.f32.mrb[0].mxu0
      %v1304 = vadd.f32 %v1092, %v1303
      %v1305 = vpop.f32.mrb[0].mxu0
      %1306 = vmatprep.mubr.bf16.mxu0 0
      %1307 = vmatmul.mubr.bf16.gmra.mrb[0].mxu0 %v1194
      %v1308 = vpop.f32.mrb[0].mxu0
      %v1309 = vadd.f32 %v1097, %v1308
      %v1310 = vpop.f32.mrb[0].mxu0
      %v1311 = vpop.f32.mrb[0].mxu0
      %v1312 = vadd.f32 %v1100, %v1311
      %v1313 = vpop.f32.mrb[0].mxu0
      %1314 = vmatprep.mubr.bf16.mxu0 0
      %1315 = vmatmul.mubr.bf16.gmra.mrb[0].mxu0 %v1197
      %v1316 = vpop.f32.mrb[0].mxu0
      %v1317 = vadd.f32 %v1105, %v1316
      %v1318 = vpop.f32.mrb[0].mxu0
      %v1319 = vpop.f32.mrb[0].mxu0
      %v1320 = vadd.f32 %v1108, %v1319
      %v1321 = vpop.f32.mrb[0].mxu0
      %1322 = vmatprep.mubr.bf16.mxu0 0
      %1323 = vmatmul.mubr.bf16.gmra.mrb[0].mxu0 %v1200
      %v1324 = vpop.f32.mrb[0].mxu0
      %v1325 = vadd.f32 %v1113, %v1324
      %v1326 = vpop.f32.mrb[0].mxu0
      %v1327 = vpop.f32.mrb[0].mxu0
      %v1328 = vadd.f32 %v1116, %v1327
      %v1329 = vpop.f32.mrb[0].mxu0
      %1330 = vmatprep.mubr.bf16.mxu0 0
      %1331 = vmatmul.mubr.bf16.gmra.mrb[0].mxu0 %v1203
      %v1332 = vpop.f32.mrb[0].mxu0
      %v1333 = vadd.f32 %v1121, %v1332
      %v1334 = vpop.f32.mrb[0].mxu0
      %v1335 = vpop.f32.mrb[0].mxu0
      %v1336 = vadd.f32 %v1124, %v1335
      %v1337 = vpop.f32.mrb[0].mxu0
      %1338 = vmatprep.mubr.bf16.mxu0 0
      %1339 = vmatmul.mubr.bf16.gmra.mrb[0].mxu0 %v1206
      %v1340 = vpop.f32.mrb[0].mxu0
      %v1341 = vadd.f32 %v1129, %v1340
      %v1342 = vpop.f32.mrb[0].mxu0
      %v1343 = vpop.f32.mrb[0].mxu0
      %v1344 = vadd.f32 %v1132, %v1343
      %v1345 = vpop.f32.mrb[0].mxu0
      %1346 = vmatprep.mubr.bf16.mxu0 0
      %1347 = vmatmul.mubr.bf16.gmra.mrb[0].mxu0 %v1209
      %v1348 = vpop.f32.mrb[0].mxu0
      %v1349 = vadd.f32 %v1137, %v1348
      %v1350 = vpop.f32.mrb[0].mxu0
      %v1351 = vpop.f32.mrb[0].mxu0
      %v1352 = vadd.f32 %v1140, %v1351
      %v1353 = vpop.f32.mrb[0].mxu0
      %1354 = vmatprep.mubr.bf16.mxu0 0
      %1355 = vmatmul.mubr.bf16.gmra.mrb[0].mxu0 %v1212
      %v1356 = vpop.f32.mrb[0].mxu0
      %v1357 = vadd.f32 %v1145, %v1356
      %v1358 = vpop.f32.mrb[0].mxu0
      %v1359 = vpop.f32.mrb[0].mxu0
      %v1360 = vadd.f32 %v1148, %v1359
      %v1361 = vpop.f32.mrb[0].mxu0
      %1362 = vmatprep.mubr.bf16.mxu0 0
      %1363 = vmatmul.mubr.bf16.gmra.mrb[0].mxu0 %v1215
      %v1364 = vpop.f32.mrb[0].mxu0
      %v1365 = vadd.f32 %v1153, %v1364
      %v1366 = vpop.f32.mrb[0].mxu0
      %v1367 = vpop.f32.mrb[0].mxu0
      %v1368 = vadd.f32 %v1156, %v1367
      %v1369 = vpop.f32.mrb[0].mxu0
      %1370 = vmatprep.mubr.bf16.mxu0 0
      %1371 = vmatmul.mubr.bf16.gmra.mrb[0].mxu0 %v1218
      %v1372 = vpop.f32.mrb[0].mxu0
      %v1373 = vadd.f32 %v1161, %v1372
      %v1374 = vpop.f32.mrb[0].mxu0
      %v1375 = vpop.f32.mrb[0].mxu0
      %v1376 = vadd.f32 %v1164, %v1375
      %v1377 = vpop.f32.mrb[0].mxu0
      %1378 = vmatprep.mubr.bf16.mxu0 0
      %1379 = vmatmul.mubr.bf16.gmra.mrb[0].mxu0 %v1221
      %v1380 = vpop.f32.mrb[0].mxu0
      %v1381 = vadd.f32 %v1169, %v1380
      %v1382 = vpop.f32.mrb[0].mxu0
      %v1383 = vpop.f32.mrb[0].mxu0
      %v1384 = vadd.f32 %v1172, %v1383
      %v1385 = vpop.f32.mrb[0].mxu0
      %1386 = vdwg.mxu0
      %v1387 = vld [vmem:[#allocation2 + $0x2] sm:$0xff]
      %v1388 = vld [vmem:[#allocation2 + $0xa] sm:$0xff]
      %v1389 = vld [vmem:[#allocation2 + $0x1a] sm:$0xff]
      %v1390 = vld [vmem:[#allocation2 + $0x22] sm:$0xff]
      %v1391 = vld [vmem:[#allocation2 + $0x32] sm:$0xff]
      %v1392 = vld [vmem:[#allocation2 + $0x3a] sm:$0xff]
      %v1393 = vld [vmem:[#allocation2 + $0x4a] sm:$0xff]
      %v1394 = vld [vmem:[#allocation2 + $0x52] sm:$0xff]
      %v1395 = vld [vmem:[#allocation2 + $0x62] sm:$0xff]
      %v1396 = vld [vmem:[#allocation2 + $0x6a] sm:$0xff]
      %v1397 = vld [vmem:[#allocation2 + $0x7a] sm:$0xff]
      %v1398 = vld [vmem:[#allocation2 + $0x82] sm:$0xff]
      %v1399 = vld [vmem:[#allocation2 + $0x92] sm:$0xff]
      %v1400 = vld [vmem:[#allocation2 + $0x9a] sm:$0xff]
      %v1401 = vld [vmem:[#allocation2 + $0xaa] sm:$0xff]
      %v1402 = vld [vmem:[#allocation2 + $0xb2] sm:$0xff]
      %v1403 = vld [vmem:[#allocation2 + $0xc2] sm:$0xff]
      %v1404 = vld [vmem:[#allocation2 + $0xca] sm:$0xff]
      %v1405 = vld [vmem:[#allocation2 + $0xda] sm:$0xff]
      %v1406 = vld [vmem:[#allocation2 + $0xe2] sm:$0xff]
      %v1407 = vld [vmem:[#allocation2 + $0xf2] sm:$0xff]
      %v1408 = vld [vmem:[#allocation2 + $0xfa] sm:$0xff]
      %v1409 = vld [vmem:[#allocation2 + $0x10a] sm:$0xff]
      %v1410 = vld [vmem:[#allocation2 + $0x112] sm:$0xff]
      %v1411 = vld [vmem:[#allocation2 + $0x122] sm:$0xff]
      %v1412 = vld [vmem:[#allocation2 + $0x12a] sm:$0xff]
      %v1413 = vld [vmem:[#allocation2 + $0x13a] sm:$0xff]
      %v1414 = vld [vmem:[#allocation2 + $0x142] sm:$0xff]
      %v1415 = vld [vmem:[#allocation2 + $0x152] sm:$0xff]
      %v1416 = vld [vmem:[#allocation2 + $0x15a] sm:$0xff]
      %v1417 = vld [vmem:[#allocation2 + $0x16a] sm:$0xff]
      %v1418 = vld [vmem:[#allocation2 + $0x172] sm:$0xff]
      %v1419 = vpack.c.bf16 %v1388, %v1387
      %v1420 = vpack.c.bf16 %v1390, %v1389
      %v1421 = vpack.c.bf16 %v1392, %v1391
      %v1422 = vpack.c.bf16 %v1394, %v1393
      %v1423 = vpack.c.bf16 %v1396, %v1395
      %v1424 = vpack.c.bf16 %v1398, %v1397
      %v1425 = vpack.c.bf16 %v1400, %v1399
      %v1426 = vpack.c.bf16 %v1402, %v1401
      %v1427 = vpack.c.bf16 %v1404, %v1403
      %v1428 = vpack.c.bf16 %v1406, %v1405
      %v1429 = vpack.c.bf16 %v1408, %v1407
      %v1430 = vpack.c.bf16 %v1410, %v1409
      %v1431 = vpack.c.bf16 %v1412, %v1411
      %v1432 = vpack.c.bf16 %v1414, %v1413
      %v1433 = vpack.c.bf16 %v1416, %v1415
      %v1434 = vpack.c.bf16 %v1418, %v1417
      %v1436 = vsel %vm824, %v1419, 0
      %v1439 = vsel %vm824, %v1420, 0
      %v1442 = vsel %vm824, %v1421, 0
      %v1445 = vsel %vm824, %v1422, 0
      %v1448 = vsel %vm824, %v1423, 0
      %v1451 = vsel %vm824, %v1424, 0
      %v1454 = vsel %vm824, %v1425, 0
      %v1457 = vsel %vm824, %v1426, 0
      %v1460 = vsel %vm824, %v1427, 0
      %v1463 = vsel %vm824, %v1428, 0
      %v1466 = vsel %vm824, %v1429, 0
      %v1469 = vsel %vm824, %v1430, 0
      %v1472 = vsel %vm824, %v1431, 0
      %v1475 = vsel %vm824, %v1432, 0
      %v1478 = vsel %vm824, %v1433, 0
      %v1481 = vsel %vm824, %v1434, 0
      %v1484 = vsel %vm1010, %v859, 0
      %1486 = vmatprep.subr.bf16.mxu0 0
      %1487 = vmatpush1.bf16.msra.mxu0 %v1484
      %1488 = vmatprep.subr.bf16.mxu0 0
      %1489 = vmatpush1.bf16.msra.mxu0 0
      %1490 = vmatprep.subr.bf16.mxu0 0
      %1491 = vmatpush1.bf16.msra.mxu0 0
      %1492 = vmatprep.subr.bf16.mxu0 0
      %1493 = vmatpush1.bf16.msra.mxu0 0
      %1494 = vmatprep.subr.bf16.mxu0 0
      %1495 = vmatpush1.bf16.msra.mxu0 0
      %1496 = vmatprep.subr.bf16.mxu0 0
      %1497 = vmatpush1.bf16.msra.mxu0 0
      %1498 = vmatprep.subr.bf16.mxu0 0
      %1499 = vmatpush1.bf16.msra.mxu0 0
      %1500 = vmatprep.subr.bf16.mxu0 0
      %1501 = vmatpush1.bf16.msra.mxu0 0
      %1502 = vmatprep.subr.bf16.mxu0 0
      %1503 = vmatpush1.bf16.msra.mxu0 0
      %1504 = vmatprep.subr.bf16.mxu0 0
      %1505 = vmatpush1.bf16.msra.mxu0 0
      %1506 = vmatprep.subr.bf16.mxu0 0
      %1507 = vmatpush1.bf16.msra.mxu0 0
      %1508 = vmatprep.subr.bf16.mxu0 0
      %1509 = vmatpush1.bf16.msra.mxu0 0
      %1510 = vmatprep.subr.bf16.mxu0 0
      %1511 = vmatpush1.bf16.msra.mxu0 0
      %1512 = vmatprep.subr.bf16.mxu0 0
      %1513 = vmatpush1.bf16.msra.mxu0 0
      %1514 = vmatprep.subr.bf16.mxu0 0
      %1515 = vmatpush1.bf16.msra.mxu0 0
      %1516 = vmatprep.subr.bf16.mxu0 0
      %1517 = vmatpush1.bf16.msra.mxu0 0
      %1518 = vmatprep.mubr.bf16.mxu0 0
      %1519 = vmatmul.mubr.bf16.gmra.mrb[0].mxu0 %v1436
      %v1520 = vpop.f32.mrb[0].mxu0
      %v1521 = vadd.f32 0.0, %v1520
      %v1522 = vpop.f32.mrb[0].mxu0
      %v1523 = vpop.f32.mrb[0].mxu0
      %v1524 = vadd.f32 0.0, %v1523
      %v1525 = vpop.f32.mrb[0].mxu0
      %1526 = vmatprep.mubr.bf16.mxu0 0
      %1527 = vmatmul.mubr.bf16.gmra.mrb[0].mxu0 %v1439
      %v1528 = vpop.f32.mrb[0].mxu0
      %v1529 = vadd.f32 0.0, %v1528
      %v1530 = vpop.f32.mrb[0].mxu0
      %v1531 = vpop.f32.mrb[0].mxu0
      %v1532 = vadd.f32 0.0, %v1531
      %v1533 = vpop.f32.mrb[0].mxu0
      %1534 = vmatprep.mubr.bf16.mxu0 0
      %1535 = vmatmul.mubr.bf16.gmra.mrb[0].mxu0 %v1442
      %v1536 = vpop.f32.mrb[0].mxu0
      %v1537 = vadd.f32 0.0, %v1536
      %v1538 = vpop.f32.mrb[0].mxu0
      %v1539 = vpop.f32.mrb[0].mxu0
      %v1540 = vadd.f32 0.0, %v1539
      %v1541 = vpop.f32.mrb[0].mxu0
      %1542 = vmatprep.mubr.bf16.mxu0 0
      %1543 = vmatmul.mubr.bf16.gmra.mrb[0].mxu0 %v1445
      %v1544 = vpop.f32.mrb[0].mxu0
      %v1545 = vadd.f32 0.0, %v1544
      %v1546 = vpop.f32.mrb[0].mxu0
      %v1547 = vpop.f32.mrb[0].mxu0
      %v1548 = vadd.f32 0.0, %v1547
      %v1549 = vpop.f32.mrb[0].mxu0
      %1550 = vmatprep.mubr.bf16.mxu0 0
      %1551 = vmatmul.mubr.bf16.gmra.mrb[0].mxu0 %v1448
      %v1552 = vpop.f32.mrb[0].mxu0
      %v1553 = vadd.f32 0.0, %v1552
      %v1554 = vpop.f32.mrb[0].mxu0
      %v1555 = vpop.f32.mrb[0].mxu0
      %v1556 = vadd.f32 0.0, %v1555
      %v1557 = vpop.f32.mrb[0].mxu0
      %1558 = vmatprep.mubr.bf16.mxu0 0
      %1559 = vmatmul.mubr.bf16.gmra.mrb[0].mxu0 %v1451
      %v1560 = vpop.f32.mrb[0].mxu0
      %v1561 = vadd.f32 0.0, %v1560
      %v1562 = vpop.f32.mrb[0].mxu0
      %v1563 = vpop.f32.mrb[0].mxu0
      %v1564 = vadd.f32 0.0, %v1563
      %v1565 = vpop.f32.mrb[0].mxu0
      %1566 = vmatprep.mubr.bf16.mxu0 0
      %1567 = vmatmul.mubr.bf16.gmra.mrb[0].mxu0 %v1454
      %v1568 = vpop.f32.mrb[0].mxu0
      %v1569 = vadd.f32 0.0, %v1568
      %v1570 = vpop.f32.mrb[0].mxu0
      %v1571 = vpop.f32.mrb[0].mxu0
      %v1572 = vadd.f32 0.0, %v1571
      %v1573 = vpop.f32.mrb[0].mxu0
      %1574 = vmatprep.mubr.bf16.mxu0 0
      %1575 = vmatmul.mubr.bf16.gmra.mrb[0].mxu0 %v1457
      %v1576 = vpop.f32.mrb[0].mxu0
      %v1577 = vadd.f32 0.0, %v1576
      %v1578 = vpop.f32.mrb[0].mxu0
      %v1579 = vpop.f32.mrb[0].mxu0
      %v1580 = vadd.f32 0.0, %v1579
      %v1581 = vpop.f32.mrb[0].mxu0
      %1582 = vmatprep.mubr.bf16.mxu0 0
      %1583 = vmatmul.mubr.bf16.gmra.mrb[0].mxu0 %v1460
      %v1584 = vpop.f32.mrb[0].mxu0
      %v1585 = vadd.f32 0.0, %v1584
      %v1586 = vpop.f32.mrb[0].mxu0
      %v1587 = vpop.f32.mrb[0].mxu0
      %v1588 = vadd.f32 0.0, %v1587
      %v1589 = vpop.f32.mrb[0].mxu0
      %1590 = vmatprep.mubr.bf16.mxu0 0
      %1591 = vmatmul.mubr.bf16.gmra.mrb[0].mxu0 %v1463
      %v1592 = vpop.f32.mrb[0].mxu0
      %v1593 = vadd.f32 0.0, %v1592
      %v1594 = vpop.f32.mrb[0].mxu0
      %v1595 = vpop.f32.mrb[0].mxu0
      %v1596 = vadd.f32 0.0, %v1595
      %v1597 = vpop.f32.mrb[0].mxu0
      %1598 = vmatprep.mubr.bf16.mxu0 0
      %1599 = vmatmul.mubr.bf16.gmra.mrb[0].mxu0 %v1466
      %v1600 = vpop.f32.mrb[0].mxu0
      %v1601 = vadd.f32 0.0, %v1600
      %v1602 = vpop.f32.mrb[0].mxu0
      %v1603 = vpop.f32.mrb[0].mxu0
      %v1604 = vadd.f32 0.0, %v1603
      %v1605 = vpop.f32.mrb[0].mxu0
      %1606 = vmatprep.mubr.bf16.mxu0 0
      %1607 = vmatmul.mubr.bf16.gmra.mrb[0].mxu0 %v1469
      %v1608 = vpop.f32.mrb[0].mxu0
      %v1609 = vadd.f32 0.0, %v1608
      %v1610 = vpop.f32.mrb[0].mxu0
      %v1611 = vpop.f32.mrb[0].mxu0
      %v1612 = vadd.f32 0.0, %v1611
      %v1613 = vpop.f32.mrb[0].mxu0
      %1614 = vmatprep.mubr.bf16.mxu0 0
      %1615 = vmatmul.mubr.bf16.gmra.mrb[0].mxu0 %v1472
      %v1616 = vpop.f32.mrb[0].mxu0
      %v1617 = vadd.f32 0.0, %v1616
      %v1618 = vpop.f32.mrb[0].mxu0
      %v1619 = vpop.f32.mrb[0].mxu0
      %v1620 = vadd.f32 0.0, %v1619
      %v1621 = vpop.f32.mrb[0].mxu0
      %1622 = vmatprep.mubr.bf16.mxu0 0
      %1623 = vmatmul.mubr.bf16.gmra.mrb[0].mxu0 %v1475
      %v1624 = vpop.f32.mrb[0].mxu0
      %v1625 = vadd.f32 0.0, %v1624
      %v1626 = vpop.f32.mrb[0].mxu0
      %v1627 = vpop.f32.mrb[0].mxu0
      %v1628 = vadd.f32 0.0, %v1627
      %v1629 = vpop.f32.mrb[0].mxu0
      %1630 = vmatprep.mubr.bf16.mxu0 0
      %1631 = vmatmul.mubr.bf16.gmra.mrb[0].mxu0 %v1478
      %v1632 = vpop.f32.mrb[0].mxu0
      %v1633 = vadd.f32 0.0, %v1632
      %v1634 = vpop.f32.mrb[0].mxu0
      %v1635 = vpop.f32.mrb[0].mxu0
      %v1636 = vadd.f32 0.0, %v1635
      %v1637 = vpop.f32.mrb[0].mxu0
      %1638 = vmatprep.mubr.bf16.mxu0 0
      %1639 = vmatmul.mubr.bf16.gmra.mrb[0].mxu0 %v1481
      %v1640 = vpop.f32.mrb[0].mxu0
      %v1641 = vadd.f32 0.0, %v1640
      %v1642 = vpop.f32.mrb[0].mxu0
      %v1643 = vpop.f32.mrb[0].mxu0
      %v1644 = vadd.f32 0.0, %v1643
      %v1645 = vpop.f32.mrb[0].mxu0
      %1646 = vdwg.mxu0
      %v1647 = vadd.f32 %v1261, %v1521
      %v1648 = vadd.f32 %v1264, %v1524
      %v1649 = vadd.f32 %v1269, %v1529
      %v1650 = vadd.f32 %v1272, %v1532
      %v1651 = vadd.f32 %v1277, %v1537
      %v1652 = vadd.f32 %v1280, %v1540
      %v1653 = vadd.f32 %v1285, %v1545
      %v1654 = vadd.f32 %v1288, %v1548
      %v1655 = vadd.f32 %v1293, %v1553
      %v1656 = vadd.f32 %v1296, %v1556
      %v1657 = vadd.f32 %v1301, %v1561
      %v1658 = vadd.f32 %v1304, %v1564
      %v1659 = vadd.f32 %v1309, %v1569
      %v1660 = vadd.f32 %v1312, %v1572
      %v1661 = vadd.f32 %v1317, %v1577
      %v1662 = vadd.f32 %v1320, %v1580
      %v1663 = vadd.f32 %v1325, %v1585
      %v1664 = vadd.f32 %v1328, %v1588
      %v1665 = vadd.f32 %v1333, %v1593
      %v1666 = vadd.f32 %v1336, %v1596
      %v1667 = vadd.f32 %v1341, %v1601
      %v1668 = vadd.f32 %v1344, %v1604
      %v1669 = vadd.f32 %v1349, %v1609
      %v1670 = vadd.f32 %v1352, %v1612
      %v1671 = vadd.f32 %v1357, %v1617
      %v1672 = vadd.f32 %v1360, %v1620
      %v1673 = vadd.f32 %v1365, %v1625
      %v1674 = vadd.f32 %v1368, %v1628
      %v1675 = vadd.f32 %v1373, %v1633
      %v1676 = vadd.f32 %v1376, %v1636
      %v1677 = vadd.f32 %v1381, %v1641
      %v1678 = vadd.f32 %v1384, %v1644
      %v1679 = vld [vmem:[%s823] sm:$0xff]
      %v1680 = vld [vmem:[%s823 + $0x8] sm:$0xff]
      %v1681 = vld [vmem:[%s823 + $0x18] sm:$0xff]
      %v1682 = vld [vmem:[%s823 + $0x20] sm:$0xff]
      %v1683 = vld [vmem:[%s823 + $0x30] sm:$0xff]
      %v1684 = vld [vmem:[%s823 + $0x38] sm:$0xff]
      %v1685 = vld [vmem:[%s823 + $0x48] sm:$0xff]
      %v1686 = vld [vmem:[%s823 + $0x50] sm:$0xff]
      %v1687 = vld [vmem:[%s823 + $0x60] sm:$0xff]
      %v1688 = vld [vmem:[%s823 + $0x68] sm:$0xff]
      %v1689 = vld [vmem:[%s823 + $0x78] sm:$0xff]
      %v1690 = vld [vmem:[%s823 + $0x80] sm:$0xff]
      %v1691 = vld [vmem:[%s823 + $0x90] sm:$0xff]
      %v1692 = vld [vmem:[%s823 + $0x98] sm:$0xff]
      %v1693 = vld [vmem:[%s823 + $0xa8] sm:$0xff]
      %v1694 = vld [vmem:[%s823 + $0xb0] sm:$0xff]
      %v1695 = vld [vmem:[%s823 + $0xc0] sm:$0xff]
      %v1696 = vld [vmem:[%s823 + $0xc8] sm:$0xff]
      %v1697 = vld [vmem:[%s823 + $0xd8] sm:$0xff]
      %v1698 = vld [vmem:[%s823 + $0xe0] sm:$0xff]
      %v1699 = vld [vmem:[%s823 + $0xf0] sm:$0xff]
      %v1700 = vld [vmem:[%s823 + $0xf8] sm:$0xff]
      %v1701 = vld [vmem:[%s823 + $0x108] sm:$0xff]
      %v1702 = vld [vmem:[%s823 + $0x110] sm:$0xff]
      %v1703 = vld [vmem:[%s823 + $0x120] sm:$0xff]
      %v1704 = vld [vmem:[%s823 + $0x128] sm:$0xff]
      %v1705 = vld [vmem:[%s823 + $0x138] sm:$0xff]
      %v1706 = vld [vmem:[%s823 + $0x140] sm:$0xff]
      %v1707 = vld [vmem:[%s823 + $0x150] sm:$0xff]
      %v1708 = vld [vmem:[%s823 + $0x158] sm:$0xff]
      %v1709 = vld [vmem:[%s823 + $0x168] sm:$0xff]
      %v1710 = vld [vmem:[%s823 + $0x170] sm:$0xff]
      %v1711 = vpack.c.bf16 %v1680, %v1679
      %v1712 = vpack.c.bf16 %v1682, %v1681
      %v1713 = vpack.c.bf16 %v1684, %v1683
      %v1714 = vpack.c.bf16 %v1686, %v1685
      %v1715 = vpack.c.bf16 %v1688, %v1687
      %v1716 = vpack.c.bf16 %v1690, %v1689
      %v1717 = vpack.c.bf16 %v1692, %v1691
      %v1718 = vpack.c.bf16 %v1694, %v1693
      %v1719 = vpack.c.bf16 %v1696, %v1695
      %v1720 = vpack.c.bf16 %v1698, %v1697
      %v1721 = vpack.c.bf16 %v1700, %v1699
      %v1722 = vpack.c.bf16 %v1702, %v1701
      %v1723 = vpack.c.bf16 %v1704, %v1703
      %v1724 = vpack.c.bf16 %v1706, %v1705
      %v1725 = vpack.c.bf16 %v1708, %v1707
      %v1726 = vpack.c.bf16 %v1710, %v1709
      %v1728 = vsel %vm824, %v1711, 0
      %v1731 = vsel %vm824, %v1712, 0
      %v1734 = vsel %vm824, %v1713, 0
      %v1737 = vsel %vm824, %v1714, 0
      %v1740 = vsel %vm824, %v1715, 0
      %v1743 = vsel %vm824, %v1716, 0
      %v1746 = vsel %vm824, %v1717, 0
      %v1749 = vsel %vm824, %v1718, 0
      %v1752 = vsel %vm824, %v1719, 0
      %v1755 = vsel %vm824, %v1720, 0
      %v1758 = vsel %vm824, %v1721, 0
      %v1761 = vsel %vm824, %v1722, 0
      %v1764 = vsel %vm824, %v1723, 0
      %v1767 = vsel %vm824, %v1724, 0
      %v1770 = vsel %vm824, %v1725, 0
      %v1773 = vsel %vm824, %v1726, 0
      %v1776 = vsel %vm1010, %v860, 0
      %1778 = vmatprep.subr.bf16.mxu0 0
      %1779 = vmatpush1.bf16.msra.mxu0 %v1776
      %1780 = vmatprep.subr.bf16.mxu0 0
      %1781 = vmatpush1.bf16.msra.mxu0 0
      %1782 = vmatprep.subr.bf16.mxu0 0
      %1783 = vmatpush1.bf16.msra.mxu0 0
      %1784 = vmatprep.subr.bf16.mxu0 0
      %1785 = vmatpush1.bf16.msra.mxu0 0
      %1786 = vmatprep.subr.bf16.mxu0 0
      %1787 = vmatpush1.bf16.msra.mxu0 0
      %1788 = vmatprep.subr.bf16.mxu0 0
      %1789 = vmatpush1.bf16.msra.mxu0 0
      %1790 = vmatprep.subr.bf16.mxu0 0
      %1791 = vmatpush1.bf16.msra.mxu0 0
      %1792 = vmatprep.subr.bf16.mxu0 0
      %1793 = vmatpush1.bf16.msra.mxu0 0
      %1794 = vmatprep.subr.bf16.mxu0 0
      %1795 = vmatpush1.bf16.msra.mxu0 0
      %1796 = vmatprep.subr.bf16.mxu0 0
      %1797 = vmatpush1.bf16.msra.mxu0 0
      %1798 = vmatprep.subr.bf16.mxu0 0
      %1799 = vmatpush1.bf16.msra.mxu0 0
      %1800 = vmatprep.subr.bf16.mxu0 0
      %1801 = vmatpush1.bf16.msra.mxu0 0
      %1802 = vmatprep.subr.bf16.mxu0 0
      %1803 = vmatpush1.bf16.msra.mxu0 0
      %1804 = vmatprep.subr.bf16.mxu0 0
      %1805 = vmatpush1.bf16.msra.mxu0 0
      %1806 = vmatprep.subr.bf16.mxu0 0
      %1807 = vmatpush1.bf16.msra.mxu0 0
      %1808 = vmatprep.subr.bf16.mxu0 0
      %1809 = vmatpush1.bf16.msra.mxu0 0
      %1810 = vmatprep.mubr.bf16.mxu0 0
      %1811 = vmatmul.mubr.bf16.gmra.mrb[0].mxu0 %v1728
      %v1812 = vpop.f32.mrb[0].mxu0
      %v1813 = vadd.f32 0.0, %v1812
      %v1814 = vpop.f32.mrb[0].mxu0
      %v1815 = vpop.f32.mrb[0].mxu0
      %v1816 = vadd.f32 0.0, %v1815
      %v1817 = vpop.f32.mrb[0].mxu0
      %1818 = vmatprep.mubr.bf16.mxu0 0
      %1819 = vmatmul.mubr.bf16.gmra.mrb[0].mxu0 %v1731
      %v1820 = vpop.f32.mrb[0].mxu0
      %v1821 = vadd.f32 0.0, %v1820
      %v1822 = vpop.f32.mrb[0].mxu0
      %v1823 = vpop.f32.mrb[0].mxu0
      %v1824 = vadd.f32 0.0, %v1823
      %v1825 = vpop.f32.mrb[0].mxu0
      %1826 = vmatprep.mubr.bf16.mxu0 0
      %1827 = vmatmul.mubr.bf16.gmra.mrb[0].mxu0 %v1734
      %v1828 = vpop.f32.mrb[0].mxu0
      %v1829 = vadd.f32 0.0, %v1828
      %v1830 = vpop.f32.mrb[0].mxu0
      %v1831 = vpop.f32.mrb[0].mxu0
      %v1832 = vadd.f32 0.0, %v1831
      %v1833 = vpop.f32.mrb[0].mxu0
      %1834 = vmatprep.mubr.bf16.mxu0 0
      %1835 = vmatmul.mubr.bf16.gmra.mrb[0].mxu0 %v1737
      %v1836 = vpop.f32.mrb[0].mxu0
      %v1837 = vadd.f32 0.0, %v1836
      %v1838 = vpop.f32.mrb[0].mxu0
      %v1839 = vpop.f32.mrb[0].mxu0
      %v1840 = vadd.f32 0.0, %v1839
      %v1841 = vpop.f32.mrb[0].mxu0
      %1842 = vmatprep.mubr.bf16.mxu0 0
      %1843 = vmatmul.mubr.bf16.gmra.mrb[0].mxu0 %v1740
      %v1844 = vpop.f32.mrb[0].mxu0
      %v1845 = vadd.f32 0.0, %v1844
      %v1846 = vpop.f32.mrb[0].mxu0
      %v1847 = vpop.f32.mrb[0].mxu0
      %v1848 = vadd.f32 0.0, %v1847
      %v1849 = vpop.f32.mrb[0].mxu0
      %1850 = vmatprep.mubr.bf16.mxu0 0
      %1851 = vmatmul.mubr.bf16.gmra.mrb[0].mxu0 %v1743
      %v1852 = vpop.f32.mrb[0].mxu0
      %v1853 = vadd.f32 0.0, %v1852
      %v1854 = vpop.f32.mrb[0].mxu0
      %v1855 = vpop.f32.mrb[0].mxu0
      %v1856 = vadd.f32 0.0, %v1855
      %v1857 = vpop.f32.mrb[0].mxu0
      %1858 = vmatprep.mubr.bf16.mxu0 0
      %1859 = vmatmul.mubr.bf16.gmra.mrb[0].mxu0 %v1746
      %v1860 = vpop.f32.mrb[0].mxu0
      %v1861 = vadd.f32 0.0, %v1860
      %v1862 = vpop.f32.mrb[0].mxu0
      %v1863 = vpop.f32.mrb[0].mxu0
      %v1864 = vadd.f32 0.0, %v1863
      %v1865 = vpop.f32.mrb[0].mxu0
      %1866 = vmatprep.mubr.bf16.mxu0 0
      %1867 = vmatmul.mubr.bf16.gmra.mrb[0].mxu0 %v1749
      %v1868 = vpop.f32.mrb[0].mxu0
      %v1869 = vadd.f32 0.0, %v1868
      %v1870 = vpop.f32.mrb[0].mxu0
      %v1871 = vpop.f32.mrb[0].mxu0
      %v1872 = vadd.f32 0.0, %v1871
      %v1873 = vpop.f32.mrb[0].mxu0
      %1874 = vmatprep.mubr.bf16.mxu0 0
      %1875 = vmatmul.mubr.bf16.gmra.mrb[0].mxu0 %v1752
      %v1876 = vpop.f32.mrb[0].mxu0
      %v1877 = vadd.f32 0.0, %v1876
      %v1878 = vpop.f32.mrb[0].mxu0
      %v1879 = vpop.f32.mrb[0].mxu0
      %v1880 = vadd.f32 0.0, %v1879
      %v1881 = vpop.f32.mrb[0].mxu0
      %1882 = vmatprep.mubr.bf16.mxu0 0
      %1883 = vmatmul.mubr.bf16.gmra.mrb[0].mxu0 %v1755
      %v1884 = vpop.f32.mrb[0].mxu0
      %v1885 = vadd.f32 0.0, %v1884
      %v1886 = vpop.f32.mrb[0].mxu0
      %v1887 = vpop.f32.mrb[0].mxu0
      %v1888 = vadd.f32 0.0, %v1887
      %v1889 = vpop.f32.mrb[0].mxu0
      %1890 = vmatprep.mubr.bf16.mxu0 0
      %1891 = vmatmul.mubr.bf16.gmra.mrb[0].mxu0 %v1758
      %v1892 = vpop.f32.mrb[0].mxu0
      %v1893 = vadd.f32 0.0, %v1892
      %v1894 = vpop.f32.mrb[0].mxu0
      %v1895 = vpop.f32.mrb[0].mxu0
      %v1896 = vadd.f32 0.0, %v1895
      %v1897 = vpop.f32.mrb[0].mxu0
      %1898 = vmatprep.mubr.bf16.mxu0 0
      %1899 = vmatmul.mubr.bf16.gmra.mrb[0].mxu0 %v1761
      %v1900 = vpop.f32.mrb[0].mxu0
      %v1901 = vadd.f32 0.0, %v1900
      %v1902 = vpop.f32.mrb[0].mxu0
      %v1903 = vpop.f32.mrb[0].mxu0
      %v1904 = vadd.f32 0.0, %v1903
      %v1905 = vpop.f32.mrb[0].mxu0
      %1906 = vmatprep.mubr.bf16.mxu0 0
      %1907 = vmatmul.mubr.bf16.gmra.mrb[0].mxu0 %v1764
      %v1908 = vpop.f32.mrb[0].mxu0
      %v1909 = vadd.f32 0.0, %v1908
      %v1910 = vpop.f32.mrb[0].mxu0
      %v1911 = vpop.f32.mrb[0].mxu0
      %v1912 = vadd.f32 0.0, %v1911
      %v1913 = vpop.f32.mrb[0].mxu0
      %1914 = vmatprep.mubr.bf16.mxu0 0
      %1915 = vmatmul.mubr.bf16.gmra.mrb[0].mxu0 %v1767
      %v1916 = vpop.f32.mrb[0].mxu0
      %v1917 = vadd.f32 0.0, %v1916
      %v1918 = vpop.f32.mrb[0].mxu0
      %v1919 = vpop.f32.mrb[0].mxu0
      %v1920 = vadd.f32 0.0, %v1919
      %v1921 = vpop.f32.mrb[0].mxu0
      %1922 = vmatprep.mubr.bf16.mxu0 0
      %1923 = vmatmul.mubr.bf16.gmra.mrb[0].mxu0 %v1770
      %v1924 = vpop.f32.mrb[0].mxu0
      %v1925 = vadd.f32 0.0, %v1924
      %v1926 = vpop.f32.mrb[0].mxu0
      %v1927 = vpop.f32.mrb[0].mxu0
      %v1928 = vadd.f32 0.0, %v1927
      %v1929 = vpop.f32.mrb[0].mxu0
      %1930 = vmatprep.mubr.bf16.mxu0 0
      %1931 = vmatmul.mubr.bf16.gmra.mrb[0].mxu0 %v1773
      %v1932 = vpop.f32.mrb[0].mxu0
      %v1933 = vadd.f32 0.0, %v1932
      %v1934 = vpop.f32.mrb[0].mxu0
      %v1935 = vpop.f32.mrb[0].mxu0
      %v1936 = vadd.f32 0.0, %v1935
      %v1937 = vpop.f32.mrb[0].mxu0
      %1938 = vdwg.mxu0
      %v1939 = vadd.f32 %v1647, %v1813
      %v1940 = vadd.f32 %v1648, %v1816
      %v1941 = vadd.f32 %v1649, %v1821
      %v1942 = vadd.f32 %v1650, %v1824
      %v1943 = vadd.f32 %v1651, %v1829
      %v1944 = vadd.f32 %v1652, %v1832
      %v1945 = vadd.f32 %v1653, %v1837
      %v1946 = vadd.f32 %v1654, %v1840
      %v1947 = vadd.f32 %v1655, %v1845
      %v1948 = vadd.f32 %v1656, %v1848
      %v1949 = vadd.f32 %v1657, %v1853
      %v1950 = vadd.f32 %v1658, %v1856
      %v1951 = vadd.f32 %v1659, %v1861
      %v1952 = vadd.f32 %v1660, %v1864
      %v1953 = vadd.f32 %v1661, %v1869
      %v1954 = vadd.f32 %v1662, %v1872
      %v1955 = vadd.f32 %v1663, %v1877
      %v1956 = vadd.f32 %v1664, %v1880
      %v1957 = vadd.f32 %v1665, %v1885
      %v1958 = vadd.f32 %v1666, %v1888
      %v1959 = vadd.f32 %v1667, %v1893
      %v1960 = vadd.f32 %v1668, %v1896
      %v1961 = vadd.f32 %v1669, %v1901
      %v1962 = vadd.f32 %v1670, %v1904
      %v1963 = vadd.f32 %v1671, %v1909
      %v1964 = vadd.f32 %v1672, %v1912
      %v1965 = vadd.f32 %v1673, %v1917
      %v1966 = vadd.f32 %v1674, %v1920
      %v1967 = vadd.f32 %v1675, %v1925
      %v1968 = vadd.f32 %v1676, %v1928
      %v1969 = vadd.f32 %v1677, %v1933
      %v1970 = vadd.f32 %v1678, %v1936
      %v1971 = vld [vmem:[%s823 + $0x1] sm:$0xff]
      %v1972 = vld [vmem:[%s823 + $0x9] sm:$0xff]
      %v1973 = vld [vmem:[%s823 + $0x19] sm:$0xff]
      %v1974 = vld [vmem:[%s823 + $0x21] sm:$0xff]
      %v1975 = vld [vmem:[%s823 + $0x31] sm:$0xff]
      %v1976 = vld [vmem:[%s823 + $0x39] sm:$0xff]
      %v1977 = vld [vmem:[%s823 + $0x49] sm:$0xff]
      %v1978 = vld [vmem:[%s823 + $0x51] sm:$0xff]
      %v1979 = vld [vmem:[%s823 + $0x61] sm:$0xff]
      %v1980 = vld [vmem:[%s823 + $0x69] sm:$0xff]
      %v1981 = vld [vmem:[%s823 + $0x79] sm:$0xff]
      %v1982 = vld [vmem:[%s823 + $0x81] sm:$0xff]
      %v1983 = vld [vmem:[%s823 + $0x91] sm:$0xff]
      %v1984 = vld [vmem:[%s823 + $0x99] sm:$0xff]
      %v1985 = vld [vmem:[%s823 + $0xa9] sm:$0xff]
      %v1986 = vld [vmem:[%s823 + $0xb1] sm:$0xff]
      %v1987 = vld [vmem:[%s823 + $0xc1] sm:$0xff]
      %v1988 = vld [vmem:[%s823 + $0xc9] sm:$0xff]
      %v1989 = vld [vmem:[%s823 + $0xd9] sm:$0xff]
      %v1990 = vld [vmem:[%s823 + $0xe1] sm:$0xff]
      %v1991 = vld [vmem:[%s823 + $0xf1] sm:$0xff]
      %v1992 = vld [vmem:[%s823 + $0xf9] sm:$0xff]
      %v1993 = vld [vmem:[%s823 + $0x109] sm:$0xff]
      %v1994 = vld [vmem:[%s823 + $0x111] sm:$0xff]
      %v1995 = vld [vmem:[%s823 + $0x121] sm:$0xff]
      %v1996 = vld [vmem:[%s823 + $0x129] sm:$0xff]
      %v1997 = vld [vmem:[%s823 + $0x139] sm:$0xff]
      %v1998 = vld [vmem:[%s823 + $0x141] sm:$0xff]
      %v1999 = vld [vmem:[%s823 + $0x151] sm:$0xff]
      %v2000 = vld [vmem:[%s823 + $0x159] sm:$0xff]
      %v2001 = vld [vmem:[%s823 + $0x169] sm:$0xff]
      %v2002 = vld [vmem:[%s823 + $0x171] sm:$0xff]
      %v2003 = vpack.c.bf16 %v1972, %v1971
      %v2004 = vpack.c.bf16 %v1974, %v1973
      %v2005 = vpack.c.bf16 %v1976, %v1975
      %v2006 = vpack.c.bf16 %v1978, %v1977
      %v2007 = vpack.c.bf16 %v1980, %v1979
      %v2008 = vpack.c.bf16 %v1982, %v1981
      %v2009 = vpack.c.bf16 %v1984, %v1983
      %v2010 = vpack.c.bf16 %v1986, %v1985
      %v2011 = vpack.c.bf16 %v1988, %v1987
      %v2012 = vpack.c.bf16 %v1990, %v1989
      %v2013 = vpack.c.bf16 %v1992, %v1991
      %v2014 = vpack.c.bf16 %v1994, %v1993
      %v2015 = vpack.c.bf16 %v1996, %v1995
      %v2016 = vpack.c.bf16 %v1998, %v1997
      %v2017 = vpack.c.bf16 %v2000, %v1999
      %v2018 = vpack.c.bf16 %v2002, %v2001
      %v2020 = vsel %vm824, %v2003, 0
      %v2023 = vsel %vm824, %v2004, 0
      %v2026 = vsel %vm824, %v2005, 0
      %v2029 = vsel %vm824, %v2006, 0
      %v2032 = vsel %vm824, %v2007, 0
      %v2035 = vsel %vm824, %v2008, 0
      %v2038 = vsel %vm824, %v2009, 0
      %v2041 = vsel %vm824, %v2010, 0
      %v2044 = vsel %vm824, %v2011, 0
      %v2047 = vsel %vm824, %v2012, 0
      %v2050 = vsel %vm824, %v2013, 0
      %v2053 = vsel %vm824, %v2014, 0
      %v2056 = vsel %vm824, %v2015, 0
      %v2059 = vsel %vm824, %v2016, 0
      %v2062 = vsel %vm824, %v2017, 0
      %v2065 = vsel %vm824, %v2018, 0
      %v2068 = vsel %vm1010, %v861, 0
      %2070 = vmatprep.subr.bf16.mxu0 0
      %2071 = vmatpush1.bf16.msra.mxu0 %v2068
      %2072 = vmatprep.subr.bf16.mxu0 0
      %2073 = vmatpush1.bf16.msra.mxu0 0
      %2074 = vmatprep.subr.bf16.mxu0 0
      %2075 = vmatpush1.bf16.msra.mxu0 0
      %2076 = vmatprep.subr.bf16.mxu0 0
      %2077 = vmatpush1.bf16.msra.mxu0 0
      %2078 = vmatprep.subr.bf16.mxu0 0
      %2079 = vmatpush1.bf16.msra.mxu0 0
      %2080 = vmatprep.subr.bf16.mxu0 0
      %2081 = vmatpush1.bf16.msra.mxu0 0
      %2082 = vmatprep.subr.bf16.mxu0 0
      %2083 = vmatpush1.bf16.msra.mxu0 0
      %2084 = vmatprep.subr.bf16.mxu0 0
      %2085 = vmatpush1.bf16.msra.mxu0 0
      %2086 = vmatprep.subr.bf16.mxu0 0
      %2087 = vmatpush1.bf16.msra.mxu0 0
      %2088 = vmatprep.subr.bf16.mxu0 0
      %2089 = vmatpush1.bf16.msra.mxu0 0
      %2090 = vmatprep.subr.bf16.mxu0 0
      %2091 = vmatpush1.bf16.msra.mxu0 0
      %2092 = vmatprep.subr.bf16.mxu0 0
      %2093 = vmatpush1.bf16.msra.mxu0 0
      %2094 = vmatprep.subr.bf16.mxu0 0
      %2095 = vmatpush1.bf16.msra.mxu0 0
      %2096 = vmatprep.subr.bf16.mxu0 0
      %2097 = vmatpush1.bf16.msra.mxu0 0
      %2098 = vmatprep.subr.bf16.mxu0 0
      %2099 = vmatpush1.bf16.msra.mxu0 0
      %2100 = vmatprep.subr.bf16.mxu0 0
      %2101 = vmatpush1.bf16.msra.mxu0 0
      %2102 = vmatprep.mubr.bf16.mxu0 0
      %2103 = vmatmul.mubr.bf16.gmra.mrb[0].mxu0 %v2020
      %v2104 = vpop.f32.mrb[0].mxu0
      %v2105 = vadd.f32 0.0, %v2104
      %v2106 = vpop.f32.mrb[0].mxu0
      %v2107 = vpop.f32.mrb[0].mxu0
      %v2108 = vadd.f32 0.0, %v2107
      %v2109 = vpop.f32.mrb[0].mxu0
      %2110 = vmatprep.mubr.bf16.mxu0 0
      %2111 = vmatmul.mubr.bf16.gmra.mrb[0].mxu0 %v2023
      %v2112 = vpop.f32.mrb[0].mxu0
      %v2113 = vadd.f32 0.0, %v2112
      %v2114 = vpop.f32.mrb[0].mxu0
      %v2115 = vpop.f32.mrb[0].mxu0
      %v2116 = vadd.f32 0.0, %v2115
      %v2117 = vpop.f32.mrb[0].mxu0
      %2118 = vmatprep.mubr.bf16.mxu0 0
      %2119 = vmatmul.mubr.bf16.gmra.mrb[0].mxu0 %v2026
      %v2120 = vpop.f32.mrb[0].mxu0
      %v2121 = vadd.f32 0.0, %v2120
      %v2122 = vpop.f32.mrb[0].mxu0
      %v2123 = vpop.f32.mrb[0].mxu0
      %v2124 = vadd.f32 0.0, %v2123
      %v2125 = vpop.f32.mrb[0].mxu0
      %2126 = vmatprep.mubr.bf16.mxu0 0
      %2127 = vmatmul.mubr.bf16.gmra.mrb[0].mxu0 %v2029
      %v2128 = vpop.f32.mrb[0].mxu0
      %v2129 = vadd.f32 0.0, %v2128
      %v2130 = vpop.f32.mrb[0].mxu0
      %v2131 = vpop.f32.mrb[0].mxu0
      %v2132 = vadd.f32 0.0, %v2131
      %v2133 = vpop.f32.mrb[0].mxu0
      %2134 = vmatprep.mubr.bf16.mxu0 0
      %2135 = vmatmul.mubr.bf16.gmra.mrb[0].mxu0 %v2032
      %v2136 = vpop.f32.mrb[0].mxu0
      %v2137 = vadd.f32 0.0, %v2136
      %v2138 = vpop.f32.mrb[0].mxu0
      %v2139 = vpop.f32.mrb[0].mxu0
      %v2140 = vadd.f32 0.0, %v2139
      %v2141 = vpop.f32.mrb[0].mxu0
      %2142 = vmatprep.mubr.bf16.mxu0 0
      %2143 = vmatmul.mubr.bf16.gmra.mrb[0].mxu0 %v2035
      %v2144 = vpop.f32.mrb[0].mxu0
      %v2145 = vadd.f32 0.0, %v2144
      %v2146 = vpop.f32.mrb[0].mxu0
      %v2147 = vpop.f32.mrb[0].mxu0
      %v2148 = vadd.f32 0.0, %v2147
      %v2149 = vpop.f32.mrb[0].mxu0
      %2150 = vmatprep.mubr.bf16.mxu0 0
      %2151 = vmatmul.mubr.bf16.gmra.mrb[0].mxu0 %v2038
      %v2152 = vpop.f32.mrb[0].mxu0
      %v2153 = vadd.f32 0.0, %v2152
      %v2154 = vpop.f32.mrb[0].mxu0
      %v2155 = vpop.f32.mrb[0].mxu0
      %v2156 = vadd.f32 0.0, %v2155
      %v2157 = vpop.f32.mrb[0].mxu0
      %2158 = vmatprep.mubr.bf16.mxu0 0
      %2159 = vmatmul.mubr.bf16.gmra.mrb[0].mxu0 %v2041
      %v2160 = vpop.f32.mrb[0].mxu0
      %v2161 = vadd.f32 0.0, %v2160
      %v2162 = vpop.f32.mrb[0].mxu0
      %v2163 = vpop.f32.mrb[0].mxu0
      %v2164 = vadd.f32 0.0, %v2163
      %v2165 = vpop.f32.mrb[0].mxu0
      %2166 = vmatprep.mubr.bf16.mxu0 0
      %2167 = vmatmul.mubr.bf16.gmra.mrb[0].mxu0 %v2044
      %v2168 = vpop.f32.mrb[0].mxu0
      %v2169 = vadd.f32 0.0, %v2168
      %v2170 = vpop.f32.mrb[0].mxu0
      %v2171 = vpop.f32.mrb[0].mxu0
      %v2172 = vadd.f32 0.0, %v2171
      %v2173 = vpop.f32.mrb[0].mxu0
      %2174 = vmatprep.mubr.bf16.mxu0 0
      %2175 = vmatmul.mubr.bf16.gmra.mrb[0].mxu0 %v2047
      %v2176 = vpop.f32.mrb[0].mxu0
      %v2177 = vadd.f32 0.0, %v2176
      %v2178 = vpop.f32.mrb[0].mxu0
      %v2179 = vpop.f32.mrb[0].mxu0
      %v2180 = vadd.f32 0.0, %v2179
      %v2181 = vpop.f32.mrb[0].mxu0
      %2182 = vmatprep.mubr.bf16.mxu0 0
      %2183 = vmatmul.mubr.bf16.gmra.mrb[0].mxu0 %v2050
      %v2184 = vpop.f32.mrb[0].mxu0
      %v2185 = vadd.f32 0.0, %v2184
      %v2186 = vpop.f32.mrb[0].mxu0
      %v2187 = vpop.f32.mrb[0].mxu0
      %v2188 = vadd.f32 0.0, %v2187
      %v2189 = vpop.f32.mrb[0].mxu0
      %2190 = vmatprep.mubr.bf16.mxu0 0
      %2191 = vmatmul.mubr.bf16.gmra.mrb[0].mxu0 %v2053
      %v2192 = vpop.f32.mrb[0].mxu0
      %v2193 = vadd.f32 0.0, %v2192
      %v2194 = vpop.f32.mrb[0].mxu0
      %v2195 = vpop.f32.mrb[0].mxu0
      %v2196 = vadd.f32 0.0, %v2195
      %v2197 = vpop.f32.mrb[0].mxu0
      %2198 = vmatprep.mubr.bf16.mxu0 0
      %2199 = vmatmul.mubr.bf16.gmra.mrb[0].mxu0 %v2056
      %v2200 = vpop.f32.mrb[0].mxu0
      %v2201 = vadd.f32 0.0, %v2200
      %v2202 = vpop.f32.mrb[0].mxu0
      %v2203 = vpop.f32.mrb[0].mxu0
      %v2204 = vadd.f32 0.0, %v2203
      %v2205 = vpop.f32.mrb[0].mxu0
      %2206 = vmatprep.mubr.bf16.mxu0 0
      %2207 = vmatmul.mubr.bf16.gmra.mrb[0].mxu0 %v2059
      %v2208 = vpop.f32.mrb[0].mxu0
      %v2209 = vadd.f32 0.0, %v2208
      %v2210 = vpop.f32.mrb[0].mxu0
      %v2211 = vpop.f32.mrb[0].mxu0
      %v2212 = vadd.f32 0.0, %v2211
      %v2213 = vpop.f32.mrb[0].mxu0
      %2214 = vmatprep.mubr.bf16.mxu0 0
      %2215 = vmatmul.mubr.bf16.gmra.mrb[0].mxu0 %v2062
      %v2216 = vpop.f32.mrb[0].mxu0
      %v2217 = vadd.f32 0.0, %v2216
      %v2218 = vpop.f32.mrb[0].mxu0
      %v2219 = vpop.f32.mrb[0].mxu0
      %v2220 = vadd.f32 0.0, %v2219
      %v2221 = vpop.f32.mrb[0].mxu0
      %2222 = vmatprep.mubr.bf16.mxu0 0
      %2223 = vmatmul.mubr.bf16.gmra.mrb[0].mxu0 %v2065
      %v2224 = vpop.f32.mrb[0].mxu0
      %v2225 = vadd.f32 0.0, %v2224
      %v2226 = vpop.f32.mrb[0].mxu0
      %v2227 = vpop.f32.mrb[0].mxu0
      %v2228 = vadd.f32 0.0, %v2227
      %v2229 = vpop.f32.mrb[0].mxu0
      %2230 = vdwg.mxu0
      %v2231 = vadd.f32 %v1939, %v2105
      %v2232 = vadd.f32 %v1940, %v2108
      %v2233 = vadd.f32 %v1941, %v2113
      %v2234 = vadd.f32 %v1942, %v2116
      %v2235 = vadd.f32 %v1943, %v2121
      %v2236 = vadd.f32 %v1944, %v2124
      %v2237 = vadd.f32 %v1945, %v2129
      %v2238 = vadd.f32 %v1946, %v2132
      %v2239 = vadd.f32 %v1947, %v2137
      %v2240 = vadd.f32 %v1948, %v2140
      %v2241 = vadd.f32 %v1949, %v2145
      %v2242 = vadd.f32 %v1950, %v2148
      %v2243 = vadd.f32 %v1951, %v2153
      %v2244 = vadd.f32 %v1952, %v2156
      %v2245 = vadd.f32 %v1953, %v2161
      %v2246 = vadd.f32 %v1954, %v2164
      %v2247 = vadd.f32 %v1955, %v2169
      %v2248 = vadd.f32 %v1956, %v2172
      %v2249 = vadd.f32 %v1957, %v2177
      %v2250 = vadd.f32 %v1958, %v2180
      %v2251 = vadd.f32 %v1959, %v2185
      %v2252 = vadd.f32 %v1960, %v2188
      %v2253 = vadd.f32 %v1961, %v2193
      %v2254 = vadd.f32 %v1962, %v2196
      %v2255 = vadd.f32 %v1963, %v2201
      %v2256 = vadd.f32 %v1964, %v2204
      %v2257 = vadd.f32 %v1965, %v2209
      %v2258 = vadd.f32 %v1966, %v2212
      %v2259 = vadd.f32 %v1967, %v2217
      %v2260 = vadd.f32 %v1968, %v2220
      %v2261 = vadd.f32 %v1969, %v2225
      %v2262 = vadd.f32 %v1970, %v2228
      %v2263 = vld [vmem:[%s823 + $0x2] sm:$0xff]
      %v2264 = vld [vmem:[%s823 + $0xa] sm:$0xff]
      %v2265 = vld [vmem:[%s823 + $0x1a] sm:$0xff]
      %v2266 = vld [vmem:[%s823 + $0x22] sm:$0xff]
      %v2267 = vld [vmem:[%s823 + $0x32] sm:$0xff]
      %v2268 = vld [vmem:[%s823 + $0x3a] sm:$0xff]
      %v2269 = vld [vmem:[%s823 + $0x4a] sm:$0xff]
      %v2270 = vld [vmem:[%s823 + $0x52] sm:$0xff]
      %v2271 = vld [vmem:[%s823 + $0x62] sm:$0xff]
      %v2272 = vld [vmem:[%s823 + $0x6a] sm:$0xff]
      %v2273 = vld [vmem:[%s823 + $0x7a] sm:$0xff]
      %v2274 = vld [vmem:[%s823 + $0x82] sm:$0xff]
      %v2275 = vld [vmem:[%s823 + $0x92] sm:$0xff]
      %v2276 = vld [vmem:[%s823 + $0x9a] sm:$0xff]
      %v2277 = vld [vmem:[%s823 + $0xaa] sm:$0xff]
      %v2278 = vld [vmem:[%s823 + $0xb2] sm:$0xff]
      %v2279 = vld [vmem:[%s823 + $0xc2] sm:$0xff]
      %v2280 = vld [vmem:[%s823 + $0xca] sm:$0xff]
      %v2281 = vld [vmem:[%s823 + $0xda] sm:$0xff]
      %v2282 = vld [vmem:[%s823 + $0xe2] sm:$0xff]
      %v2283 = vld [vmem:[%s823 + $0xf2] sm:$0xff]
      %v2284 = vld [vmem:[%s823 + $0xfa] sm:$0xff]
      %v2285 = vld [vmem:[%s823 + $0x10a] sm:$0xff]
      %v2286 = vld [vmem:[%s823 + $0x112] sm:$0xff]
      %v2287 = vld [vmem:[%s823 + $0x122] sm:$0xff]
      %v2288 = vld [vmem:[%s823 + $0x12a] sm:$0xff]
      %v2289 = vld [vmem:[%s823 + $0x13a] sm:$0xff]
      %v2290 = vld [vmem:[%s823 + $0x142] sm:$0xff]
      %v2291 = vld [vmem:[%s823 + $0x152] sm:$0xff]
      %v2292 = vld [vmem:[%s823 + $0x15a] sm:$0xff]
      %v2293 = vld [vmem:[%s823 + $0x16a] sm:$0xff]
      %v2294 = vld [vmem:[%s823 + $0x172] sm:$0xff]
      %v2295 = vpack.c.bf16 %v2264, %v2263
      %v2296 = vpack.c.bf16 %v2266, %v2265
      %v2297 = vpack.c.bf16 %v2268, %v2267
      %v2298 = vpack.c.bf16 %v2270, %v2269
      %v2299 = vpack.c.bf16 %v2272, %v2271
      %v2300 = vpack.c.bf16 %v2274, %v2273
      %v2301 = vpack.c.bf16 %v2276, %v2275
      %v2302 = vpack.c.bf16 %v2278, %v2277
      %v2303 = vpack.c.bf16 %v2280, %v2279
      %v2304 = vpack.c.bf16 %v2282, %v2281
      %v2305 = vpack.c.bf16 %v2284, %v2283
      %v2306 = vpack.c.bf16 %v2286, %v2285
      %v2307 = vpack.c.bf16 %v2288, %v2287
      %v2308 = vpack.c.bf16 %v2290, %v2289
      %v2309 = vpack.c.bf16 %v2292, %v2291
      %v2310 = vpack.c.bf16 %v2294, %v2293
      %v2312 = vsel %vm824, %v2295, 0
      %v2315 = vsel %vm824, %v2296, 0
      %v2318 = vsel %vm824, %v2297, 0
      %v2321 = vsel %vm824, %v2298, 0
      %v2324 = vsel %vm824, %v2299, 0
      %v2327 = vsel %vm824, %v2300, 0
      %v2330 = vsel %vm824, %v2301, 0
      %v2333 = vsel %vm824, %v2302, 0
      %v2336 = vsel %vm824, %v2303, 0
      %v2339 = vsel %vm824, %v2304, 0
      %v2342 = vsel %vm824, %v2305, 0
      %v2345 = vsel %vm824, %v2306, 0
      %v2348 = vsel %vm824, %v2307, 0
      %v2351 = vsel %vm824, %v2308, 0
      %v2354 = vsel %vm824, %v2309, 0
      %v2357 = vsel %vm824, %v2310, 0
      %v2360 = vsel %vm1010, %v862, 0
      %2362 = vmatprep.subr.bf16.mxu0 0
      %2363 = vmatpush1.bf16.msra.mxu0 %v2360
      %2364 = vmatprep.subr.bf16.mxu0 0
      %2365 = vmatpush1.bf16.msra.mxu0 0
      %2366 = vmatprep.subr.bf16.mxu0 0
      %2367 = vmatpush1.bf16.msra.mxu0 0
      %2368 = vmatprep.subr.bf16.mxu0 0
      %2369 = vmatpush1.bf16.msra.mxu0 0
      %2370 = vmatprep.subr.bf16.mxu0 0
      %2371 = vmatpush1.bf16.msra.mxu0 0
      %2372 = vmatprep.subr.bf16.mxu0 0
      %2373 = vmatpush1.bf16.msra.mxu0 0
      %2374 = vmatprep.subr.bf16.mxu0 0
      %2375 = vmatpush1.bf16.msra.mxu0 0
      %2376 = vmatprep.subr.bf16.mxu0 0
      %2377 = vmatpush1.bf16.msra.mxu0 0
      %2378 = vmatprep.subr.bf16.mxu0 0
      %2379 = vmatpush1.bf16.msra.mxu0 0
      %2380 = vmatprep.subr.bf16.mxu0 0
      %2381 = vmatpush1.bf16.msra.mxu0 0
      %2382 = vmatprep.subr.bf16.mxu0 0
      %2383 = vmatpush1.bf16.msra.mxu0 0
      %2384 = vmatprep.subr.bf16.mxu0 0
      %2385 = vmatpush1.bf16.msra.mxu0 0
      %2386 = vmatprep.subr.bf16.mxu0 0
      %2387 = vmatpush1.bf16.msra.mxu0 0
      %2388 = vmatprep.subr.bf16.mxu0 0
      %2389 = vmatpush1.bf16.msra.mxu0 0
      %2390 = vmatprep.subr.bf16.mxu0 0
      %2391 = vmatpush1.bf16.msra.mxu0 0
      %2392 = vmatprep.subr.bf16.mxu0 0
      %2393 = vmatpush1.bf16.msra.mxu0 0
      %2394 = vmatprep.mubr.bf16.mxu0 0
      %2395 = vmatmul.mubr.bf16.gmra.mrb[0].mxu0 %v2312
      %v2396 = vpop.f32.mrb[0].mxu0
      %v2397 = vadd.f32 0.0, %v2396
      %v2398 = vpop.f32.mrb[0].mxu0
      %v2399 = vpop.f32.mrb[0].mxu0
      %v2400 = vadd.f32 0.0, %v2399
      %v2401 = vpop.f32.mrb[0].mxu0
      %2402 = vmatprep.mubr.bf16.mxu0 0
      %2403 = vmatmul.mubr.bf16.gmra.mrb[0].mxu0 %v2315
      %v2404 = vpop.f32.mrb[0].mxu0
      %v2405 = vadd.f32 0.0, %v2404
      %v2406 = vpop.f32.mrb[0].mxu0
      %v2407 = vpop.f32.mrb[0].mxu0
      %v2408 = vadd.f32 0.0, %v2407
      %v2409 = vpop.f32.mrb[0].mxu0
      %2410 = vmatprep.mubr.bf16.mxu0 0
      %2411 = vmatmul.mubr.bf16.gmra.mrb[0].mxu0 %v2318
      %v2412 = vpop.f32.mrb[0].mxu0
      %v2413 = vadd.f32 0.0, %v2412
      %v2414 = vpop.f32.mrb[0].mxu0
      %v2415 = vpop.f32.mrb[0].mxu0
      %v2416 = vadd.f32 0.0, %v2415
      %v2417 = vpop.f32.mrb[0].mxu0
      %2418 = vmatprep.mubr.bf16.mxu0 0
      %2419 = vmatmul.mubr.bf16.gmra.mrb[0].mxu0 %v2321
      %v2420 = vpop.f32.mrb[0].mxu0
      %v2421 = vadd.f32 0.0, %v2420
      %v2422 = vpop.f32.mrb[0].mxu0
      %v2423 = vpop.f32.mrb[0].mxu0
      %v2424 = vadd.f32 0.0, %v2423
      %v2425 = vpop.f32.mrb[0].mxu0
      %2426 = vmatprep.mubr.bf16.mxu0 0
      %2427 = vmatmul.mubr.bf16.gmra.mrb[0].mxu0 %v2324
      %v2428 = vpop.f32.mrb[0].mxu0
      %v2429 = vadd.f32 0.0, %v2428
      %v2430 = vpop.f32.mrb[0].mxu0
      %v2431 = vpop.f32.mrb[0].mxu0
      %v2432 = vadd.f32 0.0, %v2431
      %v2433 = vpop.f32.mrb[0].mxu0
      %2434 = vmatprep.mubr.bf16.mxu0 0
      %2435 = vmatmul.mubr.bf16.gmra.mrb[0].mxu0 %v2327
      %v2436 = vpop.f32.mrb[0].mxu0
      %v2437 = vadd.f32 0.0, %v2436
      %v2438 = vpop.f32.mrb[0].mxu0
      %v2439 = vpop.f32.mrb[0].mxu0
      %v2440 = vadd.f32 0.0, %v2439
      %v2441 = vpop.f32.mrb[0].mxu0
      %2442 = vmatprep.mubr.bf16.mxu0 0
      %2443 = vmatmul.mubr.bf16.gmra.mrb[0].mxu0 %v2330
      %v2444 = vpop.f32.mrb[0].mxu0
      %v2445 = vadd.f32 0.0, %v2444
      %v2446 = vpop.f32.mrb[0].mxu0
      %v2447 = vpop.f32.mrb[0].mxu0
      %v2448 = vadd.f32 0.0, %v2447
      %v2449 = vpop.f32.mrb[0].mxu0
      %2450 = vmatprep.mubr.bf16.mxu0 0
      %2451 = vmatmul.mubr.bf16.gmra.mrb[0].mxu0 %v2333
      %v2452 = vpop.f32.mrb[0].mxu0
      %v2453 = vadd.f32 0.0, %v2452
      %v2454 = vpop.f32.mrb[0].mxu0
      %v2455 = vpop.f32.mrb[0].mxu0
      %v2456 = vadd.f32 0.0, %v2455
      %v2457 = vpop.f32.mrb[0].mxu0
      %2458 = vmatprep.mubr.bf16.mxu0 0
      %2459 = vmatmul.mubr.bf16.gmra.mrb[0].mxu0 %v2336
      %v2460 = vpop.f32.mrb[0].mxu0
      %v2461 = vadd.f32 0.0, %v2460
      %v2462 = vpop.f32.mrb[0].mxu0
      %v2463 = vpop.f32.mrb[0].mxu0
      %v2464 = vadd.f32 0.0, %v2463
      %v2465 = vpop.f32.mrb[0].mxu0
      %2466 = vmatprep.mubr.bf16.mxu0 0
      %2467 = vmatmul.mubr.bf16.gmra.mrb[0].mxu0 %v2339
      %v2468 = vpop.f32.mrb[0].mxu0
      %v2469 = vadd.f32 0.0, %v2468
      %v2470 = vpop.f32.mrb[0].mxu0
      %v2471 = vpop.f32.mrb[0].mxu0
      %v2472 = vadd.f32 0.0, %v2471
      %v2473 = vpop.f32.mrb[0].mxu0
      %2474 = vmatprep.mubr.bf16.mxu0 0
      %2475 = vmatmul.mubr.bf16.gmra.mrb[0].mxu0 %v2342
      %v2476 = vpop.f32.mrb[0].mxu0
      %v2477 = vadd.f32 0.0, %v2476
      %v2478 = vpop.f32.mrb[0].mxu0
      %v2479 = vpop.f32.mrb[0].mxu0
      %v2480 = vadd.f32 0.0, %v2479
      %v2481 = vpop.f32.mrb[0].mxu0
      %2482 = vmatprep.mubr.bf16.mxu0 0
      %2483 = vmatmul.mubr.bf16.gmra.mrb[0].mxu0 %v2345
      %v2484 = vpop.f32.mrb[0].mxu0
      %v2485 = vadd.f32 0.0, %v2484
      %v2486 = vpop.f32.mrb[0].mxu0
      %v2487 = vpop.f32.mrb[0].mxu0
      %v2488 = vadd.f32 0.0, %v2487
      %v2489 = vpop.f32.mrb[0].mxu0
      %2490 = vmatprep.mubr.bf16.mxu0 0
      %2491 = vmatmul.mubr.bf16.gmra.mrb[0].mxu0 %v2348
      %v2492 = vpop.f32.mrb[0].mxu0
      %v2493 = vadd.f32 0.0, %v2492
      %v2494 = vpop.f32.mrb[0].mxu0
      %v2495 = vpop.f32.mrb[0].mxu0
      %v2496 = vadd.f32 0.0, %v2495
      %v2497 = vpop.f32.mrb[0].mxu0
      %2498 = vmatprep.mubr.bf16.mxu0 0
      %2499 = vmatmul.mubr.bf16.gmra.mrb[0].mxu0 %v2351
      %v2500 = vpop.f32.mrb[0].mxu0
      %v2501 = vadd.f32 0.0, %v2500
      %v2502 = vpop.f32.mrb[0].mxu0
      %v2503 = vpop.f32.mrb[0].mxu0
      %v2504 = vadd.f32 0.0, %v2503
      %v2505 = vpop.f32.mrb[0].mxu0
      %2506 = vmatprep.mubr.bf16.mxu0 0
      %2507 = vmatmul.mubr.bf16.gmra.mrb[0].mxu0 %v2354
      %v2508 = vpop.f32.mrb[0].mxu0
      %v2509 = vadd.f32 0.0, %v2508
      %v2510 = vpop.f32.mrb[0].mxu0
      %v2511 = vpop.f32.mrb[0].mxu0
      %v2512 = vadd.f32 0.0, %v2511
      %v2513 = vpop.f32.mrb[0].mxu0
      %2514 = vmatprep.mubr.bf16.mxu0 0
      %2515 = vmatmul.mubr.bf16.gmra.mrb[0].mxu0 %v2357
      %v2516 = vpop.f32.mrb[0].mxu0
      %v2517 = vadd.f32 0.0, %v2516
      %v2518 = vpop.f32.mrb[0].mxu0
      %v2519 = vpop.f32.mrb[0].mxu0
      %v2520 = vadd.f32 0.0, %v2519
      %v2521 = vpop.f32.mrb[0].mxu0
      %2522 = vdwg.mxu0
      %v2523 = vadd.f32 %v2231, %v2397
      %v2524 = vadd.f32 %v2232, %v2400
      %v2525 = vadd.f32 %v2233, %v2405
      %v2526 = vadd.f32 %v2234, %v2408
      %v2527 = vadd.f32 %v2235, %v2413
      %v2528 = vadd.f32 %v2236, %v2416
      %v2529 = vadd.f32 %v2237, %v2421
      %v2530 = vadd.f32 %v2238, %v2424
      %v2531 = vadd.f32 %v2239, %v2429
      %v2532 = vadd.f32 %v2240, %v2432
      %v2533 = vadd.f32 %v2241, %v2437
      %v2534 = vadd.f32 %v2242, %v2440
      %v2535 = vadd.f32 %v2243, %v2445
      %v2536 = vadd.f32 %v2244, %v2448
      %v2537 = vadd.f32 %v2245, %v2453
      %v2538 = vadd.f32 %v2246, %v2456
      %v2539 = vadd.f32 %v2247, %v2461
      %v2540 = vadd.f32 %v2248, %v2464
      %v2541 = vadd.f32 %v2249, %v2469
      %v2542 = vadd.f32 %v2250, %v2472
      %v2543 = vadd.f32 %v2251, %v2477
      %v2544 = vadd.f32 %v2252, %v2480
      %v2545 = vadd.f32 %v2253, %v2485
      %v2546 = vadd.f32 %v2254, %v2488
      %v2547 = vadd.f32 %v2255, %v2493
      %v2548 = vadd.f32 %v2256, %v2496
      %v2549 = vadd.f32 %v2257, %v2501
      %v2550 = vadd.f32 %v2258, %v2504
      %v2551 = vadd.f32 %v2259, %v2509
      %v2552 = vadd.f32 %v2260, %v2512
      %v2553 = vadd.f32 %v2261, %v2517
      %v2554 = vadd.f32 %v2262, %v2520
      %s2555 = scalar_lea.vmem [#allocation2], 48
      %v2556 = vld [vmem:[%s2555] sm:$0xff]
      %v2557 = vld [vmem:[%s2555 + $0x8] sm:$0xff]
      %v2558 = vld [vmem:[%s2555 + $0x18] sm:$0xff]
      %v2559 = vld [vmem:[%s2555 + $0x20] sm:$0xff]
      %v2560 = vld [vmem:[%s2555 + $0x30] sm:$0xff]
      %v2561 = vld [vmem:[%s2555 + $0x38] sm:$0xff]
      %v2562 = vld [vmem:[%s2555 + $0x48] sm:$0xff]
      %v2563 = vld [vmem:[%s2555 + $0x50] sm:$0xff]
      %v2564 = vld [vmem:[%s2555 + $0x60] sm:$0xff]
      %v2565 = vld [vmem:[%s2555 + $0x68] sm:$0xff]
      %v2566 = vld [vmem:[%s2555 + $0x78] sm:$0xff]
      %v2567 = vld [vmem:[%s2555 + $0x80] sm:$0xff]
      %v2568 = vld [vmem:[%s2555 + $0x90] sm:$0xff]
      %v2569 = vld [vmem:[%s2555 + $0x98] sm:$0xff]
      %v2570 = vld [vmem:[%s2555 + $0xa8] sm:$0xff]
      %v2571 = vld [vmem:[%s2555 + $0xb0] sm:$0xff]
      %v2572 = vld [vmem:[%s2555 + $0xc0] sm:$0xff]
      %v2573 = vld [vmem:[%s2555 + $0xc8] sm:$0xff]
      %v2574 = vld [vmem:[%s2555 + $0xd8] sm:$0xff]
      %v2575 = vld [vmem:[%s2555 + $0xe0] sm:$0xff]
      %v2576 = vld [vmem:[%s2555 + $0xf0] sm:$0xff]
      %v2577 = vld [vmem:[%s2555 + $0xf8] sm:$0xff]
      %v2578 = vld [vmem:[%s2555 + $0x108] sm:$0xff]
      %v2579 = vld [vmem:[%s2555 + $0x110] sm:$0xff]
      %v2580 = vld [vmem:[%s2555 + $0x120] sm:$0xff]
      %v2581 = vld [vmem:[%s2555 + $0x128] sm:$0xff]
      %v2582 = vld [vmem:[%s2555 + $0x138] sm:$0xff]
      %v2583 = vld [vmem:[%s2555 + $0x140] sm:$0xff]
      %v2584 = vld [vmem:[%s2555 + $0x150] sm:$0xff]
      %v2585 = vld [vmem:[%s2555 + $0x158] sm:$0xff]
      %v2586 = vld [vmem:[%s2555 + $0x168] sm:$0xff]
      %v2587 = vld [vmem:[%s2555 + $0x170] sm:$0xff]
      %v2588 = vpack.c.bf16 %v2557, %v2556
      %v2589 = vpack.c.bf16 %v2559, %v2558
      %v2590 = vpack.c.bf16 %v2561, %v2560
      %v2591 = vpack.c.bf16 %v2563, %v2562
      %v2592 = vpack.c.bf16 %v2565, %v2564
      %v2593 = vpack.c.bf16 %v2567, %v2566
      %v2594 = vpack.c.bf16 %v2569, %v2568
      %v2595 = vpack.c.bf16 %v2571, %v2570
      %v2596 = vpack.c.bf16 %v2573, %v2572
      %v2597 = vpack.c.bf16 %v2575, %v2574
      %v2598 = vpack.c.bf16 %v2577, %v2576
      %v2599 = vpack.c.bf16 %v2579, %v2578
      %v2600 = vpack.c.bf16 %v2581, %v2580
      %v2601 = vpack.c.bf16 %v2583, %v2582
      %v2602 = vpack.c.bf16 %v2585, %v2584
      %v2603 = vpack.c.bf16 %v2587, %v2586
      %v2605 = vsel %vm824, %v2588, 0
      %v2608 = vsel %vm824, %v2589, 0
      %v2611 = vsel %vm824, %v2590, 0
      %v2614 = vsel %vm824, %v2591, 0
      %v2617 = vsel %vm824, %v2592, 0
      %v2620 = vsel %vm824, %v2593, 0
      %v2623 = vsel %vm824, %v2594, 0
      %v2626 = vsel %vm824, %v2595, 0
      %v2629 = vsel %vm824, %v2596, 0
      %v2632 = vsel %vm824, %v2597, 0
      %v2635 = vsel %vm824, %v2598, 0
      %v2638 = vsel %vm824, %v2599, 0
      %v2641 = vsel %vm824, %v2600, 0
      %v2644 = vsel %vm824, %v2601, 0
      %v2647 = vsel %vm824, %v2602, 0
      %v2650 = vsel %vm824, %v2603, 0
      %v2653 = vsel %vm1010, %v863, 0
      %2655 = vmatprep.subr.bf16.mxu0 0
      %2656 = vmatpush1.bf16.msra.mxu0 %v2653
      %2657 = vmatprep.subr.bf16.mxu0 0
      %2658 = vmatpush1.bf16.msra.mxu0 0
      %2659 = vmatprep.subr.bf16.mxu0 0
      %2660 = vmatpush1.bf16.msra.mxu0 0
      %2661 = vmatprep.subr.bf16.mxu0 0
      %2662 = vmatpush1.bf16.msra.mxu0 0
      %2663 = vmatprep.subr.bf16.mxu0 0
      %2664 = vmatpush1.bf16.msra.mxu0 0
      %2665 = vmatprep.subr.bf16.mxu0 0
      %2666 = vmatpush1.bf16.msra.mxu0 0
      %2667 = vmatprep.subr.bf16.mxu0 0
      %2668 = vmatpush1.bf16.msra.mxu0 0
      %2669 = vmatprep.subr.bf16.mxu0 0
      %2670 = vmatpush1.bf16.msra.mxu0 0
      %2671 = vmatprep.subr.bf16.mxu0 0
      %2672 = vmatpush1.bf16.msra.mxu0 0
      %2673 = vmatprep.subr.bf16.mxu0 0
      %2674 = vmatpush1.bf16.msra.mxu0 0
      %2675 = vmatprep.subr.bf16.mxu0 0
      %2676 = vmatpush1.bf16.msra.mxu0 0
      %2677 = vmatprep.subr.bf16.mxu0 0
      %2678 = vmatpush1.bf16.msra.mxu0 0
      %2679 = vmatprep.subr.bf16.mxu0 0
      %2680 = vmatpush1.bf16.msra.mxu0 0
      %2681 = vmatprep.subr.bf16.mxu0 0
      %2682 = vmatpush1.bf16.msra.mxu0 0
      %2683 = vmatprep.subr.bf16.mxu0 0
      %2684 = vmatpush1.bf16.msra.mxu0 0
      %2685 = vmatprep.subr.bf16.mxu0 0
      %2686 = vmatpush1.bf16.msra.mxu0 0
      %2687 = vmatprep.mubr.bf16.mxu0 0
      %2688 = vmatmul.mubr.bf16.gmra.mrb[0].mxu0 %v2605
      %v2689 = vpop.f32.mrb[0].mxu0
      %v2690 = vadd.f32 0.0, %v2689
      %v2691 = vpop.f32.mrb[0].mxu0
      %v2692 = vpop.f32.mrb[0].mxu0
      %v2693 = vadd.f32 0.0, %v2692
      %v2694 = vpop.f32.mrb[0].mxu0
      %2695 = vmatprep.mubr.bf16.mxu0 0
      %2696 = vmatmul.mubr.bf16.gmra.mrb[0].mxu0 %v2608
      %v2697 = vpop.f32.mrb[0].mxu0
      %v2698 = vadd.f32 0.0, %v2697
      %v2699 = vpop.f32.mrb[0].mxu0
      %v2700 = vpop.f32.mrb[0].mxu0
      %v2701 = vadd.f32 0.0, %v2700
      %v2702 = vpop.f32.mrb[0].mxu0
      %2703 = vmatprep.mubr.bf16.mxu0 0
      %2704 = vmatmul.mubr.bf16.gmra.mrb[0].mxu0 %v2611
      %v2705 = vpop.f32.mrb[0].mxu0
      %v2706 = vadd.f32 0.0, %v2705
      %v2707 = vpop.f32.mrb[0].mxu0
      %v2708 = vpop.f32.mrb[0].mxu0
      %v2709 = vadd.f32 0.0, %v2708
      %v2710 = vpop.f32.mrb[0].mxu0
      %2711 = vmatprep.mubr.bf16.mxu0 0
      %2712 = vmatmul.mubr.bf16.gmra.mrb[0].mxu0 %v2614
      %v2713 = vpop.f32.mrb[0].mxu0
      %v2714 = vadd.f32 0.0, %v2713
      %v2715 = vpop.f32.mrb[0].mxu0
      %v2716 = vpop.f32.mrb[0].mxu0
      %v2717 = vadd.f32 0.0, %v2716
      %v2718 = vpop.f32.mrb[0].mxu0
      %2719 = vmatprep.mubr.bf16.mxu0 0
      %2720 = vmatmul.mubr.bf16.gmra.mrb[0].mxu0 %v2617
      %v2721 = vpop.f32.mrb[0].mxu0
      %v2722 = vadd.f32 0.0, %v2721
      %v2723 = vpop.f32.mrb[0].mxu0
      %v2724 = vpop.f32.mrb[0].mxu0
      %v2725 = vadd.f32 0.0, %v2724
      %v2726 = vpop.f32.mrb[0].mxu0
      %2727 = vmatprep.mubr.bf16.mxu0 0
      %2728 = vmatmul.mubr.bf16.gmra.mrb[0].mxu0 %v2620
      %v2729 = vpop.f32.mrb[0].mxu0
      %v2730 = vadd.f32 0.0, %v2729
      %v2731 = vpop.f32.mrb[0].mxu0
      %v2732 = vpop.f32.mrb[0].mxu0
      %v2733 = vadd.f32 0.0, %v2732
      %v2734 = vpop.f32.mrb[0].mxu0
      %2735 = vmatprep.mubr.bf16.mxu0 0
      %2736 = vmatmul.mubr.bf16.gmra.mrb[0].mxu0 %v2623
      %v2737 = vpop.f32.mrb[0].mxu0
      %v2738 = vadd.f32 0.0, %v2737
      %v2739 = vpop.f32.mrb[0].mxu0
      %v2740 = vpop.f32.mrb[0].mxu0
      %v2741 = vadd.f32 0.0, %v2740
      %v2742 = vpop.f32.mrb[0].mxu0
      %2743 = vmatprep.mubr.bf16.mxu0 0
      %2744 = vmatmul.mubr.bf16.gmra.mrb[0].mxu0 %v2626
      %v2745 = vpop.f32.mrb[0].mxu0
      %v2746 = vadd.f32 0.0, %v2745
      %v2747 = vpop.f32.mrb[0].mxu0
      %v2748 = vpop.f32.mrb[0].mxu0
      %v2749 = vadd.f32 0.0, %v2748
      %v2750 = vpop.f32.mrb[0].mxu0
      %2751 = vmatprep.mubr.bf16.mxu0 0
      %2752 = vmatmul.mubr.bf16.gmra.mrb[0].mxu0 %v2629
      %v2753 = vpop.f32.mrb[0].mxu0
      %v2754 = vadd.f32 0.0, %v2753
      %v2755 = vpop.f32.mrb[0].mxu0
      %v2756 = vpop.f32.mrb[0].mxu0
      %v2757 = vadd.f32 0.0, %v2756
      %v2758 = vpop.f32.mrb[0].mxu0
      %2759 = vmatprep.mubr.bf16.mxu0 0
      %2760 = vmatmul.mubr.bf16.gmra.mrb[0].mxu0 %v2632
      %v2761 = vpop.f32.mrb[0].mxu0
      %v2762 = vadd.f32 0.0, %v2761
      %v2763 = vpop.f32.mrb[0].mxu0
      %v2764 = vpop.f32.mrb[0].mxu0
      %v2765 = vadd.f32 0.0, %v2764
      %v2766 = vpop.f32.mrb[0].mxu0
      %2767 = vmatprep.mubr.bf16.mxu0 0
      %2768 = vmatmul.mubr.bf16.gmra.mrb[0].mxu0 %v2635
      %v2769 = vpop.f32.mrb[0].mxu0
      %v2770 = vadd.f32 0.0, %v2769
      %v2771 = vpop.f32.mrb[0].mxu0
      %v2772 = vpop.f32.mrb[0].mxu0
      %v2773 = vadd.f32 0.0, %v2772
      %v2774 = vpop.f32.mrb[0].mxu0
      %2775 = vmatprep.mubr.bf16.mxu0 0
      %2776 = vmatmul.mubr.bf16.gmra.mrb[0].mxu0 %v2638
      %v2777 = vpop.f32.mrb[0].mxu0
      %v2778 = vadd.f32 0.0, %v2777
      %v2779 = vpop.f32.mrb[0].mxu0
      %v2780 = vpop.f32.mrb[0].mxu0
      %v2781 = vadd.f32 0.0, %v2780
      %v2782 = vpop.f32.mrb[0].mxu0
      %2783 = vmatprep.mubr.bf16.mxu0 0
      %2784 = vmatmul.mubr.bf16.gmra.mrb[0].mxu0 %v2641
      %v2785 = vpop.f32.mrb[0].mxu0
      %v2786 = vadd.f32 0.0, %v2785
      %v2787 = vpop.f32.mrb[0].mxu0
      %v2788 = vpop.f32.mrb[0].mxu0
      %v2789 = vadd.f32 0.0, %v2788
      %v2790 = vpop.f32.mrb[0].mxu0
      %2791 = vmatprep.mubr.bf16.mxu0 0
      %2792 = vmatmul.mubr.bf16.gmra.mrb[0].mxu0 %v2644
      %v2793 = vpop.f32.mrb[0].mxu0
      %v2794 = vadd.f32 0.0, %v2793
      %v2795 = vpop.f32.mrb[0].mxu0
      %v2796 = vpop.f32.mrb[0].mxu0
      %v2797 = vadd.f32 0.0, %v2796
      %v2798 = vpop.f32.mrb[0].mxu0
      %2799 = vmatprep.mubr.bf16.mxu0 0
      %2800 = vmatmul.mubr.bf16.gmra.mrb[0].mxu0 %v2647
      %v2801 = vpop.f32.mrb[0].mxu0
      %v2802 = vadd.f32 0.0, %v2801
      %v2803 = vpop.f32.mrb[0].mxu0
      %v2804 = vpop.f32.mrb[0].mxu0
      %v2805 = vadd.f32 0.0, %v2804
      %v2806 = vpop.f32.mrb[0].mxu0
      %2807 = vmatprep.mubr.bf16.mxu0 0
      %2808 = vmatmul.mubr.bf16.gmra.mrb[0].mxu0 %v2650
      %v2809 = vpop.f32.mrb[0].mxu0
      %v2810 = vadd.f32 0.0, %v2809
      %v2811 = vpop.f32.mrb[0].mxu0
      %v2812 = vpop.f32.mrb[0].mxu0
      %v2813 = vadd.f32 0.0, %v2812
      %v2814 = vpop.f32.mrb[0].mxu0
      %2815 = vdwg.mxu0
      %v2816 = vadd.f32 %v2523, %v2690
      %v2817 = vadd.f32 %v2524, %v2693
      %v2818 = vadd.f32 %v2525, %v2698
      %v2819 = vadd.f32 %v2526, %v2701
      %v2820 = vadd.f32 %v2527, %v2706
      %v2821 = vadd.f32 %v2528, %v2709
      %v2822 = vadd.f32 %v2529, %v2714
      %v2823 = vadd.f32 %v2530, %v2717
      %v2824 = vadd.f32 %v2531, %v2722
      %v2825 = vadd.f32 %v2532, %v2725
      %v2826 = vadd.f32 %v2533, %v2730
      %v2827 = vadd.f32 %v2534, %v2733
      %v2828 = vadd.f32 %v2535, %v2738
      %v2829 = vadd.f32 %v2536, %v2741
      %v2830 = vadd.f32 %v2537, %v2746
      %v2831 = vadd.f32 %v2538, %v2749
      %v2832 = vadd.f32 %v2539, %v2754
      %v2833 = vadd.f32 %v2540, %v2757
      %v2834 = vadd.f32 %v2541, %v2762
      %v2835 = vadd.f32 %v2542, %v2765
      %v2836 = vadd.f32 %v2543, %v2770
      %v2837 = vadd.f32 %v2544, %v2773
      %v2838 = vadd.f32 %v2545, %v2778
      %v2839 = vadd.f32 %v2546, %v2781
      %v2840 = vadd.f32 %v2547, %v2786
      %v2841 = vadd.f32 %v2548, %v2789
      %v2842 = vadd.f32 %v2549, %v2794
      %v2843 = vadd.f32 %v2550, %v2797
      %v2844 = vadd.f32 %v2551, %v2802
      %v2845 = vadd.f32 %v2552, %v2805
      %v2846 = vadd.f32 %v2553, %v2810
      %v2847 = vadd.f32 %v2554, %v2813
      %v2848 = vld [vmem:[%s2555 + $0x1] sm:$0xff]
      %v2849 = vld [vmem:[%s2555 + $0x9] sm:$0xff]
      %v2850 = vld [vmem:[%s2555 + $0x19] sm:$0xff]
      %v2851 = vld [vmem:[%s2555 + $0x21] sm:$0xff]
      %v2852 = vld [vmem:[%s2555 + $0x31] sm:$0xff]
      %v2853 = vld [vmem:[%s2555 + $0x39] sm:$0xff]
      %v2854 = vld [vmem:[%s2555 + $0x49] sm:$0xff]
      %v2855 = vld [vmem:[%s2555 + $0x51] sm:$0xff]
      %v2856 = vld [vmem:[%s2555 + $0x61] sm:$0xff]
      %v2857 = vld [vmem:[%s2555 + $0x69] sm:$0xff]
      %v2858 = vld [vmem:[%s2555 + $0x79] sm:$0xff]
      %v2859 = vld [vmem:[%s2555 + $0x81] sm:$0xff]
      %v2860 = vld [vmem:[%s2555 + $0x91] sm:$0xff]
      %v2861 = vld [vmem:[%s2555 + $0x99] sm:$0xff]
      %v2862 = vld [vmem:[%s2555 + $0xa9] sm:$0xff]
      %v2863 = vld [vmem:[%s2555 + $0xb1] sm:$0xff]
      %v2864 = vld [vmem:[%s2555 + $0xc1] sm:$0xff]
      %v2865 = vld [vmem:[%s2555 + $0xc9] sm:$0xff]
      %v2866 = vld [vmem:[%s2555 + $0xd9] sm:$0xff]
      %v2867 = vld [vmem:[%s2555 + $0xe1] sm:$0xff]
      %v2868 = vld [vmem:[%s2555 + $0xf1] sm:$0xff]
      %v2869 = vld [vmem:[%s2555 + $0xf9] sm:$0xff]
      %v2870 = vld [vmem:[%s2555 + $0x109] sm:$0xff]
      %v2871 = vld [vmem:[%s2555 + $0x111] sm:$0xff]
      %v2872 = vld [vmem:[%s2555 + $0x121] sm:$0xff]
      %v2873 = vld [vmem:[%s2555 + $0x129] sm:$0xff]
      %v2874 = vld [vmem:[%s2555 + $0x139] sm:$0xff]
      %v2875 = vld [vmem:[%s2555 + $0x141] sm:$0xff]
      %v2876 = vld [vmem:[%s2555 + $0x151] sm:$0xff]
      %v2877 = vld [vmem:[%s2555 + $0x159] sm:$0xff]
      %v2878 = vld [vmem:[%s2555 + $0x169] sm:$0xff]
      %v2879 = vld [vmem:[%s2555 + $0x171] sm:$0xff]
      %v2880 = vpack.c.bf16 %v2849, %v2848
      %v2881 = vpack.c.bf16 %v2851, %v2850
      %v2882 = vpack.c.bf16 %v2853, %v2852
      %v2883 = vpack.c.bf16 %v2855, %v2854
      %v2884 = vpack.c.bf16 %v2857, %v2856
      %v2885 = vpack.c.bf16 %v2859, %v2858
      %v2886 = vpack.c.bf16 %v2861, %v2860
      %v2887 = vpack.c.bf16 %v2863, %v2862
      %v2888 = vpack.c.bf16 %v2865, %v2864
      %v2889 = vpack.c.bf16 %v2867, %v2866
      %v2890 = vpack.c.bf16 %v2869, %v2868
      %v2891 = vpack.c.bf16 %v2871, %v2870
      %v2892 = vpack.c.bf16 %v2873, %v2872
      %v2893 = vpack.c.bf16 %v2875, %v2874
      %v2894 = vpack.c.bf16 %v2877, %v2876
      %v2895 = vpack.c.bf16 %v2879, %v2878
      %v2897 = vsel %vm824, %v2880, 0
      %v2900 = vsel %vm824, %v2881, 0
      %v2903 = vsel %vm824, %v2882, 0
      %v2906 = vsel %vm824, %v2883, 0
      %v2909 = vsel %vm824, %v2884, 0
      %v2912 = vsel %vm824, %v2885, 0
      %v2915 = vsel %vm824, %v2886, 0
      %v2918 = vsel %vm824, %v2887, 0
      %v2921 = vsel %vm824, %v2888, 0
      %v2924 = vsel %vm824, %v2889, 0
      %v2927 = vsel %vm824, %v2890, 0
      %v2930 = vsel %vm824, %v2891, 0
      %v2933 = vsel %vm824, %v2892, 0
      %v2936 = vsel %vm824, %v2893, 0
      %v2939 = vsel %vm824, %v2894, 0
      %v2942 = vsel %vm824, %v2895, 0
      %v2945 = vsel %vm1010, %v864, 0
      %2947 = vmatprep.subr.bf16.mxu0 0
      %2948 = vmatpush1.bf16.msra.mxu0 %v2945
      %2949 = vmatprep.subr.bf16.mxu0 0
      %2950 = vmatpush1.bf16.msra.mxu0 0
      %2951 = vmatprep.subr.bf16.mxu0 0
      %2952 = vmatpush1.bf16.msra.mxu0 0
      %2953 = vmatprep.subr.bf16.mxu0 0
      %2954 = vmatpush1.bf16.msra.mxu0 0
      %2955 = vmatprep.subr.bf16.mxu0 0
      %2956 = vmatpush1.bf16.msra.mxu0 0
      %2957 = vmatprep.subr.bf16.mxu0 0
      %2958 = vmatpush1.bf16.msra.mxu0 0
      %2959 = vmatprep.subr.bf16.mxu0 0
      %2960 = vmatpush1.bf16.msra.mxu0 0
      %2961 = vmatprep.subr.bf16.mxu0 0
      %2962 = vmatpush1.bf16.msra.mxu0 0
      %2963 = vmatprep.subr.bf16.mxu0 0
      %2964 = vmatpush1.bf16.msra.mxu0 0
      %2965 = vmatprep.subr.bf16.mxu0 0
      %2966 = vmatpush1.bf16.msra.mxu0 0
      %2967 = vmatprep.subr.bf16.mxu0 0
      %2968 = vmatpush1.bf16.msra.mxu0 0
      %2969 = vmatprep.subr.bf16.mxu0 0
      %2970 = vmatpush1.bf16.msra.mxu0 0
      %2971 = vmatprep.subr.bf16.mxu0 0
      %2972 = vmatpush1.bf16.msra.mxu0 0
      %2973 = vmatprep.subr.bf16.mxu0 0
      %2974 = vmatpush1.bf16.msra.mxu0 0
      %2975 = vmatprep.subr.bf16.mxu0 0
      %2976 = vmatpush1.bf16.msra.mxu0 0
      %2977 = vmatprep.subr.bf16.mxu0 0
      %2978 = vmatpush1.bf16.msra.mxu0 0
      %2979 = vmatprep.mubr.bf16.mxu0 0
      %2980 = vmatmul.mubr.bf16.gmra.mrb[0].mxu0 %v2897
      %v2981 = vpop.f32.mrb[0].mxu0
      %v2982 = vadd.f32 0.0, %v2981
      %v2983 = vpop.f32.mrb[0].mxu0
      %v2984 = vpop.f32.mrb[0].mxu0
      %v2985 = vadd.f32 0.0, %v2984
      %v2986 = vpop.f32.mrb[0].mxu0
      %2987 = vmatprep.mubr.bf16.mxu0 0
      %2988 = vmatmul.mubr.bf16.gmra.mrb[0].mxu0 %v2900
      %v2989 = vpop.f32.mrb[0].mxu0
      %v2990 = vadd.f32 0.0, %v2989
      %v2991 = vpop.f32.mrb[0].mxu0
      %v2992 = vpop.f32.mrb[0].mxu0
      %v2993 = vadd.f32 0.0, %v2992
      %v2994 = vpop.f32.mrb[0].mxu0
      %2995 = vmatprep.mubr.bf16.mxu0 0
      %2996 = vmatmul.mubr.bf16.gmra.mrb[0].mxu0 %v2903
      %v2997 = vpop.f32.mrb[0].mxu0
      %v2998 = vadd.f32 0.0, %v2997
      %v2999 = vpop.f32.mrb[0].mxu0
      %v3000 = vpop.f32.mrb[0].mxu0
      %v3001 = vadd.f32 0.0, %v3000
      %v3002 = vpop.f32.mrb[0].mxu0
      %3003 = vmatprep.mubr.bf16.mxu0 0
      %3004 = vmatmul.mubr.bf16.gmra.mrb[0].mxu0 %v2906
      %v3005 = vpop.f32.mrb[0].mxu0
      %v3006 = vadd.f32 0.0, %v3005
      %v3007 = vpop.f32.mrb[0].mxu0
      %v3008 = vpop.f32.mrb[0].mxu0
      %v3009 = vadd.f32 0.0, %v3008
      %v3010 = vpop.f32.mrb[0].mxu0
      %3011 = vmatprep.mubr.bf16.mxu0 0
      %3012 = vmatmul.mubr.bf16.gmra.mrb[0].mxu0 %v2909
      %v3013 = vpop.f32.mrb[0].mxu0
      %v3014 = vadd.f32 0.0, %v3013
      %v3015 = vpop.f32.mrb[0].mxu0
      %v3016 = vpop.f32.mrb[0].mxu0
      %v3017 = vadd.f32 0.0, %v3016
      %v3018 = vpop.f32.mrb[0].mxu0
      %3019 = vmatprep.mubr.bf16.mxu0 0
      %3020 = vmatmul.mubr.bf16.gmra.mrb[0].mxu0 %v2912
      %v3021 = vpop.f32.mrb[0].mxu0
      %v3022 = vadd.f32 0.0, %v3021
      %v3023 = vpop.f32.mrb[0].mxu0
      %v3024 = vpop.f32.mrb[0].mxu0
      %v3025 = vadd.f32 0.0, %v3024
      %v3026 = vpop.f32.mrb[0].mxu0
      %3027 = vmatprep.mubr.bf16.mxu0 0
      %3028 = vmatmul.mubr.bf16.gmra.mrb[0].mxu0 %v2915
      %v3029 = vpop.f32.mrb[0].mxu0
      %v3030 = vadd.f32 0.0, %v3029
      %v3031 = vpop.f32.mrb[0].mxu0
      %v3032 = vpop.f32.mrb[0].mxu0
      %v3033 = vadd.f32 0.0, %v3032
      %v3034 = vpop.f32.mrb[0].mxu0
      %3035 = vmatprep.mubr.bf16.mxu0 0
      %3036 = vmatmul.mubr.bf16.gmra.mrb[0].mxu0 %v2918
      %v3037 = vpop.f32.mrb[0].mxu0
      %v3038 = vadd.f32 0.0, %v3037
      %v3039 = vpop.f32.mrb[0].mxu0
      %v3040 = vpop.f32.mrb[0].mxu0
      %v3041 = vadd.f32 0.0, %v3040
      %v3042 = vpop.f32.mrb[0].mxu0
      %3043 = vmatprep.mubr.bf16.mxu0 0
      %3044 = vmatmul.mubr.bf16.gmra.mrb[0].mxu0 %v2921
      %v3045 = vpop.f32.mrb[0].mxu0
      %v3046 = vadd.f32 0.0, %v3045
      %v3047 = vpop.f32.mrb[0].mxu0
      %v3048 = vpop.f32.mrb[0].mxu0
      %v3049 = vadd.f32 0.0, %v3048
      %v3050 = vpop.f32.mrb[0].mxu0
      %3051 = vmatprep.mubr.bf16.mxu0 0
      %3052 = vmatmul.mubr.bf16.gmra.mrb[0].mxu0 %v2924
      %v3053 = vpop.f32.mrb[0].mxu0
      %v3054 = vadd.f32 0.0, %v3053
      %v3055 = vpop.f32.mrb[0].mxu0
      %v3056 = vpop.f32.mrb[0].mxu0
      %v3057 = vadd.f32 0.0, %v3056
      %v3058 = vpop.f32.mrb[0].mxu0
      %3059 = vmatprep.mubr.bf16.mxu0 0
      %3060 = vmatmul.mubr.bf16.gmra.mrb[0].mxu0 %v2927
      %v3061 = vpop.f32.mrb[0].mxu0
      %v3062 = vadd.f32 0.0, %v3061
      %v3063 = vpop.f32.mrb[0].mxu0
      %v3064 = vpop.f32.mrb[0].mxu0
      %v3065 = vadd.f32 0.0, %v3064
      %v3066 = vpop.f32.mrb[0].mxu0
      %3067 = vmatprep.mubr.bf16.mxu0 0
      %3068 = vmatmul.mubr.bf16.gmra.mrb[0].mxu0 %v2930
      %v3069 = vpop.f32.mrb[0].mxu0
      %v3070 = vadd.f32 0.0, %v3069
      %v3071 = vpop.f32.mrb[0].mxu0
      %v3072 = vpop.f32.mrb[0].mxu0
      %v3073 = vadd.f32 0.0, %v3072
      %v3074 = vpop.f32.mrb[0].mxu0
      %3075 = vmatprep.mubr.bf16.mxu0 0
      %3076 = vmatmul.mubr.bf16.gmra.mrb[0].mxu0 %v2933
      %v3077 = vpop.f32.mrb[0].mxu0
      %v3078 = vadd.f32 0.0, %v3077
      %v3079 = vpop.f32.mrb[0].mxu0
      %v3080 = vpop.f32.mrb[0].mxu0
      %v3081 = vadd.f32 0.0, %v3080
      %v3082 = vpop.f32.mrb[0].mxu0
      %3083 = vmatprep.mubr.bf16.mxu0 0
      %3084 = vmatmul.mubr.bf16.gmra.mrb[0].mxu0 %v2936
      %v3085 = vpop.f32.mrb[0].mxu0
      %v3086 = vadd.f32 0.0, %v3085
      %v3087 = vpop.f32.mrb[0].mxu0
      %v3088 = vpop.f32.mrb[0].mxu0
      %v3089 = vadd.f32 0.0, %v3088
      %v3090 = vpop.f32.mrb[0].mxu0
      %3091 = vmatprep.mubr.bf16.mxu0 0
      %3092 = vmatmul.mubr.bf16.gmra.mrb[0].mxu0 %v2939
      %v3093 = vpop.f32.mrb[0].mxu0
      %v3094 = vadd.f32 0.0, %v3093
      %v3095 = vpop.f32.mrb[0].mxu0
      %v3096 = vpop.f32.mrb[0].mxu0
      %v3097 = vadd.f32 0.0, %v3096
      %v3098 = vpop.f32.mrb[0].mxu0
      %3099 = vmatprep.mubr.bf16.mxu0 0
      %3100 = vmatmul.mubr.bf16.gmra.mrb[0].mxu0 %v2942
      %v3101 = vpop.f32.mrb[0].mxu0
      %v3102 = vadd.f32 0.0, %v3101
      %v3103 = vpop.f32.mrb[0].mxu0
      %v3104 = vpop.f32.mrb[0].mxu0
      %v3105 = vadd.f32 0.0, %v3104
      %v3106 = vpop.f32.mrb[0].mxu0
      %3107 = vdwg.mxu0
      %v3108 = vadd.f32 %v2816, %v2982
      %v3109 = vadd.f32 %v2817, %v2985
      %v3110 = vadd.f32 %v2818, %v2990
      %v3111 = vadd.f32 %v2819, %v2993
      %v3112 = vadd.f32 %v2820, %v2998
      %v3113 = vadd.f32 %v2821, %v3001
      %v3114 = vadd.f32 %v2822, %v3006
      %v3115 = vadd.f32 %v2823, %v3009
      %v3116 = vadd.f32 %v2824, %v3014
      %v3117 = vadd.f32 %v2825, %v3017
      %v3118 = vadd.f32 %v2826, %v3022
      %v3119 = vadd.f32 %v2827, %v3025
      %v3120 = vadd.f32 %v2828, %v3030
      %v3121 = vadd.f32 %v2829, %v3033
      %v3122 = vadd.f32 %v2830, %v3038
      %v3123 = vadd.f32 %v2831, %v3041
      %v3124 = vadd.f32 %v2832, %v3046
      %v3125 = vadd.f32 %v2833, %v3049
      %v3126 = vadd.f32 %v2834, %v3054
      %v3127 = vadd.f32 %v2835, %v3057
      %v3128 = vadd.f32 %v2836, %v3062
      %v3129 = vadd.f32 %v2837, %v3065
      %v3130 = vadd.f32 %v2838, %v3070
      %v3131 = vadd.f32 %v2839, %v3073
      %v3132 = vadd.f32 %v2840, %v3078
      %v3133 = vadd.f32 %v2841, %v3081
      %v3134 = vadd.f32 %v2842, %v3086
      %v3135 = vadd.f32 %v2843, %v3089
      %v3136 = vadd.f32 %v2844, %v3094
      %v3137 = vadd.f32 %v2845, %v3097
      %v3138 = vadd.f32 %v2846, %v3102
      %v3139 = vadd.f32 %v2847, %v3105
      %v3140 = vld [vmem:[%s2555 + $0x2] sm:$0xff]
      %v3141 = vld [vmem:[%s2555 + $0xa] sm:$0xff]
      %v3142 = vld [vmem:[%s2555 + $0x1a] sm:$0xff]
      %v3143 = vld [vmem:[%s2555 + $0x22] sm:$0xff]
      %v3144 = vld [vmem:[%s2555 + $0x32] sm:$0xff]
      %v3145 = vld [vmem:[%s2555 + $0x3a] sm:$0xff]
      %v3146 = vld [vmem:[%s2555 + $0x4a] sm:$0xff]
      %v3147 = vld [vmem:[%s2555 + $0x52] sm:$0xff]
      %v3148 = vld [vmem:[%s2555 + $0x62] sm:$0xff]
      %v3149 = vld [vmem:[%s2555 + $0x6a] sm:$0xff]
      %v3150 = vld [vmem:[%s2555 + $0x7a] sm:$0xff]
      %v3151 = vld [vmem:[%s2555 + $0x82] sm:$0xff]
      %v3152 = vld [vmem:[%s2555 + $0x92] sm:$0xff]
      %v3153 = vld [vmem:[%s2555 + $0x9a] sm:$0xff]
      %v3154 = vld [vmem:[%s2555 + $0xaa] sm:$0xff]
      %v3155 = vld [vmem:[%s2555 + $0xb2] sm:$0xff]
      %v3156 = vld [vmem:[%s2555 + $0xc2] sm:$0xff]
      %v3157 = vld [vmem:[%s2555 + $0xca] sm:$0xff]
      %v3158 = vld [vmem:[%s2555 + $0xda] sm:$0xff]
      %v3159 = vld [vmem:[%s2555 + $0xe2] sm:$0xff]
      %v3160 = vld [vmem:[%s2555 + $0xf2] sm:$0xff]
      %v3161 = vld [vmem:[%s2555 + $0xfa] sm:$0xff]
      %v3162 = vld [vmem:[%s2555 + $0x10a] sm:$0xff]
      %v3163 = vld [vmem:[%s2555 + $0x112] sm:$0xff]
      %v3164 = vld [vmem:[%s2555 + $0x122] sm:$0xff]
      %v3165 = vld [vmem:[%s2555 + $0x12a] sm:$0xff]
      %v3166 = vld [vmem:[%s2555 + $0x13a] sm:$0xff]
      %v3167 = vld [vmem:[%s2555 + $0x142] sm:$0xff]
      %v3168 = vld [vmem:[%s2555 + $0x152] sm:$0xff]
      %v3169 = vld [vmem:[%s2555 + $0x15a] sm:$0xff]
      %v3170 = vld [vmem:[%s2555 + $0x16a] sm:$0xff]
      %v3171 = vld [vmem:[%s2555 + $0x172] sm:$0xff]
      %v3172 = vpack.c.bf16 %v3141, %v3140
      %v3173 = vpack.c.bf16 %v3143, %v3142
      %v3174 = vpack.c.bf16 %v3145, %v3144
      %v3175 = vpack.c.bf16 %v3147, %v3146
      %v3176 = vpack.c.bf16 %v3149, %v3148
      %v3177 = vpack.c.bf16 %v3151, %v3150
      %v3178 = vpack.c.bf16 %v3153, %v3152
      %v3179 = vpack.c.bf16 %v3155, %v3154
      %v3180 = vpack.c.bf16 %v3157, %v3156
      %v3181 = vpack.c.bf16 %v3159, %v3158
      %v3182 = vpack.c.bf16 %v3161, %v3160
      %v3183 = vpack.c.bf16 %v3163, %v3162
      %v3184 = vpack.c.bf16 %v3165, %v3164
      %v3185 = vpack.c.bf16 %v3167, %v3166
      %v3186 = vpack.c.bf16 %v3169, %v3168
      %v3187 = vpack.c.bf16 %v3171, %v3170
      %v3189 = vsel %vm824, %v3172, 0
      %v3192 = vsel %vm824, %v3173, 0
      %v3195 = vsel %vm824, %v3174, 0
      %v3198 = vsel %vm824, %v3175, 0
      %v3201 = vsel %vm824, %v3176, 0
      %v3204 = vsel %vm824, %v3177, 0
      %v3207 = vsel %vm824, %v3178, 0
      %v3210 = vsel %vm824, %v3179, 0
      %v3213 = vsel %vm824, %v3180, 0
      %v3216 = vsel %vm824, %v3181, 0
      %v3219 = vsel %vm824, %v3182, 0
      %v3222 = vsel %vm824, %v3183, 0
      %v3225 = vsel %vm824, %v3184, 0
      %v3228 = vsel %vm824, %v3185, 0
      %v3231 = vsel %vm824, %v3186, 0
      %v3234 = vsel %vm824, %v3187, 0
      %v3237 = vsel %vm1010, %v865, 0
      %3239 = vmatprep.subr.bf16.mxu0 0
      %3240 = vmatpush1.bf16.msra.mxu0 %v3237
      %3241 = vmatprep.subr.bf16.mxu0 0
      %3242 = vmatpush1.bf16.msra.mxu0 0
      %3243 = vmatprep.subr.bf16.mxu0 0
      %3244 = vmatpush1.bf16.msra.mxu0 0
      %3245 = vmatprep.subr.bf16.mxu0 0
      %3246 = vmatpush1.bf16.msra.mxu0 0
      %3247 = vmatprep.subr.bf16.mxu0 0
      %3248 = vmatpush1.bf16.msra.mxu0 0
      %3249 = vmatprep.subr.bf16.mxu0 0
      %3250 = vmatpush1.bf16.msra.mxu0 0
      %3251 = vmatprep.subr.bf16.mxu0 0
      %3252 = vmatpush1.bf16.msra.mxu0 0
      %3253 = vmatprep.subr.bf16.mxu0 0
      %3254 = vmatpush1.bf16.msra.mxu0 0
      %3255 = vmatprep.subr.bf16.mxu0 0
      %3256 = vmatpush1.bf16.msra.mxu0 0
      %3257 = vmatprep.subr.bf16.mxu0 0
      %3258 = vmatpush1.bf16.msra.mxu0 0
      %3259 = vmatprep.subr.bf16.mxu0 0
      %3260 = vmatpush1.bf16.msra.mxu0 0
      %3261 = vmatprep.subr.bf16.mxu0 0
      %3262 = vmatpush1.bf16.msra.mxu0 0
      %3263 = vmatprep.subr.bf16.mxu0 0
      %3264 = vmatpush1.bf16.msra.mxu0 0
      %3265 = vmatprep.subr.bf16.mxu0 0
      %3266 = vmatpush1.bf16.msra.mxu0 0
      %3267 = vmatprep.subr.bf16.mxu0 0
      %3268 = vmatpush1.bf16.msra.mxu0 0
      %3269 = vmatprep.subr.bf16.mxu0 0
      %3270 = vmatpush1.bf16.msra.mxu0 0
      %3271 = vmatprep.mubr.bf16.mxu0 0
      %3272 = vmatmul.mubr.bf16.gmra.mrb[0].mxu0 %v3189
      %v3273 = vpop.f32.mrb[0].mxu0
      %v3274 = vadd.f32 0.0, %v3273
      %v3275 = vpop.f32.mrb[0].mxu0
      %v3276 = vpop.f32.mrb[0].mxu0
      %v3277 = vadd.f32 0.0, %v3276
      %v3278 = vpop.f32.mrb[0].mxu0
      %3279 = vmatprep.mubr.bf16.mxu0 0
      %3280 = vmatmul.mubr.bf16.gmra.mrb[0].mxu0 %v3192
      %v3281 = vpop.f32.mrb[0].mxu0
      %v3282 = vadd.f32 0.0, %v3281
      %v3283 = vpop.f32.mrb[0].mxu0
      %v3284 = vpop.f32.mrb[0].mxu0
      %v3285 = vadd.f32 0.0, %v3284
      %v3286 = vpop.f32.mrb[0].mxu0
      %3287 = vmatprep.mubr.bf16.mxu0 0
      %3288 = vmatmul.mubr.bf16.gmra.mrb[0].mxu0 %v3195
      %v3289 = vpop.f32.mrb[0].mxu0
      %v3290 = vadd.f32 0.0, %v3289
      %v3291 = vpop.f32.mrb[0].mxu0
      %v3292 = vpop.f32.mrb[0].mxu0
      %v3293 = vadd.f32 0.0, %v3292
      %v3294 = vpop.f32.mrb[0].mxu0
      %3295 = vmatprep.mubr.bf16.mxu0 0
      %3296 = vmatmul.mubr.bf16.gmra.mrb[0].mxu0 %v3198
      %v3297 = vpop.f32.mrb[0].mxu0
      %v3298 = vadd.f32 0.0, %v3297
      %v3299 = vpop.f32.mrb[0].mxu0
      %v3300 = vpop.f32.mrb[0].mxu0
      %v3301 = vadd.f32 0.0, %v3300
      %v3302 = vpop.f32.mrb[0].mxu0
      %3303 = vmatprep.mubr.bf16.mxu0 0
      %3304 = vmatmul.mubr.bf16.gmra.mrb[0].mxu0 %v3201
      %v3305 = vpop.f32.mrb[0].mxu0
      %v3306 = vadd.f32 0.0, %v3305
      %v3307 = vpop.f32.mrb[0].mxu0
      %v3308 = vpop.f32.mrb[0].mxu0
      %v3309 = vadd.f32 0.0, %v3308
      %v3310 = vpop.f32.mrb[0].mxu0
      %3311 = vmatprep.mubr.bf16.mxu0 0
      %3312 = vmatmul.mubr.bf16.gmra.mrb[0].mxu0 %v3204
      %v3313 = vpop.f32.mrb[0].mxu0
      %v3314 = vadd.f32 0.0, %v3313
      %v3315 = vpop.f32.mrb[0].mxu0
      %v3316 = vpop.f32.mrb[0].mxu0
      %v3317 = vadd.f32 0.0, %v3316
      %v3318 = vpop.f32.mrb[0].mxu0
      %3319 = vmatprep.mubr.bf16.mxu0 0
      %3320 = vmatmul.mubr.bf16.gmra.mrb[0].mxu0 %v3207
      %v3321 = vpop.f32.mrb[0].mxu0
      %v3322 = vadd.f32 0.0, %v3321
      %v3323 = vpop.f32.mrb[0].mxu0
      %v3324 = vpop.f32.mrb[0].mxu0
      %v3325 = vadd.f32 0.0, %v3324
      %v3326 = vpop.f32.mrb[0].mxu0
      %3327 = vmatprep.mubr.bf16.mxu0 0
      %3328 = vmatmul.mubr.bf16.gmra.mrb[0].mxu0 %v3210
      %v3329 = vpop.f32.mrb[0].mxu0
      %v3330 = vadd.f32 0.0, %v3329
      %v3331 = vpop.f32.mrb[0].mxu0
      %v3332 = vpop.f32.mrb[0].mxu0
      %v3333 = vadd.f32 0.0, %v3332
      %v3334 = vpop.f32.mrb[0].mxu0
      %3335 = vmatprep.mubr.bf16.mxu0 0
      %3336 = vmatmul.mubr.bf16.gmra.mrb[0].mxu0 %v3213
      %v3337 = vpop.f32.mrb[0].mxu0
      %v3338 = vadd.f32 0.0, %v3337
      %v3339 = vpop.f32.mrb[0].mxu0
      %v3340 = vpop.f32.mrb[0].mxu0
      %v3341 = vadd.f32 0.0, %v3340
      %v3342 = vpop.f32.mrb[0].mxu0
      %3343 = vmatprep.mubr.bf16.mxu0 0
      %3344 = vmatmul.mubr.bf16.gmra.mrb[0].mxu0 %v3216
      %v3345 = vpop.f32.mrb[0].mxu0
      %v3346 = vadd.f32 0.0, %v3345
      %v3347 = vpop.f32.mrb[0].mxu0
      %v3348 = vpop.f32.mrb[0].mxu0
      %v3349 = vadd.f32 0.0, %v3348
      %v3350 = vpop.f32.mrb[0].mxu0
      %3351 = vmatprep.mubr.bf16.mxu0 0
      %3352 = vmatmul.mubr.bf16.gmra.mrb[0].mxu0 %v3219
      %v3353 = vpop.f32.mrb[0].mxu0
      %v3354 = vadd.f32 0.0, %v3353
      %v3355 = vpop.f32.mrb[0].mxu0
      %v3356 = vpop.f32.mrb[0].mxu0
      %v3357 = vadd.f32 0.0, %v3356
      %v3358 = vpop.f32.mrb[0].mxu0
      %3359 = vmatprep.mubr.bf16.mxu0 0
      %3360 = vmatmul.mubr.bf16.gmra.mrb[0].mxu0 %v3222
      %v3361 = vpop.f32.mrb[0].mxu0
      %v3362 = vadd.f32 0.0, %v3361
      %v3363 = vpop.f32.mrb[0].mxu0
      %v3364 = vpop.f32.mrb[0].mxu0
      %v3365 = vadd.f32 0.0, %v3364
      %v3366 = vpop.f32.mrb[0].mxu0
      %3367 = vmatprep.mubr.bf16.mxu0 0
      %3368 = vmatmul.mubr.bf16.gmra.mrb[0].mxu0 %v3225
      %v3369 = vpop.f32.mrb[0].mxu0
      %v3370 = vadd.f32 0.0, %v3369
      %v3371 = vpop.f32.mrb[0].mxu0
      %v3372 = vpop.f32.mrb[0].mxu0
      %v3373 = vadd.f32 0.0, %v3372
      %v3374 = vpop.f32.mrb[0].mxu0
      %3375 = vmatprep.mubr.bf16.mxu0 0
      %3376 = vmatmul.mubr.bf16.gmra.mrb[0].mxu0 %v3228
      %v3377 = vpop.f32.mrb[0].mxu0
      %v3378 = vadd.f32 0.0, %v3377
      %v3379 = vpop.f32.mrb[0].mxu0
      %v3380 = vpop.f32.mrb[0].mxu0
      %v3381 = vadd.f32 0.0, %v3380
      %v3382 = vpop.f32.mrb[0].mxu0
      %3383 = vmatprep.mubr.bf16.mxu0 0
      %3384 = vmatmul.mubr.bf16.gmra.mrb[0].mxu0 %v3231
      %v3385 = vpop.f32.mrb[0].mxu0
      %v3386 = vadd.f32 0.0, %v3385
      %v3387 = vpop.f32.mrb[0].mxu0
      %v3388 = vpop.f32.mrb[0].mxu0
      %v3389 = vadd.f32 0.0, %v3388
      %v3390 = vpop.f32.mrb[0].mxu0
      %3391 = vmatprep.mubr.bf16.mxu0 0
      %3392 = vmatmul.mubr.bf16.gmra.mrb[0].mxu0 %v3234
      %v3393 = vpop.f32.mrb[0].mxu0
      %v3394 = vadd.f32 0.0, %v3393
      %v3395 = vpop.f32.mrb[0].mxu0
      %v3396 = vpop.f32.mrb[0].mxu0
      %v3397 = vadd.f32 0.0, %v3396
      %v3398 = vpop.f32.mrb[0].mxu0
      %3399 = vdwg.mxu0
      %v3400 = vadd.f32 %v3108, %v3274
      %v3401 = vadd.f32 %v3109, %v3277
      %v3402 = vadd.f32 %v3110, %v3282
      %v3403 = vadd.f32 %v3111, %v3285
      %v3404 = vadd.f32 %v3112, %v3290
      %v3405 = vadd.f32 %v3113, %v3293
      %v3406 = vadd.f32 %v3114, %v3298
      %v3407 = vadd.f32 %v3115, %v3301
      %v3408 = vadd.f32 %v3116, %v3306
      %v3409 = vadd.f32 %v3117, %v3309
      %v3410 = vadd.f32 %v3118, %v3314
      %v3411 = vadd.f32 %v3119, %v3317
      %v3412 = vadd.f32 %v3120, %v3322
      %v3413 = vadd.f32 %v3121, %v3325
      %v3414 = vadd.f32 %v3122, %v3330
      %v3415 = vadd.f32 %v3123, %v3333
      %v3416 = vadd.f32 %v3124, %v3338
      %v3417 = vadd.f32 %v3125, %v3341
      %v3418 = vadd.f32 %v3126, %v3346
      %v3419 = vadd.f32 %v3127, %v3349
      %v3420 = vadd.f32 %v3128, %v3354
      %v3421 = vadd.f32 %v3129, %v3357
      %v3422 = vadd.f32 %v3130, %v3362
      %v3423 = vadd.f32 %v3131, %v3365
      %v3424 = vadd.f32 %v3132, %v3370
      %v3425 = vadd.f32 %v3133, %v3373
      %v3426 = vadd.f32 %v3134, %v3378
      %v3427 = vadd.f32 %v3135, %v3381
      %v3428 = vadd.f32 %v3136, %v3386
      %v3429 = vadd.f32 %v3137, %v3389
      %v3430 = vadd.f32 %v3138, %v3394
      %v3431 = vadd.f32 %v3139, %v3397
      %3432 = vst.msk [vmem:[%s278] sm:$0xff] %vm439, %v3400
      %3433 = vst.msk [vmem:[%s278 + $0x8] sm:$0xff] %vm439, %v3401
      %3434 = vst.msk [vmem:[%s278 + $0x10] sm:$0xff] %vm439, %v3402
      %3435 = vst.msk [vmem:[%s278 + $0x18] sm:$0xff] %vm439, %v3403
      %3436 = vst.msk [vmem:[%s278 + $0x20] sm:$0xff] %vm439, %v3404
      %3437 = vst.msk [vmem:[%s278 + $0x28] sm:$0xff] %vm439, %v3405
      %3438 = vst.msk [vmem:[%s278 + $0x30] sm:$0xff] %vm439, %v3406
      %3439 = vst.msk [vmem:[%s278 + $0x38] sm:$0xff] %vm439, %v3407
      %3440 = vst.msk [vmem:[%s278 + $0x40] sm:$0xff] %vm439, %v3408
      %3441 = vst.msk [vmem:[%s278 + $0x48] sm:$0xff] %vm439, %v3409
      %3442 = vst.msk [vmem:[%s278 + $0x50] sm:$0xff] %vm439, %v3410
      %3443 = vst.msk [vmem:[%s278 + $0x58] sm:$0xff] %vm439, %v3411
      %3444 = vst.msk [vmem:[%s278 + $0x60] sm:$0xff] %vm439, %v3412
      %3445 = vst.msk [vmem:[%s278 + $0x68] sm:$0xff] %vm439, %v3413
      %3446 = vst.msk [vmem:[%s278 + $0x70] sm:$0xff] %vm439, %v3414
      %3447 = vst.msk [vmem:[%s278 + $0x78] sm:$0xff] %vm439, %v3415
      %3448 = vst.msk [vmem:[%s278 + $0x80] sm:$0xff] %vm439, %v3416
      %3449 = vst.msk [vmem:[%s278 + $0x88] sm:$0xff] %vm439, %v3417
      %3450 = vst.msk [vmem:[%s278 + $0x90] sm:$0xff] %vm439, %v3418
      %3451 = vst.msk [vmem:[%s278 + $0x98] sm:$0xff] %vm439, %v3419
      %3452 = vst.msk [vmem:[%s278 + $0xa0] sm:$0xff] %vm439, %v3420
      %3453 = vst.msk [vmem:[%s278 + $0xa8] sm:$0xff] %vm439, %v3421
      %3454 = vst.msk [vmem:[%s278 + $0xb0] sm:$0xff] %vm439, %v3422
      %3455 = vst.msk [vmem:[%s278 + $0xb8] sm:$0xff] %vm439, %v3423
      %3456 = vst.msk [vmem:[%s278 + $0xc0] sm:$0xff] %vm439, %v3424
      %3457 = vst.msk [vmem:[%s278 + $0xc8] sm:$0xff] %vm439, %v3425
      %3458 = vst.msk [vmem:[%s278 + $0xd0] sm:$0xff] %vm439, %v3426
      %3459 = vst.msk [vmem:[%s278 + $0xd8] sm:$0xff] %vm439, %v3427
      %3460 = vst.msk [vmem:[%s278 + $0xe0] sm:$0xff] %vm439, %v3428
      %3461 = vst.msk [vmem:[%s278 + $0xe8] sm:$0xff] %vm439, %v3429
      %3462 = vst.msk [vmem:[%s278 + $0xf0] sm:$0xff] %vm439, %v3430
      %3463 = vst.msk [vmem:[%s278 + $0xf8] sm:$0xff] %vm439, %v3431
      %p3464 = scmp.lt.s32.totalorder %s18, 1
      %s3465 = scalar_select %p3464, %s18, 1
      %s3466 = smul.addr %s3465, 32
      %s3467 = smul.addr %s3466, 8
      %s3468 = scalar_lea.vmem %s7, %s3467
      // Predicated region
      $region53: #{dense_block_forward.3} parent=47 // pred_check
        %p3469 = pneg %p188
      $region54: #{dense_block_forward.3} parent=47 // pred_check_branch
        %3471 = sbr.rel (%p3469) target = $region56
      $region55: #{dense_block_forward.3} parent=47 // pred_region
        _
      $region56: #{dense_block_forward.3} parent=47 // pred_fallthru
        _
    $region48: #{dense_block_forward.3} parent=5 // pred_fallthru
      _
    %p3472 = scmp.le.s32.totalorder 2, %s13
    // Predicated region
    $region57: #{dense_block_forward.3} parent=5 // pred_check
      %p3473 = pneg %p3472
    $region58: #{dense_block_forward.3} parent=5 // pred_check_branch
      %3475 = sbr.rel (%p3473) target = $region60
    $region59: #{dense_block_forward.3} parent=5 // pred_region
      %s3476 = ssub.s32 %s13, 2
      // Predicated region
      $region61: #{dense_block_forward.3} parent=59 // pred_check
        %p3477 = pneg %p194
      $region62: #{dense_block_forward.3} parent=59 // pred_check_branch
        %3479 = sbr.rel (%p3477) target = $region64
      $region63: #{dense_block_forward.3} parent=59 // pred_region
        %p3480 = scmp.lt.s32.totalorder %s19, 1
        %s3481 = scalar_select %p3480, %s19, 1
        %s3482 = smul.addr %s3481, 32
        %s3483 = smul.addr %s3482, 8
        %s3484 = scalar_lea.vmem %s7, %s3483
      $region64: #{dense_block_forward.3} parent=59 // pred_fallthru
        _
    $region60: #{dense_block_forward.3} parent=5 // pred_fallthru
      _
  $region6: #{dense_block_forward.3} parent=0 // loop_footer
    %s17 = sadd.s32 1, %s13
  $region7: #{dense_block_forward.3} parent=0 // loop_footer_branch
    %12 = sbr.rel target = $region3
  $region8: #{dense_block_forward.3} parent=0 // loop_exit
    _

// kernel: dense_block_forward.4
$region0: #{dense_block_forward.4}
  #allocation0 [shape = 'u32[]', space=smem, size = 0x4, offset = 0x4, fixed_abs, tag = 'smem constant byte address 0x4 - core index']
  #allocation1 [shape = 'u32[144,128]{1,0:T(1,128)}', space=vmem, size = 0x12000, scoped, tag = 'internal scratch']
  #allocation2 [shape = 'f32[18,18,8]{2,1,0:T(8,128)}', space=vmem, size = 0x36000, scoped, tag = 'scratch operand']
  %s0 = inlined_call_operand.vmem [shape: f32[2,256,4], index: 0, kind: input, shape index: {}]
  %s1 = inlined_call_operand.vmem [shape: f32[2,256,4], index: 1, kind: input, shape index: {}]
  %s2 = inlined_call_operand.vmem [shape: f32[1,4], index: 2, kind: input, shape index: {}]
  %s3 = inlined_call_operand.vmem [shape: f32[1,4], index: 3, kind: input, shape index: {}]
  %s4 = inlined_call_operand.vmem [shape: f32[1,4], index: 4, kind: input, shape index: {}]
  %s5 = inlined_call_operand.vmem [shape: f32[1,4], index: 5, kind: input, shape index: {}]
  %s6 = inlined_call_operand.vmem [shape: bf16[4,8], index: 6, kind: input, shape index: {}]
  %s7 = inlined_call_operand.vmem [shape: bf16[4,8], index: 7, kind: input, shape index: {}]
  %s8 = inlined_call_operand.vmem [shape: f32[1,8], index: 8, kind: input, shape index: {}]
  %s9 = inlined_call_operand.vmem [shape: f32[1,8], index: 9, kind: input, shape index: {}]
  %s10 = inlined_call_operand.vmem [shape: bf16[9,8,4], index: 10, kind: input, shape index: {}]
  %s11 = inlined_call_operand.vmem [shape: f32[2,256,4], index: 11, kind: output, shape index: {}]
  %s12 = sld [smem:[#allocation0]]
  $region81: #{dense_block_forward.4} parent=0
    _
  %s14 = ssub.s32 1, %s12
  %s15 = scalar_select 0, %s14, %s12
  loop: start=0, step=1, limit=4
  $region2: #{dense_block_forward.4} parent=0 // loop_pre_header
    _
  $region3: #{dense_block_forward.4} parent=0 // loop_header
    %s17 = sphi 0, %s21
    %p18 = scmp.ge.s32.totalorder %s17, 4
    %s27 = sphi 0, %s29
    %s30 = sphi 0, %s27
    %s31 = sphi 0, %s30
    %s47 = sphi 0, %s31
    %s53 = sphi 0, %s55
    %s56 = sphi 0, %s53
    %s57 = sphi 0, %s56
    %s73 = sphi 0, %s57
    %s77 = sphi 0, %s77
    %s79 = sphi 0, %s77
    %s80 = sphi 0, %s79
    %s94 = sphi 0, %s80
    %s98 = sphi 0, %s98
    %s100 = sphi 0, %s98
    %s101 = sphi 0, %s100
    %s115 = sphi 0, %s101
    %s119 = sphi 0, %s119
    %s121 = sphi 0, %s119
    %s122 = sphi 0, %s121
    %s136 = sphi 0, %s122
    %s140 = sphi 0, %s140
    %s142 = sphi 0, %s140
    %s143 = sphi 0, %s142
    %s157 = sphi 0, %s143
    %s161 = sphi 0, %s161
    %s163 = sphi 0, %s161
    %s164 = sphi 0, %s163
    %s178 = sphi 0, %s164
    %s182 = sphi 0, %s182
    %s184 = sphi 0, %s182
    %s185 = sphi 0, %s184
    %s199 = sphi 0, %s185
    %s203 = sphi 0, %s203
    %s205 = sphi 0, %s203
    %s206 = sphi 0, %s205
    %s220 = sphi 0, %s206
    %s224 = sphi 0, %s224
    %s226 = sphi 0, %s224
    %s227 = sphi 0, %s226
    %s241 = sphi 0, %s227
    %s245 = sphi 0, %s245
    %s247 = sphi 0, %s245
    %s248 = sphi 0, %s247
    %s262 = sphi 0, %s248
    %s268 = sphi 0, %s270
    %s271 = sphi 0, %s268
    %s272 = sphi 0, %s271
    %s288 = sphi 0, %s272
  $region4: #{dense_block_forward.4} parent=0 // loop_header_branch
    %20 = sbr.rel (%p18) target = $region8
  $region5: #{dense_block_forward.4} parent=0 // loop_body
    %s22 = ssub.s32 %s17, 1
    %s23 = ssub.s32 %s17, 2
    %s24 = sadd.s32 %s17, 1
    %s25 = ssub.s32 %s17, %s24
    %p26 = scmp.eq.s32.totalorder %s25, 0
    %s28 = sadd.s32 %s27, 1
    %s29 = scalar_select %p26, %s27, %s28
    %p32 = pneg %p26
    %p33 = scmp.eq.s32.totalorder %s17, 1
    %p34 = por %p32, %p33
    %p35 = scmp.ne.s32.totalorder %s27, %s30
    %p36 = scmp.eq.s32.totalorder %s17, 0
    %p37 = por %p35, %p36
    %p38 = scmp.ne.s32.totalorder %s27, %s30
    %p39 = scmp.eq.s32.totalorder %s22, 1
    %p40 = por %p38, %p39
    %p41 = scmp.ne.s32.totalorder %s30, %s31
    %p42 = scmp.eq.s32.totalorder %s22, 0
    %p43 = por %p41, %p42
    %p44 = scmp.ne.s32.totalorder %s30, %s31
    %p45 = scmp.eq.s32.totalorder %s23, 1
    %p46 = por %p44, %p45
    %p48 = scmp.ne.s32.totalorder %s31, %s47
    %p49 = scmp.eq.s32.totalorder %s23, 0
    %p50 = por %p48, %p49
    %s51 = ssub.s32 %s17, %s24
    %p52 = scmp.eq.s32.totalorder %s51, 0
    %s54 = sadd.s32 %s53, 1
    %s55 = scalar_select %p52, %s53, %s54
    %p58 = pneg %p52
    %p59 = scmp.eq.s32.totalorder %s17, 1
    %p60 = por %p58, %p59
    %p61 = scmp.ne.s32.totalorder %s53, %s56
    %p62 = scmp.eq.s32.totalorder %s17, 0
    %p63 = por %p61, %p62
    %p64 = scmp.ne.s32.totalorder %s53, %s56
    %p65 = scmp.eq.s32.totalorder %s22, 1
    %p66 = por %p64, %p65
    %p67 = scmp.ne.s32.totalorder %s56, %s57
    %p68 = scmp.eq.s32.totalorder %s22, 0
    %p69 = por %p67, %p68
    %p70 = scmp.ne.s32.totalorder %s56, %s57
    %p71 = scmp.eq.s32.totalorder %s23, 1
    %p72 = por %p70, %p71
    %p74 = scmp.ne.s32.totalorder %s57, %s73
    %p75 = scmp.eq.s32.totalorder %s23, 0
    %p76 = por %p74, %p75
    %s78 = sadd.s32 %s77, 1
    %p81 = scmp.eq.s32.totalorder %s17, 1
    %p82 = scmp.ne.s32.totalorder %s77, %s79
    %p83 = scmp.eq.s32.totalorder %s17, 0
    %p84 = por %p82, %p83
    %p85 = scmp.ne.s32.totalorder %s77, %s79
    %p86 = scmp.eq.s32.totalorder %s22, 1
    %p87 = por %p85, %p86
    %p88 = scmp.ne.s32.totalorder %s79, %s80
    %p89 = scmp.eq.s32.totalorder %s22, 0
    %p90 = por %p88, %p89
    %p91 = scmp.ne.s32.totalorder %s79, %s80
    %p92 = scmp.eq.s32.totalorder %s23, 1
    %p93 = por %p91, %p92
    %p95 = scmp.ne.s32.totalorder %s80, %s94
    %p96 = scmp.eq.s32.totalorder %s23, 0
    %p97 = por %p95, %p96
    %s99 = sadd.s32 %s98, 1
    %p102 = scmp.eq.s32.totalorder %s17, 1
    %p103 = scmp.ne.s32.totalorder %s98, %s100
    %p104 = scmp.eq.s32.totalorder %s17, 0
    %p105 = por %p103, %p104
    %p106 = scmp.ne.s32.totalorder %s98, %s100
    %p107 = scmp.eq.s32.totalorder %s22, 1
    %p108 = por %p106, %p107
    %p109 = scmp.ne.s32.totalorder %s100, %s101
    %p110 = scmp.eq.s32.totalorder %s22, 0
    %p111 = por %p109, %p110
    %p112 = scmp.ne.s32.totalorder %s100, %s101
    %p113 = scmp.eq.s32.totalorder %s23, 1
    %p114 = por %p112, %p113
    %p116 = scmp.ne.s32.totalorder %s101, %s115
    %p117 = scmp.eq.s32.totalorder %s23, 0
    %p118 = por %p116, %p117
    %s120 = sadd.s32 %s119, 1
    %p123 = scmp.eq.s32.totalorder %s17, 1
    %p124 = scmp.ne.s32.totalorder %s119, %s121
    %p125 = scmp.eq.s32.totalorder %s17, 0
    %p126 = por %p124, %p125
    %p127 = scmp.ne.s32.totalorder %s119, %s121
    %p128 = scmp.eq.s32.totalorder %s22, 1
    %p129 = por %p127, %p128
    %p130 = scmp.ne.s32.totalorder %s121, %s122
    %p131 = scmp.eq.s32.totalorder %s22, 0
    %p132 = por %p130, %p131
    %p133 = scmp.ne.s32.totalorder %s121, %s122
    %p134 = scmp.eq.s32.totalorder %s23, 1
    %p135 = por %p133, %p134
    %p137 = scmp.ne.s32.totalorder %s122, %s136
    %p138 = scmp.eq.s32.totalorder %s23, 0
    %p139 = por %p137, %p138
    %s141 = sadd.s32 %s140, 1
    %p144 = scmp.eq.s32.totalorder %s17, 1
    %p145 = scmp.ne.s32.totalorder %s140, %s142
    %p146 = scmp.eq.s32.totalorder %s17, 0
    %p147 = por %p145, %p146
    %p148 = scmp.ne.s32.totalorder %s140, %s142
    %p149 = scmp.eq.s32.totalorder %s22, 1
    %p150 = por %p148, %p149
    %p151 = scmp.ne.s32.totalorder %s142, %s143
    %p152 = scmp.eq.s32.totalorder %s22, 0
    %p153 = por %p151, %p152
    %p154 = scmp.ne.s32.totalorder %s142, %s143
    %p155 = scmp.eq.s32.totalorder %s23, 1
    %p156 = por %p154, %p155
    %p158 = scmp.ne.s32.totalorder %s143, %s157
    %p159 = scmp.eq.s32.totalorder %s23, 0
    %p160 = por %p158, %p159
    %s162 = sadd.s32 %s161, 1
    %p165 = scmp.eq.s32.totalorder %s17, 1
    %p166 = scmp.ne.s32.totalorder %s161, %s163
    %p167 = scmp.eq.s32.totalorder %s17, 0
    %p168 = por %p166, %p167
    %p169 = scmp.ne.s32.totalorder %s161, %s163
    %p170 = scmp.eq.s32.totalorder %s22, 1
    %p171 = por %p169, %p170
    %p172 = scmp.ne.s32.totalorder %s163, %s164
    %p173 = scmp.eq.s32.totalorder %s22, 0
    %p174 = por %p172, %p173
    %p175 = scmp.ne.s32.totalorder %s163, %s164
    %p176 = scmp.eq.s32.totalorder %s23, 1
    %p177 = por %p175, %p176
    %p179 = scmp.ne.s32.totalorder %s164, %s178
    %p180 = scmp.eq.s32.totalorder %s23, 0
    %p181 = por %p179, %p180
    %s183 = sadd.s32 %s182, 1
    %p186 = scmp.eq.s32.totalorder %s17, 1
    %p187 = scmp.ne.s32.totalorder %s182, %s184
    %p188 = scmp.eq.s32.totalorder %s17, 0
    %p189 = por %p187, %p188
    %p190 = scmp.ne.s32.totalorder %s182, %s184
    %p191 = scmp.eq.s32.totalorder %s22, 1
    %p192 = por %p190, %p191
    %p193 = scmp.ne.s32.totalorder %s184, %s185
    %p194 = scmp.eq.s32.totalorder %s22, 0
    %p195 = por %p193, %p194
    %p196 = scmp.ne.s32.totalorder %s184, %s185
    %p197 = scmp.eq.s32.totalorder %s23, 1
    %p198 = por %p196, %p197
    %p200 = scmp.ne.s32.totalorder %s185, %s199
    %p201 = scmp.eq.s32.totalorder %s23, 0
    %p202 = por %p200, %p201
    %s204 = sadd.s32 %s203, 1
    %p207 = scmp.eq.s32.totalorder %s17, 1
    %p208 = scmp.ne.s32.totalorder %s203, %s205
    %p209 = scmp.eq.s32.totalorder %s17, 0
    %p210 = por %p208, %p209
    %p211 = scmp.ne.s32.totalorder %s203, %s205
    %p212 = scmp.eq.s32.totalorder %s22, 1
    %p213 = por %p211, %p212
    %p214 = scmp.ne.s32.totalorder %s205, %s206
    %p215 = scmp.eq.s32.totalorder %s22, 0
    %p216 = por %p214, %p215
    %p217 = scmp.ne.s32.totalorder %s205, %s206
    %p218 = scmp.eq.s32.totalorder %s23, 1
    %p219 = por %p217, %p218
    %p221 = scmp.ne.s32.totalorder %s206, %s220
    %p222 = scmp.eq.s32.totalorder %s23, 0
    %p223 = por %p221, %p222
    %s225 = sadd.s32 %s224, 1
    %p228 = scmp.eq.s32.totalorder %s17, 1
    %p229 = scmp.ne.s32.totalorder %s224, %s226
    %p230 = scmp.eq.s32.totalorder %s17, 0
    %p231 = por %p229, %p230
    %p232 = scmp.ne.s32.totalorder %s224, %s226
    %p233 = scmp.eq.s32.totalorder %s22, 1
    %p234 = por %p232, %p233
    %p235 = scmp.ne.s32.totalorder %s226, %s227
    %p236 = scmp.eq.s32.totalorder %s22, 0
    %p237 = por %p235, %p236
    %p238 = scmp.ne.s32.totalorder %s226, %s227
    %p239 = scmp.eq.s32.totalorder %s23, 1
    %p240 = por %p238, %p239
    %p242 = scmp.ne.s32.totalorder %s227, %s241
    %p243 = scmp.eq.s32.totalorder %s23, 0
    %p244 = por %p242, %p243
    %s246 = sadd.s32 %s245, 1
    %p249 = scmp.eq.s32.totalorder %s17, 1
    %p250 = scmp.ne.s32.totalorder %s245, %s247
    %p251 = scmp.eq.s32.totalorder %s17, 0
    %p252 = por %p250, %p251
    %p253 = scmp.ne.s32.totalorder %s245, %s247
    %p254 = scmp.eq.s32.totalorder %s22, 1
    %p255 = por %p253, %p254
    %p256 = scmp.ne.s32.totalorder %s247, %s248
    %p257 = scmp.eq.s32.totalorder %s22, 0
    %p258 = por %p256, %p257
    %p259 = scmp.ne.s32.totalorder %s247, %s248
    %p260 = scmp.eq.s32.totalorder %s23, 1
    %p261 = por %p259, %p260
    %p263 = scmp.ne.s32.totalorder %s248, %s262
    %p264 = scmp.eq.s32.totalorder %s23, 0
    %p265 = por %p263, %p264
    %s266 = ssub.s32 %s17, %s24
    %p267 = scmp.eq.s32.totalorder %s266, 0
    %s269 = sadd.s32 %s268, 1
    %s270 = scalar_select %p267, %s268, %s269
    %p273 = pneg %p267
    %p274 = scmp.eq.s32.totalorder %s17, 1
    %p275 = por %p273, %p274
    %p276 = scmp.ne.s32.totalorder %s268, %s271
    %p277 = scmp.eq.s32.totalorder %s17, 0
    %p278 = por %p276, %p277
    %p279 = scmp.ne.s32.totalorder %s268, %s271
    %p280 = scmp.eq.s32.totalorder %s22, 1
    %p281 = por %p279, %p280
    %p282 = scmp.ne.s32.totalorder %s271, %s272
    %p283 = scmp.eq.s32.totalorder %s22, 0
    %p284 = por %p282, %p283
    %p285 = scmp.ne.s32.totalorder %s271, %s272
    %p286 = scmp.eq.s32.totalorder %s23, 1
    %p287 = por %p285, %p286
    %p289 = scmp.ne.s32.totalorder %s272, %s288
    %p290 = scmp.eq.s32.totalorder %s23, 0
    %p291 = por %p289, %p290
    %p292 = scmp.le.s32.totalorder 1, %s17
    %p293 = scmp.lt.s32.totalorder %s17, 3
    %p294 = pnand %p292, %p293
    %p295 = pneg %p294
    // Predicated region
    $region9: #{dense_block_forward.4} parent=5 // pred_check
      _
    $region10: #{dense_block_forward.4} parent=5 // pred_check_branch
      %297 = sbr.rel (%p294) target = $region12
    $region11: #{dense_block_forward.4} parent=5 // pred_region
      %s298 = ssub.s32 %s17, 1
      // Predicated region
      $region13: #{dense_block_forward.4} parent=11 // pred_check
        %p299 = pneg %p90
      $region14: #{dense_block_forward.4} parent=11 // pred_check_branch
        %301 = sbr.rel (%p299) target = $region16
      $region15: #{dense_block_forward.4} parent=11 // pred_region
        _
      $region16: #{dense_block_forward.4} parent=11 // pred_fallthru
        _
      // Predicated region
      $region17: #{dense_block_forward.4} parent=11 // pred_check
        %p302 = pneg %p111
      $region18: #{dense_block_forward.4} parent=11 // pred_check_branch
        %304 = sbr.rel (%p302) target = $region20
      $region19: #{dense_block_forward.4} parent=11 // pred_region
        _
      $region20: #{dense_block_forward.4} parent=11 // pred_fallthru
        _
      // Predicated region
      $region21: #{dense_block_forward.4} parent=11 // pred_check
        %p305 = pneg %p132
      $region22: #{dense_block_forward.4} parent=11 // pred_check_branch
        %307 = sbr.rel (%p305) target = $region24
      $region23: #{dense_block_forward.4} parent=11 // pred_region
        _
      $region24: #{dense_block_forward.4} parent=11 // pred_fallthru
        _
      // Predicated region
      $region25: #{dense_block_forward.4} parent=11 // pred_check
        %p308 = pneg %p153
      $region26: #{dense_block_forward.4} parent=11 // pred_check_branch
        %310 = sbr.rel (%p308) target = $region28
      $region27: #{dense_block_forward.4} parent=11 // pred_region
        _
      $region28: #{dense_block_forward.4} parent=11 // pred_fallthru
        _
      // Predicated region
      $region29: #{dense_block_forward.4} parent=11 // pred_check
        %p311 = pneg %p174
      $region30: #{dense_block_forward.4} parent=11 // pred_check_branch
        %313 = sbr.rel (%p311) target = $region32
      $region31: #{dense_block_forward.4} parent=11 // pred_region
        _
      $region32: #{dense_block_forward.4} parent=11 // pred_fallthru
        _
      // Predicated region
      $region33: #{dense_block_forward.4} parent=11 // pred_check
        %p314 = pneg %p195
      $region34: #{dense_block_forward.4} parent=11 // pred_check_branch
        %316 = sbr.rel (%p314) target = $region36
      $region35: #{dense_block_forward.4} parent=11 // pred_region
        _
      $region36: #{dense_block_forward.4} parent=11 // pred_fallthru
        _
      // Predicated region
      $region37: #{dense_block_forward.4} parent=11 // pred_check
        %p317 = pneg %p216
      $region38: #{dense_block_forward.4} parent=11 // pred_check_branch
        %319 = sbr.rel (%p317) target = $region40
      $region39: #{dense_block_forward.4} parent=11 // pred_region
        _
      $region40: #{dense_block_forward.4} parent=11 // pred_fallthru
        _
      // Predicated region
      $region41: #{dense_block_forward.4} parent=11 // pred_check
        %p320 = pneg %p237
      $region42: #{dense_block_forward.4} parent=11 // pred_check_branch
        %322 = sbr.rel (%p320) target = $region44
      $region43: #{dense_block_forward.4} parent=11 // pred_region
        _
      $region44: #{dense_block_forward.4} parent=11 // pred_fallthru
        _
      // Predicated region
      $region45: #{dense_block_forward.4} parent=11 // pred_check
        %p323 = pneg %p258
      $region46: #{dense_block_forward.4} parent=11 // pred_check_branch
        %325 = sbr.rel (%p323) target = $region48
      $region47: #{dense_block_forward.4} parent=11 // pred_region
        _
      $region48: #{dense_block_forward.4} parent=11 // pred_fallthru
        _
    $region12: #{dense_block_forward.4} parent=5 // pred_fallthru
      _
    %p326 = scmp.lt.s32.totalorder %s17, 2
    // Predicated region
    $region49: #{dense_block_forward.4} parent=5 // pred_check
      %p327 = pneg %p326
    $region50: #{dense_block_forward.4} parent=5 // pred_check_branch
      %329 = sbr.rel (%p327) target = $region52
    $region51: #{dense_block_forward.4} parent=5 // pred_region
      // Predicated region
      $region53: #{dense_block_forward.4} parent=51 // pred_check
        %p330 = pneg %p37
      $region54: #{dense_block_forward.4} parent=51 // pred_check_branch
        %332 = sbr.rel (%p330) target = $region56
      $region55: #{dense_block_forward.4} parent=51 // pred_region
        %p333 = scmp.lt.s32.totalorder %s17, 1
        %s334 = scalar_select %p333, %s17, 1
        %s335 = smul.addr %s334, 32
        %s336 = smul.addr %s335, 8
        %s337 = scalar_lea.vmem %s0, %s336
      $region56: #{dense_block_forward.4} parent=51 // pred_fallthru
        _
      // Predicated region
      $region57: #{dense_block_forward.4} parent=51 // pred_check
        %p338 = pneg %p63
      $region58: #{dense_block_forward.4} parent=51 // pred_check_branch
        %340 = sbr.rel (%p338) target = $region60
      $region59: #{dense_block_forward.4} parent=51 // pred_region
        %p341 = scmp.lt.s32.totalorder %s17, 1
        %s342 = scalar_select %p341, %s17, 1
        %s343 = smul.addr %s342, 32
        %s344 = smul.addr %s343, 8
        %s345 = scalar_lea.vmem %s1, %s344
      $region60: #{dense_block_forward.4} parent=51 // pred_fallthru
        _
    $region52: #{dense_block_forward.4} parent=5 // pred_fallthru
      _
    %p346 = scmp.le.s32.totalorder 1, %s17
    %p347 = scmp.lt.s32.totalorder %s17, 3
    %p348 = pnand %p346, %p347
    %p349 = pneg %p348
    // Predicated region
    $region61: #{dense_block_forward.4} parent=5 // pred_check
      _
    $region62: #{dense_block_forward.4} parent=5 // pred_check_branch
      %351 = sbr.rel (%p348) target = $region64
    $region63: #{dense_block_forward.4} parent=5 // pred_region
      %s352 = ssub.s32 %s17, 1
      %p353 = scmp.lt.s32.totalorder %s22, 1
      %s354 = scalar_select %p353, %s22, 1
      %s355 = smul.addr %s354, 32
      %s356 = smul.addr %s355, 8
      %s357 = scalar_lea.vmem %s0, %s356
      %p358 = pneg %p43
      %p359 = pneg %p40
      %p360 = scmp.lt.s32.totalorder %s22, 1
      %s361 = scalar_select %p360, %s22, 1
      %s362 = smul.addr %s361, 32
      %s363 = smul.addr %s362, 8
      %s364 = scalar_lea.vmem %s1, %s363
      %p365 = pneg %p69
      %p366 = pneg %p66
      %p367 = pneg %p90
      %p368 = pneg %p87
      %p369 = pneg %p111
      %p370 = pneg %p108
      %p371 = pneg %p132
      %p372 = pneg %p129
      %p373 = pneg %p153
      %p374 = pneg %p150
      %p375 = pneg %p174
      %p376 = pneg %p171
      %p377 = pneg %p195
      %p378 = pneg %p192
      %p379 = pneg %p216
      %p380 = pneg %p213
      %p381 = pneg %p237
      %p382 = pneg %p234
      %p383 = pneg %p258
      %p384 = pneg %p255
      %p385 = pneg %p284
      %p386 = pneg %p281
      %p387 = scmp.lt.s32.totalorder %s22, 1
      %s388 = scalar_select %p387, %s22, 1
      %s389 = smul.addr %s388, 32
      %s390 = smul.addr %s389, 8
      %s391 = scalar_lea.vmem %s11, %s390
      %p392 = scmp.lt.s32.totalorder %s22, 1
      %s393 = scalar_select %p392, %s22, 1
      %s394 = smul.addr %s393, 32
      %s395 = smul.addr %s394, 8
      %s396 = scalar_lea.vmem %s0, %s395
      %p397 = scmp.lt.s32.totalorder %s22, 1
      %s398 = scalar_select %p397, %s22, 1
      %s399 = smul.addr %s398, 32
      %s400 = smul.addr %s399, 8
      %s401 = scalar_lea.vmem %s1, %s400
      %p402 = scmp.lt.s32.totalorder %s22, 1
      %s403 = scalar_select %p402, %s22, 1
      %s404 = smul.addr %s403, 32
      %s405 = smul.addr %s404, 8
      %s406 = scalar_lea.vmem %s11, %s405
      %v408 = vld [vmem:[%s396] sm:$0xff]
      %v409 = vld [vmem:[%s396 + $0x8] sm:$0xff]
      %v410 = vld [vmem:[%s396 + $0x10] sm:$0xff]
      %v411 = vld [vmem:[%s396 + $0x18] sm:$0xff]
      %v412 = vld [vmem:[%s396 + $0x20] sm:$0xff]
      %v413 = vld [vmem:[%s396 + $0x28] sm:$0xff]
      %v414 = vld [vmem:[%s396 + $0x30] sm:$0xff]
      %v415 = vld [vmem:[%s396 + $0x38] sm:$0xff]
      %v416 = vld [vmem:[%s396 + $0x40] sm:$0xff]
      %v417 = vld [vmem:[%s396 + $0x48] sm:$0xff]
      %v418 = vld [vmem:[%s396 + $0x50] sm:$0xff]
      %v419 = vld [vmem:[%s396 + $0x58] sm:$0xff]
      %v420 = vld [vmem:[%s396 + $0x60] sm:$0xff]
      %v421 = vld [vmem:[%s396 + $0x68] sm:$0xff]
      %v422 = vld [vmem:[%s396 + $0x70] sm:$0xff]
      %v423 = vld [vmem:[%s396 + $0x78] sm:$0xff]
      %v424 = vld [vmem:[%s396 + $0x80] sm:$0xff]
      %v425 = vld [vmem:[%s396 + $0x88] sm:$0xff]
      %v426 = vld [vmem:[%s396 + $0x90] sm:$0xff]
      %v427 = vld [vmem:[%s396 + $0x98] sm:$0xff]
      %v428 = vld [vmem:[%s396 + $0xa0] sm:$0xff]
      %v429 = vld [vmem:[%s396 + $0xa8] sm:$0xff]
      %v430 = vld [vmem:[%s396 + $0xb0] sm:$0xff]
      %v431 = vld [vmem:[%s396 + $0xb8] sm:$0xff]
      %v432 = vld [vmem:[%s396 + $0xc0] sm:$0xff]
      %v433 = vld [vmem:[%s396 + $0xc8] sm:$0xff]
      %v434 = vld [vmem:[%s396 + $0xd0] sm:$0xff]
      %v435 = vld [vmem:[%s396 + $0xd8] sm:$0xff]
      %v436 = vld [vmem:[%s396 + $0xe0] sm:$0xff]
      %v437 = vld [vmem:[%s396 + $0xe8] sm:$0xff]
      %v438 = vld [vmem:[%s396 + $0xf0] sm:$0xff]
      %v439 = vld [vmem:[%s396 + $0xf8] sm:$0xff]
      %v440 = vld [vmem:[%s2] sm:$0x1]
      %v442 = vlaneseq
      %v443 = vshrl.u32 %v442, 7
      %v444 = vsub.s32 0, %v443
      %v445 = vrot.slane %v440, %v444
      %v447 = vmul.f32 %v408, %v445
      %v448 = vmul.f32 %v409, %v445
      %v449 = vmul.f32 %v410, %v445
      %v450 = vmul.f32 %v411, %v445
      %v451 = vmul.f32 %v412, %v445
      %v452 = vmul.f32 %v413, %v445
      %v453 = vmul.f32 %v414, %v445
      %v454 = vmul.f32 %v415, %v445
      %v455 = vmul.f32 %v416, %v445
      %v456 = vmul.f32 %v417, %v445
      %v457 = vmul.f32 %v418, %v445
      %v458 = vmul.f32 %v419, %v445
      %v459 = vmul.f32 %v420, %v445
      %v460 = vmul.f32 %v421, %v445
      %v461 = vmul.f32 %v422, %v445
      %v462 = vmul.f32 %v423, %v445
      %v463 = vmul.f32 %v424, %v445
      %v464 = vmul.f32 %v425, %v445
      %v465 = vmul.f32 %v426, %v445
      %v466 = vmul.f32 %v427, %v445
      %v467 = vmul.f32 %v428, %v445
      %v468 = vmul.f32 %v429, %v445
      %v469 = vmul.f32 %v430, %v445
      %v470 = vmul.f32 %v431, %v445
      %v471 = vmul.f32 %v432, %v445
      %v472 = vmul.f32 %v433, %v445
      %v473 = vmul.f32 %v434, %v445
      %v474 = vmul.f32 %v435, %v445
      %v475 = vmul.f32 %v436, %v445
      %v476 = vmul.f32 %v437, %v445
      %v477 = vmul.f32 %v438, %v445
      %v478 = vmul.f32 %v439, %v445
      %v479 = vld [vmem:[%s4] sm:$0x1]
      %v481 = vlaneseq
      %v482 = vshrl.u32 %v481, 7
      %v483 = vsub.s32 0, %v482
      %v484 = vrot.slane %v479, %v483
      %v486 = vadd.f32 %v447, %v484
      %v487 = vadd.f32 %v448, %v484
      %v488 = vadd.f32 %v449, %v484
      %v489 = vadd.f32 %v450, %v484
      %v490 = vadd.f32 %v451, %v484
      %v491 = vadd.f32 %v452, %v484
      %v492 = vadd.f32 %v453, %v484
      %v493 = vadd.f32 %v454, %v484
      %v494 = vadd.f32 %v455, %v484
      %v495 = vadd.f32 %v456, %v484
      %v496 = vadd.f32 %v457, %v484
      %v497 = vadd.f32 %v458, %v484
      %v498 = vadd.f32 %v459, %v484
      %v499 = vadd.f32 %v460, %v484
      %v500 = vadd.f32 %v461, %v484
      %v501 = vadd.f32 %v462, %v484
      %v502 = vadd.f32 %v463, %v484
      %v503 = vadd.f32 %v464, %v484
      %v504 = vadd.f32 %v465, %v484
      %v505 = vadd.f32 %v466, %v484
      %v506 = vadd.f32 %v467, %v484
      %v507 = vadd.f32 %v468, %v484
      %v508 = vadd.f32 %v469, %v484
      %v509 = vadd.f32 %v470, %v484
      %v510 = vadd.f32 %v471, %v484
      %v511 = vadd.f32 %v472, %v484
      %v512 = vadd.f32 %v473, %v484
      %v513 = vadd.f32 %v474, %v484
      %v514 = vadd.f32 %v475, %v484
      %v515 = vadd.f32 %v476, %v484
      %v516 = vadd.f32 %v477, %v484
      %v517 = vadd.f32 %v478, %v484
      %v518 = vmax.f32 %v486, 0.0
      %v519 = vmax.f32 %v487, 0.0
      %v520 = vmax.f32 %v488, 0.0
      %v521 = vmax.f32 %v489, 0.0
      %v522 = vmax.f32 %v490, 0.0
      %v523 = vmax.f32 %v491, 0.0
      %v524 = vmax.f32 %v492, 0.0
      %v525 = vmax.f32 %v493, 0.0
      %v526 = vmax.f32 %v494, 0.0
      %v527 = vmax.f32 %v495, 0.0
      %v528 = vmax.f32 %v496, 0.0
      %v529 = vmax.f32 %v497, 0.0
      %v530 = vmax.f32 %v498, 0.0
      %v531 = vmax.f32 %v499, 0.0
      %v532 = vmax.f32 %v500, 0.0
      %v533 = vmax.f32 %v501, 0.0
      %v534 = vmax.f32 %v502, 0.0
      %v535 = vmax.f32 %v503, 0.0
      %v536 = vmax.f32 %v504, 0.0
      %v537 = vmax.f32 %v505, 0.0
      %v538 = vmax.f32 %v506, 0.0
      %v539 = vmax.f32 %v507, 0.0
      %v540 = vmax.f32 %v508, 0.0
      %v541 = vmax.f32 %v509, 0.0
      %v542 = vmax.f32 %v510, 0.0
      %v543 = vmax.f32 %v511, 0.0
      %v544 = vmax.f32 %v512, 0.0
      %v545 = vmax.f32 %v513, 0.0
      %v546 = vmax.f32 %v514, 0.0
      %v547 = vmax.f32 %v515, 0.0
      %v548 = vmax.f32 %v516, 0.0
      %v549 = vmax.f32 %v517, 0.0
      %v550 = vpack.c.bf16 %v519, %v518
      %v551 = vpack.c.bf16 %v521, %v520
      %v552 = vpack.c.bf16 %v523, %v522
      %v553 = vpack.c.bf16 %v525, %v524
      %v554 = vpack.c.bf16 %v527, %v526
      %v555 = vpack.c.bf16 %v529, %v528
      %v556 = vpack.c.bf16 %v531, %v530
      %v557 = vpack.c.bf16 %v533, %v532
      %v558 = vpack.c.bf16 %v535, %v534
      %v559 = vpack.c.bf16 %v537, %v536
      %v560 = vpack.c.bf16 %v539, %v538
      %v561 = vpack.c.bf16 %v541, %v540
      %v562 = vpack.c.bf16 %v543, %v542
      %v563 = vpack.c.bf16 %v545, %v544
      %v564 = vpack.c.bf16 %v547, %v546
      %v565 = vpack.c.bf16 %v549, %v548
      %v566 = vld [vmem:[%s6] sm:$0x3]
      %v567 = vld [vmem:[%s401] sm:$0xff]
      %v568 = vld [vmem:[%s401 + $0x8] sm:$0xff]
      %v569 = vld [vmem:[%s401 + $0x10] sm:$0xff]
      %v570 = vld [vmem:[%s401 + $0x18] sm:$0xff]
      %v571 = vld [vmem:[%s401 + $0x20] sm:$0xff]
      %v572 = vld [vmem:[%s401 + $0x28] sm:$0xff]
      %v573 = vld [vmem:[%s401 + $0x30] sm:$0xff]
      %v574 = vld [vmem:[%s401 + $0x38] sm:$0xff]
      %v575 = vld [vmem:[%s401 + $0x40] sm:$0xff]
      %v576 = vld [vmem:[%s401 + $0x48] sm:$0xff]
      %v577 = vld [vmem:[%s401 + $0x50] sm:$0xff]
      %v578 = vld [vmem:[%s401 + $0x58] sm:$0xff]
      %v579 = vld [vmem:[%s401 + $0x60] sm:$0xff]
      %v580 = vld [vmem:[%s401 + $0x68] sm:$0xff]
      %v581 = vld [vmem:[%s401 + $0x70] sm:$0xff]
      %v582 = vld [vmem:[%s401 + $0x78] sm:$0xff]
      %v583 = vld [vmem:[%s401 + $0x80] sm:$0xff]
      %v584 = vld [vmem:[%s401 + $0x88] sm:$0xff]
      %v585 = vld [vmem:[%s401 + $0x90] sm:$0xff]
      %v586 = vld [vmem:[%s401 + $0x98] sm:$0xff]
      %v587 = vld [vmem:[%s401 + $0xa0] sm:$0xff]
      %v588 = vld [vmem:[%s401 + $0xa8] sm:$0xff]
      %v589 = vld [vmem:[%s401 + $0xb0] sm:$0xff]
      %v590 = vld [vmem:[%s401 + $0xb8] sm:$0xff]
      %v591 = vld [vmem:[%s401 + $0xc0] sm:$0xff]
      %v592 = vld [vmem:[%s401 + $0xc8] sm:$0xff]
      %v593 = vld [vmem:[%s401 + $0xd0] sm:$0xff]
      %v594 = vld [vmem:[%s401 + $0xd8] sm:$0xff]
      %v595 = vld [vmem:[%s401 + $0xe0] sm:$0xff]
      %v596 = vld [vmem:[%s401 + $0xe8] sm:$0xff]
      %v597 = vld [vmem:[%s401 + $0xf0] sm:$0xff]
      %v598 = vld [vmem:[%s401 + $0xf8] sm:$0xff]
      %v599 = vld [vmem:[%s3] sm:$0x1]
      %v601 = vlaneseq
      %v602 = vshrl.u32 %v601, 7
      %v603 = vsub.s32 0, %v602
      %v604 = vrot.slane %v599, %v603
      %v606 = vmul.f32 %v567, %v604
      %v607 = vmul.f32 %v568, %v604
      %v608 = vmul.f32 %v569, %v604
      %v609 = vmul.f32 %v570, %v604
      %v610 = vmul.f32 %v571, %v604
      %v611 = vmul.f32 %v572, %v604
      %v612 = vmul.f32 %v573, %v604
      %v613 = vmul.f32 %v574, %v604
      %v614 = vmul.f32 %v575, %v604
      %v615 = vmul.f32 %v576, %v604
      %v616 = vmul.f32 %v577, %v604
      %v617 = vmul.f32 %v578, %v604
      %v618 = vmul.f32 %v579, %v604
      %v619 = vmul.f32 %v580, %v604
      %v620 = vmul.f32 %v581, %v604
      %v621 = vmul.f32 %v582, %v604
      %v622 = vmul.f32 %v583, %v604
      %v623 = vmul.f32 %v584, %v604
      %v624 = vmul.f32 %v585, %v604
      %v625 = vmul.f32 %v586, %v604
      %v626 = vmul.f32 %v587, %v604
      %v627 = vmul.f32 %v588, %v604
      %v628 = vmul.f32 %v589, %v604
      %v629 = vmul.f32 %v590, %v604
      %v630 = vmul.f32 %v591, %v604
      %v631 = vmul.f32 %v592, %v604
      %v632 = vmul.f32 %v593, %v604
      %v633 = vmul.f32 %v594, %v604
      %v634 = vmul.f32 %v595, %v604
      %v635 = vmul.f32 %v596, %v604
      %v636 = vmul.f32 %v597, %v604
      %v637 = vmul.f32 %v598, %v604
      %v638 = vld [vmem:[%s5] sm:$0x1]
      %v640 = vlaneseq
      %v641 = vshrl.u32 %v640, 7
      %v642 = vsub.s32 0, %v641
      %v643 = vrot.slane %v638, %v642
      %v645 = vadd.f32 %v606, %v643
      %v646 = vadd.f32 %v607, %v643
      %v647 = vadd.f32 %v608, %v643
      %v648 = vadd.f32 %v609, %v643
      %v649 = vadd.f32 %v610, %v643
      %v650 = vadd.f32 %v611, %v643
      %v651 = vadd.f32 %v612, %v643
      %v652 = vadd.f32 %v613, %v643
      %v653 = vadd.f32 %v614, %v643
      %v654 = vadd.f32 %v615, %v643
      %v655 = vadd.f32 %v616, %v643
      %v656 = vadd.f32 %v617, %v643
      %v657 = vadd.f32 %v618, %v643
      %v658 = vadd.f32 %v619, %v643
      %v659 = vadd.f32 %v620, %v643
      %v660 = vadd.f32 %v621, %v643
      %v661 = vadd.f32 %v622, %v643
      %v662 = vadd.f32 %v623, %v643
      %v663 = vadd.f32 %v624, %v643
      %v664 = vadd.f32 %v625, %v643
      %v665 = vadd.f32 %v626, %v643
      %v666 = vadd.f32 %v627, %v643
      %v667 = vadd.f32 %v628, %v643
      %v668 = vadd.f32 %v629, %v643
      %v669 = vadd.f32 %v630, %v643
      %v670 = vadd.f32 %v631, %v643
      %v671 = vadd.f32 %v632, %v643
      %v672 = vadd.f32 %v633, %v643
      %v673 = vadd.f32 %v634, %v643
      %v674 = vadd.f32 %v635, %v643
      %v675 = vadd.f32 %v636, %v643
      %v676 = vadd.f32 %v637, %v643
      %v677 = vmax.f32 %v645, 0.0
      %v678 = vmax.f32 %v646, 0.0
      %v679 = vmax.f32 %v647, 0.0
      %v680 = vmax.f32 %v648, 0.0
      %v681 = vmax.f32 %v649, 0.0
      %v682 = vmax.f32 %v650, 0.0
      %v683 = vmax.f32 %v651, 0.0
      %v684 = vmax.f32 %v652, 0.0
      %v685 = vmax.f32 %v653, 0.0
      %v686 = vmax.f32 %v654, 0.0
      %v687 = vmax.f32 %v655, 0.0
      %v688 = vmax.f32 %v656, 0.0
      %v689 = vmax.f32 %v657, 0.0
      %v690 = vmax.f32 %v658, 0.0
      %v691 = vmax.f32 %v659, 0.0
      %v692 = vmax.f32 %v660, 0.0
      %v693 = vmax.f32 %v661, 0.0
      %v694 = vmax.f32 %v662, 0.0
      %v695 = vmax.f32 %v663, 0.0
      %v696 = vmax.f32 %v664, 0.0
      %v697 = vmax.f32 %v665, 0.0
      %v698 = vmax.f32 %v666, 0.0
      %v699 = vmax.f32 %v667, 0.0
      %v700 = vmax.f32 %v668, 0.0
      %v701 = vmax.f32 %v669, 0.0
      %v702 = vmax.f32 %v670, 0.0
      %v703 = vmax.f32 %v671, 0.0
      %v704 = vmax.f32 %v672, 0.0
      %v705 = vmax.f32 %v673, 0.0
      %v706 = vmax.f32 %v674, 0.0
      %v707 = vmax.f32 %v675, 0.0
      %v708 = vmax.f32 %v676, 0.0
      %v709 = vpack.c.bf16 %v678, %v677
      %v710 = vpack.c.bf16 %v680, %v679
      %v711 = vpack.c.bf16 %v682, %v681
      %v712 = vpack.c.bf16 %v684, %v683
      %v713 = vpack.c.bf16 %v686, %v685
      %v714 = vpack.c.bf16 %v688, %v687
      %v715 = vpack.c.bf16 %v690, %v689
      %v716 = vpack.c.bf16 %v692, %v691
      %v717 = vpack.c.bf16 %v694, %v693
      %v718 = vpack.c.bf16 %v696, %v695
      %v719 = vpack.c.bf16 %v698, %v697
      %v720 = vpack.c.bf16 %v700, %v699
      %v721 = vpack.c.bf16 %v702, %v701
      %v722 = vpack.c.bf16 %v704, %v703
      %v723 = vpack.c.bf16 %v706, %v705
      %v724 = vpack.c.bf16 %v708, %v707
      %v725 = vld [vmem:[%s7] sm:$0x3]
      %vm726 = vcmask 31744
      %v728 = vsel %vm726, %v709, 0
      %v731 = vsel %vm726, %v710, 0
      %v734 = vsel %vm726, %v711, 0
      %v737 = vsel %vm726, %v712, 0
      %v740 = vsel %vm726, %v713, 0
      %v743 = vsel %vm726, %v714, 0
      %v746 = vsel %vm726, %v715, 0
      %v749 = vsel %vm726, %v716, 0
      %v752 = vsel %vm726, %v717, 0
      %v755 = vsel %vm726, %v718, 0
      %v758 = vsel %vm726, %v719, 0
      %v761 = vsel %vm726, %v720, 0
      %v764 = vsel %vm726, %v721, 0
      %v767 = vsel %vm726, %v722, 0
      %v770 = vsel %vm726, %v723, 0
      %v773 = vsel %vm726, %v724, 0
      %vm775 = vcmask 1041408
      %v777 = vsel %vm775, %v725, 0
      %779 = vmatprep.subr.bf16.mxu0 0
      %780 = vmatpush1.bf16.msra.mxu0 %v777
      %781 = vmatprep.subr.bf16.mxu0 0
      %782 = vmatpush1.bf16.msra.mxu0 0
      %783 = vmatprep.subr.bf16.mxu0 0
      %784 = vmatpush1.bf16.msra.mxu0 0
      %785 = vmatprep.subr.bf16.mxu0 0
      %786 = vmatpush1.bf16.msra.mxu0 0
      %787 = vmatprep.subr.bf16.mxu0 0
      %788 = vmatpush1.bf16.msra.mxu0 0
      %789 = vmatprep.subr.bf16.mxu0 0
      %790 = vmatpush1.bf16.msra.mxu0 0
      %791 = vmatprep.subr.bf16.mxu0 0
      %792 = vmatpush1.bf16.msra.mxu0 0
      %793 = vmatprep.subr.bf16.mxu0 0
      %794 = vmatpush1.bf16.msra.mxu0 0
      %795 = vmatprep.subr.bf16.mxu0 0
      %796 = vmatpush1.bf16.msra.mxu0 0
      %797 = vmatprep.subr.bf16.mxu0 0
      %798 = vmatpush1.bf16.msra.mxu0 0
      %799 = vmatprep.subr.bf16.mxu0 0
      %800 = vmatpush1.bf16.msra.mxu0 0
      %801 = vmatprep.subr.bf16.mxu0 0
      %802 = vmatpush1.bf16.msra.mxu0 0
      %803 = vmatprep.subr.bf16.mxu0 0
      %804 = vmatpush1.bf16.msra.mxu0 0
      %805 = vmatprep.subr.bf16.mxu0 0
      %806 = vmatpush1.bf16.msra.mxu0 0
      %807 = vmatprep.subr.bf16.mxu0 0
      %808 = vmatpush1.bf16.msra.mxu0 0
      %809 = vmatprep.subr.bf16.mxu0 0
      %810 = vmatpush1.bf16.msra.mxu0 0
      %811 = vmatprep.mubr.bf16.mxu0 0
      %812 = vmatmul.mubr.bf16.gmra.mrb[0].mxu0 %v728
      %v813 = vpop.f32.mrb[0].mxu0
      %v814 = vadd.f32 0.0, %v813
      %v815 = vpop.f32.mrb[0].mxu0
      %v816 = vpop.f32.mrb[0].mxu0
      %v817 = vadd.f32 0.0, %v816
      %v818 = vpop.f32.mrb[0].mxu0
      %819 = vmatprep.mubr.bf16.mxu0 0
      %820 = vmatmul.mubr.bf16.gmra.mrb[0].mxu0 %v731
      %v821 = vpop.f32.mrb[0].mxu0
      %v822 = vadd.f32 0.0, %v821
      %v823 = vpop.f32.mrb[0].mxu0
      %v824 = vpop.f32.mrb[0].mxu0
      %v825 = vadd.f32 0.0, %v824
      %v826 = vpop.f32.mrb[0].mxu0
      %827 = vmatprep.mubr.bf16.mxu0 0
      %828 = vmatmul.mubr.bf16.gmra.mrb[0].mxu0 %v734
      %v829 = vpop.f32.mrb[0].mxu0
      %v830 = vadd.f32 0.0, %v829
      %v831 = vpop.f32.mrb[0].mxu0
      %v832 = vpop.f32.mrb[0].mxu0
      %v833 = vadd.f32 0.0, %v832
      %v834 = vpop.f32.mrb[0].mxu0
      %835 = vmatprep.mubr.bf16.mxu0 0
      %836 = vmatmul.mubr.bf16.gmra.mrb[0].mxu0 %v737
      %v837 = vpop.f32.mrb[0].mxu0
      %v838 = vadd.f32 0.0, %v837
      %v839 = vpop.f32.mrb[0].mxu0
      %v840 = vpop.f32.mrb[0].mxu0
      %v841 = vadd.f32 0.0, %v840
      %v842 = vpop.f32.mrb[0].mxu0
      %843 = vmatprep.mubr.bf16.mxu0 0
      %844 = vmatmul.mubr.bf16.gmra.mrb[0].mxu0 %v740
      %v845 = vpop.f32.mrb[0].mxu0
      %v846 = vadd.f32 0.0, %v845
      %v847 = vpop.f32.mrb[0].mxu0
      %v848 = vpop.f32.mrb[0].mxu0
      %v849 = vadd.f32 0.0, %v848
      %v850 = vpop.f32.mrb[0].mxu0
      %851 = vmatprep.mubr.bf16.mxu0 0
      %852 = vmatmul.mubr.bf16.gmra.mrb[0].mxu0 %v743
      %v853 = vpop.f32.mrb[0].mxu0
      %v854 = vadd.f32 0.0, %v853
      %v855 = vpop.f32.mrb[0].mxu0
      %v856 = vpop.f32.mrb[0].mxu0
      %v857 = vadd.f32 0.0, %v856
      %v858 = vpop.f32.mrb[0].mxu0
      %859 = vmatprep.mubr.bf16.mxu0 0
      %860 = vmatmul.mubr.bf16.gmra.mrb[0].mxu0 %v746
      %v861 = vpop.f32.mrb[0].mxu0
      %v862 = vadd.f32 0.0, %v861
      %v863 = vpop.f32.mrb[0].mxu0
      %v864 = vpop.f32.mrb[0].mxu0
      %v865 = vadd.f32 0.0, %v864
      %v866 = vpop.f32.mrb[0].mxu0
      %867 = vmatprep.mubr.bf16.mxu0 0
      %868 = vmatmul.mubr.bf16.gmra.mrb[0].mxu0 %v749
      %v869 = vpop.f32.mrb[0].mxu0
      %v870 = vadd.f32 0.0, %v869
      %v871 = vpop.f32.mrb[0].mxu0
      %v872 = vpop.f32.mrb[0].mxu0
      %v873 = vadd.f32 0.0, %v872
      %v874 = vpop.f32.mrb[0].mxu0
      %875 = vmatprep.mubr.bf16.mxu0 0
      %876 = vmatmul.mubr.bf16.gmra.mrb[0].mxu0 %v752
      %v877 = vpop.f32.mrb[0].mxu0
      %v878 = vadd.f32 0.0, %v877
      %v879 = vpop.f32.mrb[0].mxu0
      %v880 = vpop.f32.mrb[0].mxu0
      %v881 = vadd.f32 0.0, %v880
      %v882 = vpop.f32.mrb[0].mxu0
      %883 = vmatprep.mubr.bf16.mxu0 0
      %884 = vmatmul.mubr.bf16.gmra.mrb[0].mxu0 %v755
      %v885 = vpop.f32.mrb[0].mxu0
      %v886 = vadd.f32 0.0, %v885
      %v887 = vpop.f32.mrb[0].mxu0
      %v888 = vpop.f32.mrb[0].mxu0
      %v889 = vadd.f32 0.0, %v888
      %v890 = vpop.f32.mrb[0].mxu0
      %891 = vmatprep.mubr.bf16.mxu0 0
      %892 = vmatmul.mubr.bf16.gmra.mrb[0].mxu0 %v758
      %v893 = vpop.f32.mrb[0].mxu0
      %v894 = vadd.f32 0.0, %v893
      %v895 = vpop.f32.mrb[0].mxu0
      %v896 = vpop.f32.mrb[0].mxu0
      %v897 = vadd.f32 0.0, %v896
      %v898 = vpop.f32.mrb[0].mxu0
      %899 = vmatprep.mubr.bf16.mxu0 0
      %900 = vmatmul.mubr.bf16.gmra.mrb[0].mxu0 %v761
      %v901 = vpop.f32.mrb[0].mxu0
      %v902 = vadd.f32 0.0, %v901
      %v903 = vpop.f32.mrb[0].mxu0
      %v904 = vpop.f32.mrb[0].mxu0
      %v905 = vadd.f32 0.0, %v904
      %v906 = vpop.f32.mrb[0].mxu0
      %907 = vmatprep.mubr.bf16.mxu0 0
      %908 = vmatmul.mubr.bf16.gmra.mrb[0].mxu0 %v764
      %v909 = vpop.f32.mrb[0].mxu0
      %v910 = vadd.f32 0.0, %v909
      %v911 = vpop.f32.mrb[0].mxu0
      %v912 = vpop.f32.mrb[0].mxu0
      %v913 = vadd.f32 0.0, %v912
      %v914 = vpop.f32.mrb[0].mxu0
      %915 = vmatprep.mubr.bf16.mxu0 0
      %916 = vmatmul.mubr.bf16.gmra.mrb[0].mxu0 %v767
      %v917 = vpop.f32.mrb[0].mxu0
      %v918 = vadd.f32 0.0, %v917
      %v919 = vpop.f32.mrb[0].mxu0
      %v920 = vpop.f32.mrb[0].mxu0
      %v921 = vadd.f32 0.0, %v920
      %v922 = vpop.f32.mrb[0].mxu0
      %923 = vmatprep.mubr.bf16.mxu0 0
      %924 = vmatmul.mubr.bf16.gmra.mrb[0].mxu0 %v770
      %v925 = vpop.f32.mrb[0].mxu0
      %v926 = vadd.f32 0.0, %v925
      %v927 = vpop.f32.mrb[0].mxu0
      %v928 = vpop.f32.mrb[0].mxu0
      %v929 = vadd.f32 0.0, %v928
      %v930 = vpop.f32.mrb[0].mxu0
      %931 = vmatprep.mubr.bf16.mxu0 0
      %932 = vmatmul.mubr.bf16.gmra.mrb[0].mxu0 %v773
      %v933 = vpop.f32.mrb[0].mxu0
      %v934 = vadd.f32 0.0, %v933
      %v935 = vpop.f32.mrb[0].mxu0
      %v936 = vpop.f32.mrb[0].mxu0
      %v937 = vadd.f32 0.0, %v936
      %v938 = vpop.f32.mrb[0].mxu0
      %939 = vdwg.mxu0
      %v941 = vsel %vm726, %v550, 0
      %v944 = vsel %vm726, %v551, 0
      %v947 = vsel %vm726, %v552, 0
      %v950 = vsel %vm726, %v553, 0
      %v953 = vsel %vm726, %v554, 0
      %v956 = vsel %vm726, %v555, 0
      %v959 = vsel %vm726, %v556, 0
      %v962 = vsel %vm726, %v557, 0
      %v965 = vsel %vm726, %v558, 0
      %v968 = vsel %vm726, %v559, 0
      %v971 = vsel %vm726, %v560, 0
      %v974 = vsel %vm726, %v561, 0
      %v977 = vsel %vm726, %v562, 0
      %v980 = vsel %vm726, %v563, 0
      %v983 = vsel %vm726, %v564, 0
      %v986 = vsel %vm726, %v565, 0
      %v989 = vsel %vm775, %v566, 0
      %991 = vmatprep.subr.bf16.mxu0 0
      %992 = vmatpush1.bf16.msra.mxu0 %v989
      %993 = vmatprep.subr.bf16.mxu0 0
      %994 = vmatpush1.bf16.msra.mxu0 0
      %995 = vmatprep.subr.bf16.mxu0 0
      %996 = vmatpush1.bf16.msra.mxu0 0
      %997 = vmatprep.subr.bf16.mxu0 0
      %998 = vmatpush1.bf16.msra.mxu0 0
      %999 = vmatprep.subr.bf16.mxu0 0
      %1000 = vmatpush1.bf16.msra.mxu0 0
      %1001 = vmatprep.subr.bf16.mxu0 0
      %1002 = vmatpush1.bf16.msra.mxu0 0
      %1003 = vmatprep.subr.bf16.mxu0 0
      %1004 = vmatpush1.bf16.msra.mxu0 0
      %1005 = vmatprep.subr.bf16.mxu0 0
      %1006 = vmatpush1.bf16.msra.mxu0 0
      %1007 = vmatprep.subr.bf16.mxu0 0
      %1008 = vmatpush1.bf16.msra.mxu0 0
      %1009 = vmatprep.subr.bf16.mxu0 0
      %1010 = vmatpush1.bf16.msra.mxu0 0
      %1011 = vmatprep.subr.bf16.mxu0 0
      %1012 = vmatpush1.bf16.msra.mxu0 0
      %1013 = vmatprep.subr.bf16.mxu0 0
      %1014 = vmatpush1.bf16.msra.mxu0 0
      %1015 = vmatprep.subr.bf16.mxu0 0
      %1016 = vmatpush1.bf16.msra.mxu0 0
      %1017 = vmatprep.subr.bf16.mxu0 0
      %1018 = vmatpush1.bf16.msra.mxu0 0
      %1019 = vmatprep.subr.bf16.mxu0 0
      %1020 = vmatpush1.bf16.msra.mxu0 0
      %1021 = vmatprep.subr.bf16.mxu0 0
      %1022 = vmatpush1.bf16.msra.mxu0 0
      %1023 = vmatprep.mubr.bf16.mxu0 0
      %1024 = vmatmul.mubr.bf16.gmra.mrb[0].mxu0 %v941
      %v1025 = vpop.f32.mrb[0].mxu0
      %v1026 = vadd.f32 %v814, %v1025
      %v1027 = vpop.f32.mrb[0].mxu0
      %v1028 = vpop.f32.mrb[0].mxu0
      %v1029 = vadd.f32 %v817, %v1028
      %v1030 = vpop.f32.mrb[0].mxu0
      %1031 = vmatprep.mubr.bf16.mxu0 0
      %1032 = vmatmul.mubr.bf16.gmra.mrb[0].mxu0 %v944
      %v1033 = vpop.f32.mrb[0].mxu0
      %v1034 = vadd.f32 %v822, %v1033
      %v1035 = vpop.f32.mrb[0].mxu0
      %v1036 = vpop.f32.mrb[0].mxu0
      %v1037 = vadd.f32 %v825, %v1036
      %v1038 = vpop.f32.mrb[0].mxu0
      %1039 = vmatprep.mubr.bf16.mxu0 0
      %1040 = vmatmul.mubr.bf16.gmra.mrb[0].mxu0 %v947
      %v1041 = vpop.f32.mrb[0].mxu0
      %v1042 = vadd.f32 %v830, %v1041
      %v1043 = vpop.f32.mrb[0].mxu0
      %v1044 = vpop.f32.mrb[0].mxu0
      %v1045 = vadd.f32 %v833, %v1044
      %v1046 = vpop.f32.mrb[0].mxu0
      %1047 = vmatprep.mubr.bf16.mxu0 0
      %1048 = vmatmul.mubr.bf16.gmra.mrb[0].mxu0 %v950
      %v1049 = vpop.f32.mrb[0].mxu0
      %v1050 = vadd.f32 %v838, %v1049
      %v1051 = vpop.f32.mrb[0].mxu0
      %v1052 = vpop.f32.mrb[0].mxu0
      %v1053 = vadd.f32 %v841, %v1052
      %v1054 = vpop.f32.mrb[0].mxu0
      %1055 = vmatprep.mubr.bf16.mxu0 0
      %1056 = vmatmul.mubr.bf16.gmra.mrb[0].mxu0 %v953
      %v1057 = vpop.f32.mrb[0].mxu0
      %v1058 = vadd.f32 %v846, %v1057
      %v1059 = vpop.f32.mrb[0].mxu0
      %v1060 = vpop.f32.mrb[0].mxu0
      %v1061 = vadd.f32 %v849, %v1060
      %v1062 = vpop.f32.mrb[0].mxu0
      %1063 = vmatprep.mubr.bf16.mxu0 0
      %1064 = vmatmul.mubr.bf16.gmra.mrb[0].mxu0 %v956
      %v1065 = vpop.f32.mrb[0].mxu0
      %v1066 = vadd.f32 %v854, %v1065
      %v1067 = vpop.f32.mrb[0].mxu0
      %v1068 = vpop.f32.mrb[0].mxu0
      %v1069 = vadd.f32 %v857, %v1068
      %v1070 = vpop.f32.mrb[0].mxu0
      %1071 = vmatprep.mubr.bf16.mxu0 0
      %1072 = vmatmul.mubr.bf16.gmra.mrb[0].mxu0 %v959
      %v1073 = vpop.f32.mrb[0].mxu0
      %v1074 = vadd.f32 %v862, %v1073
      %v1075 = vpop.f32.mrb[0].mxu0
      %v1076 = vpop.f32.mrb[0].mxu0
      %v1077 = vadd.f32 %v865, %v1076
      %v1078 = vpop.f32.mrb[0].mxu0
      %1079 = vmatprep.mubr.bf16.mxu0 0
      %1080 = vmatmul.mubr.bf16.gmra.mrb[0].mxu0 %v962
      %v1081 = vpop.f32.mrb[0].mxu0
      %v1082 = vadd.f32 %v870, %v1081
      %v1083 = vpop.f32.mrb[0].mxu0
      %v1084 = vpop.f32.mrb[0].mxu0
      %v1085 = vadd.f32 %v873, %v1084
      %v1086 = vpop.f32.mrb[0].mxu0
      %1087 = vmatprep.mubr.bf16.mxu0 0
      %1088 = vmatmul.mubr.bf16.gmra.mrb[0].mxu0 %v965
      %v1089 = vpop.f32.mrb[0].mxu0
      %v1090 = vadd.f32 %v878, %v1089
      %v1091 = vpop.f32.mrb[0].mxu0
      %v1092 = vpop.f32.mrb[0].mxu0
      %v1093 = vadd.f32 %v881, %v1092
      %v1094 = vpop.f32.mrb[0].mxu0
      %1095 = vmatprep.mubr.bf16.mxu0 0
      %1096 = vmatmul.mubr.bf16.gmra.mrb[0].mxu0 %v968
      %v1097 = vpop.f32.mrb[0].mxu0
      %v1098 = vadd.f32 %v886, %v1097
      %v1099 = vpop.f32.mrb[0].mxu0
      %v1100 = vpop.f32.mrb[0].mxu0
      %v1101 = vadd.f32 %v889, %v1100
      %v1102 = vpop.f32.mrb[0].mxu0
      %1103 = vmatprep.mubr.bf16.mxu0 0
      %1104 = vmatmul.mubr.bf16.gmra.mrb[0].mxu0 %v971
      %v1105 = vpop.f32.mrb[0].mxu0
      %v1106 = vadd.f32 %v894, %v1105
      %v1107 = vpop.f32.mrb[0].mxu0
      %v1108 = vpop.f32.mrb[0].mxu0
      %v1109 = vadd.f32 %v897, %v1108
      %v1110 = vpop.f32.mrb[0].mxu0
      %1111 = vmatprep.mubr.bf16.mxu0 0
      %1112 = vmatmul.mubr.bf16.gmra.mrb[0].mxu0 %v974
      %v1113 = vpop.f32.mrb[0].mxu0
      %v1114 = vadd.f32 %v902, %v1113
      %v1115 = vpop.f32.mrb[0].mxu0
      %v1116 = vpop.f32.mrb[0].mxu0
      %v1117 = vadd.f32 %v905, %v1116
      %v1118 = vpop.f32.mrb[0].mxu0
      %1119 = vmatprep.mubr.bf16.mxu0 0
      %1120 = vmatmul.mubr.bf16.gmra.mrb[0].mxu0 %v977
      %v1121 = vpop.f32.mrb[0].mxu0
      %v1122 = vadd.f32 %v910, %v1121
      %v1123 = vpop.f32.mrb[0].mxu0
      %v1124 = vpop.f32.mrb[0].mxu0
      %v1125 = vadd.f32 %v913, %v1124
      %v1126 = vpop.f32.mrb[0].mxu0
      %1127 = vmatprep.mubr.bf16.mxu0 0
      %1128 = vmatmul.mubr.bf16.gmra.mrb[0].mxu0 %v980
      %v1129 = vpop.f32.mrb[0].mxu0
      %v1130 = vadd.f32 %v918, %v1129
      %v1131 = vpop.f32.mrb[0].mxu0
      %v1132 = vpop.f32.mrb[0].mxu0
      %v1133 = vadd.f32 %v921, %v1132
      %v1134 = vpop.f32.mrb[0].mxu0
      %1135 = vmatprep.mubr.bf16.mxu0 0
      %1136 = vmatmul.mubr.bf16.gmra.mrb[0].mxu0 %v983
      %v1137 = vpop.f32.mrb[0].mxu0
      %v1138 = vadd.f32 %v926, %v1137
      %v1139 = vpop.f32.mrb[0].mxu0
      %v1140 = vpop.f32.mrb[0].mxu0
      %v1141 = vadd.f32 %v929, %v1140
      %v1142 = vpop.f32.mrb[0].mxu0
      %1143 = vmatprep.mubr.bf16.mxu0 0
      %1144 = vmatmul.mubr.bf16.gmra.mrb[0].mxu0 %v986
      %v1145 = vpop.f32.mrb[0].mxu0
      %v1146 = vadd.f32 %v934, %v1145
      %v1147 = vpop.f32.mrb[0].mxu0
      %v1148 = vpop.f32.mrb[0].mxu0
      %v1149 = vadd.f32 %v937, %v1148
      %v1150 = vpop.f32.mrb[0].mxu0
      %1151 = vdwg.mxu0
      %v1152 = vld [vmem:[%s8] sm:$0x1]
      %v1154 = vlaneseq
      %v1155 = vshrl.u32 %v1154, 7
      %v1156 = vsub.s32 0, %v1155
      %v1157 = vrot.slane %v1152, %v1156
      %v1159 = vmul.f32 %v1026, %v1157
      %v1160 = vmul.f32 %v1029, %v1157
      %v1161 = vmul.f32 %v1034, %v1157
      %v1162 = vmul.f32 %v1037, %v1157
      %v1163 = vmul.f32 %v1042, %v1157
      %v1164 = vmul.f32 %v1045, %v1157
      %v1165 = vmul.f32 %v1050, %v1157
      %v1166 = vmul.f32 %v1053, %v1157
      %v1167 = vmul.f32 %v1058, %v1157
      %v1168 = vmul.f32 %v1061, %v1157
      %v1169 = vmul.f32 %v1066, %v1157
      %v1170 = vmul.f32 %v1069, %v1157
      %v1171 = vmul.f32 %v1074, %v1157
      %v1172 = vmul.f32 %v1077, %v1157
      %v1173 = vmul.f32 %v1082, %v1157
      %v1174 = vmul.f32 %v1085, %v1157
      %v1175 = vmul.f32 %v1090, %v1157
      %v1176 = vmul.f32 %v1093, %v1157
      %v1177 = vmul.f32 %v1098, %v1157
      %v1178 = vmul.f32 %v1101, %v1157
      %v1179 = vmul.f32 %v1106, %v1157
      %v1180 = vmul.f32 %v1109, %v1157
      %v1181 = vmul.f32 %v1114, %v1157
      %v1182 = vmul.f32 %v1117, %v1157
      %v1183 = vmul.f32 %v1122, %v1157
      %v1184 = vmul.f32 %v1125, %v1157
      %v1185 = vmul.f32 %v1130, %v1157
      %v1186 = vmul.f32 %v1133, %v1157
      %v1187 = vmul.f32 %v1138, %v1157
      %v1188 = vmul.f32 %v1141, %v1157
      %v1189 = vmul.f32 %v1146, %v1157
      %v1190 = vmul.f32 %v1149, %v1157
      %v1191 = vld [vmem:[%s9] sm:$0x1]
      %v1193 = vlaneseq
      %v1194 = vshrl.u32 %v1193, 7
      %v1195 = vsub.s32 0, %v1194
      %v1196 = vrot.slane %v1191, %v1195
      %v1198 = vadd.f32 %v1159, %v1196
      %v1199 = vadd.f32 %v1160, %v1196
      %v1200 = vadd.f32 %v1161, %v1196
      %v1201 = vadd.f32 %v1162, %v1196
      %v1202 = vadd.f32 %v1163, %v1196
      %v1203 = vadd.f32 %v1164, %v1196
      %v1204 = vadd.f32 %v1165, %v1196
      %v1205 = vadd.f32 %v1166, %v1196
      %v1206 = vadd.f32 %v1167, %v1196
      %v1207 = vadd.f32 %v1168, %v1196
      %v1208 = vadd.f32 %v1169, %v1196
      %v1209 = vadd.f32 %v1170, %v1196
      %v1210 = vadd.f32 %v1171, %v1196
      %v1211 = vadd.f32 %v1172, %v1196
      %v1212 = vadd.f32 %v1173, %v1196
      %v1213 = vadd.f32 %v1174, %v1196
      %v1214 = vadd.f32 %v1175, %v1196
      %v1215 = vadd.f32 %v1176, %v1196
      %v1216 = vadd.f32 %v1177, %v1196
      %v1217 = vadd.f32 %v1178, %v1196
      %v1218 = vadd.f32 %v1179, %v1196
      %v1219 = vadd.f32 %v1180, %v1196
      %v1220 = vadd.f32 %v1181, %v1196
      %v1221 = vadd.f32 %v1182, %v1196
      %v1222 = vadd.f32 %v1183, %v1196
      %v1223 = vadd.f32 %v1184, %v1196
      %v1224 = vadd.f32 %v1185, %v1196
      %v1225 = vadd.f32 %v1186, %v1196
      %v1226 = vadd.f32 %v1187, %v1196
      %v1227 = vadd.f32 %v1188, %v1196
      %v1228 = vadd.f32 %v1189, %v1196
      %v1229 = vadd.f32 %v1190, %v1196
      %v1230 = vmax.f32 %v1198, 0.0
      %v1231 = vmax.f32 %v1199, 0.0
      %v1232 = vmax.f32 %v1200, 0.0
      %v1233 = vmax.f32 %v1201, 0.0
      %v1234 = vmax.f32 %v1202, 0.0
      %v1235 = vmax.f32 %v1203, 0.0
      %v1236 = vmax.f32 %v1204, 0.0
      %v1237 = vmax.f32 %v1205, 0.0
      %v1238 = vmax.f32 %v1206, 0.0
      %v1239 = vmax.f32 %v1207, 0.0
      %v1240 = vmax.f32 %v1208, 0.0
      %v1241 = vmax.f32 %v1209, 0.0
      %v1242 = vmax.f32 %v1210, 0.0
      %v1243 = vmax.f32 %v1211, 0.0
      %v1244 = vmax.f32 %v1212, 0.0
      %v1245 = vmax.f32 %v1213, 0.0
      %v1246 = vmax.f32 %v1214, 0.0
      %v1247 = vmax.f32 %v1215, 0.0
      %v1248 = vmax.f32 %v1216, 0.0
      %v1249 = vmax.f32 %v1217, 0.0
      %v1250 = vmax.f32 %v1218, 0.0
      %v1251 = vmax.f32 %v1219, 0.0
      %v1252 = vmax.f32 %v1220, 0.0
      %v1253 = vmax.f32 %v1221, 0.0
      %v1254 = vmax.f32 %v1222, 0.0
      %v1255 = vmax.f32 %v1223, 0.0
      %v1256 = vmax.f32 %v1224, 0.0
      %v1257 = vmax.f32 %v1225, 0.0
      %v1258 = vmax.f32 %v1226, 0.0
      %v1259 = vmax.f32 %v1227, 0.0
      %v1260 = vmax.f32 %v1228, 0.0
      %v1261 = vmax.f32 %v1229, 0.0
      %p1262 = scmp.eq.s32.totalorder %s22, 0
      // Predicated region
      $region65: #{dense_block_forward.4} parent=63 // pred_check
        %p1263 = pneg %p1262
      $region66: #{dense_block_forward.4} parent=63 // pred_check_branch
        %1265 = sbr.rel (%p1263) target = $region68
      $region67: #{dense_block_forward.4} parent=63 // pred_region
        %vm1266 = vcmask 64512
        %1267 = vst.msk [vmem:[#allocation2] sm:$0xff] %vm1266, 0.0
        %1268 = vst.msk [vmem:[#allocation2 + $0x8] sm:$0xff] %vm1266, 0.0
        %vm1269 = vcmask 58368
        %1270 = vst.msk [vmem:[#allocation2 + $0x10] sm:$0x3] %vm1269, 0.0
        %1271 = vst.msk [vmem:[#allocation2 + $0x18] sm:$0xff] %vm1266, 0.0
        %1272 = vst.msk [vmem:[#allocation2 + $0x20] sm:$0xff] %vm1266, 0.0
        %1273 = vst.msk [vmem:[#allocation2 + $0x28] sm:$0x3] %vm1269, 0.0
        %1274 = vst.msk [vmem:[#allocation2 + $0x30] sm:$0xff] %vm1266, 0.0
        %1275 = vst.msk [vmem:[#allocation2 + $0x38] sm:$0xff] %vm1266, 0.0
        %1276 = vst.msk [vmem:[#allocation2 + $0x40] sm:$0x3] %vm1269, 0.0
        %1277 = vst.msk [vmem:[#allocation2 + $0x48] sm:$0xff] %vm1266, 0.0
        %1278 = vst.msk [vmem:[#allocation2 + $0x50] sm:$0xff] %vm1266, 0.0
        %1279 = vst.msk [vmem:[#allocation2 + $0x58] sm:$0x3] %vm1269, 0.0
        %1280 = vst.msk [vmem:[#allocation2 + $0x60] sm:$0xff] %vm1266, 0.0
        %1281 = vst.msk [vmem:[#allocation2 + $0x68] sm:$0xff] %vm1266, 0.0
        %1282 = vst.msk [vmem:[#allocation2 + $0x70] sm:$0x3] %vm1269, 0.0
        %1283 = vst.msk [vmem:[#allocation2 + $0x78] sm:$0xff] %vm1266, 0.0
        %1284 = vst.msk [vmem:[#allocation2 + $0x80] sm:$0xff] %vm1266, 0.0
        %1285 = vst.msk [vmem:[#allocation2 + $0x88] sm:$0x3] %vm1269, 0.0
        %1286 = vst.msk [vmem:[#allocation2 + $0x90] sm:$0xff] %vm1266, 0.0
        %1287 = vst.msk [vmem:[#allocation2 + $0x98] sm:$0xff] %vm1266, 0.0
        %1288 = vst.msk [vmem:[#allocation2 + $0xa0] sm:$0x3] %vm1269, 0.0
        %1289 = vst.msk [vmem:[#allocation2 + $0xa8] sm:$0xff] %vm1266, 0.0
        %1290 = vst.msk [vmem:[#allocation2 + $0xb0] sm:$0xff] %vm1266, 0.0
        %1291 = vst.msk [vmem:[#allocation2 + $0xb8] sm:$0x3] %vm1269, 0.0
        %1292 = vst.msk [vmem:[#allocation2 + $0xc0] sm:$0xff] %vm1266, 0.0
        %1293 = vst.msk [vmem:[#allocation2 + $0xc8] sm:$0xff] %vm1266, 0.0
        %1294 = vst.msk [vmem:[#allocation2 + $0xd0] sm:$0x3] %vm1269, 0.0
        %1295 = vst.msk [vmem:[#allocation2 + $0xd8] sm:$0xff] %vm1266, 0.0
        %1296 = vst.msk [vmem:[#allocation2 + $0xe0] sm:$0xff] %vm1266, 0.0
        %1297 = vst.msk [vmem:[#allocation2 + $0xe8] sm:$0x3] %vm1269, 0.0
        %1298 = vst.msk [vmem:[#allocation2 + $0xf0] sm:$0xff] %vm1266, 0.0
        %1299 = vst.msk [vmem:[#allocation2 + $0xf8] sm:$0xff] %vm1266, 0.0
        %1300 = vst.msk [vmem:[#allocation2 + $0x100] sm:$0x3] %vm1269, 0.0
        %1301 = vst.msk [vmem:[#allocation2 + $0x108] sm:$0xff] %vm1266, 0.0
        %1302 = vst.msk [vmem:[#allocation2 + $0x110] sm:$0xff] %vm1266, 0.0
        %1303 = vst.msk [vmem:[#allocation2 + $0x118] sm:$0x3] %vm1269, 0.0
        %1304 = vst.msk [vmem:[#allocation2 + $0x120] sm:$0xff] %vm1266, 0.0
        %1305 = vst.msk [vmem:[#allocation2 + $0x128] sm:$0xff] %vm1266, 0.0
        %1306 = vst.msk [vmem:[#allocation2 + $0x130] sm:$0x3] %vm1269, 0.0
        %1307 = vst.msk [vmem:[#allocation2 + $0x138] sm:$0xff] %vm1266, 0.0
        %1308 = vst.msk [vmem:[#allocation2 + $0x140] sm:$0xff] %vm1266, 0.0
        %1309 = vst.msk [vmem:[#allocation2 + $0x148] sm:$0x3] %vm1269, 0.0
        %1310 = vst.msk [vmem:[#allocation2 + $0x150] sm:$0xff] %vm1266, 0.0
        %1311 = vst.msk [vmem:[#allocation2 + $0x158] sm:$0xff] %vm1266, 0.0
        %1312 = vst.msk [vmem:[#allocation2 + $0x160] sm:$0x3] %vm1269, 0.0
        %1313 = vst.msk [vmem:[#allocation2 + $0x168] sm:$0xff] %vm1266, 0.0
        %1314 = vst.msk [vmem:[#allocation2 + $0x170] sm:$0xff] %vm1266, 0.0
        %1315 = vst.msk [vmem:[#allocation2 + $0x178] sm:$0x3] %vm1269, 0.0
        %1316 = vst.msk [vmem:[#allocation2 + $0x180] sm:$0xff] %vm1266, 0.0
        %1317 = vst.msk [vmem:[#allocation2 + $0x188] sm:$0xff] %vm1266, 0.0
        %1318 = vst.msk [vmem:[#allocation2 + $0x190] sm:$0x3] %vm1269, 0.0
        %1319 = vst.msk [vmem:[#allocation2 + $0x198] sm:$0xff] %vm1266, 0.0
        %1320 = vst.msk [vmem:[#allocation2 + $0x1a0] sm:$0xff] %vm1266, 0.0
        %1321 = vst.msk [vmem:[#allocation2 + $0x1a8] sm:$0x3] %vm1269, 0.0
      $region68: #{dense_block_forward.4} parent=63 // pred_fallthru
        _
      %s1322 = scalar_lea.vmem [#allocation2], 24
      %vm1323 = vcmask 64512
      %1324 = vst.msk [vmem:[%s1322 + $0x1] sm:$0xff] %vm1323, %v1230
      %1325 = vst.msk [vmem:[%s1322 + $0x9] sm:$0xff] %vm1323, %v1231
      %1326 = vst.msk [vmem:[%s1322 + $0x19] sm:$0xff] %vm1323, %v1232
      %1327 = vst.msk [vmem:[%s1322 + $0x21] sm:$0xff] %vm1323, %v1233
      %1328 = vst.msk [vmem:[%s1322 + $0x31] sm:$0xff] %vm1323, %v1234
      %1329 = vst.msk [vmem:[%s1322 + $0x39] sm:$0xff] %vm1323, %v1235
      %1330 = vst.msk [vmem:[%s1322 + $0x49] sm:$0xff] %vm1323, %v1236
      %1331 = vst.msk [vmem:[%s1322 + $0x51] sm:$0xff] %vm1323, %v1237
      %1332 = vst.msk [vmem:[%s1322 + $0x61] sm:$0xff] %vm1323, %v1238
      %1333 = vst.msk [vmem:[%s1322 + $0x69] sm:$0xff] %vm1323, %v1239
      %1334 = vst.msk [vmem:[%s1322 + $0x79] sm:$0xff] %vm1323, %v1240
      %1335 = vst.msk [vmem:[%s1322 + $0x81] sm:$0xff] %vm1323, %v1241
      %1336 = vst.msk [vmem:[%s1322 + $0x91] sm:$0xff] %vm1323, %v1242
      %1337 = vst.msk [vmem:[%s1322 + $0x99] sm:$0xff] %vm1323, %v1243
      %1338 = vst.msk [vmem:[%s1322 + $0xa9] sm:$0xff] %vm1323, %v1244
      %1339 = vst.msk [vmem:[%s1322 + $0xb1] sm:$0xff] %vm1323, %v1245
      %1340 = vst.msk [vmem:[%s1322 + $0xc1] sm:$0xff] %vm1323, %v1246
      %1341 = vst.msk [vmem:[%s1322 + $0xc9] sm:$0xff] %vm1323, %v1247
      %1342 = vst.msk [vmem:[%s1322 + $0xd9] sm:$0xff] %vm1323, %v1248
      %1343 = vst.msk [vmem:[%s1322 + $0xe1] sm:$0xff] %vm1323, %v1249
      %1344 = vst.msk [vmem:[%s1322 + $0xf1] sm:$0xff] %vm1323, %v1250
      %1345 = vst.msk [vmem:[%s1322 + $0xf9] sm:$0xff] %vm1323, %v1251
      %1346 = vst.msk [vmem:[%s1322 + $0x109] sm:$0xff] %vm1323, %v1252
      %1347 = vst.msk [vmem:[%s1322 + $0x111] sm:$0xff] %vm1323, %v1253
      %1348 = vst.msk [vmem:[%s1322 + $0x121] sm:$0xff] %vm1323, %v1254
      %1349 = vst.msk [vmem:[%s1322 + $0x129] sm:$0xff] %vm1323, %v1255
      %1350 = vst.msk [vmem:[%s1322 + $0x139] sm:$0xff] %vm1323, %v1256
      %1351 = vst.msk [vmem:[%s1322 + $0x141] sm:$0xff] %vm1323, %v1257
      %1352 = vst.msk [vmem:[%s1322 + $0x151] sm:$0xff] %vm1323, %v1258
      %1353 = vst.msk [vmem:[%s1322 + $0x159] sm:$0xff] %vm1323, %v1259
      %1354 = vst.msk [vmem:[%s1322 + $0x169] sm:$0xff] %vm1323, %v1260
      %1355 = vst.msk [vmem:[%s1322 + $0x171] sm:$0xff] %vm1323, %v1261
      %v1356 = vld [vmem:[%s10] sm:$0xf]
      %v1357 = vld [vmem:[%s10 + $0x4] sm:$0xf]
      %v1358 = vld [vmem:[%s10 + $0x8] sm:$0xf]
      %v1359 = vld [vmem:[%s10 + $0xc] sm:$0xf]
      %v1360 = vld [vmem:[%s10 + $0x10] sm:$0xf]
      %v1361 = vld [vmem:[%s10 + $0x14] sm:$0xf]
      %v1362 = vld [vmem:[%s10 + $0x18] sm:$0xf]
      %v1363 = vld [vmem:[%s10 + $0x1c] sm:$0xf]
      %v1364 = vld [vmem:[%s10 + $0x20] sm:$0xf]
      %v1365 = vld [vmem:[#allocation2] sm:$0xff]
      %v1366 = vld [vmem:[#allocation2 + $0x8] sm:$0xff]
      %v1367 = vld [vmem:[#allocation2 + $0x18] sm:$0xff]
      %v1368 = vld [vmem:[#allocation2 + $0x20] sm:$0xff]
      %v1369 = vld [vmem:[#allocation2 + $0x30] sm:$0xff]
      %v1370 = vld [vmem:[#allocation2 + $0x38] sm:$0xff]
      %v1371 = vld [vmem:[#allocation2 + $0x48] sm:$0xff]
      %v1372 = vld [vmem:[#allocation2 + $0x50] sm:$0xff]
      %v1373 = vld [vmem:[#allocation2 + $0x60] sm:$0xff]
      %v1374 = vld [vmem:[#allocation2 + $0x68] sm:$0xff]
      %v1375 = vld [vmem:[#allocation2 + $0x78] sm:$0xff]
      %v1376 = vld [vmem:[#allocation2 + $0x80] sm:$0xff]
      %v1377 = vld [vmem:[#allocation2 + $0x90] sm:$0xff]
      %v1378 = vld [vmem:[#allocation2 + $0x98] sm:$0xff]
      %v1379 = vld [vmem:[#allocation2 + $0xa8] sm:$0xff]
      %v1380 = vld [vmem:[#allocation2 + $0xb0] sm:$0xff]
      %v1381 = vld [vmem:[#allocation2 + $0xc0] sm:$0xff]
      %v1382 = vld [vmem:[#allocation2 + $0xc8] sm:$0xff]
      %v1383 = vld [vmem:[#allocation2 + $0xd8] sm:$0xff]
      %v1384 = vld [vmem:[#allocation2 + $0xe0] sm:$0xff]
      %v1385 = vld [vmem:[#allocation2 + $0xf0] sm:$0xff]
      %v1386 = vld [vmem:[#allocation2 + $0xf8] sm:$0xff]
      %v1387 = vld [vmem:[#allocation2 + $0x108] sm:$0xff]
      %v1388 = vld [vmem:[#allocation2 + $0x110] sm:$0xff]
      %v1389 = vld [vmem:[#allocation2 + $0x120] sm:$0xff]
      %v1390 = vld [vmem:[#allocation2 + $0x128] sm:$0xff]
      %v1391 = vld [vmem:[#allocation2 + $0x138] sm:$0xff]
      %v1392 = vld [vmem:[#allocation2 + $0x140] sm:$0xff]
      %v1393 = vld [vmem:[#allocation2 + $0x150] sm:$0xff]
      %v1394 = vld [vmem:[#allocation2 + $0x158] sm:$0xff]
      %v1395 = vld [vmem:[#allocation2 + $0x168] sm:$0xff]
      %v1396 = vld [vmem:[#allocation2 + $0x170] sm:$0xff]
      %v1397 = vpack.c.bf16 %v1366, %v1365
      %v1398 = vpack.c.bf16 %v1368, %v1367
      %v1399 = vpack.c.bf16 %v1370, %v1369
      %v1400 = vpack.c.bf16 %v1372, %v1371
      %v1401 = vpack.c.bf16 %v1374, %v1373
      %v1402 = vpack.c.bf16 %v1376, %v1375
      %v1403 = vpack.c.bf16 %v1378, %v1377
      %v1404 = vpack.c.bf16 %v1380, %v1379
      %v1405 = vpack.c.bf16 %v1382, %v1381
      %v1406 = vpack.c.bf16 %v1384, %v1383
      %v1407 = vpack.c.bf16 %v1386, %v1385
      %v1408 = vpack.c.bf16 %v1388, %v1387
      %v1409 = vpack.c.bf16 %v1390, %v1389
      %v1410 = vpack.c.bf16 %v1392, %v1391
      %v1411 = vpack.c.bf16 %v1394, %v1393
      %v1412 = vpack.c.bf16 %v1396, %v1395
      %v1413 = vld [vmem:[#allocation2 + $0x1] sm:$0xff]
      %v1414 = vld [vmem:[#allocation2 + $0x9] sm:$0xff]
      %v1415 = vld [vmem:[#allocation2 + $0x19] sm:$0xff]
      %v1416 = vld [vmem:[#allocation2 + $0x21] sm:$0xff]
      %v1417 = vld [vmem:[#allocation2 + $0x31] sm:$0xff]
      %v1418 = vld [vmem:[#allocation2 + $0x39] sm:$0xff]
      %v1419 = vld [vmem:[#allocation2 + $0x49] sm:$0xff]
      %v1420 = vld [vmem:[#allocation2 + $0x51] sm:$0xff]
      %v1421 = vld [vmem:[#allocation2 + $0x61] sm:$0xff]
      %v1422 = vld [vmem:[#allocation2 + $0x69] sm:$0xff]
      %v1423 = vld [vmem:[#allocation2 + $0x79] sm:$0xff]
      %v1424 = vld [vmem:[#allocation2 + $0x81] sm:$0xff]
      %v1425 = vld [vmem:[#allocation2 + $0x91] sm:$0xff]
      %v1426 = vld [vmem:[#allocation2 + $0x99] sm:$0xff]
      %v1427 = vld [vmem:[#allocation2 + $0xa9] sm:$0xff]
      %v1428 = vld [vmem:[#allocation2 + $0xb1] sm:$0xff]
      %v1429 = vld [vmem:[#allocation2 + $0xc1] sm:$0xff]
      %v1430 = vld [vmem:[#allocation2 + $0xc9] sm:$0xff]
      %v1431 = vld [vmem:[#allocation2 + $0xd9] sm:$0xff]
      %v1432 = vld [vmem:[#allocation2 + $0xe1] sm:$0xff]
      %v1433 = vld [vmem:[#allocation2 + $0xf1] sm:$0xff]
      %v1434 = vld [vmem:[#allocation2 + $0xf9] sm:$0xff]
      %v1435 = vld [vmem:[#allocation2 + $0x109] sm:$0xff]
      %v1436 = vld [vmem:[#allocation2 + $0x111] sm:$0xff]
      %v1437 = vld [vmem:[#allocation2 + $0x121] sm:$0xff]
      %v1438 = vld [vmem:[#allocation2 + $0x129] sm:$0xff]
      %v1439 = vld [vmem:[#allocation2 + $0x139] sm:$0xff]
      %v1440 = vld [vmem:[#allocation2 + $0x141] sm:$0xff]
      %v1441 = vld [vmem:[#allocation2 + $0x151] sm:$0xff]
      %v1442 = vld [vmem:[#allocation2 + $0x159] sm:$0xff]
      %v1443 = vld [vmem:[#allocation2 + $0x169] sm:$0xff]
      %v1444 = vld [vmem:[#allocation2 + $0x171] sm:$0xff]
      %v1445 = vpack.c.bf16 %v1414, %v1413
      %v1446 = vpack.c.bf16 %v1416, %v1415
      %v1447 = vpack.c.bf16 %v1418, %v1417
      %v1448 = vpack.c.bf16 %v1420, %v1419
      %v1449 = vpack.c.bf16 %v1422, %v1421
      %v1450 = vpack.c.bf16 %v1424, %v1423
      %v1451 = vpack.c.bf16 %v1426, %v1425
      %v1452 = vpack.c.bf16 %v1428, %v1427
      %v1453 = vpack.c.bf16 %v1430, %v1429
      %v1454 = vpack.c.bf16 %v1432, %v1431
      %v1455 = vpack.c.bf16 %v1434, %v1433
      %v1456 = vpack.c.bf16 %v1436, %v1435
      %v1457 = vpack.c.bf16 %v1438, %v1437
      %v1458 = vpack.c.bf16 %v1440, %v1439
      %v1459 = vpack.c.bf16 %v1442, %v1441
      %v1460 = vpack.c.bf16 %v1444, %v1443
      %v1462 = vsel %vm1323, %v1445, 0
      %v1465 = vsel %vm1323, %v1446, 0
      %v1468 = vsel %vm1323, %v1447, 0
      %v1471 = vsel %vm1323, %v1448, 0
      %v1474 = vsel %vm1323, %v1449, 0
      %v1477 = vsel %vm1323, %v1450, 0
      %v1480 = vsel %vm1323, %v1451, 0
      %v1483 = vsel %vm1323, %v1452, 0
      %v1486 = vsel %vm1323, %v1453, 0
      %v1489 = vsel %vm1323, %v1454, 0
      %v1492 = vsel %vm1323, %v1455, 0
      %v1495 = vsel %vm1323, %v1456, 0
      %v1498 = vsel %vm1323, %v1457, 0
      %v1501 = vsel %vm1323, %v1458, 0
      %v1504 = vsel %vm1323, %v1459, 0
      %v1507 = vsel %vm1323, %v1460, 0
      %vm1509 = vcmask 1043456
      %v1511 = vsel %vm1509, %v1357, 0
      %1513 = vmatprep.subr.bf16.mxu0 0
      %1514 = vmatpush1.bf16.msra.mxu0 %v1511
      %1515 = vmatprep.subr.bf16.mxu0 0
      %1516 = vmatpush1.bf16.msra.mxu0 0
      %1517 = vmatprep.subr.bf16.mxu0 0
      %1518 = vmatpush1.bf16.msra.mxu0 0
      %1519 = vmatprep.subr.bf16.mxu0 0
      %1520 = vmatpush1.bf16.msra.mxu0 0
      %1521 = vmatprep.subr.bf16.mxu0 0
      %1522 = vmatpush1.bf16.msra.mxu0 0
      %1523 = vmatprep.subr.bf16.mxu0 0
      %1524 = vmatpush1.bf16.msra.mxu0 0
      %1525 = vmatprep.subr.bf16.mxu0 0
      %1526 = vmatpush1.bf16.msra.mxu0 0
      %1527 = vmatprep.subr.bf16.mxu0 0
      %1528 = vmatpush1.bf16.msra.mxu0 0
      %1529 = vmatprep.subr.bf16.mxu0 0
      %1530 = vmatpush1.bf16.msra.mxu0 0
      %1531 = vmatprep.subr.bf16.mxu0 0
      %1532 = vmatpush1.bf16.msra.mxu0 0
      %1533 = vmatprep.subr.bf16.mxu0 0
      %1534 = vmatpush1.bf16.msra.mxu0 0
      %1535 = vmatprep.subr.bf16.mxu0 0
      %1536 = vmatpush1.bf16.msra.mxu0 0
      %1537 = vmatprep.subr.bf16.mxu0 0
      %1538 = vmatpush1.bf16.msra.mxu0 0
      %1539 = vmatprep.subr.bf16.mxu0 0
      %1540 = vmatpush1.bf16.msra.mxu0 0
      %1541 = vmatprep.subr.bf16.mxu0 0
      %1542 = vmatpush1.bf16.msra.mxu0 0
      %1543 = vmatprep.subr.bf16.mxu0 0
      %1544 = vmatpush1.bf16.msra.mxu0 0
      %1545 = vmatprep.mubr.bf16.mxu0 0
      %1546 = vmatmul.mubr.bf16.gmra.mrb[0].mxu0 %v1462
      %v1547 = vpop.f32.mrb[0].mxu0
      %v1548 = vadd.f32 0.0, %v1547
      %v1549 = vpop.f32.mrb[0].mxu0
      %v1550 = vpop.f32.mrb[0].mxu0
      %v1551 = vadd.f32 0.0, %v1550
      %v1552 = vpop.f32.mrb[0].mxu0
      %1553 = vmatprep.mubr.bf16.mxu0 0
      %1554 = vmatmul.mubr.bf16.gmra.mrb[0].mxu0 %v1465
      %v1555 = vpop.f32.mrb[0].mxu0
      %v1556 = vadd.f32 0.0, %v1555
      %v1557 = vpop.f32.mrb[0].mxu0
      %v1558 = vpop.f32.mrb[0].mxu0
      %v1559 = vadd.f32 0.0, %v1558
      %v1560 = vpop.f32.mrb[0].mxu0
      %1561 = vmatprep.mubr.bf16.mxu0 0
      %1562 = vmatmul.mubr.bf16.gmra.mrb[0].mxu0 %v1468
      %v1563 = vpop.f32.mrb[0].mxu0
      %v1564 = vadd.f32 0.0, %v1563
      %v1565 = vpop.f32.mrb[0].mxu0
      %v1566 = vpop.f32.mrb[0].mxu0
      %v1567 = vadd.f32 0.0, %v1566
      %v1568 = vpop.f32.mrb[0].mxu0
      %1569 = vmatprep.mubr.bf16.mxu0 0
      %1570 = vmatmul.mubr.bf16.gmra.mrb[0].mxu0 %v1471
      %v1571 = vpop.f32.mrb[0].mxu0
      %v1572 = vadd.f32 0.0, %v1571
      %v1573 = vpop.f32.mrb[0].mxu0
      %v1574 = vpop.f32.mrb[0].mxu0
      %v1575 = vadd.f32 0.0, %v1574
      %v1576 = vpop.f32.mrb[0].mxu0
      %1577 = vmatprep.mubr.bf16.mxu0 0
      %1578 = vmatmul.mubr.bf16.gmra.mrb[0].mxu0 %v1474
      %v1579 = vpop.f32.mrb[0].mxu0
      %v1580 = vadd.f32 0.0, %v1579
      %v1581 = vpop.f32.mrb[0].mxu0
      %v1582 = vpop.f32.mrb[0].mxu0
      %v1583 = vadd.f32 0.0, %v1582
      %v1584 = vpop.f32.mrb[0].mxu0
      %1585 = vmatprep.mubr.bf16.mxu0 0
      %1586 = vmatmul.mubr.bf16.gmra.mrb[0].mxu0 %v1477
      %v1587 = vpop.f32.mrb[0].mxu0
      %v1588 = vadd.f32 0.0, %v1587
      %v1589 = vpop.f32.mrb[0].mxu0
      %v1590 = vpop.f32.mrb[0].mxu0
      %v1591 = vadd.f32 0.0, %v1590
      %v1592 = vpop.f32.mrb[0].mxu0
      %1593 = vmatprep.mubr.bf16.mxu0 0
      %1594 = vmatmul.mubr.bf16.gmra.mrb[0].mxu0 %v1480
      %v1595 = vpop.f32.mrb[0].mxu0
      %v1596 = vadd.f32 0.0, %v1595
      %v1597 = vpop.f32.mrb[0].mxu0
      %v1598 = vpop.f32.mrb[0].mxu0
      %v1599 = vadd.f32 0.0, %v1598
      %v1600 = vpop.f32.mrb[0].mxu0
      %1601 = vmatprep.mubr.bf16.mxu0 0
      %1602 = vmatmul.mubr.bf16.gmra.mrb[0].mxu0 %v1483
      %v1603 = vpop.f32.mrb[0].mxu0
      %v1604 = vadd.f32 0.0, %v1603
      %v1605 = vpop.f32.mrb[0].mxu0
      %v1606 = vpop.f32.mrb[0].mxu0
      %v1607 = vadd.f32 0.0, %v1606
      %v1608 = vpop.f32.mrb[0].mxu0
      %1609 = vmatprep.mubr.bf16.mxu0 0
      %1610 = vmatmul.mubr.bf16.gmra.mrb[0].mxu0 %v1486
      %v1611 = vpop.f32.mrb[0].mxu0
      %v1612 = vadd.f32 0.0, %v1611
      %v1613 = vpop.f32.mrb[0].mxu0
      %v1614 = vpop.f32.mrb[0].mxu0
      %v1615 = vadd.f32 0.0, %v1614
      %v1616 = vpop.f32.mrb[0].mxu0
      %1617 = vmatprep.mubr.bf16.mxu0 0
      %1618 = vmatmul.mubr.bf16.gmra.mrb[0].mxu0 %v1489
      %v1619 = vpop.f32.mrb[0].mxu0
      %v1620 = vadd.f32 0.0, %v1619
      %v1621 = vpop.f32.mrb[0].mxu0
      %v1622 = vpop.f32.mrb[0].mxu0
      %v1623 = vadd.f32 0.0, %v1622
      %v1624 = vpop.f32.mrb[0].mxu0
      %1625 = vmatprep.mubr.bf16.mxu0 0
      %1626 = vmatmul.mubr.bf16.gmra.mrb[0].mxu0 %v1492
      %v1627 = vpop.f32.mrb[0].mxu0
      %v1628 = vadd.f32 0.0, %v1627
      %v1629 = vpop.f32.mrb[0].mxu0
      %v1630 = vpop.f32.mrb[0].mxu0
      %v1631 = vadd.f32 0.0, %v1630
      %v1632 = vpop.f32.mrb[0].mxu0
      %1633 = vmatprep.mubr.bf16.mxu0 0
      %1634 = vmatmul.mubr.bf16.gmra.mrb[0].mxu0 %v1495
      %v1635 = vpop.f32.mrb[0].mxu0
      %v1636 = vadd.f32 0.0, %v1635
      %v1637 = vpop.f32.mrb[0].mxu0
      %v1638 = vpop.f32.mrb[0].mxu0
      %v1639 = vadd.f32 0.0, %v1638
      %v1640 = vpop.f32.mrb[0].mxu0
      %1641 = vmatprep.mubr.bf16.mxu0 0
      %1642 = vmatmul.mubr.bf16.gmra.mrb[0].mxu0 %v1498
      %v1643 = vpop.f32.mrb[0].mxu0
      %v1644 = vadd.f32 0.0, %v1643
      %v1645 = vpop.f32.mrb[0].mxu0
      %v1646 = vpop.f32.mrb[0].mxu0
      %v1647 = vadd.f32 0.0, %v1646
      %v1648 = vpop.f32.mrb[0].mxu0
      %1649 = vmatprep.mubr.bf16.mxu0 0
      %1650 = vmatmul.mubr.bf16.gmra.mrb[0].mxu0 %v1501
      %v1651 = vpop.f32.mrb[0].mxu0
      %v1652 = vadd.f32 0.0, %v1651
      %v1653 = vpop.f32.mrb[0].mxu0
      %v1654 = vpop.f32.mrb[0].mxu0
      %v1655 = vadd.f32 0.0, %v1654
      %v1656 = vpop.f32.mrb[0].mxu0
      %1657 = vmatprep.mubr.bf16.mxu0 0
      %1658 = vmatmul.mubr.bf16.gmra.mrb[0].mxu0 %v1504
      %v1659 = vpop.f32.mrb[0].mxu0
      %v1660 = vadd.f32 0.0, %v1659
      %v1661 = vpop.f32.mrb[0].mxu0
      %v1662 = vpop.f32.mrb[0].mxu0
      %v1663 = vadd.f32 0.0, %v1662
      %v1664 = vpop.f32.mrb[0].mxu0
      %1665 = vmatprep.mubr.bf16.mxu0 0
      %1666 = vmatmul.mubr.bf16.gmra.mrb[0].mxu0 %v1507
      %v1667 = vpop.f32.mrb[0].mxu0
      %v1668 = vadd.f32 0.0, %v1667
      %v1669 = vpop.f32.mrb[0].mxu0
      %v1670 = vpop.f32.mrb[0].mxu0
      %v1671 = vadd.f32 0.0, %v1670
      %v1672 = vpop.f32.mrb[0].mxu0
      %1673 = vdwg.mxu0
      %v1675 = vsel %vm1323, %v1397, 0
      %v1678 = vsel %vm1323, %v1398, 0
      %v1681 = vsel %vm1323, %v1399, 0
      %v1684 = vsel %vm1323, %v1400, 0
      %v1687 = vsel %vm1323, %v1401, 0
      %v1690 = vsel %vm1323, %v1402, 0
      %v1693 = vsel %vm1323, %v1403, 0
      %v1696 = vsel %vm1323, %v1404, 0
      %v1699 = vsel %vm1323, %v1405, 0
      %v1702 = vsel %vm1323, %v1406, 0
      %v1705 = vsel %vm1323, %v1407, 0
      %v1708 = vsel %vm1323, %v1408, 0
      %v1711 = vsel %vm1323, %v1409, 0
      %v1714 = vsel %vm1323, %v1410, 0
      %v1717 = vsel %vm1323, %v1411, 0
      %v1720 = vsel %vm1323, %v1412, 0
      %v1723 = vsel %vm1509, %v1356, 0
      %1725 = vmatprep.subr.bf16.mxu0 0
      %1726 = vmatpush1.bf16.msra.mxu0 %v1723
      %1727 = vmatprep.subr.bf16.mxu0 0
      %1728 = vmatpush1.bf16.msra.mxu0 0
      %1729 = vmatprep.subr.bf16.mxu0 0
      %1730 = vmatpush1.bf16.msra.mxu0 0
      %1731 = vmatprep.subr.bf16.mxu0 0
      %1732 = vmatpush1.bf16.msra.mxu0 0
      %1733 = vmatprep.subr.bf16.mxu0 0
      %1734 = vmatpush1.bf16.msra.mxu0 0
      %1735 = vmatprep.subr.bf16.mxu0 0
      %1736 = vmatpush1.bf16.msra.mxu0 0
      %1737 = vmatprep.subr.bf16.mxu0 0
      %1738 = vmatpush1.bf16.msra.mxu0 0
      %1739 = vmatprep.subr.bf16.mxu0 0
      %1740 = vmatpush1.bf16.msra.mxu0 0
      %1741 = vmatprep.subr.bf16.mxu0 0
      %1742 = vmatpush1.bf16.msra.mxu0 0
      %1743 = vmatprep.subr.bf16.mxu0 0
      %1744 = vmatpush1.bf16.msra.mxu0 0
      %1745 = vmatprep.subr.bf16.mxu0 0
      %1746 = vmatpush1.bf16.msra.mxu0 0
      %1747 = vmatprep.subr.bf16.mxu0 0
      %1748 = vmatpush1.bf16.msra.mxu0 0
      %1749 = vmatprep.subr.bf16.mxu0 0
      %1750 = vmatpush1.bf16.msra.mxu0 0
      %1751 = vmatprep.subr.bf16.mxu0 0
      %1752 = vmatpush1.bf16.msra.mxu0 0
      %1753 = vmatprep.subr.bf16.mxu0 0
      %1754 = vmatpush1.bf16.msra.mxu0 0
      %1755 = vmatprep.subr.bf16.mxu0 0
      %1756 = vmatpush1.bf16.msra.mxu0 0
      %1757 = vmatprep.mubr.bf16.mxu0 0
      %1758 = vmatmul.mubr.bf16.gmra.mrb[0].mxu0 %v1675
      %v1759 = vpop.f32.mrb[0].mxu0
      %v1760 = vadd.f32 %v1548, %v1759
      %v1761 = vpop.f32.mrb[0].mxu0
      %v1762 = vpop.f32.mrb[0].mxu0
      %v1763 = vadd.f32 %v1551, %v1762
      %v1764 = vpop.f32.mrb[0].mxu0
      %1765 = vmatprep.mubr.bf16.mxu0 0
      %1766 = vmatmul.mubr.bf16.gmra.mrb[0].mxu0 %v1678
      %v1767 = vpop.f32.mrb[0].mxu0
      %v1768 = vadd.f32 %v1556, %v1767
      %v1769 = vpop.f32.mrb[0].mxu0
      %v1770 = vpop.f32.mrb[0].mxu0
      %v1771 = vadd.f32 %v1559, %v1770
      %v1772 = vpop.f32.mrb[0].mxu0
      %1773 = vmatprep.mubr.bf16.mxu0 0
      %1774 = vmatmul.mubr.bf16.gmra.mrb[0].mxu0 %v1681
      %v1775 = vpop.f32.mrb[0].mxu0
      %v1776 = vadd.f32 %v1564, %v1775
      %v1777 = vpop.f32.mrb[0].mxu0
      %v1778 = vpop.f32.mrb[0].mxu0
      %v1779 = vadd.f32 %v1567, %v1778
      %v1780 = vpop.f32.mrb[0].mxu0
      %1781 = vmatprep.mubr.bf16.mxu0 0
      %1782 = vmatmul.mubr.bf16.gmra.mrb[0].mxu0 %v1684
      %v1783 = vpop.f32.mrb[0].mxu0
      %v1784 = vadd.f32 %v1572, %v1783
      %v1785 = vpop.f32.mrb[0].mxu0
      %v1786 = vpop.f32.mrb[0].mxu0
      %v1787 = vadd.f32 %v1575, %v1786
      %v1788 = vpop.f32.mrb[0].mxu0
      %1789 = vmatprep.mubr.bf16.mxu0 0
      %1790 = vmatmul.mubr.bf16.gmra.mrb[0].mxu0 %v1687
      %v1791 = vpop.f32.mrb[0].mxu0
      %v1792 = vadd.f32 %v1580, %v1791
      %v1793 = vpop.f32.mrb[0].mxu0
      %v1794 = vpop.f32.mrb[0].mxu0
      %v1795 = vadd.f32 %v1583, %v1794
      %v1796 = vpop.f32.mrb[0].mxu0
      %1797 = vmatprep.mubr.bf16.mxu0 0
      %1798 = vmatmul.mubr.bf16.gmra.mrb[0].mxu0 %v1690
      %v1799 = vpop.f32.mrb[0].mxu0
      %v1800 = vadd.f32 %v1588, %v1799
      %v1801 = vpop.f32.mrb[0].mxu0
      %v1802 = vpop.f32.mrb[0].mxu0
      %v1803 = vadd.f32 %v1591, %v1802
      %v1804 = vpop.f32.mrb[0].mxu0
      %1805 = vmatprep.mubr.bf16.mxu0 0
      %1806 = vmatmul.mubr.bf16.gmra.mrb[0].mxu0 %v1693
      %v1807 = vpop.f32.mrb[0].mxu0
      %v1808 = vadd.f32 %v1596, %v1807
      %v1809 = vpop.f32.mrb[0].mxu0
      %v1810 = vpop.f32.mrb[0].mxu0
      %v1811 = vadd.f32 %v1599, %v1810
      %v1812 = vpop.f32.mrb[0].mxu0
      %1813 = vmatprep.mubr.bf16.mxu0 0
      %1814 = vmatmul.mubr.bf16.gmra.mrb[0].mxu0 %v1696
      %v1815 = vpop.f32.mrb[0].mxu0
      %v1816 = vadd.f32 %v1604, %v1815
      %v1817 = vpop.f32.mrb[0].mxu0
      %v1818 = vpop.f32.mrb[0].mxu0
      %v1819 = vadd.f32 %v1607, %v1818
      %v1820 = vpop.f32.mrb[0].mxu0
      %1821 = vmatprep.mubr.bf16.mxu0 0
      %1822 = vmatmul.mubr.bf16.gmra.mrb[0].mxu0 %v1699
      %v1823 = vpop.f32.mrb[0].mxu0
      %v1824 = vadd.f32 %v1612, %v1823
      %v1825 = vpop.f32.mrb[0].mxu0
      %v1826 = vpop.f32.mrb[0].mxu0
      %v1827 = vadd.f32 %v1615, %v1826
      %v1828 = vpop.f32.mrb[0].mxu0
      %1829 = vmatprep.mubr.bf16.mxu0 0
      %1830 = vmatmul.mubr.bf16.gmra.mrb[0].mxu0 %v1702
      %v1831 = vpop.f32.mrb[0].mxu0
      %v1832 = vadd.f32 %v1620, %v1831
      %v1833 = vpop.f32.mrb[0].mxu0
      %v1834 = vpop.f32.mrb[0].mxu0
      %v1835 = vadd.f32 %v1623, %v1834
      %v1836 = vpop.f32.mrb[0].mxu0
      %1837 = vmatprep.mubr.bf16.mxu0 0
      %1838 = vmatmul.mubr.bf16.gmra.mrb[0].mxu0 %v1705
      %v1839 = vpop.f32.mrb[0].mxu0
      %v1840 = vadd.f32 %v1628, %v1839
      %v1841 = vpop.f32.mrb[0].mxu0
      %v1842 = vpop.f32.mrb[0].mxu0
      %v1843 = vadd.f32 %v1631, %v1842
      %v1844 = vpop.f32.mrb[0].mxu0
      %1845 = vmatprep.mubr.bf16.mxu0 0
      %1846 = vmatmul.mubr.bf16.gmra.mrb[0].mxu0 %v1708
      %v1847 = vpop.f32.mrb[0].mxu0
      %v1848 = vadd.f32 %v1636, %v1847
      %v1849 = vpop.f32.mrb[0].mxu0
      %v1850 = vpop.f32.mrb[0].mxu0
      %v1851 = vadd.f32 %v1639, %v1850
      %v1852 = vpop.f32.mrb[0].mxu0
      %1853 = vmatprep.mubr.bf16.mxu0 0
      %1854 = vmatmul.mubr.bf16.gmra.mrb[0].mxu0 %v1711
      %v1855 = vpop.f32.mrb[0].mxu0
      %v1856 = vadd.f32 %v1644, %v1855
      %v1857 = vpop.f32.mrb[0].mxu0
      %v1858 = vpop.f32.mrb[0].mxu0
      %v1859 = vadd.f32 %v1647, %v1858
      %v1860 = vpop.f32.mrb[0].mxu0
      %1861 = vmatprep.mubr.bf16.mxu0 0
      %1862 = vmatmul.mubr.bf16.gmra.mrb[0].mxu0 %v1714
      %v1863 = vpop.f32.mrb[0].mxu0
      %v1864 = vadd.f32 %v1652, %v1863
      %v1865 = vpop.f32.mrb[0].mxu0
      %v1866 = vpop.f32.mrb[0].mxu0
      %v1867 = vadd.f32 %v1655, %v1866
      %v1868 = vpop.f32.mrb[0].mxu0
      %1869 = vmatprep.mubr.bf16.mxu0 0
      %1870 = vmatmul.mubr.bf16.gmra.mrb[0].mxu0 %v1717
      %v1871 = vpop.f32.mrb[0].mxu0
      %v1872 = vadd.f32 %v1660, %v1871
      %v1873 = vpop.f32.mrb[0].mxu0
      %v1874 = vpop.f32.mrb[0].mxu0
      %v1875 = vadd.f32 %v1663, %v1874
      %v1876 = vpop.f32.mrb[0].mxu0
      %1877 = vmatprep.mubr.bf16.mxu0 0
      %1878 = vmatmul.mubr.bf16.gmra.mrb[0].mxu0 %v1720
      %v1879 = vpop.f32.mrb[0].mxu0
      %v1880 = vadd.f32 %v1668, %v1879
      %v1881 = vpop.f32.mrb[0].mxu0
      %v1882 = vpop.f32.mrb[0].mxu0
      %v1883 = vadd.f32 %v1671, %v1882
      %v1884 = vpop.f32.mrb[0].mxu0
      %1885 = vdwg.mxu0
      %v1886 = vld [vmem:[#allocation2 + $0x2] sm:$0xff]
      %v1887 = vld [vmem:[#allocation2 + $0xa] sm:$0xff]
      %v1888 = vld [vmem:[#allocation2 + $0x1a] sm:$0xff]
      %v1889 = vld [vmem:[#allocation2 + $0x22] sm:$0xff]
      %v1890 = vld [vmem:[#allocation2 + $0x32] sm:$0xff]
      %v1891 = vld [vmem:[#allocation2 + $0x3a] sm:$0xff]
      %v1892 = vld [vmem:[#allocation2 + $0x4a] sm:$0xff]
      %v1893 = vld [vmem:[#allocation2 + $0x52] sm:$0xff]
      %v1894 = vld [vmem:[#allocation2 + $0x62] sm:$0xff]
      %v1895 = vld [vmem:[#allocation2 + $0x6a] sm:$0xff]
      %v1896 = vld [vmem:[#allocation2 + $0x7a] sm:$0xff]
      %v1897 = vld [vmem:[#allocation2 + $0x82] sm:$0xff]
      %v1898 = vld [vmem:[#allocation2 + $0x92] sm:$0xff]
      %v1899 = vld [vmem:[#allocation2 + $0x9a] sm:$0xff]
      %v1900 = vld [vmem:[#allocation2 + $0xaa] sm:$0xff]
      %v1901 = vld [vmem:[#allocation2 + $0xb2] sm:$0xff]
      %v1902 = vld [vmem:[#allocation2 + $0xc2] sm:$0xff]
      %v1903 = vld [vmem:[#allocation2 + $0xca] sm:$0xff]
      %v1904 = vld [vmem:[#allocation2 + $0xda] sm:$0xff]
      %v1905 = vld [vmem:[#allocation2 + $0xe2] sm:$0xff]
      %v1906 = vld [vmem:[#allocation2 + $0xf2] sm:$0xff]
      %v1907 = vld [vmem:[#allocation2 + $0xfa] sm:$0xff]
      %v1908 = vld [vmem:[#allocation2 + $0x10a] sm:$0xff]
      %v1909 = vld [vmem:[#allocation2 + $0x112] sm:$0xff]
      %v1910 = vld [vmem:[#allocation2 + $0x122] sm:$0xff]
      %v1911 = vld [vmem:[#allocation2 + $0x12a] sm:$0xff]
      %v1912 = vld [vmem:[#allocation2 + $0x13a] sm:$0xff]
      %v1913 = vld [vmem:[#allocation2 + $0x142] sm:$0xff]
      %v1914 = vld [vmem:[#allocation2 + $0x152] sm:$0xff]
      %v1915 = vld [vmem:[#allocation2 + $0x15a] sm:$0xff]
      %v1916 = vld [vmem:[#allocation2 + $0x16a] sm:$0xff]
      %v1917 = vld [vmem:[#allocation2 + $0x172] sm:$0xff]
      %v1918 = vpack.c.bf16 %v1887, %v1886
      %v1919 = vpack.c.bf16 %v1889, %v1888
      %v1920 = vpack.c.bf16 %v1891, %v1890
      %v1921 = vpack.c.bf16 %v1893, %v1892
      %v1922 = vpack.c.bf16 %v1895, %v1894
      %v1923 = vpack.c.bf16 %v1897, %v1896
      %v1924 = vpack.c.bf16 %v1899, %v1898
      %v1925 = vpack.c.bf16 %v1901, %v1900
      %v1926 = vpack.c.bf16 %v1903, %v1902
      %v1927 = vpack.c.bf16 %v1905, %v1904
      %v1928 = vpack.c.bf16 %v1907, %v1906
      %v1929 = vpack.c.bf16 %v1909, %v1908
      %v1930 = vpack.c.bf16 %v1911, %v1910
      %v1931 = vpack.c.bf16 %v1913, %v1912
      %v1932 = vpack.c.bf16 %v1915, %v1914
      %v1933 = vpack.c.bf16 %v1917, %v1916
      %v1935 = vsel %vm1323, %v1918, 0
      %v1938 = vsel %vm1323, %v1919, 0
      %v1941 = vsel %vm1323, %v1920, 0
      %v1944 = vsel %vm1323, %v1921, 0
      %v1947 = vsel %vm1323, %v1922, 0
      %v1950 = vsel %vm1323, %v1923, 0
      %v1953 = vsel %vm1323, %v1924, 0
      %v1956 = vsel %vm1323, %v1925, 0
      %v1959 = vsel %vm1323, %v1926, 0
      %v1962 = vsel %vm1323, %v1927, 0
      %v1965 = vsel %vm1323, %v1928, 0
      %v1968 = vsel %vm1323, %v1929, 0
      %v1971 = vsel %vm1323, %v1930, 0
      %v1974 = vsel %vm1323, %v1931, 0
      %v1977 = vsel %vm1323, %v1932, 0
      %v1980 = vsel %vm1323, %v1933, 0
      %v1983 = vsel %vm1509, %v1358, 0
      %1985 = vmatprep.subr.bf16.mxu0 0
      %1986 = vmatpush1.bf16.msra.mxu0 %v1983
      %1987 = vmatprep.subr.bf16.mxu0 0
      %1988 = vmatpush1.bf16.msra.mxu0 0
      %1989 = vmatprep.subr.bf16.mxu0 0
      %1990 = vmatpush1.bf16.msra.mxu0 0
      %1991 = vmatprep.subr.bf16.mxu0 0
      %1992 = vmatpush1.bf16.msra.mxu0 0
      %1993 = vmatprep.subr.bf16.mxu0 0
      %1994 = vmatpush1.bf16.msra.mxu0 0
      %1995 = vmatprep.subr.bf16.mxu0 0
      %1996 = vmatpush1.bf16.msra.mxu0 0
      %1997 = vmatprep.subr.bf16.mxu0 0
      %1998 = vmatpush1.bf16.msra.mxu0 0
      %1999 = vmatprep.subr.bf16.mxu0 0
      %2000 = vmatpush1.bf16.msra.mxu0 0
      %2001 = vmatprep.subr.bf16.mxu0 0
      %2002 = vmatpush1.bf16.msra.mxu0 0
      %2003 = vmatprep.subr.bf16.mxu0 0
      %2004 = vmatpush1.bf16.msra.mxu0 0
      %2005 = vmatprep.subr.bf16.mxu0 0
      %2006 = vmatpush1.bf16.msra.mxu0 0
      %2007 = vmatprep.subr.bf16.mxu0 0
      %2008 = vmatpush1.bf16.msra.mxu0 0
      %2009 = vmatprep.subr.bf16.mxu0 0
      %2010 = vmatpush1.bf16.msra.mxu0 0
      %2011 = vmatprep.subr.bf16.mxu0 0
      %2012 = vmatpush1.bf16.msra.mxu0 0
      %2013 = vmatprep.subr.bf16.mxu0 0
      %2014 = vmatpush1.bf16.msra.mxu0 0
      %2015 = vmatprep.subr.bf16.mxu0 0
      %2016 = vmatpush1.bf16.msra.mxu0 0
      %2017 = vmatprep.mubr.bf16.mxu0 0
      %2018 = vmatmul.mubr.bf16.gmra.mrb[0].mxu0 %v1935
      %v2019 = vpop.f32.mrb[0].mxu0
      %v2020 = vadd.f32 0.0, %v2019
      %v2021 = vpop.f32.mrb[0].mxu0
      %v2022 = vpop.f32.mrb[0].mxu0
      %v2023 = vadd.f32 0.0, %v2022
      %v2024 = vpop.f32.mrb[0].mxu0
      %2025 = vmatprep.mubr.bf16.mxu0 0
      %2026 = vmatmul.mubr.bf16.gmra.mrb[0].mxu0 %v1938
      %v2027 = vpop.f32.mrb[0].mxu0
      %v2028 = vadd.f32 0.0, %v2027
      %v2029 = vpop.f32.mrb[0].mxu0
      %v2030 = vpop.f32.mrb[0].mxu0
      %v2031 = vadd.f32 0.0, %v2030
      %v2032 = vpop.f32.mrb[0].mxu0
      %2033 = vmatprep.mubr.bf16.mxu0 0
      %2034 = vmatmul.mubr.bf16.gmra.mrb[0].mxu0 %v1941
      %v2035 = vpop.f32.mrb[0].mxu0
      %v2036 = vadd.f32 0.0, %v2035
      %v2037 = vpop.f32.mrb[0].mxu0
      %v2038 = vpop.f32.mrb[0].mxu0
      %v2039 = vadd.f32 0.0, %v2038
      %v2040 = vpop.f32.mrb[0].mxu0
      %2041 = vmatprep.mubr.bf16.mxu0 0
      %2042 = vmatmul.mubr.bf16.gmra.mrb[0].mxu0 %v1944
      %v2043 = vpop.f32.mrb[0].mxu0
      %v2044 = vadd.f32 0.0, %v2043
      %v2045 = vpop.f32.mrb[0].mxu0
      %v2046 = vpop.f32.mrb[0].mxu0
      %v2047 = vadd.f32 0.0, %v2046
      %v2048 = vpop.f32.mrb[0].mxu0
      %2049 = vmatprep.mubr.bf16.mxu0 0
      %2050 = vmatmul.mubr.bf16.gmra.mrb[0].mxu0 %v1947
      %v2051 = vpop.f32.mrb[0].mxu0
      %v2052 = vadd.f32 0.0, %v2051
      %v2053 = vpop.f32.mrb[0].mxu0
      %v2054 = vpop.f32.mrb[0].mxu0
      %v2055 = vadd.f32 0.0, %v2054
      %v2056 = vpop.f32.mrb[0].mxu0
      %2057 = vmatprep.mubr.bf16.mxu0 0
      %2058 = vmatmul.mubr.bf16.gmra.mrb[0].mxu0 %v1950
      %v2059 = vpop.f32.mrb[0].mxu0
      %v2060 = vadd.f32 0.0, %v2059
      %v2061 = vpop.f32.mrb[0].mxu0
      %v2062 = vpop.f32.mrb[0].mxu0
      %v2063 = vadd.f32 0.0, %v2062
      %v2064 = vpop.f32.mrb[0].mxu0
      %2065 = vmatprep.mubr.bf16.mxu0 0
      %2066 = vmatmul.mubr.bf16.gmra.mrb[0].mxu0 %v1953
      %v2067 = vpop.f32.mrb[0].mxu0
      %v2068 = vadd.f32 0.0, %v2067
      %v2069 = vpop.f32.mrb[0].mxu0
      %v2070 = vpop.f32.mrb[0].mxu0
      %v2071 = vadd.f32 0.0, %v2070
      %v2072 = vpop.f32.mrb[0].mxu0
      %2073 = vmatprep.mubr.bf16.mxu0 0
      %2074 = vmatmul.mubr.bf16.gmra.mrb[0].mxu0 %v1956
      %v2075 = vpop.f32.mrb[0].mxu0
      %v2076 = vadd.f32 0.0, %v2075
      %v2077 = vpop.f32.mrb[0].mxu0
      %v2078 = vpop.f32.mrb[0].mxu0
      %v2079 = vadd.f32 0.0, %v2078
      %v2080 = vpop.f32.mrb[0].mxu0
      %2081 = vmatprep.mubr.bf16.mxu0 0
      %2082 = vmatmul.mubr.bf16.gmra.mrb[0].mxu0 %v1959
      %v2083 = vpop.f32.mrb[0].mxu0
      %v2084 = vadd.f32 0.0, %v2083
      %v2085 = vpop.f32.mrb[0].mxu0
      %v2086 = vpop.f32.mrb[0].mxu0
      %v2087 = vadd.f32 0.0, %v2086
      %v2088 = vpop.f32.mrb[0].mxu0
      %2089 = vmatprep.mubr.bf16.mxu0 0
      %2090 = vmatmul.mubr.bf16.gmra.mrb[0].mxu0 %v1962
      %v2091 = vpop.f32.mrb[0].mxu0
      %v2092 = vadd.f32 0.0, %v2091
      %v2093 = vpop.f32.mrb[0].mxu0
      %v2094 = vpop.f32.mrb[0].mxu0
      %v2095 = vadd.f32 0.0, %v2094
      %v2096 = vpop.f32.mrb[0].mxu0
      %2097 = vmatprep.mubr.bf16.mxu0 0
      %2098 = vmatmul.mubr.bf16.gmra.mrb[0].mxu0 %v1965
      %v2099 = vpop.f32.mrb[0].mxu0
      %v2100 = vadd.f32 0.0, %v2099
      %v2101 = vpop.f32.mrb[0].mxu0
      %v2102 = vpop.f32.mrb[0].mxu0
      %v2103 = vadd.f32 0.0, %v2102
      %v2104 = vpop.f32.mrb[0].mxu0
      %2105 = vmatprep.mubr.bf16.mxu0 0
      %2106 = vmatmul.mubr.bf16.gmra.mrb[0].mxu0 %v1968
      %v2107 = vpop.f32.mrb[0].mxu0
      %v2108 = vadd.f32 0.0, %v2107
      %v2109 = vpop.f32.mrb[0].mxu0
      %v2110 = vpop.f32.mrb[0].mxu0
      %v2111 = vadd.f32 0.0, %v2110
      %v2112 = vpop.f32.mrb[0].mxu0
      %2113 = vmatprep.mubr.bf16.mxu0 0
      %2114 = vmatmul.mubr.bf16.gmra.mrb[0].mxu0 %v1971
      %v2115 = vpop.f32.mrb[0].mxu0
      %v2116 = vadd.f32 0.0, %v2115
      %v2117 = vpop.f32.mrb[0].mxu0
      %v2118 = vpop.f32.mrb[0].mxu0
      %v2119 = vadd.f32 0.0, %v2118
      %v2120 = vpop.f32.mrb[0].mxu0
      %2121 = vmatprep.mubr.bf16.mxu0 0
      %2122 = vmatmul.mubr.bf16.gmra.mrb[0].mxu0 %v1974
      %v2123 = vpop.f32.mrb[0].mxu0
      %v2124 = vadd.f32 0.0, %v2123
      %v2125 = vpop.f32.mrb[0].mxu0
      %v2126 = vpop.f32.mrb[0].mxu0
      %v2127 = vadd.f32 0.0, %v2126
      %v2128 = vpop.f32.mrb[0].mxu0
      %2129 = vmatprep.mubr.bf16.mxu0 0
      %2130 = vmatmul.mubr.bf16.gmra.mrb[0].mxu0 %v1977
      %v2131 = vpop.f32.mrb[0].mxu0
      %v2132 = vadd.f32 0.0, %v2131
      %v2133 = vpop.f32.mrb[0].mxu0
      %v2134 = vpop.f32.mrb[0].mxu0
      %v2135 = vadd.f32 0.0, %v2134
      %v2136 = vpop.f32.mrb[0].mxu0
      %2137 = vmatprep.mubr.bf16.mxu0 0
      %2138 = vmatmul.mubr.bf16.gmra.mrb[0].mxu0 %v1980
      %v2139 = vpop.f32.mrb[0].mxu0
      %v2140 = vadd.f32 0.0, %v2139
      %v2141 = vpop.f32.mrb[0].mxu0
      %v2142 = vpop.f32.mrb[0].mxu0
      %v2143 = vadd.f32 0.0, %v2142
      %v2144 = vpop.f32.mrb[0].mxu0
      %2145 = vdwg.mxu0
      %v2146 = vadd.f32 %v1760, %v2020
      %v2147 = vadd.f32 %v1763, %v2023
      %v2148 = vadd.f32 %v1768, %v2028
      %v2149 = vadd.f32 %v1771, %v2031
      %v2150 = vadd.f32 %v1776, %v2036
      %v2151 = vadd.f32 %v1779, %v2039
      %v2152 = vadd.f32 %v1784, %v2044
      %v2153 = vadd.f32 %v1787, %v2047
      %v2154 = vadd.f32 %v1792, %v2052
      %v2155 = vadd.f32 %v1795, %v2055
      %v2156 = vadd.f32 %v1800, %v2060
      %v2157 = vadd.f32 %v1803, %v2063
      %v2158 = vadd.f32 %v1808, %v2068
      %v2159 = vadd.f32 %v1811, %v2071
      %v2160 = vadd.f32 %v1816, %v2076
      %v2161 = vadd.f32 %v1819, %v2079
      %v2162 = vadd.f32 %v1824, %v2084
      %v2163 = vadd.f32 %v1827, %v2087
      %v2164 = vadd.f32 %v1832, %v2092
      %v2165 = vadd.f32 %v1835, %v2095
      %v2166 = vadd.f32 %v1840, %v2100
      %v2167 = vadd.f32 %v1843, %v2103
      %v2168 = vadd.f32 %v1848, %v2108
      %v2169 = vadd.f32 %v1851, %v2111
      %v2170 = vadd.f32 %v1856, %v2116
      %v2171 = vadd.f32 %v1859, %v2119
      %v2172 = vadd.f32 %v1864, %v2124
      %v2173 = vadd.f32 %v1867, %v2127
      %v2174 = vadd.f32 %v1872, %v2132
      %v2175 = vadd.f32 %v1875, %v2135
      %v2176 = vadd.f32 %v1880, %v2140
      %v2177 = vadd.f32 %v1883, %v2143
      %v2178 = vld [vmem:[%s1322] sm:$0xff]
      %v2179 = vld [vmem:[%s1322 + $0x8] sm:$0xff]
      %v2180 = vld [vmem:[%s1322 + $0x18] sm:$0xff]
      %v2181 = vld [vmem:[%s1322 + $0x20] sm:$0xff]
      %v2182 = vld [vmem:[%s1322 + $0x30] sm:$0xff]
      %v2183 = vld [vmem:[%s1322 + $0x38] sm:$0xff]
      %v2184 = vld [vmem:[%s1322 + $0x48] sm:$0xff]
      %v2185 = vld [vmem:[%s1322 + $0x50] sm:$0xff]
      %v2186 = vld [vmem:[%s1322 + $0x60] sm:$0xff]
      %v2187 = vld [vmem:[%s1322 + $0x68] sm:$0xff]
      %v2188 = vld [vmem:[%s1322 + $0x78] sm:$0xff]
      %v2189 = vld [vmem:[%s1322 + $0x80] sm:$0xff]
      %v2190 = vld [vmem:[%s1322 + $0x90] sm:$0xff]
      %v2191 = vld [vmem:[%s1322 + $0x98] sm:$0xff]
      %v2192 = vld [vmem:[%s1322 + $0xa8] sm:$0xff]
      %v2193 = vld [vmem:[%s1322 + $0xb0] sm:$0xff]
      %v2194 = vld [vmem:[%s1322 + $0xc0] sm:$0xff]
      %v2195 = vld [vmem:[%s1322 + $0xc8] sm:$0xff]
      %v2196 = vld [vmem:[%s1322 + $0xd8] sm:$0xff]
      %v2197 = vld [vmem:[%s1322 + $0xe0] sm:$0xff]
      %v2198 = vld [vmem:[%s1322 + $0xf0] sm:$0xff]
      %v2199 = vld [vmem:[%s1322 + $0xf8] sm:$0xff]
      %v2200 = vld [vmem:[%s1322 + $0x108] sm:$0xff]
      %v2201 = vld [vmem:[%s1322 + $0x110] sm:$0xff]
      %v2202 = vld [vmem:[%s1322 + $0x120] sm:$0xff]
      %v2203 = vld [vmem:[%s1322 + $0x128] sm:$0xff]
      %v2204 = vld [vmem:[%s1322 + $0x138] sm:$0xff]
      %v2205 = vld [vmem:[%s1322 + $0x140] sm:$0xff]
      %v2206 = vld [vmem:[%s1322 + $0x150] sm:$0xff]
      %v2207 = vld [vmem:[%s1322 + $0x158] sm:$0xff]
      %v2208 = vld [vmem:[%s1322 + $0x168] sm:$0xff]
      %v2209 = vld [vmem:[%s1322 + $0x170] sm:$0xff]
      %v2210 = vpack.c.bf16 %v2179, %v2178
      %v2211 = vpack.c.bf16 %v2181, %v2180
      %v2212 = vpack.c.bf16 %v2183, %v2182
      %v2213 = vpack.c.bf16 %v2185, %v2184
      %v2214 = vpack.c.bf16 %v2187, %v2186
      %v2215 = vpack.c.bf16 %v2189, %v2188
      %v2216 = vpack.c.bf16 %v2191, %v2190
      %v2217 = vpack.c.bf16 %v2193, %v2192
      %v2218 = vpack.c.bf16 %v2195, %v2194
      %v2219 = vpack.c.bf16 %v2197, %v2196
      %v2220 = vpack.c.bf16 %v2199, %v2198
      %v2221 = vpack.c.bf16 %v2201, %v2200
      %v2222 = vpack.c.bf16 %v2203, %v2202
      %v2223 = vpack.c.bf16 %v2205, %v2204
      %v2224 = vpack.c.bf16 %v2207, %v2206
      %v2225 = vpack.c.bf16 %v2209, %v2208
      %v2227 = vsel %vm1323, %v2210, 0
      %v2230 = vsel %vm1323, %v2211, 0
      %v2233 = vsel %vm1323, %v2212, 0
      %v2236 = vsel %vm1323, %v2213, 0
      %v2239 = vsel %vm1323, %v2214, 0
      %v2242 = vsel %vm1323, %v2215, 0
      %v2245 = vsel %vm1323, %v2216, 0
      %v2248 = vsel %vm1323, %v2217, 0
      %v2251 = vsel %vm1323, %v2218, 0
      %v2254 = vsel %vm1323, %v2219, 0
      %v2257 = vsel %vm1323, %v2220, 0
      %v2260 = vsel %vm1323, %v2221, 0
      %v2263 = vsel %vm1323, %v2222, 0
      %v2266 = vsel %vm1323, %v2223, 0
      %v2269 = vsel %vm1323, %v2224, 0
      %v2272 = vsel %vm1323, %v2225, 0
      %v2275 = vsel %vm1509, %v1359, 0
      %2277 = vmatprep.subr.bf16.mxu0 0
      %2278 = vmatpush1.bf16.msra.mxu0 %v2275
      %2279 = vmatprep.subr.bf16.mxu0 0
      %2280 = vmatpush1.bf16.msra.mxu0 0
      %2281 = vmatprep.subr.bf16.mxu0 0
      %2282 = vmatpush1.bf16.msra.mxu0 0
      %2283 = vmatprep.subr.bf16.mxu0 0
      %2284 = vmatpush1.bf16.msra.mxu0 0
      %2285 = vmatprep.subr.bf16.mxu0 0
      %2286 = vmatpush1.bf16.msra.mxu0 0
      %2287 = vmatprep.subr.bf16.mxu0 0
      %2288 = vmatpush1.bf16.msra.mxu0 0
      %2289 = vmatprep.subr.bf16.mxu0 0
      %2290 = vmatpush1.bf16.msra.mxu0 0
      %2291 = vmatprep.subr.bf16.mxu0 0
      %2292 = vmatpush1.bf16.msra.mxu0 0
      %2293 = vmatprep.subr.bf16.mxu0 0
      %2294 = vmatpush1.bf16.msra.mxu0 0
      %2295 = vmatprep.subr.bf16.mxu0 0
      %2296 = vmatpush1.bf16.msra.mxu0 0
      %2297 = vmatprep.subr.bf16.mxu0 0
      %2298 = vmatpush1.bf16.msra.mxu0 0
      %2299 = vmatprep.subr.bf16.mxu0 0
      %2300 = vmatpush1.bf16.msra.mxu0 0
      %2301 = vmatprep.subr.bf16.mxu0 0
      %2302 = vmatpush1.bf16.msra.mxu0 0
      %2303 = vmatprep.subr.bf16.mxu0 0
      %2304 = vmatpush1.bf16.msra.mxu0 0
      %2305 = vmatprep.subr.bf16.mxu0 0
      %2306 = vmatpush1.bf16.msra.mxu0 0
      %2307 = vmatprep.subr.bf16.mxu0 0
      %2308 = vmatpush1.bf16.msra.mxu0 0
      %2309 = vmatprep.mubr.bf16.mxu0 0
      %2310 = vmatmul.mubr.bf16.gmra.mrb[0].mxu0 %v2227
      %v2311 = vpop.f32.mrb[0].mxu0
      %v2312 = vadd.f32 0.0, %v2311
      %v2313 = vpop.f32.mrb[0].mxu0
      %v2314 = vpop.f32.mrb[0].mxu0
      %v2315 = vadd.f32 0.0, %v2314
      %v2316 = vpop.f32.mrb[0].mxu0
      %2317 = vmatprep.mubr.bf16.mxu0 0
      %2318 = vmatmul.mubr.bf16.gmra.mrb[0].mxu0 %v2230
      %v2319 = vpop.f32.mrb[0].mxu0
      %v2320 = vadd.f32 0.0, %v2319
      %v2321 = vpop.f32.mrb[0].mxu0
      %v2322 = vpop.f32.mrb[0].mxu0
      %v2323 = vadd.f32 0.0, %v2322
      %v2324 = vpop.f32.mrb[0].mxu0
      %2325 = vmatprep.mubr.bf16.mxu0 0
      %2326 = vmatmul.mubr.bf16.gmra.mrb[0].mxu0 %v2233
      %v2327 = vpop.f32.mrb[0].mxu0
      %v2328 = vadd.f32 0.0, %v2327
      %v2329 = vpop.f32.mrb[0].mxu0
      %v2330 = vpop.f32.mrb[0].mxu0
      %v2331 = vadd.f32 0.0, %v2330
      %v2332 = vpop.f32.mrb[0].mxu0
      %2333 = vmatprep.mubr.bf16.mxu0 0
      %2334 = vmatmul.mubr.bf16.gmra.mrb[0].mxu0 %v2236
      %v2335 = vpop.f32.mrb[0].mxu0
      %v2336 = vadd.f32 0.0, %v2335
      %v2337 = vpop.f32.mrb[0].mxu0
      %v2338 = vpop.f32.mrb[0].mxu0
      %v2339 = vadd.f32 0.0, %v2338
      %v2340 = vpop.f32.mrb[0].mxu0
      %2341 = vmatprep.mubr.bf16.mxu0 0
      %2342 = vmatmul.mubr.bf16.gmra.mrb[0].mxu0 %v2239
      %v2343 = vpop.f32.mrb[0].mxu0
      %v2344 = vadd.f32 0.0, %v2343
      %v2345 = vpop.f32.mrb[0].mxu0
      %v2346 = vpop.f32.mrb[0].mxu0
      %v2347 = vadd.f32 0.0, %v2346
      %v2348 = vpop.f32.mrb[0].mxu0
      %2349 = vmatprep.mubr.bf16.mxu0 0
      %2350 = vmatmul.mubr.bf16.gmra.mrb[0].mxu0 %v2242
      %v2351 = vpop.f32.mrb[0].mxu0
      %v2352 = vadd.f32 0.0, %v2351
      %v2353 = vpop.f32.mrb[0].mxu0
      %v2354 = vpop.f32.mrb[0].mxu0
      %v2355 = vadd.f32 0.0, %v2354
      %v2356 = vpop.f32.mrb[0].mxu0
      %2357 = vmatprep.mubr.bf16.mxu0 0
      %2358 = vmatmul.mubr.bf16.gmra.mrb[0].mxu0 %v2245
      %v2359 = vpop.f32.mrb[0].mxu0
      %v2360 = vadd.f32 0.0, %v2359
      %v2361 = vpop.f32.mrb[0].mxu0
      %v2362 = vpop.f32.mrb[0].mxu0
      %v2363 = vadd.f32 0.0, %v2362
      %v2364 = vpop.f32.mrb[0].mxu0
      %2365 = vmatprep.mubr.bf16.mxu0 0
      %2366 = vmatmul.mubr.bf16.gmra.mrb[0].mxu0 %v2248
      %v2367 = vpop.f32.mrb[0].mxu0
      %v2368 = vadd.f32 0.0, %v2367
      %v2369 = vpop.f32.mrb[0].mxu0
      %v2370 = vpop.f32.mrb[0].mxu0
      %v2371 = vadd.f32 0.0, %v2370
      %v2372 = vpop.f32.mrb[0].mxu0
      %2373 = vmatprep.mubr.bf16.mxu0 0
      %2374 = vmatmul.mubr.bf16.gmra.mrb[0].mxu0 %v2251
      %v2375 = vpop.f32.mrb[0].mxu0
      %v2376 = vadd.f32 0.0, %v2375
      %v2377 = vpop.f32.mrb[0].mxu0
      %v2378 = vpop.f32.mrb[0].mxu0
      %v2379 = vadd.f32 0.0, %v2378
      %v2380 = vpop.f32.mrb[0].mxu0
      %2381 = vmatprep.mubr.bf16.mxu0 0
      %2382 = vmatmul.mubr.bf16.gmra.mrb[0].mxu0 %v2254
      %v2383 = vpop.f32.mrb[0].mxu0
      %v2384 = vadd.f32 0.0, %v2383
      %v2385 = vpop.f32.mrb[0].mxu0
      %v2386 = vpop.f32.mrb[0].mxu0
      %v2387 = vadd.f32 0.0, %v2386
      %v2388 = vpop.f32.mrb[0].mxu0
      %2389 = vmatprep.mubr.bf16.mxu0 0
      %2390 = vmatmul.mubr.bf16.gmra.mrb[0].mxu0 %v2257
      %v2391 = vpop.f32.mrb[0].mxu0
      %v2392 = vadd.f32 0.0, %v2391
      %v2393 = vpop.f32.mrb[0].mxu0
      %v2394 = vpop.f32.mrb[0].mxu0
      %v2395 = vadd.f32 0.0, %v2394
      %v2396 = vpop.f32.mrb[0].mxu0
      %2397 = vmatprep.mubr.bf16.mxu0 0
      %2398 = vmatmul.mubr.bf16.gmra.mrb[0].mxu0 %v2260
      %v2399 = vpop.f32.mrb[0].mxu0
      %v2400 = vadd.f32 0.0, %v2399
      %v2401 = vpop.f32.mrb[0].mxu0
      %v2402 = vpop.f32.mrb[0].mxu0
      %v2403 = vadd.f32 0.0, %v2402
      %v2404 = vpop.f32.mrb[0].mxu0
      %2405 = vmatprep.mubr.bf16.mxu0 0
      %2406 = vmatmul.mubr.bf16.gmra.mrb[0].mxu0 %v2263
      %v2407 = vpop.f32.mrb[0].mxu0
      %v2408 = vadd.f32 0.0, %v2407
      %v2409 = vpop.f32.mrb[0].mxu0
      %v2410 = vpop.f32.mrb[0].mxu0
      %v2411 = vadd.f32 0.0, %v2410
      %v2412 = vpop.f32.mrb[0].mxu0
      %2413 = vmatprep.mubr.bf16.mxu0 0
      %2414 = vmatmul.mubr.bf16.gmra.mrb[0].mxu0 %v2266
      %v2415 = vpop.f32.mrb[0].mxu0
      %v2416 = vadd.f32 0.0, %v2415
      %v2417 = vpop.f32.mrb[0].mxu0
      %v2418 = vpop.f32.mrb[0].mxu0
      %v2419 = vadd.f32 0.0, %v2418
      %v2420 = vpop.f32.mrb[0].mxu0
      %2421 = vmatprep.mubr.bf16.mxu0 0
      %2422 = vmatmul.mubr.bf16.gmra.mrb[0].mxu0 %v2269
      %v2423 = vpop.f32.mrb[0].mxu0
      %v2424 = vadd.f32 0.0, %v2423
      %v2425 = vpop.f32.mrb[0].mxu0
      %v2426 = vpop.f32.mrb[0].mxu0
      %v2427 = vadd.f32 0.0, %v2426
      %v2428 = vpop.f32.mrb[0].mxu0
      %2429 = vmatprep.mubr.bf16.mxu0 0
      %2430 = vmatmul.mubr.bf16.gmra.mrb[0].mxu0 %v2272
      %v2431 = vpop.f32.mrb[0].mxu0
      %v2432 = vadd.f32 0.0, %v2431
      %v2433 = vpop.f32.mrb[0].mxu0
      %v2434 = vpop.f32.mrb[0].mxu0
      %v2435 = vadd.f32 0.0, %v2434
      %v2436 = vpop.f32.mrb[0].mxu0
      %2437 = vdwg.mxu0
      %v2438 = vadd.f32 %v2146, %v2312
      %v2439 = vadd.f32 %v2147, %v2315
      %v2440 = vadd.f32 %v2148, %v2320
      %v2441 = vadd.f32 %v2149, %v2323
      %v2442 = vadd.f32 %v2150, %v2328
      %v2443 = vadd.f32 %v2151, %v2331
      %v2444 = vadd.f32 %v2152, %v2336
      %v2445 = vadd.f32 %v2153, %v2339
      %v2446 = vadd.f32 %v2154, %v2344
      %v2447 = vadd.f32 %v2155, %v2347
      %v2448 = vadd.f32 %v2156, %v2352
      %v2449 = vadd.f32 %v2157, %v2355
      %v2450 = vadd.f32 %v2158, %v2360
      %v2451 = vadd.f32 %v2159, %v2363
      %v2452 = vadd.f32 %v2160, %v2368
      %v2453 = vadd.f32 %v2161, %v2371
      %v2454 = vadd.f32 %v2162, %v2376
      %v2455 = vadd.f32 %v2163, %v2379
      %v2456 = vadd.f32 %v2164, %v2384
      %v2457 = vadd.f32 %v2165, %v2387
      %v2458 = vadd.f32 %v2166, %v2392
      %v2459 = vadd.f32 %v2167, %v2395
      %v2460 = vadd.f32 %v2168, %v2400
      %v2461 = vadd.f32 %v2169, %v2403
      %v2462 = vadd.f32 %v2170, %v2408
      %v2463 = vadd.f32 %v2171, %v2411
      %v2464 = vadd.f32 %v2172, %v2416
      %v2465 = vadd.f32 %v2173, %v2419
      %v2466 = vadd.f32 %v2174, %v2424
      %v2467 = vadd.f32 %v2175, %v2427
      %v2468 = vadd.f32 %v2176, %v2432
      %v2469 = vadd.f32 %v2177, %v2435
      %v2470 = vld [vmem:[%s1322 + $0x1] sm:$0xff]
      %v2471 = vld [vmem:[%s1322 + $0x9] sm:$0xff]
      %v2472 = vld [vmem:[%s1322 + $0x19] sm:$0xff]
      %v2473 = vld [vmem:[%s1322 + $0x21] sm:$0xff]
      %v2474 = vld [vmem:[%s1322 + $0x31] sm:$0xff]
      %v2475 = vld [vmem:[%s1322 + $0x39] sm:$0xff]
      %v2476 = vld [vmem:[%s1322 + $0x49] sm:$0xff]
      %v2477 = vld [vmem:[%s1322 + $0x51] sm:$0xff]
      %v2478 = vld [vmem:[%s1322 + $0x61] sm:$0xff]
      %v2479 = vld [vmem:[%s1322 + $0x69] sm:$0xff]
      %v2480 = vld [vmem:[%s1322 + $0x79] sm:$0xff]
      %v2481 = vld [vmem:[%s1322 + $0x81] sm:$0xff]
      %v2482 = vld [vmem:[%s1322 + $0x91] sm:$0xff]
      %v2483 = vld [vmem:[%s1322 + $0x99] sm:$0xff]
      %v2484 = vld [vmem:[%s1322 + $0xa9] sm:$0xff]
      %v2485 = vld [vmem:[%s1322 + $0xb1] sm:$0xff]
      %v2486 = vld [vmem:[%s1322 + $0xc1] sm:$0xff]
      %v2487 = vld [vmem:[%s1322 + $0xc9] sm:$0xff]
      %v2488 = vld [vmem:[%s1322 + $0xd9] sm:$0xff]
      %v2489 = vld [vmem:[%s1322 + $0xe1] sm:$0xff]
      %v2490 = vld [vmem:[%s1322 + $0xf1] sm:$0xff]
      %v2491 = vld [vmem:[%s1322 + $0xf9] sm:$0xff]
      %v2492 = vld [vmem:[%s1322 + $0x109] sm:$0xff]
      %v2493 = vld [vmem:[%s1322 + $0x111] sm:$0xff]
      %v2494 = vld [vmem:[%s1322 + $0x121] sm:$0xff]
      %v2495 = vld [vmem:[%s1322 + $0x129] sm:$0xff]
      %v2496 = vld [vmem:[%s1322 + $0x139] sm:$0xff]
      %v2497 = vld [vmem:[%s1322 + $0x141] sm:$0xff]
      %v2498 = vld [vmem:[%s1322 + $0x151] sm:$0xff]
      %v2499 = vld [vmem:[%s1322 + $0x159] sm:$0xff]
      %v2500 = vld [vmem:[%s1322 + $0x169] sm:$0xff]
      %v2501 = vld [vmem:[%s1322 + $0x171] sm:$0xff]
      %v2502 = vpack.c.bf16 %v2471, %v2470
      %v2503 = vpack.c.bf16 %v2473, %v2472
      %v2504 = vpack.c.bf16 %v2475, %v2474
      %v2505 = vpack.c.bf16 %v2477, %v2476
      %v2506 = vpack.c.bf16 %v2479, %v2478
      %v2507 = vpack.c.bf16 %v2481, %v2480
      %v2508 = vpack.c.bf16 %v2483, %v2482
      %v2509 = vpack.c.bf16 %v2485, %v2484
      %v2510 = vpack.c.bf16 %v2487, %v2486
      %v2511 = vpack.c.bf16 %v2489, %v2488
      %v2512 = vpack.c.bf16 %v2491, %v2490
      %v2513 = vpack.c.bf16 %v2493, %v2492
      %v2514 = vpack.c.bf16 %v2495, %v2494
      %v2515 = vpack.c.bf16 %v2497, %v2496
      %v2516 = vpack.c.bf16 %v2499, %v2498
      %v2517 = vpack.c.bf16 %v2501, %v2500
      %v2519 = vsel %vm1323, %v2502, 0
      %v2522 = vsel %vm1323, %v2503, 0
      %v2525 = vsel %vm1323, %v2504, 0
      %v2528 = vsel %vm1323, %v2505, 0
      %v2531 = vsel %vm1323, %v2506, 0
      %v2534 = vsel %vm1323, %v2507, 0
      %v2537 = vsel %vm1323, %v2508, 0
      %v2540 = vsel %vm1323, %v2509, 0
      %v2543 = vsel %vm1323, %v2510, 0
      %v2546 = vsel %vm1323, %v2511, 0
      %v2549 = vsel %vm1323, %v2512, 0
      %v2552 = vsel %vm1323, %v2513, 0
      %v2555 = vsel %vm1323, %v2514, 0
      %v2558 = vsel %vm1323, %v2515, 0
      %v2561 = vsel %vm1323, %v2516, 0
      %v2564 = vsel %vm1323, %v2517, 0
      %v2567 = vsel %vm1509, %v1360, 0
      %2569 = vmatprep.subr.bf16.mxu0 0
      %2570 = vmatpush1.bf16.msra.mxu0 %v2567
      %2571 = vmatprep.subr.bf16.mxu0 0
      %2572 = vmatpush1.bf16.msra.mxu0 0
      %2573 = vmatprep.subr.bf16.mxu0 0
      %2574 = vmatpush1.bf16.msra.mxu0 0
      %2575 = vmatprep.subr.bf16.mxu0 0
      %2576 = vmatpush1.bf16.msra.mxu0 0
      %2577 = vmatprep.subr.bf16.mxu0 0
      %2578 = vmatpush1.bf16.msra.mxu0 0
      %2579 = vmatprep.subr.bf16.mxu0 0
      %2580 = vmatpush1.bf16.msra.mxu0 0
      %2581 = vmatprep.subr.bf16.mxu0 0
      %2582 = vmatpush1.bf16.msra.mxu0 0
      %2583 = vmatprep.subr.bf16.mxu0 0
      %2584 = vmatpush1.bf16.msra.mxu0 0
      %2585 = vmatprep.subr.bf16.mxu0 0
      %2586 = vmatpush1.bf16.msra.mxu0 0
      %2587 = vmatprep.subr.bf16.mxu0 0
      %2588 = vmatpush1.bf16.msra.mxu0 0
      %2589 = vmatprep.subr.bf16.mxu0 0
      %2590 = vmatpush1.bf16.msra.mxu0 0
      %2591 = vmatprep.subr.bf16.mxu0 0
      %2592 = vmatpush1.bf16.msra.mxu0 0
      %2593 = vmatprep.subr.bf16.mxu0 0
      %2594 = vmatpush1.bf16.msra.mxu0 0
      %2595 = vmatprep.subr.bf16.mxu0 0
      %2596 = vmatpush1.bf16.msra.mxu0 0
      %2597 = vmatprep.subr.bf16.mxu0 0
      %2598 = vmatpush1.bf16.msra.mxu0 0
      %2599 = vmatprep.subr.bf16.mxu0 0
      %2600 = vmatpush1.bf16.msra.mxu0 0
      %2601 = vmatprep.mubr.bf16.mxu0 0
      %2602 = vmatmul.mubr.bf16.gmra.mrb[0].mxu0 %v2519
      %v2603 = vpop.f32.mrb[0].mxu0
      %v2604 = vadd.f32 0.0, %v2603
      %v2605 = vpop.f32.mrb[0].mxu0
      %v2606 = vpop.f32.mrb[0].mxu0
      %v2607 = vadd.f32 0.0, %v2606
      %v2608 = vpop.f32.mrb[0].mxu0
      %2609 = vmatprep.mubr.bf16.mxu0 0
      %2610 = vmatmul.mubr.bf16.gmra.mrb[0].mxu0 %v2522
      %v2611 = vpop.f32.mrb[0].mxu0
      %v2612 = vadd.f32 0.0, %v2611
      %v2613 = vpop.f32.mrb[0].mxu0
      %v2614 = vpop.f32.mrb[0].mxu0
      %v2615 = vadd.f32 0.0, %v2614
      %v2616 = vpop.f32.mrb[0].mxu0
      %2617 = vmatprep.mubr.bf16.mxu0 0
      %2618 = vmatmul.mubr.bf16.gmra.mrb[0].mxu0 %v2525
      %v2619 = vpop.f32.mrb[0].mxu0
      %v2620 = vadd.f32 0.0, %v2619
      %v2621 = vpop.f32.mrb[0].mxu0
      %v2622 = vpop.f32.mrb[0].mxu0
      %v2623 = vadd.f32 0.0, %v2622
      %v2624 = vpop.f32.mrb[0].mxu0
      %2625 = vmatprep.mubr.bf16.mxu0 0
      %2626 = vmatmul.mubr.bf16.gmra.mrb[0].mxu0 %v2528
      %v2627 = vpop.f32.mrb[0].mxu0
      %v2628 = vadd.f32 0.0, %v2627
      %v2629 = vpop.f32.mrb[0].mxu0
      %v2630 = vpop.f32.mrb[0].mxu0
      %v2631 = vadd.f32 0.0, %v2630
      %v2632 = vpop.f32.mrb[0].mxu0
      %2633 = vmatprep.mubr.bf16.mxu0 0
      %2634 = vmatmul.mubr.bf16.gmra.mrb[0].mxu0 %v2531
      %v2635 = vpop.f32.mrb[0].mxu0
      %v2636 = vadd.f32 0.0, %v2635
      %v2637 = vpop.f32.mrb[0].mxu0
      %v2638 = vpop.f32.mrb[0].mxu0
      %v2639 = vadd.f32 0.0, %v2638
      %v2640 = vpop.f32.mrb[0].mxu0
      %2641 = vmatprep.mubr.bf16.mxu0 0
      %2642 = vmatmul.mubr.bf16.gmra.mrb[0].mxu0 %v2534
      %v2643 = vpop.f32.mrb[0].mxu0
      %v2644 = vadd.f32 0.0, %v2643
      %v2645 = vpop.f32.mrb[0].mxu0
      %v2646 = vpop.f32.mrb[0].mxu0
      %v2647 = vadd.f32 0.0, %v2646
      %v2648 = vpop.f32.mrb[0].mxu0
      %2649 = vmatprep.mubr.bf16.mxu0 0
      %2650 = vmatmul.mubr.bf16.gmra.mrb[0].mxu0 %v2537
      %v2651 = vpop.f32.mrb[0].mxu0
      %v2652 = vadd.f32 0.0, %v2651
      %v2653 = vpop.f32.mrb[0].mxu0
      %v2654 = vpop.f32.mrb[0].mxu0
      %v2655 = vadd.f32 0.0, %v2654
      %v2656 = vpop.f32.mrb[0].mxu0
      %2657 = vmatprep.mubr.bf16.mxu0 0
      %2658 = vmatmul.mubr.bf16.gmra.mrb[0].mxu0 %v2540
      %v2659 = vpop.f32.mrb[0].mxu0
      %v2660 = vadd.f32 0.0, %v2659
      %v2661 = vpop.f32.mrb[0].mxu0
      %v2662 = vpop.f32.mrb[0].mxu0
      %v2663 = vadd.f32 0.0, %v2662
      %v2664 = vpop.f32.mrb[0].mxu0
      %2665 = vmatprep.mubr.bf16.mxu0 0
      %2666 = vmatmul.mubr.bf16.gmra.mrb[0].mxu0 %v2543
      %v2667 = vpop.f32.mrb[0].mxu0
      %v2668 = vadd.f32 0.0, %v2667
      %v2669 = vpop.f32.mrb[0].mxu0
      %v2670 = vpop.f32.mrb[0].mxu0
      %v2671 = vadd.f32 0.0, %v2670
      %v2672 = vpop.f32.mrb[0].mxu0
      %2673 = vmatprep.mubr.bf16.mxu0 0
      %2674 = vmatmul.mubr.bf16.gmra.mrb[0].mxu0 %v2546
      %v2675 = vpop.f32.mrb[0].mxu0
      %v2676 = vadd.f32 0.0, %v2675
      %v2677 = vpop.f32.mrb[0].mxu0
      %v2678 = vpop.f32.mrb[0].mxu0
      %v2679 = vadd.f32 0.0, %v2678
      %v2680 = vpop.f32.mrb[0].mxu0
      %2681 = vmatprep.mubr.bf16.mxu0 0
      %2682 = vmatmul.mubr.bf16.gmra.mrb[0].mxu0 %v2549
      %v2683 = vpop.f32.mrb[0].mxu0
      %v2684 = vadd.f32 0.0, %v2683
      %v2685 = vpop.f32.mrb[0].mxu0
      %v2686 = vpop.f32.mrb[0].mxu0
      %v2687 = vadd.f32 0.0, %v2686
      %v2688 = vpop.f32.mrb[0].mxu0
      %2689 = vmatprep.mubr.bf16.mxu0 0
      %2690 = vmatmul.mubr.bf16.gmra.mrb[0].mxu0 %v2552
      %v2691 = vpop.f32.mrb[0].mxu0
      %v2692 = vadd.f32 0.0, %v2691
      %v2693 = vpop.f32.mrb[0].mxu0
      %v2694 = vpop.f32.mrb[0].mxu0
      %v2695 = vadd.f32 0.0, %v2694
      %v2696 = vpop.f32.mrb[0].mxu0
      %2697 = vmatprep.mubr.bf16.mxu0 0
      %2698 = vmatmul.mubr.bf16.gmra.mrb[0].mxu0 %v2555
      %v2699 = vpop.f32.mrb[0].mxu0
      %v2700 = vadd.f32 0.0, %v2699
      %v2701 = vpop.f32.mrb[0].mxu0
      %v2702 = vpop.f32.mrb[0].mxu0
      %v2703 = vadd.f32 0.0, %v2702
      %v2704 = vpop.f32.mrb[0].mxu0
      %2705 = vmatprep.mubr.bf16.mxu0 0
      %2706 = vmatmul.mubr.bf16.gmra.mrb[0].mxu0 %v2558
      %v2707 = vpop.f32.mrb[0].mxu0
      %v2708 = vadd.f32 0.0, %v2707
      %v2709 = vpop.f32.mrb[0].mxu0
      %v2710 = vpop.f32.mrb[0].mxu0
      %v2711 = vadd.f32 0.0, %v2710
      %v2712 = vpop.f32.mrb[0].mxu0
      %2713 = vmatprep.mubr.bf16.mxu0 0
      %2714 = vmatmul.mubr.bf16.gmra.mrb[0].mxu0 %v2561
      %v2715 = vpop.f32.mrb[0].mxu0
      %v2716 = vadd.f32 0.0, %v2715
      %v2717 = vpop.f32.mrb[0].mxu0
      %v2718 = vpop.f32.mrb[0].mxu0
      %v2719 = vadd.f32 0.0, %v2718
      %v2720 = vpop.f32.mrb[0].mxu0
      %2721 = vmatprep.mubr.bf16.mxu0 0
      %2722 = vmatmul.mubr.bf16.gmra.mrb[0].mxu0 %v2564
      %v2723 = vpop.f32.mrb[0].mxu0
      %v2724 = vadd.f32 0.0, %v2723
      %v2725 = vpop.f32.mrb[0].mxu0
      %v2726 = vpop.f32.mrb[0].mxu0
      %v2727 = vadd.f32 0.0, %v2726
      %v2728 = vpop.f32.mrb[0].mxu0
      %2729 = vdwg.mxu0
      %v2730 = vadd.f32 %v2438, %v2604
      %v2731 = vadd.f32 %v2439, %v2607
      %v2732 = vadd.f32 %v2440, %v2612
      %v2733 = vadd.f32 %v2441, %v2615
      %v2734 = vadd.f32 %v2442, %v2620
      %v2735 = vadd.f32 %v2443, %v2623
      %v2736 = vadd.f32 %v2444, %v2628
      %v2737 = vadd.f32 %v2445, %v2631
      %v2738 = vadd.f32 %v2446, %v2636
      %v2739 = vadd.f32 %v2447, %v2639
      %v2740 = vadd.f32 %v2448, %v2644
      %v2741 = vadd.f32 %v2449, %v2647
      %v2742 = vadd.f32 %v2450, %v2652
      %v2743 = vadd.f32 %v2451, %v2655
      %v2744 = vadd.f32 %v2452, %v2660
      %v2745 = vadd.f32 %v2453, %v2663
      %v2746 = vadd.f32 %v2454, %v2668
      %v2747 = vadd.f32 %v2455, %v2671
      %v2748 = vadd.f32 %v2456, %v2676
      %v2749 = vadd.f32 %v2457, %v2679
      %v2750 = vadd.f32 %v2458, %v2684
      %v2751 = vadd.f32 %v2459, %v2687
      %v2752 = vadd.f32 %v2460, %v2692
      %v2753 = vadd.f32 %v2461, %v2695
      %v2754 = vadd.f32 %v2462, %v2700
      %v2755 = vadd.f32 %v2463, %v2703
      %v2756 = vadd.f32 %v2464, %v2708
      %v2757 = vadd.f32 %v2465, %v2711
      %v2758 = vadd.f32 %v2466, %v2716
      %v2759 = vadd.f32 %v2467, %v2719
      %v2760 = vadd.f32 %v2468, %v2724
      %v2761 = vadd.f32 %v2469, %v2727
      %v2762 = vld [vmem:[%s1322 + $0x2] sm:$0xff]
      %v2763 = vld [vmem:[%s1322 + $0xa] sm:$0xff]
      %v2764 = vld [vmem:[%s1322 + $0x1a] sm:$0xff]
      %v2765 = vld [vmem:[%s1322 + $0x22] sm:$0xff]
      %v2766 = vld [vmem:[%s1322 + $0x32] sm:$0xff]
      %v2767 = vld [vmem:[%s1322 + $0x3a] sm:$0xff]
      %v2768 = vld [vmem:[%s1322 + $0x4a] sm:$0xff]
      %v2769 = vld [vmem:[%s1322 + $0x52] sm:$0xff]
      %v2770 = vld [vmem:[%s1322 + $0x62] sm:$0xff]
      %v2771 = vld [vmem:[%s1322 + $0x6a] sm:$0xff]
      %v2772 = vld [vmem:[%s1322 + $0x7a] sm:$0xff]
      %v2773 = vld [vmem:[%s1322 + $0x82] sm:$0xff]
      %v2774 = vld [vmem:[%s1322 + $0x92] sm:$0xff]
      %v2775 = vld [vmem:[%s1322 + $0x9a] sm:$0xff]
      %v2776 = vld [vmem:[%s1322 + $0xaa] sm:$0xff]
      %v2777 = vld [vmem:[%s1322 + $0xb2] sm:$0xff]
      %v2778 = vld [vmem:[%s1322 + $0xc2] sm:$0xff]
      %v2779 = vld [vmem:[%s1322 + $0xca] sm:$0xff]
      %v2780 = vld [vmem:[%s1322 + $0xda] sm:$0xff]
      %v2781 = vld [vmem:[%s1322 + $0xe2] sm:$0xff]
      %v2782 = vld [vmem:[%s1322 + $0xf2] sm:$0xff]
      %v2783 = vld [vmem:[%s1322 + $0xfa] sm:$0xff]
      %v2784 = vld [vmem:[%s1322 + $0x10a] sm:$0xff]
      %v2785 = vld [vmem:[%s1322 + $0x112] sm:$0xff]
      %v2786 = vld [vmem:[%s1322 + $0x122] sm:$0xff]
      %v2787 = vld [vmem:[%s1322 + $0x12a] sm:$0xff]
      %v2788 = vld [vmem:[%s1322 + $0x13a] sm:$0xff]
      %v2789 = vld [vmem:[%s1322 + $0x142] sm:$0xff]
      %v2790 = vld [vmem:[%s1322 + $0x152] sm:$0xff]
      %v2791 = vld [vmem:[%s1322 + $0x15a] sm:$0xff]
      %v2792 = vld [vmem:[%s1322 + $0x16a] sm:$0xff]
      %v2793 = vld [vmem:[%s1322 + $0x172] sm:$0xff]
      %v2794 = vpack.c.bf16 %v2763, %v2762
      %v2795 = vpack.c.bf16 %v2765, %v2764
      %v2796 = vpack.c.bf16 %v2767, %v2766
      %v2797 = vpack.c.bf16 %v2769, %v2768
      %v2798 = vpack.c.bf16 %v2771, %v2770
      %v2799 = vpack.c.bf16 %v2773, %v2772
      %v2800 = vpack.c.bf16 %v2775, %v2774
      %v2801 = vpack.c.bf16 %v2777, %v2776
      %v2802 = vpack.c.bf16 %v2779, %v2778
      %v2803 = vpack.c.bf16 %v2781, %v2780
      %v2804 = vpack.c.bf16 %v2783, %v2782
      %v2805 = vpack.c.bf16 %v2785, %v2784
      %v2806 = vpack.c.bf16 %v2787, %v2786
      %v2807 = vpack.c.bf16 %v2789, %v2788
      %v2808 = vpack.c.bf16 %v2791, %v2790
      %v2809 = vpack.c.bf16 %v2793, %v2792
      %v2811 = vsel %vm1323, %v2794, 0
      %v2814 = vsel %vm1323, %v2795, 0
      %v2817 = vsel %vm1323, %v2796, 0
      %v2820 = vsel %vm1323, %v2797, 0
      %v2823 = vsel %vm1323, %v2798, 0
      %v2826 = vsel %vm1323, %v2799, 0
      %v2829 = vsel %vm1323, %v2800, 0
      %v2832 = vsel %vm1323, %v2801, 0
      %v2835 = vsel %vm1323, %v2802, 0
      %v2838 = vsel %vm1323, %v2803, 0
      %v2841 = vsel %vm1323, %v2804, 0
      %v2844 = vsel %vm1323, %v2805, 0
      %v2847 = vsel %vm1323, %v2806, 0
      %v2850 = vsel %vm1323, %v2807, 0
      %v2853 = vsel %vm1323, %v2808, 0
      %v2856 = vsel %vm1323, %v2809, 0
      %v2859 = vsel %vm1509, %v1361, 0
      %2861 = vmatprep.subr.bf16.mxu0 0
      %2862 = vmatpush1.bf16.msra.mxu0 %v2859
      %2863 = vmatprep.subr.bf16.mxu0 0
      %2864 = vmatpush1.bf16.msra.mxu0 0
      %2865 = vmatprep.subr.bf16.mxu0 0
      %2866 = vmatpush1.bf16.msra.mxu0 0
      %2867 = vmatprep.subr.bf16.mxu0 0
      %2868 = vmatpush1.bf16.msra.mxu0 0
      %2869 = vmatprep.subr.bf16.mxu0 0
      %2870 = vmatpush1.bf16.msra.mxu0 0
      %2871 = vmatprep.subr.bf16.mxu0 0
      %2872 = vmatpush1.bf16.msra.mxu0 0
      %2873 = vmatprep.subr.bf16.mxu0 0
      %2874 = vmatpush1.bf16.msra.mxu0 0
      %2875 = vmatprep.subr.bf16.mxu0 0
      %2876 = vmatpush1.bf16.msra.mxu0 0
      %2877 = vmatprep.subr.bf16.mxu0 0
      %2878 = vmatpush1.bf16.msra.mxu0 0
      %2879 = vmatprep.subr.bf16.mxu0 0
      %2880 = vmatpush1.bf16.msra.mxu0 0
      %2881 = vmatprep.subr.bf16.mxu0 0
      %2882 = vmatpush1.bf16.msra.mxu0 0
      %2883 = vmatprep.subr.bf16.mxu0 0
      %2884 = vmatpush1.bf16.msra.mxu0 0
      %2885 = vmatprep.subr.bf16.mxu0 0
      %2886 = vmatpush1.bf16.msra.mxu0 0
      %2887 = vmatprep.subr.bf16.mxu0 0
      %2888 = vmatpush1.bf16.msra.mxu0 0
      %2889 = vmatprep.subr.bf16.mxu0 0
      %2890 = vmatpush1.bf16.msra.mxu0 0
      %2891 = vmatprep.subr.bf16.mxu0 0
      %2892 = vmatpush1.bf16.msra.mxu0 0
      %2893 = vmatprep.mubr.bf16.mxu0 0
      %2894 = vmatmul.mubr.bf16.gmra.mrb[0].mxu0 %v2811
      %v2895 = vpop.f32.mrb[0].mxu0
      %v2896 = vadd.f32 0.0, %v2895
      %v2897 = vpop.f32.mrb[0].mxu0
      %v2898 = vpop.f32.mrb[0].mxu0
      %v2899 = vadd.f32 0.0, %v2898
      %v2900 = vpop.f32.mrb[0].mxu0
      %2901 = vmatprep.mubr.bf16.mxu0 0
      %2902 = vmatmul.mubr.bf16.gmra.mrb[0].mxu0 %v2814
      %v2903 = vpop.f32.mrb[0].mxu0
      %v2904 = vadd.f32 0.0, %v2903
      %v2905 = vpop.f32.mrb[0].mxu0
      %v2906 = vpop.f32.mrb[0].mxu0
      %v2907 = vadd.f32 0.0, %v2906
      %v2908 = vpop.f32.mrb[0].mxu0
      %2909 = vmatprep.mubr.bf16.mxu0 0
      %2910 = vmatmul.mubr.bf16.gmra.mrb[0].mxu0 %v2817
      %v2911 = vpop.f32.mrb[0].mxu0
      %v2912 = vadd.f32 0.0, %v2911
      %v2913 = vpop.f32.mrb[0].mxu0
      %v2914 = vpop.f32.mrb[0].mxu0
      %v2915 = vadd.f32 0.0, %v2914
      %v2916 = vpop.f32.mrb[0].mxu0
      %2917 = vmatprep.mubr.bf16.mxu0 0
      %2918 = vmatmul.mubr.bf16.gmra.mrb[0].mxu0 %v2820
      %v2919 = vpop.f32.mrb[0].mxu0
      %v2920 = vadd.f32 0.0, %v2919
      %v2921 = vpop.f32.mrb[0].mxu0
      %v2922 = vpop.f32.mrb[0].mxu0
      %v2923 = vadd.f32 0.0, %v2922
      %v2924 = vpop.f32.mrb[0].mxu0
      %2925 = vmatprep.mubr.bf16.mxu0 0
      %2926 = vmatmul.mubr.bf16.gmra.mrb[0].mxu0 %v2823
      %v2927 = vpop.f32.mrb[0].mxu0
      %v2928 = vadd.f32 0.0, %v2927
      %v2929 = vpop.f32.mrb[0].mxu0
      %v2930 = vpop.f32.mrb[0].mxu0
      %v2931 = vadd.f32 0.0, %v2930
      %v2932 = vpop.f32.mrb[0].mxu0
      %2933 = vmatprep.mubr.bf16.mxu0 0
      %2934 = vmatmul.mubr.bf16.gmra.mrb[0].mxu0 %v2826
      %v2935 = vpop.f32.mrb[0].mxu0
      %v2936 = vadd.f32 0.0, %v2935
      %v2937 = vpop.f32.mrb[0].mxu0
      %v2938 = vpop.f32.mrb[0].mxu0
      %v2939 = vadd.f32 0.0, %v2938
      %v2940 = vpop.f32.mrb[0].mxu0
      %2941 = vmatprep.mubr.bf16.mxu0 0
      %2942 = vmatmul.mubr.bf16.gmra.mrb[0].mxu0 %v2829
      %v2943 = vpop.f32.mrb[0].mxu0
      %v2944 = vadd.f32 0.0, %v2943
      %v2945 = vpop.f32.mrb[0].mxu0
      %v2946 = vpop.f32.mrb[0].mxu0
      %v2947 = vadd.f32 0.0, %v2946
      %v2948 = vpop.f32.mrb[0].mxu0
      %2949 = vmatprep.mubr.bf16.mxu0 0
      %2950 = vmatmul.mubr.bf16.gmra.mrb[0].mxu0 %v2832
      %v2951 = vpop.f32.mrb[0].mxu0
      %v2952 = vadd.f32 0.0, %v2951
      %v2953 = vpop.f32.mrb[0].mxu0
      %v2954 = vpop.f32.mrb[0].mxu0
      %v2955 = vadd.f32 0.0, %v2954
      %v2956 = vpop.f32.mrb[0].mxu0
      %2957 = vmatprep.mubr.bf16.mxu0 0
      %2958 = vmatmul.mubr.bf16.gmra.mrb[0].mxu0 %v2835
      %v2959 = vpop.f32.mrb[0].mxu0
      %v2960 = vadd.f32 0.0, %v2959
      %v2961 = vpop.f32.mrb[0].mxu0
      %v2962 = vpop.f32.mrb[0].mxu0
      %v2963 = vadd.f32 0.0, %v2962
      %v2964 = vpop.f32.mrb[0].mxu0
      %2965 = vmatprep.mubr.bf16.mxu0 0
      %2966 = vmatmul.mubr.bf16.gmra.mrb[0].mxu0 %v2838
      %v2967 = vpop.f32.mrb[0].mxu0
      %v2968 = vadd.f32 0.0, %v2967
      %v2969 = vpop.f32.mrb[0].mxu0
      %v2970 = vpop.f32.mrb[0].mxu0
      %v2971 = vadd.f32 0.0, %v2970
      %v2972 = vpop.f32.mrb[0].mxu0
      %2973 = vmatprep.mubr.bf16.mxu0 0
      %2974 = vmatmul.mubr.bf16.gmra.mrb[0].mxu0 %v2841
      %v2975 = vpop.f32.mrb[0].mxu0
      %v2976 = vadd.f32 0.0, %v2975
      %v2977 = vpop.f32.mrb[0].mxu0
      %v2978 = vpop.f32.mrb[0].mxu0
      %v2979 = vadd.f32 0.0, %v2978
      %v2980 = vpop.f32.mrb[0].mxu0
      %2981 = vmatprep.mubr.bf16.mxu0 0
      %2982 = vmatmul.mubr.bf16.gmra.mrb[0].mxu0 %v2844
      %v2983 = vpop.f32.mrb[0].mxu0
      %v2984 = vadd.f32 0.0, %v2983
      %v2985 = vpop.f32.mrb[0].mxu0
      %v2986 = vpop.f32.mrb[0].mxu0
      %v2987 = vadd.f32 0.0, %v2986
      %v2988 = vpop.f32.mrb[0].mxu0
      %2989 = vmatprep.mubr.bf16.mxu0 0
      %2990 = vmatmul.mubr.bf16.gmra.mrb[0].mxu0 %v2847
      %v2991 = vpop.f32.mrb[0].mxu0
      %v2992 = vadd.f32 0.0, %v2991
      %v2993 = vpop.f32.mrb[0].mxu0
      %v2994 = vpop.f32.mrb[0].mxu0
      %v2995 = vadd.f32 0.0, %v2994
      %v2996 = vpop.f32.mrb[0].mxu0
      %2997 = vmatprep.mubr.bf16.mxu0 0
      %2998 = vmatmul.mubr.bf16.gmra.mrb[0].mxu0 %v2850
      %v2999 = vpop.f32.mrb[0].mxu0
      %v3000 = vadd.f32 0.0, %v2999
      %v3001 = vpop.f32.mrb[0].mxu0
      %v3002 = vpop.f32.mrb[0].mxu0
      %v3003 = vadd.f32 0.0, %v3002
      %v3004 = vpop.f32.mrb[0].mxu0
      %3005 = vmatprep.mubr.bf16.mxu0 0
      %3006 = vmatmul.mubr.bf16.gmra.mrb[0].mxu0 %v2853
      %v3007 = vpop.f32.mrb[0].mxu0
      %v3008 = vadd.f32 0.0, %v3007
      %v3009 = vpop.f32.mrb[0].mxu0
      %v3010 = vpop.f32.mrb[0].mxu0
      %v3011 = vadd.f32 0.0, %v3010
      %v3012 = vpop.f32.mrb[0].mxu0
      %3013 = vmatprep.mubr.bf16.mxu0 0
      %3014 = vmatmul.mubr.bf16.gmra.mrb[0].mxu0 %v2856
      %v3015 = vpop.f32.mrb[0].mxu0
      %v3016 = vadd.f32 0.0, %v3015
      %v3017 = vpop.f32.mrb[0].mxu0
      %v3018 = vpop.f32.mrb[0].mxu0
      %v3019 = vadd.f32 0.0, %v3018
      %v3020 = vpop.f32.mrb[0].mxu0
      %3021 = vdwg.mxu0
      %v3022 = vadd.f32 %v2730, %v2896
      %v3023 = vadd.f32 %v2731, %v2899
      %v3024 = vadd.f32 %v2732, %v2904
      %v3025 = vadd.f32 %v2733, %v2907
      %v3026 = vadd.f32 %v2734, %v2912
      %v3027 = vadd.f32 %v2735, %v2915
      %v3028 = vadd.f32 %v2736, %v2920
      %v3029 = vadd.f32 %v2737, %v2923
      %v3030 = vadd.f32 %v2738, %v2928
      %v3031 = vadd.f32 %v2739, %v2931
      %v3032 = vadd.f32 %v2740, %v2936
      %v3033 = vadd.f32 %v2741, %v2939
      %v3034 = vadd.f32 %v2742, %v2944
      %v3035 = vadd.f32 %v2743, %v2947
      %v3036 = vadd.f32 %v2744, %v2952
      %v3037 = vadd.f32 %v2745, %v2955
      %v3038 = vadd.f32 %v2746, %v2960
      %v3039 = vadd.f32 %v2747, %v2963
      %v3040 = vadd.f32 %v2748, %v2968
      %v3041 = vadd.f32 %v2749, %v2971
      %v3042 = vadd.f32 %v2750, %v2976
      %v3043 = vadd.f32 %v2751, %v2979
      %v3044 = vadd.f32 %v2752, %v2984
      %v3045 = vadd.f32 %v2753, %v2987
      %v3046 = vadd.f32 %v2754, %v2992
      %v3047 = vadd.f32 %v2755, %v2995
      %v3048 = vadd.f32 %v2756, %v3000
      %v3049 = vadd.f32 %v2757, %v3003
      %v3050 = vadd.f32 %v2758, %v3008
      %v3051 = vadd.f32 %v2759, %v3011
      %v3052 = vadd.f32 %v2760, %v3016
      %v3053 = vadd.f32 %v2761, %v3019
      %s3054 = scalar_lea.vmem [#allocation2], 48
      %v3055 = vld [vmem:[%s3054] sm:$0xff]
      %v3056 = vld [vmem:[%s3054 + $0x8] sm:$0xff]
      %v3057 = vld [vmem:[%s3054 + $0x18] sm:$0xff]
      %v3058 = vld [vmem:[%s3054 + $0x20] sm:$0xff]
      %v3059 = vld [vmem:[%s3054 + $0x30] sm:$0xff]
      %v3060 = vld [vmem:[%s3054 + $0x38] sm:$0xff]
      %v3061 = vld [vmem:[%s3054 + $0x48] sm:$0xff]
      %v3062 = vld [vmem:[%s3054 + $0x50] sm:$0xff]
      %v3063 = vld [vmem:[%s3054 + $0x60] sm:$0xff]
      %v3064 = vld [vmem:[%s3054 + $0x68] sm:$0xff]
      %v3065 = vld [vmem:[%s3054 + $0x78] sm:$0xff]
      %v3066 = vld [vmem:[%s3054 + $0x80] sm:$0xff]
      %v3067 = vld [vmem:[%s3054 + $0x90] sm:$0xff]
      %v3068 = vld [vmem:[%s3054 + $0x98] sm:$0xff]
      %v3069 = vld [vmem:[%s3054 + $0xa8] sm:$0xff]
      %v3070 = vld [vmem:[%s3054 + $0xb0] sm:$0xff]
      %v3071 = vld [vmem:[%s3054 + $0xc0] sm:$0xff]
      %v3072 = vld [vmem:[%s3054 + $0xc8] sm:$0xff]
      %v3073 = vld [vmem:[%s3054 + $0xd8] sm:$0xff]
      %v3074 = vld [vmem:[%s3054 + $0xe0] sm:$0xff]
      %v3075 = vld [vmem:[%s3054 + $0xf0] sm:$0xff]
      %v3076 = vld [vmem:[%s3054 + $0xf8] sm:$0xff]
      %v3077 = vld [vmem:[%s3054 + $0x108] sm:$0xff]
      %v3078 = vld [vmem:[%s3054 + $0x110] sm:$0xff]
      %v3079 = vld [vmem:[%s3054 + $0x120] sm:$0xff]
      %v3080 = vld [vmem:[%s3054 + $0x128] sm:$0xff]
      %v3081 = vld [vmem:[%s3054 + $0x138] sm:$0xff]
      %v3082 = vld [vmem:[%s3054 + $0x140] sm:$0xff]
      %v3083 = vld [vmem:[%s3054 + $0x150] sm:$0xff]
      %v3084 = vld [vmem:[%s3054 + $0x158] sm:$0xff]
      %v3085 = vld [vmem:[%s3054 + $0x168] sm:$0xff]
      %v3086 = vld [vmem:[%s3054 + $0x170] sm:$0xff]
      %v3087 = vpack.c.bf16 %v3056, %v3055
      %v3088 = vpack.c.bf16 %v3058, %v3057
      %v3089 = vpack.c.bf16 %v3060, %v3059
      %v3090 = vpack.c.bf16 %v3062, %v3061
      %v3091 = vpack.c.bf16 %v3064, %v3063
      %v3092 = vpack.c.bf16 %v3066, %v3065
      %v3093 = vpack.c.bf16 %v3068, %v3067
      %v3094 = vpack.c.bf16 %v3070, %v3069
      %v3095 = vpack.c.bf16 %v3072, %v3071
      %v3096 = vpack.c.bf16 %v3074, %v3073
      %v3097 = vpack.c.bf16 %v3076, %v3075
      %v3098 = vpack.c.bf16 %v3078, %v3077
      %v3099 = vpack.c.bf16 %v3080, %v3079
      %v3100 = vpack.c.bf16 %v3082, %v3081
      %v3101 = vpack.c.bf16 %v3084, %v3083
      %v3102 = vpack.c.bf16 %v3086, %v3085
      %v3104 = vsel %vm1323, %v3087, 0
      %v3107 = vsel %vm1323, %v3088, 0
      %v3110 = vsel %vm1323, %v3089, 0
      %v3113 = vsel %vm1323, %v3090, 0
      %v3116 = vsel %vm1323, %v3091, 0
      %v3119 = vsel %vm1323, %v3092, 0
      %v3122 = vsel %vm1323, %v3093, 0
      %v3125 = vsel %vm1323, %v3094, 0
      %v3128 = vsel %vm1323, %v3095, 0
      %v3131 = vsel %vm1323, %v3096, 0
      %v3134 = vsel %vm1323, %v3097, 0
      %v3137 = vsel %vm1323, %v3098, 0
      %v3140 = vsel %vm1323, %v3099, 0
      %v3143 = vsel %vm1323, %v3100, 0
      %v3146 = vsel %vm1323, %v3101, 0
      %v3149 = vsel %vm1323, %v3102, 0
      %v3152 = vsel %vm1509, %v1362, 0
      %3154 = vmatprep.subr.bf16.mxu0 0
      %3155 = vmatpush1.bf16.msra.mxu0 %v3152
      %3156 = vmatprep.subr.bf16.mxu0 0
      %3157 = vmatpush1.bf16.msra.mxu0 0
      %3158 = vmatprep.subr.bf16.mxu0 0
      %3159 = vmatpush1.bf16.msra.mxu0 0
      %3160 = vmatprep.subr.bf16.mxu0 0
      %3161 = vmatpush1.bf16.msra.mxu0 0
      %3162 = vmatprep.subr.bf16.mxu0 0
      %3163 = vmatpush1.bf16.msra.mxu0 0
      %3164 = vmatprep.subr.bf16.mxu0 0
      %3165 = vmatpush1.bf16.msra.mxu0 0
      %3166 = vmatprep.subr.bf16.mxu0 0
      %3167 = vmatpush1.bf16.msra.mxu0 0
      %3168 = vmatprep.subr.bf16.mxu0 0
      %3169 = vmatpush1.bf16.msra.mxu0 0
      %3170 = vmatprep.subr.bf16.mxu0 0
      %3171 = vmatpush1.bf16.msra.mxu0 0
      %3172 = vmatprep.subr.bf16.mxu0 0
      %3173 = vmatpush1.bf16.msra.mxu0 0
      %3174 = vmatprep.subr.bf16.mxu0 0
      %3175 = vmatpush1.bf16.msra.mxu0 0
      %3176 = vmatprep.subr.bf16.mxu0 0
      %3177 = vmatpush1.bf16.msra.mxu0 0
      %3178 = vmatprep.subr.bf16.mxu0 0
      %3179 = vmatpush1.bf16.msra.mxu0 0
      %3180 = vmatprep.subr.bf16.mxu0 0
      %3181 = vmatpush1.bf16.msra.mxu0 0
      %3182 = vmatprep.subr.bf16.mxu0 0
      %3183 = vmatpush1.bf16.msra.mxu0 0
      %3184 = vmatprep.subr.bf16.mxu0 0
      %3185 = vmatpush1.bf16.msra.mxu0 0
      %3186 = vmatprep.mubr.bf16.mxu0 0
      %3187 = vmatmul.mubr.bf16.gmra.mrb[0].mxu0 %v3104
      %v3188 = vpop.f32.mrb[0].mxu0
      %v3189 = vadd.f32 0.0, %v3188
      %v3190 = vpop.f32.mrb[0].mxu0
      %v3191 = vpop.f32.mrb[0].mxu0
      %v3192 = vadd.f32 0.0, %v3191
      %v3193 = vpop.f32.mrb[0].mxu0
      %3194 = vmatprep.mubr.bf16.mxu0 0
      %3195 = vmatmul.mubr.bf16.gmra.mrb[0].mxu0 %v3107
      %v3196 = vpop.f32.mrb[0].mxu0
      %v3197 = vadd.f32 0.0, %v3196
      %v3198 = vpop.f32.mrb[0].mxu0
      %v3199 = vpop.f32.mrb[0].mxu0
      %v3200 = vadd.f32 0.0, %v3199
      %v3201 = vpop.f32.mrb[0].mxu0
      %3202 = vmatprep.mubr.bf16.mxu0 0
      %3203 = vmatmul.mubr.bf16.gmra.mrb[0].mxu0 %v3110
      %v3204 = vpop.f32.mrb[0].mxu0
      %v3205 = vadd.f32 0.0, %v3204
      %v3206 = vpop.f32.mrb[0].mxu0
      %v3207 = vpop.f32.mrb[0].mxu0
      %v3208 = vadd.f32 0.0, %v3207
      %v3209 = vpop.f32.mrb[0].mxu0
      %3210 = vmatprep.mubr.bf16.mxu0 0
      %3211 = vmatmul.mubr.bf16.gmra.mrb[0].mxu0 %v3113
      %v3212 = vpop.f32.mrb[0].mxu0
      %v3213 = vadd.f32 0.0, %v3212
      %v3214 = vpop.f32.mrb[0].mxu0
      %v3215 = vpop.f32.mrb[0].mxu0
      %v3216 = vadd.f32 0.0, %v3215
      %v3217 = vpop.f32.mrb[0].mxu0
      %3218 = vmatprep.mubr.bf16.mxu0 0
      %3219 = vmatmul.mubr.bf16.gmra.mrb[0].mxu0 %v3116
      %v3220 = vpop.f32.mrb[0].mxu0
      %v3221 = vadd.f32 0.0, %v3220
      %v3222 = vpop.f32.mrb[0].mxu0
      %v3223 = vpop.f32.mrb[0].mxu0
      %v3224 = vadd.f32 0.0, %v3223
      %v3225 = vpop.f32.mrb[0].mxu0
      %3226 = vmatprep.mubr.bf16.mxu0 0
      %3227 = vmatmul.mubr.bf16.gmra.mrb[0].mxu0 %v3119
      %v3228 = vpop.f32.mrb[0].mxu0
      %v3229 = vadd.f32 0.0, %v3228
      %v3230 = vpop.f32.mrb[0].mxu0
      %v3231 = vpop.f32.mrb[0].mxu0
      %v3232 = vadd.f32 0.0, %v3231
      %v3233 = vpop.f32.mrb[0].mxu0
      %3234 = vmatprep.mubr.bf16.mxu0 0
      %3235 = vmatmul.mubr.bf16.gmra.mrb[0].mxu0 %v3122
      %v3236 = vpop.f32.mrb[0].mxu0
      %v3237 = vadd.f32 0.0, %v3236
      %v3238 = vpop.f32.mrb[0].mxu0
      %v3239 = vpop.f32.mrb[0].mxu0
      %v3240 = vadd.f32 0.0, %v3239
      %v3241 = vpop.f32.mrb[0].mxu0
      %3242 = vmatprep.mubr.bf16.mxu0 0
      %3243 = vmatmul.mubr.bf16.gmra.mrb[0].mxu0 %v3125
      %v3244 = vpop.f32.mrb[0].mxu0
      %v3245 = vadd.f32 0.0, %v3244
      %v3246 = vpop.f32.mrb[0].mxu0
      %v3247 = vpop.f32.mrb[0].mxu0
      %v3248 = vadd.f32 0.0, %v3247
      %v3249 = vpop.f32.mrb[0].mxu0
      %3250 = vmatprep.mubr.bf16.mxu0 0
      %3251 = vmatmul.mubr.bf16.gmra.mrb[0].mxu0 %v3128
      %v3252 = vpop.f32.mrb[0].mxu0
      %v3253 = vadd.f32 0.0, %v3252
      %v3254 = vpop.f32.mrb[0].mxu0
      %v3255 = vpop.f32.mrb[0].mxu0
      %v3256 = vadd.f32 0.0, %v3255
      %v3257 = vpop.f32.mrb[0].mxu0
      %3258 = vmatprep.mubr.bf16.mxu0 0
      %3259 = vmatmul.mubr.bf16.gmra.mrb[0].mxu0 %v3131
      %v3260 = vpop.f32.mrb[0].mxu0
      %v3261 = vadd.f32 0.0, %v3260
      %v3262 = vpop.f32.mrb[0].mxu0
      %v3263 = vpop.f32.mrb[0].mxu0
      %v3264 = vadd.f32 0.0, %v3263
      %v3265 = vpop.f32.mrb[0].mxu0
      %3266 = vmatprep.mubr.bf16.mxu0 0
      %3267 = vmatmul.mubr.bf16.gmra.mrb[0].mxu0 %v3134
      %v3268 = vpop.f32.mrb[0].mxu0
      %v3269 = vadd.f32 0.0, %v3268
      %v3270 = vpop.f32.mrb[0].mxu0
      %v3271 = vpop.f32.mrb[0].mxu0
      %v3272 = vadd.f32 0.0, %v3271
      %v3273 = vpop.f32.mrb[0].mxu0
      %3274 = vmatprep.mubr.bf16.mxu0 0
      %3275 = vmatmul.mubr.bf16.gmra.mrb[0].mxu0 %v3137
      %v3276 = vpop.f32.mrb[0].mxu0
      %v3277 = vadd.f32 0.0, %v3276
      %v3278 = vpop.f32.mrb[0].mxu0
      %v3279 = vpop.f32.mrb[0].mxu0
      %v3280 = vadd.f32 0.0, %v3279
      %v3281 = vpop.f32.mrb[0].mxu0
      %3282 = vmatprep.mubr.bf16.mxu0 0
      %3283 = vmatmul.mubr.bf16.gmra.mrb[0].mxu0 %v3140
      %v3284 = vpop.f32.mrb[0].mxu0
      %v3285 = vadd.f32 0.0, %v3284
      %v3286 = vpop.f32.mrb[0].mxu0
      %v3287 = vpop.f32.mrb[0].mxu0
      %v3288 = vadd.f32 0.0, %v3287
      %v3289 = vpop.f32.mrb[0].mxu0
      %3290 = vmatprep.mubr.bf16.mxu0 0
      %3291 = vmatmul.mubr.bf16.gmra.mrb[0].mxu0 %v3143
      %v3292 = vpop.f32.mrb[0].mxu0
      %v3293 = vadd.f32 0.0, %v3292
      %v3294 = vpop.f32.mrb[0].mxu0
      %v3295 = vpop.f32.mrb[0].mxu0
      %v3296 = vadd.f32 0.0, %v3295
      %v3297 = vpop.f32.mrb[0].mxu0
      %3298 = vmatprep.mubr.bf16.mxu0 0
      %3299 = vmatmul.mubr.bf16.gmra.mrb[0].mxu0 %v3146
      %v3300 = vpop.f32.mrb[0].mxu0
      %v3301 = vadd.f32 0.0, %v3300
      %v3302 = vpop.f32.mrb[0].mxu0
      %v3303 = vpop.f32.mrb[0].mxu0
      %v3304 = vadd.f32 0.0, %v3303
      %v3305 = vpop.f32.mrb[0].mxu0
      %3306 = vmatprep.mubr.bf16.mxu0 0
      %3307 = vmatmul.mubr.bf16.gmra.mrb[0].mxu0 %v3149
      %v3308 = vpop.f32.mrb[0].mxu0
      %v3309 = vadd.f32 0.0, %v3308
      %v3310 = vpop.f32.mrb[0].mxu0
      %v3311 = vpop.f32.mrb[0].mxu0
      %v3312 = vadd.f32 0.0, %v3311
      %v3313 = vpop.f32.mrb[0].mxu0
      %3314 = vdwg.mxu0
      %v3315 = vadd.f32 %v3022, %v3189
      %v3316 = vadd.f32 %v3023, %v3192
      %v3317 = vadd.f32 %v3024, %v3197
      %v3318 = vadd.f32 %v3025, %v3200
      %v3319 = vadd.f32 %v3026, %v3205
      %v3320 = vadd.f32 %v3027, %v3208
      %v3321 = vadd.f32 %v3028, %v3213
      %v3322 = vadd.f32 %v3029, %v3216
      %v3323 = vadd.f32 %v3030, %v3221
      %v3324 = vadd.f32 %v3031, %v3224
      %v3325 = vadd.f32 %v3032, %v3229
      %v3326 = vadd.f32 %v3033, %v3232
      %v3327 = vadd.f32 %v3034, %v3237
      %v3328 = vadd.f32 %v3035, %v3240
      %v3329 = vadd.f32 %v3036, %v3245
      %v3330 = vadd.f32 %v3037, %v3248
      %v3331 = vadd.f32 %v3038, %v3253
      %v3332 = vadd.f32 %v3039, %v3256
      %v3333 = vadd.f32 %v3040, %v3261
      %v3334 = vadd.f32 %v3041, %v3264
      %v3335 = vadd.f32 %v3042, %v3269
      %v3336 = vadd.f32 %v3043, %v3272
      %v3337 = vadd.f32 %v3044, %v3277
      %v3338 = vadd.f32 %v3045, %v3280
      %v3339 = vadd.f32 %v3046, %v3285
      %v3340 = vadd.f32 %v3047, %v3288
      %v3341 = vadd.f32 %v3048, %v3293
      %v3342 = vadd.f32 %v3049, %v3296
      %v3343 = vadd.f32 %v3050, %v3301
      %v3344 = vadd.f32 %v3051, %v3304
      %v3345 = vadd.f32 %v3052, %v3309
      %v3346 = vadd.f32 %v3053, %v3312
      %v3347 = vld [vmem:[%s3054 + $0x1] sm:$0xff]
      %v3348 = vld [vmem:[%s3054 + $0x9] sm:$0xff]
      %v3349 = vld [vmem:[%s3054 + $0x19] sm:$0xff]
      %v3350 = vld [vmem:[%s3054 + $0x21] sm:$0xff]
      %v3351 = vld [vmem:[%s3054 + $0x31] sm:$0xff]
      %v3352 = vld [vmem:[%s3054 + $0x39] sm:$0xff]
      %v3353 = vld [vmem:[%s3054 + $0x49] sm:$0xff]
      %v3354 = vld [vmem:[%s3054 + $0x51] sm:$0xff]
      %v3355 = vld [vmem:[%s3054 + $0x61] sm:$0xff]
      %v3356 = vld [vmem:[%s3054 + $0x69] sm:$0xff]
      %v3357 = vld [vmem:[%s3054 + $0x79] sm:$0xff]
      %v3358 = vld [vmem:[%s3054 + $0x81] sm:$0xff]
      %v3359 = vld [vmem:[%s3054 + $0x91] sm:$0xff]
      %v3360 = vld [vmem:[%s3054 + $0x99] sm:$0xff]
      %v3361 = vld [vmem:[%s3054 + $0xa9] sm:$0xff]
      %v3362 = vld [vmem:[%s3054 + $0xb1] sm:$0xff]
      %v3363 = vld [vmem:[%s3054 + $0xc1] sm:$0xff]
      %v3364 = vld [vmem:[%s3054 + $0xc9] sm:$0xff]
      %v3365 = vld [vmem:[%s3054 + $0xd9] sm:$0xff]
      %v3366 = vld [vmem:[%s3054 + $0xe1] sm:$0xff]
      %v3367 = vld [vmem:[%s3054 + $0xf1] sm:$0xff]
      %v3368 = vld [vmem:[%s3054 + $0xf9] sm:$0xff]
      %v3369 = vld [vmem:[%s3054 + $0x109] sm:$0xff]
      %v3370 = vld [vmem:[%s3054 + $0x111] sm:$0xff]
      %v3371 = vld [vmem:[%s3054 + $0x121] sm:$0xff]
      %v3372 = vld [vmem:[%s3054 + $0x129] sm:$0xff]
      %v3373 = vld [vmem:[%s3054 + $0x139] sm:$0xff]
      %v3374 = vld [vmem:[%s3054 + $0x141] sm:$0xff]
      %v3375 = vld [vmem:[%s3054 + $0x151] sm:$0xff]
      %v3376 = vld [vmem:[%s3054 + $0x159] sm:$0xff]
      %v3377 = vld [vmem:[%s3054 + $0x169] sm:$0xff]
      %v3378 = vld [vmem:[%s3054 + $0x171] sm:$0xff]
      %v3379 = vpack.c.bf16 %v3348, %v3347
      %v3380 = vpack.c.bf16 %v3350, %v3349
      %v3381 = vpack.c.bf16 %v3352, %v3351
      %v3382 = vpack.c.bf16 %v3354, %v3353
      %v3383 = vpack.c.bf16 %v3356, %v3355
      %v3384 = vpack.c.bf16 %v3358, %v3357
      %v3385 = vpack.c.bf16 %v3360, %v3359
      %v3386 = vpack.c.bf16 %v3362, %v3361
      %v3387 = vpack.c.bf16 %v3364, %v3363
      %v3388 = vpack.c.bf16 %v3366, %v3365
      %v3389 = vpack.c.bf16 %v3368, %v3367
      %v3390 = vpack.c.bf16 %v3370, %v3369
      %v3391 = vpack.c.bf16 %v3372, %v3371
      %v3392 = vpack.c.bf16 %v3374, %v3373
      %v3393 = vpack.c.bf16 %v3376, %v3375
      %v3394 = vpack.c.bf16 %v3378, %v3377
      %v3396 = vsel %vm1323, %v3379, 0
      %v3399 = vsel %vm1323, %v3380, 0
      %v3402 = vsel %vm1323, %v3381, 0
      %v3405 = vsel %vm1323, %v3382, 0
      %v3408 = vsel %vm1323, %v3383, 0
      %v3411 = vsel %vm1323, %v3384, 0
      %v3414 = vsel %vm1323, %v3385, 0
      %v3417 = vsel %vm1323, %v3386, 0
      %v3420 = vsel %vm1323, %v3387, 0
      %v3423 = vsel %vm1323, %v3388, 0
      %v3426 = vsel %vm1323, %v3389, 0
      %v3429 = vsel %vm1323, %v3390, 0
      %v3432 = vsel %vm1323, %v3391, 0
      %v3435 = vsel %vm1323, %v3392, 0
      %v3438 = vsel %vm1323, %v3393, 0
      %v3441 = vsel %vm1323, %v3394, 0
      %v3444 = vsel %vm1509, %v1363, 0
      %3446 = vmatprep.subr.bf16.mxu0 0
      %3447 = vmatpush1.bf16.msra.mxu0 %v3444
      %3448 = vmatprep.subr.bf16.mxu0 0
      %3449 = vmatpush1.bf16.msra.mxu0 0
      %3450 = vmatprep.subr.bf16.mxu0 0
      %3451 = vmatpush1.bf16.msra.mxu0 0
      %3452 = vmatprep.subr.bf16.mxu0 0
      %3453 = vmatpush1.bf16.msra.mxu0 0
      %3454 = vmatprep.subr.bf16.mxu0 0
      %3455 = vmatpush1.bf16.msra.mxu0 0
      %3456 = vmatprep.subr.bf16.mxu0 0
      %3457 = vmatpush1.bf16.msra.mxu0 0
      %3458 = vmatprep.subr.bf16.mxu0 0
      %3459 = vmatpush1.bf16.msra.mxu0 0
      %3460 = vmatprep.subr.bf16.mxu0 0
      %3461 = vmatpush1.bf16.msra.mxu0 0
      %3462 = vmatprep.subr.bf16.mxu0 0
      %3463 = vmatpush1.bf16.msra.mxu0 0
      %3464 = vmatprep.subr.bf16.mxu0 0
      %3465 = vmatpush1.bf16.msra.mxu0 0
      %3466 = vmatprep.subr.bf16.mxu0 0
      %3467 = vmatpush1.bf16.msra.mxu0 0
      %3468 = vmatprep.subr.bf16.mxu0 0
      %3469 = vmatpush1.bf16.msra.mxu0 0
      %3470 = vmatprep.subr.bf16.mxu0 0
      %3471 = vmatpush1.bf16.msra.mxu0 0
      %3472 = vmatprep.subr.bf16.mxu0 0
      %3473 = vmatpush1.bf16.msra.mxu0 0
      %3474 = vmatprep.subr.bf16.mxu0 0
      %3475 = vmatpush1.bf16.msra.mxu0 0
      %3476 = vmatprep.subr.bf16.mxu0 0
      %3477 = vmatpush1.bf16.msra.mxu0 0
      %3478 = vmatprep.mubr.bf16.mxu0 0
      %3479 = vmatmul.mubr.bf16.gmra.mrb[0].mxu0 %v3396
      %v3480 = vpop.f32.mrb[0].mxu0
      %v3481 = vadd.f32 0.0, %v3480
      %v3482 = vpop.f32.mrb[0].mxu0
      %v3483 = vpop.f32.mrb[0].mxu0
      %v3484 = vadd.f32 0.0, %v3483
      %v3485 = vpop.f32.mrb[0].mxu0
      %3486 = vmatprep.mubr.bf16.mxu0 0
      %3487 = vmatmul.mubr.bf16.gmra.mrb[0].mxu0 %v3399
      %v3488 = vpop.f32.mrb[0].mxu0
      %v3489 = vadd.f32 0.0, %v3488
      %v3490 = vpop.f32.mrb[0].mxu0
      %v3491 = vpop.f32.mrb[0].mxu0
      %v3492 = vadd.f32 0.0, %v3491
      %v3493 = vpop.f32.mrb[0].mxu0
      %3494 = vmatprep.mubr.bf16.mxu0 0
      %3495 = vmatmul.mubr.bf16.gmra.mrb[0].mxu0 %v3402
      %v3496 = vpop.f32.mrb[0].mxu0
      %v3497 = vadd.f32 0.0, %v3496
      %v3498 = vpop.f32.mrb[0].mxu0
      %v3499 = vpop.f32.mrb[0].mxu0
      %v3500 = vadd.f32 0.0, %v3499
      %v3501 = vpop.f32.mrb[0].mxu0
      %3502 = vmatprep.mubr.bf16.mxu0 0
      %3503 = vmatmul.mubr.bf16.gmra.mrb[0].mxu0 %v3405
      %v3504 = vpop.f32.mrb[0].mxu0
      %v3505 = vadd.f32 0.0, %v3504
      %v3506 = vpop.f32.mrb[0].mxu0
      %v3507 = vpop.f32.mrb[0].mxu0
      %v3508 = vadd.f32 0.0, %v3507
      %v3509 = vpop.f32.mrb[0].mxu0
      %3510 = vmatprep.mubr.bf16.mxu0 0
      %3511 = vmatmul.mubr.bf16.gmra.mrb[0].mxu0 %v3408
      %v3512 = vpop.f32.mrb[0].mxu0
      %v3513 = vadd.f32 0.0, %v3512
      %v3514 = vpop.f32.mrb[0].mxu0
      %v3515 = vpop.f32.mrb[0].mxu0
      %v3516 = vadd.f32 0.0, %v3515
      %v3517 = vpop.f32.mrb[0].mxu0
      %3518 = vmatprep.mubr.bf16.mxu0 0
      %3519 = vmatmul.mubr.bf16.gmra.mrb[0].mxu0 %v3411
      %v3520 = vpop.f32.mrb[0].mxu0
      %v3521 = vadd.f32 0.0, %v3520
      %v3522 = vpop.f32.mrb[0].mxu0
      %v3523 = vpop.f32.mrb[0].mxu0
      %v3524 = vadd.f32 0.0, %v3523
      %v3525 = vpop.f32.mrb[0].mxu0
      %3526 = vmatprep.mubr.bf16.mxu0 0
      %3527 = vmatmul.mubr.bf16.gmra.mrb[0].mxu0 %v3414
      %v3528 = vpop.f32.mrb[0].mxu0
      %v3529 = vadd.f32 0.0, %v3528
      %v3530 = vpop.f32.mrb[0].mxu0
      %v3531 = vpop.f32.mrb[0].mxu0
      %v3532 = vadd.f32 0.0, %v3531
      %v3533 = vpop.f32.mrb[0].mxu0
      %3534 = vmatprep.mubr.bf16.mxu0 0
      %3535 = vmatmul.mubr.bf16.gmra.mrb[0].mxu0 %v3417
      %v3536 = vpop.f32.mrb[0].mxu0
      %v3537 = vadd.f32 0.0, %v3536
      %v3538 = vpop.f32.mrb[0].mxu0
      %v3539 = vpop.f32.mrb[0].mxu0
      %v3540 = vadd.f32 0.0, %v3539
      %v3541 = vpop.f32.mrb[0].mxu0
      %3542 = vmatprep.mubr.bf16.mxu0 0
      %3543 = vmatmul.mubr.bf16.gmra.mrb[0].mxu0 %v3420
      %v3544 = vpop.f32.mrb[0].mxu0
      %v3545 = vadd.f32 0.0, %v3544
      %v3546 = vpop.f32.mrb[0].mxu0
      %v3547 = vpop.f32.mrb[0].mxu0
      %v3548 = vadd.f32 0.0, %v3547
      %v3549 = vpop.f32.mrb[0].mxu0
      %3550 = vmatprep.mubr.bf16.mxu0 0
      %3551 = vmatmul.mubr.bf16.gmra.mrb[0].mxu0 %v3423
      %v3552 = vpop.f32.mrb[0].mxu0
      %v3553 = vadd.f32 0.0, %v3552
      %v3554 = vpop.f32.mrb[0].mxu0
      %v3555 = vpop.f32.mrb[0].mxu0
      %v3556 = vadd.f32 0.0, %v3555
      %v3557 = vpop.f32.mrb[0].mxu0
      %3558 = vmatprep.mubr.bf16.mxu0 0
      %3559 = vmatmul.mubr.bf16.gmra.mrb[0].mxu0 %v3426
      %v3560 = vpop.f32.mrb[0].mxu0
      %v3561 = vadd.f32 0.0, %v3560
      %v3562 = vpop.f32.mrb[0].mxu0
      %v3563 = vpop.f32.mrb[0].mxu0
      %v3564 = vadd.f32 0.0, %v3563
      %v3565 = vpop.f32.mrb[0].mxu0
      %3566 = vmatprep.mubr.bf16.mxu0 0
      %3567 = vmatmul.mubr.bf16.gmra.mrb[0].mxu0 %v3429
      %v3568 = vpop.f32.mrb[0].mxu0
      %v3569 = vadd.f32 0.0, %v3568
      %v3570 = vpop.f32.mrb[0].mxu0
      %v3571 = vpop.f32.mrb[0].mxu0
      %v3572 = vadd.f32 0.0, %v3571
      %v3573 = vpop.f32.mrb[0].mxu0
      %3574 = vmatprep.mubr.bf16.mxu0 0
      %3575 = vmatmul.mubr.bf16.gmra.mrb[0].mxu0 %v3432
      %v3576 = vpop.f32.mrb[0].mxu0
      %v3577 = vadd.f32 0.0, %v3576
      %v3578 = vpop.f32.mrb[0].mxu0
      %v3579 = vpop.f32.mrb[0].mxu0
      %v3580 = vadd.f32 0.0, %v3579
      %v3581 = vpop.f32.mrb[0].mxu0
      %3582 = vmatprep.mubr.bf16.mxu0 0
      %3583 = vmatmul.mubr.bf16.gmra.mrb[0].mxu0 %v3435
      %v3584 = vpop.f32.mrb[0].mxu0
      %v3585 = vadd.f32 0.0, %v3584
      %v3586 = vpop.f32.mrb[0].mxu0
      %v3587 = vpop.f32.mrb[0].mxu0
      %v3588 = vadd.f32 0.0, %v3587
      %v3589 = vpop.f32.mrb[0].mxu0
      %3590 = vmatprep.mubr.bf16.mxu0 0
      %3591 = vmatmul.mubr.bf16.gmra.mrb[0].mxu0 %v3438
      %v3592 = vpop.f32.mrb[0].mxu0
      %v3593 = vadd.f32 0.0, %v3592
      %v3594 = vpop.f32.mrb[0].mxu0
      %v3595 = vpop.f32.mrb[0].mxu0
      %v3596 = vadd.f32 0.0, %v3595
      %v3597 = vpop.f32.mrb[0].mxu0
      %3598 = vmatprep.mubr.bf16.mxu0 0
      %3599 = vmatmul.mubr.bf16.gmra.mrb[0].mxu0 %v3441
      %v3600 = vpop.f32.mrb[0].mxu0
      %v3601 = vadd.f32 0.0, %v3600
      %v3602 = vpop.f32.mrb[0].mxu0
      %v3603 = vpop.f32.mrb[0].mxu0
      %v3604 = vadd.f32 0.0, %v3603
      %v3605 = vpop.f32.mrb[0].mxu0
      %3606 = vdwg.mxu0
      %v3607 = vadd.f32 %v3315, %v3481
      %v3608 = vadd.f32 %v3316, %v3484
      %v3609 = vadd.f32 %v3317, %v3489
      %v3610 = vadd.f32 %v3318, %v3492
      %v3611 = vadd.f32 %v3319, %v3497
      %v3612 = vadd.f32 %v3320, %v3500
      %v3613 = vadd.f32 %v3321, %v3505
      %v3614 = vadd.f32 %v3322, %v3508
      %v3615 = vadd.f32 %v3323, %v3513
      %v3616 = vadd.f32 %v3324, %v3516
      %v3617 = vadd.f32 %v3325, %v3521
      %v3618 = vadd.f32 %v3326, %v3524
      %v3619 = vadd.f32 %v3327, %v3529
      %v3620 = vadd.f32 %v3328, %v3532
      %v3621 = vadd.f32 %v3329, %v3537
      %v3622 = vadd.f32 %v3330, %v3540
      %v3623 = vadd.f32 %v3331, %v3545
      %v3624 = vadd.f32 %v3332, %v3548
      %v3625 = vadd.f32 %v3333, %v3553
      %v3626 = vadd.f32 %v3334, %v3556
      %v3627 = vadd.f32 %v3335, %v3561
      %v3628 = vadd.f32 %v3336, %v3564
      %v3629 = vadd.f32 %v3337, %v3569
      %v3630 = vadd.f32 %v3338, %v3572
      %v3631 = vadd.f32 %v3339, %v3577
      %v3632 = vadd.f32 %v3340, %v3580
      %v3633 = vadd.f32 %v3341, %v3585
      %v3634 = vadd.f32 %v3342, %v3588
      %v3635 = vadd.f32 %v3343, %v3593
      %v3636 = vadd.f32 %v3344, %v3596
      %v3637 = vadd.f32 %v3345, %v3601
      %v3638 = vadd.f32 %v3346, %v3604
      %v3639 = vld [vmem:[%s3054 + $0x2] sm:$0xff]
      %v3640 = vld [vmem:[%s3054 + $0xa] sm:$0xff]
      %v3641 = vld [vmem:[%s3054 + $0x1a] sm:$0xff]
      %v3642 = vld [vmem:[%s3054 + $0x22] sm:$0xff]
      %v3643 = vld [vmem:[%s3054 + $0x32] sm:$0xff]
      %v3644 = vld [vmem:[%s3054 + $0x3a] sm:$0xff]
      %v3645 = vld [vmem:[%s3054 + $0x4a] sm:$0xff]
      %v3646 = vld [vmem:[%s3054 + $0x52] sm:$0xff]
      %v3647 = vld [vmem:[%s3054 + $0x62] sm:$0xff]
      %v3648 = vld [vmem:[%s3054 + $0x6a] sm:$0xff]
      %v3649 = vld [vmem:[%s3054 + $0x7a] sm:$0xff]
      %v3650 = vld [vmem:[%s3054 + $0x82] sm:$0xff]
      %v3651 = vld [vmem:[%s3054 + $0x92] sm:$0xff]
      %v3652 = vld [vmem:[%s3054 + $0x9a] sm:$0xff]
      %v3653 = vld [vmem:[%s3054 + $0xaa] sm:$0xff]
      %v3654 = vld [vmem:[%s3054 + $0xb2] sm:$0xff]
      %v3655 = vld [vmem:[%s3054 + $0xc2] sm:$0xff]
      %v3656 = vld [vmem:[%s3054 + $0xca] sm:$0xff]
      %v3657 = vld [vmem:[%s3054 + $0xda] sm:$0xff]
      %v3658 = vld [vmem:[%s3054 + $0xe2] sm:$0xff]
      %v3659 = vld [vmem:[%s3054 + $0xf2] sm:$0xff]
      %v3660 = vld [vmem:[%s3054 + $0xfa] sm:$0xff]
      %v3661 = vld [vmem:[%s3054 + $0x10a] sm:$0xff]
      %v3662 = vld [vmem:[%s3054 + $0x112] sm:$0xff]
      %v3663 = vld [vmem:[%s3054 + $0x122] sm:$0xff]
      %v3664 = vld [vmem:[%s3054 + $0x12a] sm:$0xff]
      %v3665 = vld [vmem:[%s3054 + $0x13a] sm:$0xff]
      %v3666 = vld [vmem:[%s3054 + $0x142] sm:$0xff]
      %v3667 = vld [vmem:[%s3054 + $0x152] sm:$0xff]
      %v3668 = vld [vmem:[%s3054 + $0x15a] sm:$0xff]
      %v3669 = vld [vmem:[%s3054 + $0x16a] sm:$0xff]
      %v3670 = vld [vmem:[%s3054 + $0x172] sm:$0xff]
      %v3671 = vpack.c.bf16 %v3640, %v3639
      %v3672 = vpack.c.bf16 %v3642, %v3641
      %v3673 = vpack.c.bf16 %v3644, %v3643
      %v3674 = vpack.c.bf16 %v3646, %v3645
      %v3675 = vpack.c.bf16 %v3648, %v3647
      %v3676 = vpack.c.bf16 %v3650, %v3649
      %v3677 = vpack.c.bf16 %v3652, %v3651
      %v3678 = vpack.c.bf16 %v3654, %v3653
      %v3679 = vpack.c.bf16 %v3656, %v3655
      %v3680 = vpack.c.bf16 %v3658, %v3657
      %v3681 = vpack.c.bf16 %v3660, %v3659
      %v3682 = vpack.c.bf16 %v3662, %v3661
      %v3683 = vpack.c.bf16 %v3664, %v3663
      %v3684 = vpack.c.bf16 %v3666, %v3665
      %v3685 = vpack.c.bf16 %v3668, %v3667
      %v3686 = vpack.c.bf16 %v3670, %v3669
      %v3688 = vsel %vm1323, %v3671, 0
      %v3691 = vsel %vm1323, %v3672, 0
      %v3694 = vsel %vm1323, %v3673, 0
      %v3697 = vsel %vm1323, %v3674, 0
      %v3700 = vsel %vm1323, %v3675, 0
      %v3703 = vsel %vm1323, %v3676, 0
      %v3706 = vsel %vm1323, %v3677, 0
      %v3709 = vsel %vm1323, %v3678, 0
      %v3712 = vsel %vm1323, %v3679, 0
      %v3715 = vsel %vm1323, %v3680, 0
      %v3718 = vsel %vm1323, %v3681, 0
      %v3721 = vsel %vm1323, %v3682, 0
      %v3724 = vsel %vm1323, %v3683, 0
      %v3727 = vsel %vm1323, %v3684, 0
      %v3730 = vsel %vm1323, %v3685, 0
      %v3733 = vsel %vm1323, %v3686, 0
      %v3736 = vsel %vm1509, %v1364, 0
      %3738 = vmatprep.subr.bf16.mxu0 0
      %3739 = vmatpush1.bf16.msra.mxu0 %v3736
      %3740 = vmatprep.subr.bf16.mxu0 0
      %3741 = vmatpush1.bf16.msra.mxu0 0
      %3742 = vmatprep.subr.bf16.mxu0 0
      %3743 = vmatpush1.bf16.msra.mxu0 0
      %3744 = vmatprep.subr.bf16.mxu0 0
      %3745 = vmatpush1.bf16.msra.mxu0 0
      %3746 = vmatprep.subr.bf16.mxu0 0
      %3747 = vmatpush1.bf16.msra.mxu0 0
      %3748 = vmatprep.subr.bf16.mxu0 0
      %3749 = vmatpush1.bf16.msra.mxu0 0
      %3750 = vmatprep.subr.bf16.mxu0 0
      %3751 = vmatpush1.bf16.msra.mxu0 0
      %3752 = vmatprep.subr.bf16.mxu0 0
      %3753 = vmatpush1.bf16.msra.mxu0 0
      %3754 = vmatprep.subr.bf16.mxu0 0
      %3755 = vmatpush1.bf16.msra.mxu0 0
      %3756 = vmatprep.subr.bf16.mxu0 0
      %3757 = vmatpush1.bf16.msra.mxu0 0
      %3758 = vmatprep.subr.bf16.mxu0 0
      %3759 = vmatpush1.bf16.msra.mxu0 0
      %3760 = vmatprep.subr.bf16.mxu0 0
      %3761 = vmatpush1.bf16.msra.mxu0 0
      %3762 = vmatprep.subr.bf16.mxu0 0
      %3763 = vmatpush1.bf16.msra.mxu0 0
      %3764 = vmatprep.subr.bf16.mxu0 0
      %3765 = vmatpush1.bf16.msra.mxu0 0
      %3766 = vmatprep.subr.bf16.mxu0 0
      %3767 = vmatpush1.bf16.msra.mxu0 0
      %3768 = vmatprep.subr.bf16.mxu0 0
      %3769 = vmatpush1.bf16.msra.mxu0 0
      %3770 = vmatprep.mubr.bf16.mxu0 0
      %3771 = vmatmul.mubr.bf16.gmra.mrb[0].mxu0 %v3688
      %v3772 = vpop.f32.mrb[0].mxu0
      %v3773 = vadd.f32 0.0, %v3772
      %v3774 = vpop.f32.mrb[0].mxu0
      %v3775 = vpop.f32.mrb[0].mxu0
      %v3776 = vadd.f32 0.0, %v3775
      %v3777 = vpop.f32.mrb[0].mxu0
      %3778 = vmatprep.mubr.bf16.mxu0 0
      %3779 = vmatmul.mubr.bf16.gmra.mrb[0].mxu0 %v3691
      %v3780 = vpop.f32.mrb[0].mxu0
      %v3781 = vadd.f32 0.0, %v3780
      %v3782 = vpop.f32.mrb[0].mxu0
      %v3783 = vpop.f32.mrb[0].mxu0
      %v3784 = vadd.f32 0.0, %v3783
      %v3785 = vpop.f32.mrb[0].mxu0
      %3786 = vmatprep.mubr.bf16.mxu0 0
      %3787 = vmatmul.mubr.bf16.gmra.mrb[0].mxu0 %v3694
      %v3788 = vpop.f32.mrb[0].mxu0
      %v3789 = vadd.f32 0.0, %v3788
      %v3790 = vpop.f32.mrb[0].mxu0
      %v3791 = vpop.f32.mrb[0].mxu0
      %v3792 = vadd.f32 0.0, %v3791
      %v3793 = vpop.f32.mrb[0].mxu0
      %3794 = vmatprep.mubr.bf16.mxu0 0
      %3795 = vmatmul.mubr.bf16.gmra.mrb[0].mxu0 %v3697
      %v3796 = vpop.f32.mrb[0].mxu0
      %v3797 = vadd.f32 0.0, %v3796
      %v3798 = vpop.f32.mrb[0].mxu0
      %v3799 = vpop.f32.mrb[0].mxu0
      %v3800 = vadd.f32 0.0, %v3799
      %v3801 = vpop.f32.mrb[0].mxu0
      %3802 = vmatprep.mubr.bf16.mxu0 0
      %3803 = vmatmul.mubr.bf16.gmra.mrb[0].mxu0 %v3700
      %v3804 = vpop.f32.mrb[0].mxu0
      %v3805 = vadd.f32 0.0, %v3804
      %v3806 = vpop.f32.mrb[0].mxu0
      %v3807 = vpop.f32.mrb[0].mxu0
      %v3808 = vadd.f32 0.0, %v3807
      %v3809 = vpop.f32.mrb[0].mxu0
      %3810 = vmatprep.mubr.bf16.mxu0 0
      %3811 = vmatmul.mubr.bf16.gmra.mrb[0].mxu0 %v3703
      %v3812 = vpop.f32.mrb[0].mxu0
      %v3813 = vadd.f32 0.0, %v3812
      %v3814 = vpop.f32.mrb[0].mxu0
      %v3815 = vpop.f32.mrb[0].mxu0
      %v3816 = vadd.f32 0.0, %v3815
      %v3817 = vpop.f32.mrb[0].mxu0
      %3818 = vmatprep.mubr.bf16.mxu0 0
      %3819 = vmatmul.mubr.bf16.gmra.mrb[0].mxu0 %v3706
      %v3820 = vpop.f32.mrb[0].mxu0
      %v3821 = vadd.f32 0.0, %v3820
      %v3822 = vpop.f32.mrb[0].mxu0
      %v3823 = vpop.f32.mrb[0].mxu0
      %v3824 = vadd.f32 0.0, %v3823
      %v3825 = vpop.f32.mrb[0].mxu0
      %3826 = vmatprep.mubr.bf16.mxu0 0
      %3827 = vmatmul.mubr.bf16.gmra.mrb[0].mxu0 %v3709
      %v3828 = vpop.f32.mrb[0].mxu0
      %v3829 = vadd.f32 0.0, %v3828
      %v3830 = vpop.f32.mrb[0].mxu0
      %v3831 = vpop.f32.mrb[0].mxu0
      %v3832 = vadd.f32 0.0, %v3831
      %v3833 = vpop.f32.mrb[0].mxu0
      %3834 = vmatprep.mubr.bf16.mxu0 0
      %3835 = vmatmul.mubr.bf16.gmra.mrb[0].mxu0 %v3712
      %v3836 = vpop.f32.mrb[0].mxu0
      %v3837 = vadd.f32 0.0, %v3836
      %v3838 = vpop.f32.mrb[0].mxu0
      %v3839 = vpop.f32.mrb[0].mxu0
      %v3840 = vadd.f32 0.0, %v3839
      %v3841 = vpop.f32.mrb[0].mxu0
      %3842 = vmatprep.mubr.bf16.mxu0 0
      %3843 = vmatmul.mubr.bf16.gmra.mrb[0].mxu0 %v3715
      %v3844 = vpop.f32.mrb[0].mxu0
      %v3845 = vadd.f32 0.0, %v3844
      %v3846 = vpop.f32.mrb[0].mxu0
      %v3847 = vpop.f32.mrb[0].mxu0
      %v3848 = vadd.f32 0.0, %v3847
      %v3849 = vpop.f32.mrb[0].mxu0
      %3850 = vmatprep.mubr.bf16.mxu0 0
      %3851 = vmatmul.mubr.bf16.gmra.mrb[0].mxu0 %v3718
      %v3852 = vpop.f32.mrb[0].mxu0
      %v3853 = vadd.f32 0.0, %v3852
      %v3854 = vpop.f32.mrb[0].mxu0
      %v3855 = vpop.f32.mrb[0].mxu0
      %v3856 = vadd.f32 0.0, %v3855
      %v3857 = vpop.f32.mrb[0].mxu0
      %3858 = vmatprep.mubr.bf16.mxu0 0
      %3859 = vmatmul.mubr.bf16.gmra.mrb[0].mxu0 %v3721
      %v3860 = vpop.f32.mrb[0].mxu0
      %v3861 = vadd.f32 0.0, %v3860
      %v3862 = vpop.f32.mrb[0].mxu0
      %v3863 = vpop.f32.mrb[0].mxu0
      %v3864 = vadd.f32 0.0, %v3863
      %v3865 = vpop.f32.mrb[0].mxu0
      %3866 = vmatprep.mubr.bf16.mxu0 0
      %3867 = vmatmul.mubr.bf16.gmra.mrb[0].mxu0 %v3724
      %v3868 = vpop.f32.mrb[0].mxu0
      %v3869 = vadd.f32 0.0, %v3868
      %v3870 = vpop.f32.mrb[0].mxu0
      %v3871 = vpop.f32.mrb[0].mxu0
      %v3872 = vadd.f32 0.0, %v3871
      %v3873 = vpop.f32.mrb[0].mxu0
      %3874 = vmatprep.mubr.bf16.mxu0 0
      %3875 = vmatmul.mubr.bf16.gmra.mrb[0].mxu0 %v3727
      %v3876 = vpop.f32.mrb[0].mxu0
      %v3877 = vadd.f32 0.0, %v3876
      %v3878 = vpop.f32.mrb[0].mxu0
      %v3879 = vpop.f32.mrb[0].mxu0
      %v3880 = vadd.f32 0.0, %v3879
      %v3881 = vpop.f32.mrb[0].mxu0
      %3882 = vmatprep.mubr.bf16.mxu0 0
      %3883 = vmatmul.mubr.bf16.gmra.mrb[0].mxu0 %v3730
      %v3884 = vpop.f32.mrb[0].mxu0
      %v3885 = vadd.f32 0.0, %v3884
      %v3886 = vpop.f32.mrb[0].mxu0
      %v3887 = vpop.f32.mrb[0].mxu0
      %v3888 = vadd.f32 0.0, %v3887
      %v3889 = vpop.f32.mrb[0].mxu0
      %3890 = vmatprep.mubr.bf16.mxu0 0
      %3891 = vmatmul.mubr.bf16.gmra.mrb[0].mxu0 %v3733
      %v3892 = vpop.f32.mrb[0].mxu0
      %v3893 = vadd.f32 0.0, %v3892
      %v3894 = vpop.f32.mrb[0].mxu0
      %v3895 = vpop.f32.mrb[0].mxu0
      %v3896 = vadd.f32 0.0, %v3895
      %v3897 = vpop.f32.mrb[0].mxu0
      %3898 = vdwg.mxu0
      %v3899 = vadd.f32 %v3607, %v3773
      %v3900 = vadd.f32 %v3608, %v3776
      %v3901 = vadd.f32 %v3609, %v3781
      %v3902 = vadd.f32 %v3610, %v3784
      %v3903 = vadd.f32 %v3611, %v3789
      %v3904 = vadd.f32 %v3612, %v3792
      %v3905 = vadd.f32 %v3613, %v3797
      %v3906 = vadd.f32 %v3614, %v3800
      %v3907 = vadd.f32 %v3615, %v3805
      %v3908 = vadd.f32 %v3616, %v3808
      %v3909 = vadd.f32 %v3617, %v3813
      %v3910 = vadd.f32 %v3618, %v3816
      %v3911 = vadd.f32 %v3619, %v3821
      %v3912 = vadd.f32 %v3620, %v3824
      %v3913 = vadd.f32 %v3621, %v3829
      %v3914 = vadd.f32 %v3622, %v3832
      %v3915 = vadd.f32 %v3623, %v3837
      %v3916 = vadd.f32 %v3624, %v3840
      %v3917 = vadd.f32 %v3625, %v3845
      %v3918 = vadd.f32 %v3626, %v3848
      %v3919 = vadd.f32 %v3627, %v3853
      %v3920 = vadd.f32 %v3628, %v3856
      %v3921 = vadd.f32 %v3629, %v3861
      %v3922 = vadd.f32 %v3630, %v3864
      %v3923 = vadd.f32 %v3631, %v3869
      %v3924 = vadd.f32 %v3632, %v3872
      %v3925 = vadd.f32 %v3633, %v3877
      %v3926 = vadd.f32 %v3634, %v3880
      %v3927 = vadd.f32 %v3635, %v3885
      %v3928 = vadd.f32 %v3636, %v3888
      %v3929 = vadd.f32 %v3637, %v3893
      %v3930 = vadd.f32 %v3638, %v3896
      %3931 = vst.msk [vmem:[%s406] sm:$0xff] %vm726, %v3899
      %3932 = vst.msk [vmem:[%s406 + $0x8] sm:$0xff] %vm726, %v3900
      %3933 = vst.msk [vmem:[%s406 + $0x10] sm:$0xff] %vm726, %v3901
      %3934 = vst.msk [vmem:[%s406 + $0x18] sm:$0xff] %vm726, %v3902
      %3935 = vst.msk [vmem:[%s406 + $0x20] sm:$0xff] %vm726, %v3903
      %3936 = vst.msk [vmem:[%s406 + $0x28] sm:$0xff] %vm726, %v3904
      %3937 = vst.msk [vmem:[%s406 + $0x30] sm:$0xff] %vm726, %v3905
      %3938 = vst.msk [vmem:[%s406 + $0x38] sm:$0xff] %vm726, %v3906
      %3939 = vst.msk [vmem:[%s406 + $0x40] sm:$0xff] %vm726, %v3907
      %3940 = vst.msk [vmem:[%s406 + $0x48] sm:$0xff] %vm726, %v3908
      %3941 = vst.msk [vmem:[%s406 + $0x50] sm:$0xff] %vm726, %v3909
      %3942 = vst.msk [vmem:[%s406 + $0x58] sm:$0xff] %vm726, %v3910
      %3943 = vst.msk [vmem:[%s406 + $0x60] sm:$0xff] %vm726, %v3911
      %3944 = vst.msk [vmem:[%s406 + $0x68] sm:$0xff] %vm726, %v3912
      %3945 = vst.msk [vmem:[%s406 + $0x70] sm:$0xff] %vm726, %v3913
      %3946 = vst.msk [vmem:[%s406 + $0x78] sm:$0xff] %vm726, %v3914
      %3947 = vst.msk [vmem:[%s406 + $0x80] sm:$0xff] %vm726, %v3915
      %3948 = vst.msk [vmem:[%s406 + $0x88] sm:$0xff] %vm726, %v3916
      %3949 = vst.msk [vmem:[%s406 + $0x90] sm:$0xff] %vm726, %v3917
      %3950 = vst.msk [vmem:[%s406 + $0x98] sm:$0xff] %vm726, %v3918
      %3951 = vst.msk [vmem:[%s406 + $0xa0] sm:$0xff] %vm726, %v3919
      %3952 = vst.msk [vmem:[%s406 + $0xa8] sm:$0xff] %vm726, %v3920
      %3953 = vst.msk [vmem:[%s406 + $0xb0] sm:$0xff] %vm726, %v3921
      %3954 = vst.msk [vmem:[%s406 + $0xb8] sm:$0xff] %vm726, %v3922
      %3955 = vst.msk [vmem:[%s406 + $0xc0] sm:$0xff] %vm726, %v3923
      %3956 = vst.msk [vmem:[%s406 + $0xc8] sm:$0xff] %vm726, %v3924
      %3957 = vst.msk [vmem:[%s406 + $0xd0] sm:$0xff] %vm726, %v3925
      %3958 = vst.msk [vmem:[%s406 + $0xd8] sm:$0xff] %vm726, %v3926
      %3959 = vst.msk [vmem:[%s406 + $0xe0] sm:$0xff] %vm726, %v3927
      %3960 = vst.msk [vmem:[%s406 + $0xe8] sm:$0xff] %vm726, %v3928
      %3961 = vst.msk [vmem:[%s406 + $0xf0] sm:$0xff] %vm726, %v3929
      %3962 = vst.msk [vmem:[%s406 + $0xf8] sm:$0xff] %vm726, %v3930
      %p3963 = scmp.lt.s32.totalorder %s22, 1
      %s3964 = scalar_select %p3963, %s22, 1
      %s3965 = smul.addr %s3964, 32
      %s3966 = smul.addr %s3965, 8
      %s3967 = scalar_lea.vmem %s11, %s3966
      // Predicated region
      $region69: #{dense_block_forward.4} parent=63 // pred_check
        %p3968 = pneg %p281
      $region70: #{dense_block_forward.4} parent=63 // pred_check_branch
        %3970 = sbr.rel (%p3968) target = $region72
      $region71: #{dense_block_forward.4} parent=63 // pred_region
        _
      $region72: #{dense_block_forward.4} parent=63 // pred_fallthru
        _
    $region64: #{dense_block_forward.4} parent=5 // pred_fallthru
      _
    %p3971 = scmp.le.s32.totalorder 2, %s17
    // Predicated region
    $region73: #{dense_block_forward.4} parent=5 // pred_check
      %p3972 = pneg %p3971
    $region74: #{dense_block_forward.4} parent=5 // pred_check_branch
      %3974 = sbr.rel (%p3972) target = $region76
    $region75: #{dense_block_forward.4} parent=5 // pred_region
      %s3975 = ssub.s32 %s17, 2
      // Predicated region
      $region77: #{dense_block_forward.4} parent=75 // pred_check
        %p3976 = pneg %p287
      $region78: #{dense_block_forward.4} parent=75 // pred_check_branch
        %3978 = sbr.rel (%p3976) target = $region80
      $region79: #{dense_block_forward.4} parent=75 // pred_region
        %p3979 = scmp.lt.s32.totalorder %s23, 1
        %s3980 = scalar_select %p3979, %s23, 1
        %s3981 = smul.addr %s3980, 32
        %s3982 = smul.addr %s3981, 8
        %s3983 = scalar_lea.vmem %s11, %s3982
      $region80: #{dense_block_forward.4} parent=75 // pred_fallthru
        _
    $region76: #{dense_block_forward.4} parent=5 // pred_fallthru
      _
  $region6: #{dense_block_forward.4} parent=0 // loop_footer
    %s21 = sadd.s32 1, %s17
  $region7: #{dense_block_forward.4} parent=0 // loop_footer_branch
    %16 = sbr.rel target = $region3
  $region8: #{dense_block_forward.4} parent=0 // loop_exit
    _

</llo_original>
